<compile_context>
chip_gen: v7x
topology: tpu7x:2x2x1
jax: 0.10.0
libtpu: 0.0.40
codegen_flags: <defaults>
</compile_context>

<pallas_src>
import functools

import jax
import jax.numpy as jnp
from jax.experimental import pallas as pl
from jax.experimental.pallas import tpu as pltpu


def _pick_batch_tile(B):
    """Batch-chunk size: full batch when small, multiple of 128 when large
    (keeps every block's lane dim legal and gives >=2 grid steps for v7x)."""
    if B > 256:
        for tb in (512, 256, 128):
            if B % tb == 0:
                return tb
    return B


# ----------------------------------------------------------------------------
# Fused kernel: chain (VPU, batch on lanes) + o_ebd + complex MLP head (MXU)
# ----------------------------------------------------------------------------
def fused_kernel(x_r_ref, x_i_ref, u_r_ref, u_i_ref, of_ref,
                 m_r_ref, m_i_ref,
                 oebd_w_ref, oebd_b_ref,
                 w1f_rr_ref, w1f_ri_ref, w1f_ir_ref, w1f_ii_ref,
                 w1o_r_ref, w1o_i_ref, b1_r_ref, b1_i_ref,
                 w2_r_ref, w2_i_ref, w2_s_ref, b2_r_ref, b2_i_ref,
                 w3_r_ref, w3_i_ref, w3_s_ref, b3_r_ref, b3_i_ref,
                 y_r_ref, y_i_ref,
                 *, num_layers, dim, compute_dtype):
    L, D = num_layers, dim
    f32 = jnp.float32
    cd = compute_dtype   # set to jnp.bfloat16 for ~2x MXU on v6e/v7x (f32 acc kept)

    def mm(a, b):
        return jnp.dot(a.astype(cd), b.astype(cd), preferred_element_type=f32)

    def mish(v):
        # mish(v) = v * tanh(softplus(v)) rewritten with a single exp:
        # tanh(log(1+e)) = ((1+e)^2 - 1)/((1+e)^2 + 1) = n/(n+2), n = e*(e+2)
        e = jnp.exp(jnp.minimum(v, 20.0))
        n = e * (e + 2.0)
        return v * (n / (n + 2.0))

    def _acc(a, b):
        return b if a is None else a + b

    # ---------------- chain stage: lane-vectorized over the batch -------------
    # The current (B, D, D) complex operand is carried as D row-planes of shape
    # (D, TB): rows_r[p][k, b] == out[b, p, k].real
    def m_apply(layer, rr, ri):
        """temp = M[layer] @ out; M entries are batch-independent SMEM scalars."""
        base = layer * D * D
        t_r, t_i = [], []
        for p in range(D):
            ar = ai = None
            for j in range(D):
                mr = m_r_ref[base + p * D + j]
                mi = m_i_ref[base + p * D + j]
                ar = _acc(ar, mr * rr[j] - mi * ri[j])
                ai = _acc(ai, mr * ri[j] + mi * rr[j])
            t_r.append(ar)
            t_i.append(ai)
        return t_r, t_i

    def x_apply(layer, rr, ri):
        """out = x[:, layer] @ temp; per-sample x entries vectorized along lanes."""
        xl_r = x_r_ref[layer]          # (D, D, TB)
        xl_i = x_i_ref[layer]
        n_r, n_i = [], []
        for p in range(D):
            ar = ai = None
            for j in range(D):
                xr = xl_r[p, j][None, :]   # (1, TB) broadcast over the k rows
                xi = xl_i[p, j][None, :]
                ar = _acc(ar, xr * rr[j] - xi * ri[j])
                ai = _acc(ai, xr * ri[j] + xi * rr[j])
            n_r.append(ar)
            n_i.append(ai)
        return n_r, n_i

    x0_r = x_r_ref[0]                  # (D, D, TB)
    x0_i = x_i_ref[0]
    rows_r = [x0_r[p] for p in range(D)]
    rows_i = [x0_i[p] for p in range(D)]

    for layer in range(L - 1):
        rows_r, rows_i = m_apply(layer, rows_r, rows_i)
        rows_r, rows_i = x_apply(layer + 1, rows_r, rows_i)
    rows_r, rows_i = m_apply(L - 1, rows_r, rows_i)

    out_r = [u_r_ref[p] - rows_r[p] for p in range(D)]   # (D, TB) each
    out_i = [u_i_ref[p] - rows_i[p] for p in range(D)]

    # ---------------- head stage (transposed: activations = (feat, batch)) ----
    of_t = of_ref[...]                                    # (8, TB)
    o_emb = mm(oebd_w_ref[...], of_t) + oebd_b_ref[...]   # (half, TB), real

    # layer 1: real inputs (chain features + o_embedding) x complex weight W1.
    # The torch cat/flatten is never materialized: each chain row-plane is
    # contracted directly against its pre-sliced weight block.
    h_r = mm(w1o_r_ref[...], o_emb) + b1_r_ref[...]
    h_i = mm(w1o_i_ref[...], o_emb) + b1_i_ref[...]
    for p in range(D):
        h_r = h_r + mm(w1f_rr_ref[p], out_r[p]) + mm(w1f_ri_ref[p], out_i[p])
        h_i = h_i + mm(w1f_ir_ref[p], out_r[p]) + mm(w1f_ii_ref[p], out_i[p])
    h_r, h_i = mish(h_r), mish(h_i)

    # layer 2: complex x complex via the 3-mult (Gauss) form; Wr+Wi pre-summed.
    p1 = mm(w2_r_ref[...], h_r)
    p2 = mm(w2_i_ref[...], h_i)
    p3 = mm(w2_s_ref[...], h_r + h_i)
    g_r = mish(p1 - p2 + b2_r_ref[...])
    g_i = mish(p3 - p1 - p2 + b2_i_ref[...])

    # layer 3
    q1 = mm(w3_r_ref[...], g_r)
    q2 = mm(w3_i_ref[...], g_i)
    q3 = mm(w3_s_ref[...], g_r + g_i)
    z_r = q1 - q2 + b3_r_ref[...]                         # (D, TB)
    z_i = q3 - q1 - q2 + b3_i_ref[...]

    # ToStateVec: L2-normalize each column (one state vector per sample).
    s = jnp.sum(z_r * z_r + z_i * z_i, axis=0, keepdims=True)
    inv = jax.lax.rsqrt(s + 1e-12)
    y_r_ref[...] = (z_r * inv).astype(y_r_ref.dtype)
    y_i_ref[...] = (z_i * inv).astype(y_i_ref.dtype)


# ----------------------------------------------------------------------------
# Wrapper: complex->planar split, batch-to-lane transposes, weight plumbing
# ----------------------------------------------------------------------------
def quantum_model_v4(params, x, u, o, *, compute_dtype=jnp.float32,
                     batch_tile=None):
    B, L, D, _ = x.shape
    feat = 2 * D * D
    half = feat                        # head_input_dim // 2 == 2*D*D
    f32 = jnp.float32

    # complex -> real/imag planes, batch moved to the lane (last) axis
    x_r = jnp.transpose(jnp.real(x), (1, 2, 3, 0)).astype(f32)   # (L, D, D, B)
    x_i = jnp.transpose(jnp.imag(x), (1, 2, 3, 0)).astype(f32)
    u_r = jnp.transpose(jnp.real(u), (1, 2, 0)).astype(f32)      # (D, D, B)
    u_i = jnp.transpose(jnp.imag(u), (1, 2, 0)).astype(f32)
    of = jnp.concatenate([jnp.real(o), jnp.imag(o)], axis=-1).reshape(B, -1)
    of_t = jnp.transpose(of).astype(f32)                         # (8, B)

    # parameter plumbing (done once, outside the kernel)
    m_r = params["m_r"].reshape(-1).astype(f32)                  # SMEM scalars
    m_i = params["m_i"].reshape(-1).astype(f32)

    def T(a):
        return jnp.transpose(a).astype(f32)

    oebd_w = T(params["oebd_w"])       # (half, 8)
    oebd_b = T(params["oebd_b"])       # (half, 1)

    def split_w1(w):                   # w: (hid, half) -> transposed + split
        wt = jnp.transpose(w).astype(f32)              # (half, hid)
        wf = wt[:, :feat].reshape(half, D, 2 * D)
        w_real = jnp.transpose(wf[:, :, :D], (1, 0, 2))   # (D, half, D): real rows
        w_imag = jnp.transpose(wf[:, :, D:], (1, 0, 2))   # (D, half, D): imag rows
        return w_real, w_imag, wt[:, feat:]               # (half, half): o_emb rows

    w1f_rr, w1f_ri, w1o_r = split_w1(params["w1_r"])
    w1f_ir, w1f_ii, w1o_i = split_w1(params["w1_i"])
    b1_r, b1_i = T(params["b1_r"]), T(params["b1_i"])

    w2_r, w2_i = T(params["w2_r"]), T(params["w2_i"])
    w2_s = w2_r + w2_i                 # pre-summed for the 3-mult complex matmul
    b2_r, b2_i = T(params["b2_r"]), T(params["b2_i"])
    w3_r, w3_i = T(params["w3_r"]), T(params["w3_i"])
    w3_s = w3_r + w3_i
    b3_r, b3_i = T(params["b3_r"]), T(params["b3_i"])

    tb = batch_tile or _pick_batch_tile(B)
    assert B % tb == 0
    grid = (B // tb,)

    def rep2(b):
        return (0, 0)

    def rep3(b):
        return (0, 0, 0)

    in_specs = [
        pl.BlockSpec((L, D, D, tb), lambda b: (0, 0, 0, b)),   # x_r
        pl.BlockSpec((L, D, D, tb), lambda b: (0, 0, 0, b)),   # x_i
        pl.BlockSpec((D, D, tb), lambda b: (0, 0, b)),         # u_r
        pl.BlockSpec((D, D, tb), lambda b: (0, 0, b)),         # u_i
        pl.BlockSpec((8, tb), lambda b: (0, b)),               # o features
        pl.BlockSpec(memory_space=pltpu.MemorySpace.SMEM),     # m_r scalars
        pl.BlockSpec(memory_space=pltpu.MemorySpace.SMEM),     # m_i scalars
        pl.BlockSpec((half, 8), rep2),                         # oebd_w^T
        pl.BlockSpec((half, 1), rep2),                         # oebd_b^T
        pl.BlockSpec((D, half, D), rep3),                      # w1f_rr
        pl.BlockSpec((D, half, D), rep3),                      # w1f_ri
        pl.BlockSpec((D, half, D), rep3),                      # w1f_ir
        pl.BlockSpec((D, half, D), rep3),                      # w1f_ii
        pl.BlockSpec((half, half), rep2),                      # w1o_r
        pl.BlockSpec((half, half), rep2),                      # w1o_i
        pl.BlockSpec((half, 1), rep2),                         # b1_r
        pl.BlockSpec((half, 1), rep2),                         # b1_i
        pl.BlockSpec((half, half), rep2),                      # w2_r
        pl.BlockSpec((half, half), rep2),                      # w2_i
        pl.BlockSpec((half, half), rep2),                      # w2_s
        pl.BlockSpec((half, 1), rep2),                         # b2_r
        pl.BlockSpec((half, 1), rep2),                         # b2_i
        pl.BlockSpec((D, half), rep2),                         # w3_r
        pl.BlockSpec((D, half), rep2),                         # w3_i
        pl.BlockSpec((D, half), rep2),                         # w3_s
        pl.BlockSpec((D, 1), rep2),                            # b3_r
        pl.BlockSpec((D, 1), rep2),                            # b3_i
    ]
    out_specs = (
        pl.BlockSpec((D, tb), lambda b: (0, b)),
        pl.BlockSpec((D, tb), lambda b: (0, b)),
    )

    # VMEM limit sized from the actual block footprint (conservative x2 for
    # double buffering), clamped to the smallest per-core VMEM (v7x 64 MiB).
    blk_bytes = 4 * tb * (2 * L * D * D + 2 * D * D + 8 + 2 * D)
    w_bytes = 4 * (half * 8 + half
                   + 4 * D * half * D + 2 * half * half + 2 * half
                   + 3 * half * half + 2 * half
                   + 3 * D * half + 2 * D)
    vmem_limit = int(min(64 * 1024 * 1024,
                         max(2 * (blk_bytes + w_bytes) + (1 << 20),
                             32 * 1024 * 1024)))

    kernel = functools.partial(fused_kernel, num_layers=L, dim=D,
                               compute_dtype=compute_dtype)
    y_r_t, y_i_t = pl.pallas_call(
        kernel,
        grid=grid,
        in_specs=in_specs,
        out_specs=out_specs,
        out_shape=(jax.ShapeDtypeStruct((D, B), f32),
                   jax.ShapeDtypeStruct((D, B), f32)),
        compiler_params=pltpu.CompilerParams(
            dimension_semantics=("parallel",),
            vmem_limit_bytes=vmem_limit),
    )(x_r, x_i, u_r, u_i, of_t, m_r, m_i,
      oebd_w, oebd_b,
      w1f_rr, w1f_ri, w1f_ir, w1f_ii, w1o_r, w1o_i, b1_r, b1_i,
      w2_r, w2_i, w2_s, b2_r, b2_i,
      w3_r, w3_i, w3_s, b3_r, b3_i)

    return (jnp.transpose(y_r_t) + 1j * jnp.transpose(y_i_t)).astype(jnp.complex64)


# ----------------------------------------------------------------------------
# Deterministic parameter init (shapes follow QuantumModelv4.__init__)
# ----------------------------------------------------------------------------
def init_params(key, num_layers, num_qubits):
    D = 2 ** num_qubits
    hid = 4 * D * D            # head_input_dim
    half = hid // 2

    def lin(k, fan_in, fan_out):
        kw, kb = jax.random.split(k)
        bound = 1.0 / jnp.sqrt(jnp.float32(fan_in))
        w = jax.random.uniform(kw, (fan_in, fan_out), jnp.float32, -bound, bound)
        b = jax.random.uniform(kb, (1, fan_out), jnp.float32, -bound, bound)
        return w, b

    ks = jax.random.split(key, 7)
    params = {
        # ParameterList of identity matrices (complex eye)
        "m_r": jnp.tile(jnp.eye(D, dtype=jnp.float32)[None], (num_layers, 1, 1)),
        "m_i": jnp.zeros((num_layers, D, D), jnp.float32),
    }
    params["oebd_w"], params["oebd_b"] = lin(ks[0], 8, half)
    params["w1_r"], params["b1_r"] = lin(ks[1], hid, half)
    params["w1_i"], params["b1_i"] = lin(ks[2], hid, half)
    params["w2_r"], params["b2_r"] = lin(ks[3], half, half)
    params["w2_i"], params["b2_i"] = lin(ks[4], half, half)
    params["w3_r"], params["b3_r"] = lin(ks[5], half, D)
    params["w3_i"], params["b3_i"] = lin(ks[6], half, D)
    return params


# ----------------------------------------------------------------------------
# Pure-JAX reference (for correctness check)
# ----------------------------------------------------------------------------
def reference(params, x, u, o):
    B, L, D, _ = x.shape
    M = (params["m_r"] + 1j * params["m_i"]).astype(jnp.complex64)
    out = x[:, 0]
    for i in range(L - 1):
        temp = jnp.einsum("ij,bjk->bik", M[i], out)
        out = jnp.einsum("bij,bjk->bik", x[:, i + 1], temp)
    out = jnp.einsum("ij,bjk->bik", M[L - 1], out)
    out = u - out

    feat = jnp.concatenate([out.real, out.imag], axis=-1).reshape(B, -1)
    ofeat = jnp.concatenate([o.real, o.imag], axis=-1).reshape(B, -1)
    o_emb = ofeat @ params["oebd_w"] + params["oebd_b"][0]
    cat = jnp.concatenate([feat, o_emb], axis=-1).astype(jnp.complex64)

    def mish(v):
        return v * jnp.tanh(jax.nn.softplus(v))

    def cmish(z):
        return mish(z.real) + 1j * mish(z.imag)

    W1 = params["w1_r"] + 1j * params["w1_i"]
    W2 = params["w2_r"] + 1j * params["w2_i"]
    W3 = params["w3_r"] + 1j * params["w3_i"]
    b1 = params["b1_r"][0] + 1j * params["b1_i"][0]
    b2 = params["b2_r"][0] + 1j * params["b2_i"][0]
    b3 = params["b3_r"][0] + 1j * params["b3_i"][0]

    h = cmish(cat @ W1 + b1)
    h = cmish(h @ W2 + b2)
    z = h @ W3 + b3
    norm = jnp.sqrt(jnp.sum(jnp.abs(z) ** 2, axis=-1, keepdims=True))
    return z / norm


if __name__ == "__main__":
    NUM_QUBITS = 2     # param_dim D = 4, head_input_dim = 64
    NUM_LAYERS = 3
    B = 2
    D = 2 ** NUM_QUBITS

    key = jax.random.PRNGKey(0)
    kp, kx, ku, ko = jax.random.split(key, 4)
    params = init_params(kp, NUM_LAYERS, NUM_QUBITS)

    def crandn(k, shape):
        k1, k2 = jax.random.split(k)
        return (jax.random.normal(k1, shape, jnp.float32)
                + 1j * jax.random.normal(k2, shape, jnp.float32)).astype(jnp.complex64)

    x = crandn(kx, (B, NUM_LAYERS, D, D))   # moment operators
    u = crandn(ku, (B, D, D))               # overall operators
    o = crandn(ko, (B, 4))                  # observables (4 complex -> 8 real feats)

    y = jax.jit(quantum_model_v4)(params, x, u, o)
    y = jax.block_until_ready(y)

    y_ref = reference(params, x, u, o)
    assert y.shape == (B, D) and y.dtype == jnp.complex64
    assert jnp.allclose(y, y_ref, atol=2e-4, rtol=2e-4), "Pallas output mismatch vs reference"

    print("KERNEL_OK")
</pallas_src>

<mosaic_0001>
module attributes {stable_mosaic.version = 11 : i64} {
  func.func @fused_kernel(%arg0: i32, %arg1: memref<3x4x4x2xf32, #tpu.memory_space<vmem>>, %arg2: memref<3x4x4x2xf32, #tpu.memory_space<vmem>>, %arg3: memref<4x4x2xf32, #tpu.memory_space<vmem>>, %arg4: memref<4x4x2xf32, #tpu.memory_space<vmem>>, %arg5: memref<8x2xf32, #tpu.memory_space<vmem>>, %arg6: memref<48xf32, #tpu.memory_space<smem>>, %arg7: memref<48xf32, #tpu.memory_space<smem>>, %arg8: memref<32x8xf32, #tpu.memory_space<vmem>>, %arg9: memref<32x1xf32, #tpu.memory_space<vmem>>, %arg10: memref<4x32x4xf32, #tpu.memory_space<vmem>>, %arg11: memref<4x32x4xf32, #tpu.memory_space<vmem>>, %arg12: memref<4x32x4xf32, #tpu.memory_space<vmem>>, %arg13: memref<4x32x4xf32, #tpu.memory_space<vmem>>, %arg14: memref<32x32xf32, #tpu.memory_space<vmem>>, %arg15: memref<32x32xf32, #tpu.memory_space<vmem>>, %arg16: memref<32x1xf32, #tpu.memory_space<vmem>>, %arg17: memref<32x1xf32, #tpu.memory_space<vmem>>, %arg18: memref<32x32xf32, #tpu.memory_space<vmem>>, %arg19: memref<32x32xf32, #tpu.memory_space<vmem>>, %arg20: memref<32x32xf32, #tpu.memory_space<vmem>>, %arg21: memref<32x1xf32, #tpu.memory_space<vmem>>, %arg22: memref<32x1xf32, #tpu.memory_space<vmem>>, %arg23: memref<4x32xf32, #tpu.memory_space<vmem>>, %arg24: memref<4x32xf32, #tpu.memory_space<vmem>>, %arg25: memref<4x32xf32, #tpu.memory_space<vmem>>, %arg26: memref<4x1xf32, #tpu.memory_space<vmem>>, %arg27: memref<4x1xf32, #tpu.memory_space<vmem>>, %arg28: memref<4x2xf32, #tpu.memory_space<vmem>>, %arg29: memref<4x2xf32, #tpu.memory_space<vmem>>) attributes {dimension_semantics = [#tpu.dimension_semantics<parallel>], iteration_bounds = array<i64: 1>, scalar_prefetch = 0 : i64, scratch_operands = 0 : i64, tpu.core_type = #tpu.core_type<tc>, window_params = [{transform_indices = @transform_0, window_bounds = array<i64: 3, 4, 4, 2>}, {transform_indices = @transform_1, window_bounds = array<i64: 3, 4, 4, 2>}, {transform_indices = @transform_2, window_bounds = array<i64: 4, 4, 2>}, {transform_indices = @transform_3, window_bounds = array<i64: 4, 4, 2>}, {transform_indices = @transform_4, window_bounds = array<i64: 8, 2>}, {transform_indices = @transform_5, window_bounds = array<i64: 48>}, {transform_indices = @transform_6, window_bounds = array<i64: 48>}, {pipeline_mode = #tpu.pipeline_mode<synchronous>, transform_indices = @transform_7, window_bounds = array<i64: 32, 8>}, {pipeline_mode = #tpu.pipeline_mode<synchronous>, transform_indices = @transform_8, window_bounds = array<i64: 32, 1>}, {pipeline_mode = #tpu.pipeline_mode<synchronous>, transform_indices = @transform_9, window_bounds = array<i64: 4, 32, 4>}, {pipeline_mode = #tpu.pipeline_mode<synchronous>, transform_indices = @transform_10, window_bounds = array<i64: 4, 32, 4>}, {pipeline_mode = #tpu.pipeline_mode<synchronous>, transform_indices = @transform_11, window_bounds = array<i64: 4, 32, 4>}, {pipeline_mode = #tpu.pipeline_mode<synchronous>, transform_indices = @transform_12, window_bounds = array<i64: 4, 32, 4>}, {pipeline_mode = #tpu.pipeline_mode<synchronous>, transform_indices = @transform_13, window_bounds = array<i64: 32, 32>}, {pipeline_mode = #tpu.pipeline_mode<synchronous>, transform_indices = @transform_14, window_bounds = array<i64: 32, 32>}, {pipeline_mode = #tpu.pipeline_mode<synchronous>, transform_indices = @transform_15, window_bounds = array<i64: 32, 1>}, {pipeline_mode = #tpu.pipeline_mode<synchronous>, transform_indices = @transform_16, window_bounds = array<i64: 32, 1>}, {pipeline_mode = #tpu.pipeline_mode<synchronous>, transform_indices = @transform_17, window_bounds = array<i64: 32, 32>}, {pipeline_mode = #tpu.pipeline_mode<synchronous>, transform_indices = @transform_18, window_bounds = array<i64: 32, 32>}, {pipeline_mode = #tpu.pipeline_mode<synchronous>, transform_indices = @transform_19, window_bounds = array<i64: 32, 32>}, {pipeline_mode = #tpu.pipeline_mode<synchronous>, transform_indices = @transform_20, window_bounds = array<i64: 32, 1>}, {pipeline_mode = #tpu.pipeline_mode<synchronous>, transform_indices = @transform_21, window_bounds = array<i64: 32, 1>}, {pipeline_mode = #tpu.pipeline_mode<synchronous>, transform_indices = @transform_22, window_bounds = array<i64: 4, 32>}, {pipeline_mode = #tpu.pipeline_mode<synchronous>, transform_indices = @transform_23, window_bounds = array<i64: 4, 32>}, {pipeline_mode = #tpu.pipeline_mode<synchronous>, transform_indices = @transform_24, window_bounds = array<i64: 4, 32>}, {pipeline_mode = #tpu.pipeline_mode<synchronous>, transform_indices = @transform_25, window_bounds = array<i64: 4, 1>}, {pipeline_mode = #tpu.pipeline_mode<synchronous>, transform_indices = @transform_26, window_bounds = array<i64: 4, 1>}, {transform_indices = @transform_27, window_bounds = array<i64: 4, 2>}, {transform_indices = @transform_28, window_bounds = array<i64: 4, 2>}]} {
    %c0 = arith.constant 0 : index
    %c0_0 = arith.constant 0 : index
    %c0_1 = arith.constant 0 : index
    %c0_2 = arith.constant 0 : index
    %0 = vector.load %arg1[%c0, %c0_0, %c0_1, %c0_2] : memref<3x4x4x2xf32, #tpu.memory_space<vmem>>, vector<1x4x4x2xf32>
    %1 = vector.shape_cast %0 : vector<1x4x4x2xf32> to vector<4x4x2xf32>
    %c0_3 = arith.constant 0 : index
    %c0_4 = arith.constant 0 : index
    %c0_5 = arith.constant 0 : index
    %c0_6 = arith.constant 0 : index
    %2 = vector.load %arg2[%c0_3, %c0_4, %c0_5, %c0_6] : memref<3x4x4x2xf32, #tpu.memory_space<vmem>>, vector<1x4x4x2xf32>
    %3 = vector.shape_cast %2 : vector<1x4x4x2xf32> to vector<4x4x2xf32>
    %4 = vector.extract_strided_slice %1 {offsets = [0, 0, 0], sizes = [1, 4, 2], strides = [1, 1, 1]} : vector<4x4x2xf32> to vector<1x4x2xf32>
    %5 = vector.shape_cast %4 : vector<1x4x2xf32> to vector<4x2xf32>
    %6 = vector.extract_strided_slice %1 {offsets = [1, 0, 0], sizes = [1, 4, 2], strides = [1, 1, 1]} : vector<4x4x2xf32> to vector<1x4x2xf32>
    %7 = vector.shape_cast %6 : vector<1x4x2xf32> to vector<4x2xf32>
    %8 = vector.extract_strided_slice %1 {offsets = [2, 0, 0], sizes = [1, 4, 2], strides = [1, 1, 1]} : vector<4x4x2xf32> to vector<1x4x2xf32>
    %9 = vector.shape_cast %8 : vector<1x4x2xf32> to vector<4x2xf32>
    %10 = vector.extract_strided_slice %1 {offsets = [3, 0, 0], sizes = [1, 4, 2], strides = [1, 1, 1]} : vector<4x4x2xf32> to vector<1x4x2xf32>
    %11 = vector.shape_cast %10 : vector<1x4x2xf32> to vector<4x2xf32>
    %12 = vector.extract_strided_slice %3 {offsets = [0, 0, 0], sizes = [1, 4, 2], strides = [1, 1, 1]} : vector<4x4x2xf32> to vector<1x4x2xf32>
    %13 = vector.shape_cast %12 : vector<1x4x2xf32> to vector<4x2xf32>
    %14 = vector.extract_strided_slice %3 {offsets = [1, 0, 0], sizes = [1, 4, 2], strides = [1, 1, 1]} : vector<4x4x2xf32> to vector<1x4x2xf32>
    %15 = vector.shape_cast %14 : vector<1x4x2xf32> to vector<4x2xf32>
    %16 = vector.extract_strided_slice %3 {offsets = [2, 0, 0], sizes = [1, 4, 2], strides = [1, 1, 1]} : vector<4x4x2xf32> to vector<1x4x2xf32>
    %17 = vector.shape_cast %16 : vector<1x4x2xf32> to vector<4x2xf32>
    %18 = vector.extract_strided_slice %3 {offsets = [3, 0, 0], sizes = [1, 4, 2], strides = [1, 1, 1]} : vector<4x4x2xf32> to vector<1x4x2xf32>
    %19 = vector.shape_cast %18 : vector<1x4x2xf32> to vector<4x2xf32>
    %c0_7 = arith.constant 0 : index
    %20 = memref.load %arg6[%c0_7] : memref<48xf32, #tpu.memory_space<smem>>
    %c0_8 = arith.constant 0 : index
    %21 = memref.load %arg7[%c0_8] : memref<48xf32, #tpu.memory_space<smem>>
    %22 = vector.broadcast %20 : f32 to vector<4x2xf32>
    %23 = arith.mulf %22, %5 : vector<4x2xf32>
    %24 = vector.broadcast %21 : f32 to vector<4x2xf32>
    %25 = arith.mulf %24, %13 : vector<4x2xf32>
    %26 = arith.subf %23, %25 : vector<4x2xf32>
    %27 = vector.broadcast %20 : f32 to vector<4x2xf32>
    %28 = arith.mulf %27, %13 : vector<4x2xf32>
    %29 = vector.broadcast %21 : f32 to vector<4x2xf32>
    %30 = arith.mulf %29, %5 : vector<4x2xf32>
    %31 = arith.addf %28, %30 : vector<4x2xf32>
    %c1 = arith.constant 1 : index
    %32 = memref.load %arg6[%c1] : memref<48xf32, #tpu.memory_space<smem>>
    %c1_9 = arith.constant 1 : index
    %33 = memref.load %arg7[%c1_9] : memref<48xf32, #tpu.memory_space<smem>>
    %34 = vector.broadcast %32 : f32 to vector<4x2xf32>
    %35 = arith.mulf %34, %7 : vector<4x2xf32>
    %36 = vector.broadcast %33 : f32 to vector<4x2xf32>
    %37 = arith.mulf %36, %15 : vector<4x2xf32>
    %38 = arith.subf %35, %37 : vector<4x2xf32>
    %39 = arith.addf %26, %38 : vector<4x2xf32>
    %40 = vector.broadcast %32 : f32 to vector<4x2xf32>
    %41 = arith.mulf %40, %15 : vector<4x2xf32>
    %42 = vector.broadcast %33 : f32 to vector<4x2xf32>
    %43 = arith.mulf %42, %7 : vector<4x2xf32>
    %44 = arith.addf %41, %43 : vector<4x2xf32>
    %45 = arith.addf %31, %44 : vector<4x2xf32>
    %c2 = arith.constant 2 : index
    %46 = memref.load %arg6[%c2] : memref<48xf32, #tpu.memory_space<smem>>
    %c2_10 = arith.constant 2 : index
    %47 = memref.load %arg7[%c2_10] : memref<48xf32, #tpu.memory_space<smem>>
    %48 = vector.broadcast %46 : f32 to vector<4x2xf32>
    %49 = arith.mulf %48, %9 : vector<4x2xf32>
    %50 = vector.broadcast %47 : f32 to vector<4x2xf32>
    %51 = arith.mulf %50, %17 : vector<4x2xf32>
    %52 = arith.subf %49, %51 : vector<4x2xf32>
    %53 = arith.addf %39, %52 : vector<4x2xf32>
    %54 = vector.broadcast %46 : f32 to vector<4x2xf32>
    %55 = arith.mulf %54, %17 : vector<4x2xf32>
    %56 = vector.broadcast %47 : f32 to vector<4x2xf32>
    %57 = arith.mulf %56, %9 : vector<4x2xf32>
    %58 = arith.addf %55, %57 : vector<4x2xf32>
    %59 = arith.addf %45, %58 : vector<4x2xf32>
    %c3 = arith.constant 3 : index
    %60 = memref.load %arg6[%c3] : memref<48xf32, #tpu.memory_space<smem>>
    %c3_11 = arith.constant 3 : index
    %61 = memref.load %arg7[%c3_11] : memref<48xf32, #tpu.memory_space<smem>>
    %62 = vector.broadcast %60 : f32 to vector<4x2xf32>
    %63 = arith.mulf %62, %11 : vector<4x2xf32>
    %64 = vector.broadcast %61 : f32 to vector<4x2xf32>
    %65 = arith.mulf %64, %19 : vector<4x2xf32>
    %66 = arith.subf %63, %65 : vector<4x2xf32>
    %67 = arith.addf %53, %66 : vector<4x2xf32>
    %68 = vector.broadcast %60 : f32 to vector<4x2xf32>
    %69 = arith.mulf %68, %19 : vector<4x2xf32>
    %70 = vector.broadcast %61 : f32 to vector<4x2xf32>
    %71 = arith.mulf %70, %11 : vector<4x2xf32>
    %72 = arith.addf %69, %71 : vector<4x2xf32>
    %73 = arith.addf %59, %72 : vector<4x2xf32>
    %c4 = arith.constant 4 : index
    %74 = memref.load %arg6[%c4] : memref<48xf32, #tpu.memory_space<smem>>
    %c4_12 = arith.constant 4 : index
    %75 = memref.load %arg7[%c4_12] : memref<48xf32, #tpu.memory_space<smem>>
    %76 = vector.broadcast %74 : f32 to vector<4x2xf32>
    %77 = arith.mulf %76, %5 : vector<4x2xf32>
    %78 = vector.broadcast %75 : f32 to vector<4x2xf32>
    %79 = arith.mulf %78, %13 : vector<4x2xf32>
    %80 = arith.subf %77, %79 : vector<4x2xf32>
    %81 = vector.broadcast %74 : f32 to vector<4x2xf32>
    %82 = arith.mulf %81, %13 : vector<4x2xf32>
    %83 = vector.broadcast %75 : f32 to vector<4x2xf32>
    %84 = arith.mulf %83, %5 : vector<4x2xf32>
    %85 = arith.addf %82, %84 : vector<4x2xf32>
    %c5 = arith.constant 5 : index
    %86 = memref.load %arg6[%c5] : memref<48xf32, #tpu.memory_space<smem>>
    %c5_13 = arith.constant 5 : index
    %87 = memref.load %arg7[%c5_13] : memref<48xf32, #tpu.memory_space<smem>>
    %88 = vector.broadcast %86 : f32 to vector<4x2xf32>
    %89 = arith.mulf %88, %7 : vector<4x2xf32>
    %90 = vector.broadcast %87 : f32 to vector<4x2xf32>
    %91 = arith.mulf %90, %15 : vector<4x2xf32>
    %92 = arith.subf %89, %91 : vector<4x2xf32>
    %93 = arith.addf %80, %92 : vector<4x2xf32>
    %94 = vector.broadcast %86 : f32 to vector<4x2xf32>
    %95 = arith.mulf %94, %15 : vector<4x2xf32>
    %96 = vector.broadcast %87 : f32 to vector<4x2xf32>
    %97 = arith.mulf %96, %7 : vector<4x2xf32>
    %98 = arith.addf %95, %97 : vector<4x2xf32>
    %99 = arith.addf %85, %98 : vector<4x2xf32>
    %c6 = arith.constant 6 : index
    %100 = memref.load %arg6[%c6] : memref<48xf32, #tpu.memory_space<smem>>
    %c6_14 = arith.constant 6 : index
    %101 = memref.load %arg7[%c6_14] : memref<48xf32, #tpu.memory_space<smem>>
    %102 = vector.broadcast %100 : f32 to vector<4x2xf32>
    %103 = arith.mulf %102, %9 : vector<4x2xf32>
    %104 = vector.broadcast %101 : f32 to vector<4x2xf32>
    %105 = arith.mulf %104, %17 : vector<4x2xf32>
    %106 = arith.subf %103, %105 : vector<4x2xf32>
    %107 = arith.addf %93, %106 : vector<4x2xf32>
    %108 = vector.broadcast %100 : f32 to vector<4x2xf32>
    %109 = arith.mulf %108, %17 : vector<4x2xf32>
    %110 = vector.broadcast %101 : f32 to vector<4x2xf32>
    %111 = arith.mulf %110, %9 : vector<4x2xf32>
    %112 = arith.addf %109, %111 : vector<4x2xf32>
    %113 = arith.addf %99, %112 : vector<4x2xf32>
    %c7 = arith.constant 7 : index
    %114 = memref.load %arg6[%c7] : memref<48xf32, #tpu.memory_space<smem>>
    %c7_15 = arith.constant 7 : index
    %115 = memref.load %arg7[%c7_15] : memref<48xf32, #tpu.memory_space<smem>>
    %116 = vector.broadcast %114 : f32 to vector<4x2xf32>
    %117 = arith.mulf %116, %11 : vector<4x2xf32>
    %118 = vector.broadcast %115 : f32 to vector<4x2xf32>
    %119 = arith.mulf %118, %19 : vector<4x2xf32>
    %120 = arith.subf %117, %119 : vector<4x2xf32>
    %121 = arith.addf %107, %120 : vector<4x2xf32>
    %122 = vector.broadcast %114 : f32 to vector<4x2xf32>
    %123 = arith.mulf %122, %19 : vector<4x2xf32>
    %124 = vector.broadcast %115 : f32 to vector<4x2xf32>
    %125 = arith.mulf %124, %11 : vector<4x2xf32>
    %126 = arith.addf %123, %125 : vector<4x2xf32>
    %127 = arith.addf %113, %126 : vector<4x2xf32>
    %c8 = arith.constant 8 : index
    %128 = memref.load %arg6[%c8] : memref<48xf32, #tpu.memory_space<smem>>
    %c8_16 = arith.constant 8 : index
    %129 = memref.load %arg7[%c8_16] : memref<48xf32, #tpu.memory_space<smem>>
    %130 = vector.broadcast %128 : f32 to vector<4x2xf32>
    %131 = arith.mulf %130, %5 : vector<4x2xf32>
    %132 = vector.broadcast %129 : f32 to vector<4x2xf32>
    %133 = arith.mulf %132, %13 : vector<4x2xf32>
    %134 = arith.subf %131, %133 : vector<4x2xf32>
    %135 = vector.broadcast %128 : f32 to vector<4x2xf32>
    %136 = arith.mulf %135, %13 : vector<4x2xf32>
    %137 = vector.broadcast %129 : f32 to vector<4x2xf32>
    %138 = arith.mulf %137, %5 : vector<4x2xf32>
    %139 = arith.addf %136, %138 : vector<4x2xf32>
    %c9 = arith.constant 9 : index
    %140 = memref.load %arg6[%c9] : memref<48xf32, #tpu.memory_space<smem>>
    %c9_17 = arith.constant 9 : index
    %141 = memref.load %arg7[%c9_17] : memref<48xf32, #tpu.memory_space<smem>>
    %142 = vector.broadcast %140 : f32 to vector<4x2xf32>
    %143 = arith.mulf %142, %7 : vector<4x2xf32>
    %144 = vector.broadcast %141 : f32 to vector<4x2xf32>
    %145 = arith.mulf %144, %15 : vector<4x2xf32>
    %146 = arith.subf %143, %145 : vector<4x2xf32>
    %147 = arith.addf %134, %146 : vector<4x2xf32>
    %148 = vector.broadcast %140 : f32 to vector<4x2xf32>
    %149 = arith.mulf %148, %15 : vector<4x2xf32>
    %150 = vector.broadcast %141 : f32 to vector<4x2xf32>
    %151 = arith.mulf %150, %7 : vector<4x2xf32>
    %152 = arith.addf %149, %151 : vector<4x2xf32>
    %153 = arith.addf %139, %152 : vector<4x2xf32>
    %c10 = arith.constant 10 : index
    %154 = memref.load %arg6[%c10] : memref<48xf32, #tpu.memory_space<smem>>
    %c10_18 = arith.constant 10 : index
    %155 = memref.load %arg7[%c10_18] : memref<48xf32, #tpu.memory_space<smem>>
    %156 = vector.broadcast %154 : f32 to vector<4x2xf32>
    %157 = arith.mulf %156, %9 : vector<4x2xf32>
    %158 = vector.broadcast %155 : f32 to vector<4x2xf32>
    %159 = arith.mulf %158, %17 : vector<4x2xf32>
    %160 = arith.subf %157, %159 : vector<4x2xf32>
    %161 = arith.addf %147, %160 : vector<4x2xf32>
    %162 = vector.broadcast %154 : f32 to vector<4x2xf32>
    %163 = arith.mulf %162, %17 : vector<4x2xf32>
    %164 = vector.broadcast %155 : f32 to vector<4x2xf32>
    %165 = arith.mulf %164, %9 : vector<4x2xf32>
    %166 = arith.addf %163, %165 : vector<4x2xf32>
    %167 = arith.addf %153, %166 : vector<4x2xf32>
    %c11 = arith.constant 11 : index
    %168 = memref.load %arg6[%c11] : memref<48xf32, #tpu.memory_space<smem>>
    %c11_19 = arith.constant 11 : index
    %169 = memref.load %arg7[%c11_19] : memref<48xf32, #tpu.memory_space<smem>>
    %170 = vector.broadcast %168 : f32 to vector<4x2xf32>
    %171 = arith.mulf %170, %11 : vector<4x2xf32>
    %172 = vector.broadcast %169 : f32 to vector<4x2xf32>
    %173 = arith.mulf %172, %19 : vector<4x2xf32>
    %174 = arith.subf %171, %173 : vector<4x2xf32>
    %175 = arith.addf %161, %174 : vector<4x2xf32>
    %176 = vector.broadcast %168 : f32 to vector<4x2xf32>
    %177 = arith.mulf %176, %19 : vector<4x2xf32>
    %178 = vector.broadcast %169 : f32 to vector<4x2xf32>
    %179 = arith.mulf %178, %11 : vector<4x2xf32>
    %180 = arith.addf %177, %179 : vector<4x2xf32>
    %181 = arith.addf %167, %180 : vector<4x2xf32>
    %c12 = arith.constant 12 : index
    %182 = memref.load %arg6[%c12] : memref<48xf32, #tpu.memory_space<smem>>
    %c12_20 = arith.constant 12 : index
    %183 = memref.load %arg7[%c12_20] : memref<48xf32, #tpu.memory_space<smem>>
    %184 = vector.broadcast %182 : f32 to vector<4x2xf32>
    %185 = arith.mulf %184, %5 : vector<4x2xf32>
    %186 = vector.broadcast %183 : f32 to vector<4x2xf32>
    %187 = arith.mulf %186, %13 : vector<4x2xf32>
    %188 = arith.subf %185, %187 : vector<4x2xf32>
    %189 = vector.broadcast %182 : f32 to vector<4x2xf32>
    %190 = arith.mulf %189, %13 : vector<4x2xf32>
    %191 = vector.broadcast %183 : f32 to vector<4x2xf32>
    %192 = arith.mulf %191, %5 : vector<4x2xf32>
    %193 = arith.addf %190, %192 : vector<4x2xf32>
    %c13 = arith.constant 13 : index
    %194 = memref.load %arg6[%c13] : memref<48xf32, #tpu.memory_space<smem>>
    %c13_21 = arith.constant 13 : index
    %195 = memref.load %arg7[%c13_21] : memref<48xf32, #tpu.memory_space<smem>>
    %196 = vector.broadcast %194 : f32 to vector<4x2xf32>
    %197 = arith.mulf %196, %7 : vector<4x2xf32>
    %198 = vector.broadcast %195 : f32 to vector<4x2xf32>
    %199 = arith.mulf %198, %15 : vector<4x2xf32>
    %200 = arith.subf %197, %199 : vector<4x2xf32>
    %201 = arith.addf %188, %200 : vector<4x2xf32>
    %202 = vector.broadcast %194 : f32 to vector<4x2xf32>
    %203 = arith.mulf %202, %15 : vector<4x2xf32>
    %204 = vector.broadcast %195 : f32 to vector<4x2xf32>
    %205 = arith.mulf %204, %7 : vector<4x2xf32>
    %206 = arith.addf %203, %205 : vector<4x2xf32>
    %207 = arith.addf %193, %206 : vector<4x2xf32>
    %c14 = arith.constant 14 : index
    %208 = memref.load %arg6[%c14] : memref<48xf32, #tpu.memory_space<smem>>
    %c14_22 = arith.constant 14 : index
    %209 = memref.load %arg7[%c14_22] : memref<48xf32, #tpu.memory_space<smem>>
    %210 = vector.broadcast %208 : f32 to vector<4x2xf32>
    %211 = arith.mulf %210, %9 : vector<4x2xf32>
    %212 = vector.broadcast %209 : f32 to vector<4x2xf32>
    %213 = arith.mulf %212, %17 : vector<4x2xf32>
    %214 = arith.subf %211, %213 : vector<4x2xf32>
    %215 = arith.addf %201, %214 : vector<4x2xf32>
    %216 = vector.broadcast %208 : f32 to vector<4x2xf32>
    %217 = arith.mulf %216, %17 : vector<4x2xf32>
    %218 = vector.broadcast %209 : f32 to vector<4x2xf32>
    %219 = arith.mulf %218, %9 : vector<4x2xf32>
    %220 = arith.addf %217, %219 : vector<4x2xf32>
    %221 = arith.addf %207, %220 : vector<4x2xf32>
    %c15 = arith.constant 15 : index
    %222 = memref.load %arg6[%c15] : memref<48xf32, #tpu.memory_space<smem>>
    %c15_23 = arith.constant 15 : index
    %223 = memref.load %arg7[%c15_23] : memref<48xf32, #tpu.memory_space<smem>>
    %224 = vector.broadcast %222 : f32 to vector<4x2xf32>
    %225 = arith.mulf %224, %11 : vector<4x2xf32>
    %226 = vector.broadcast %223 : f32 to vector<4x2xf32>
    %227 = arith.mulf %226, %19 : vector<4x2xf32>
    %228 = arith.subf %225, %227 : vector<4x2xf32>
    %229 = arith.addf %215, %228 : vector<4x2xf32>
    %230 = vector.broadcast %222 : f32 to vector<4x2xf32>
    %231 = arith.mulf %230, %19 : vector<4x2xf32>
    %232 = vector.broadcast %223 : f32 to vector<4x2xf32>
    %233 = arith.mulf %232, %11 : vector<4x2xf32>
    %234 = arith.addf %231, %233 : vector<4x2xf32>
    %235 = arith.addf %221, %234 : vector<4x2xf32>
    %c1_24 = arith.constant 1 : index
    %c0_25 = arith.constant 0 : index
    %c0_26 = arith.constant 0 : index
    %c0_27 = arith.constant 0 : index
    %236 = vector.load %arg1[%c1_24, %c0_25, %c0_26, %c0_27] : memref<3x4x4x2xf32, #tpu.memory_space<vmem>>, vector<1x4x4x2xf32>
    %237 = vector.shape_cast %236 : vector<1x4x4x2xf32> to vector<4x4x2xf32>
    %c1_28 = arith.constant 1 : index
    %c0_29 = arith.constant 0 : index
    %c0_30 = arith.constant 0 : index
    %c0_31 = arith.constant 0 : index
    %238 = vector.load %arg2[%c1_28, %c0_29, %c0_30, %c0_31] : memref<3x4x4x2xf32, #tpu.memory_space<vmem>>, vector<1x4x4x2xf32>
    %239 = vector.shape_cast %238 : vector<1x4x4x2xf32> to vector<4x4x2xf32>
    %240 = vector.extract_strided_slice %237 {offsets = [0, 0, 0], sizes = [1, 1, 2], strides = [1, 1, 1]} : vector<4x4x2xf32> to vector<1x1x2xf32>
    %241 = vector.shape_cast %240 : vector<1x1x2xf32> to vector<2xf32>
    %242 = vector.shape_cast %241 : vector<2xf32> to vector<1x2xf32>
    %243 = vector.extract_strided_slice %239 {offsets = [0, 0, 0], sizes = [1, 1, 2], strides = [1, 1, 1]} : vector<4x4x2xf32> to vector<1x1x2xf32>
    %244 = vector.shape_cast %243 : vector<1x1x2xf32> to vector<2xf32>
    %245 = vector.shape_cast %244 : vector<2xf32> to vector<1x2xf32>
    %246 = vector.broadcast %242 : vector<1x2xf32> to vector<4x2xf32>
    %247 = arith.mulf %246, %67 : vector<4x2xf32>
    %248 = vector.broadcast %245 : vector<1x2xf32> to vector<4x2xf32>
    %249 = arith.mulf %248, %73 : vector<4x2xf32>
    %250 = arith.subf %247, %249 : vector<4x2xf32>
    %251 = vector.broadcast %242 : vector<1x2xf32> to vector<4x2xf32>
    %252 = arith.mulf %251, %73 : vector<4x2xf32>
    %253 = vector.broadcast %245 : vector<1x2xf32> to vector<4x2xf32>
    %254 = arith.mulf %253, %67 : vector<4x2xf32>
    %255 = arith.addf %252, %254 : vector<4x2xf32>
    %256 = vector.extract_strided_slice %237 {offsets = [0, 1, 0], sizes = [1, 1, 2], strides = [1, 1, 1]} : vector<4x4x2xf32> to vector<1x1x2xf32>
    %257 = vector.shape_cast %256 : vector<1x1x2xf32> to vector<2xf32>
    %258 = vector.shape_cast %257 : vector<2xf32> to vector<1x2xf32>
    %259 = vector.extract_strided_slice %239 {offsets = [0, 1, 0], sizes = [1, 1, 2], strides = [1, 1, 1]} : vector<4x4x2xf32> to vector<1x1x2xf32>
    %260 = vector.shape_cast %259 : vector<1x1x2xf32> to vector<2xf32>
    %261 = vector.shape_cast %260 : vector<2xf32> to vector<1x2xf32>
    %262 = vector.broadcast %258 : vector<1x2xf32> to vector<4x2xf32>
    %263 = arith.mulf %262, %121 : vector<4x2xf32>
    %264 = vector.broadcast %261 : vector<1x2xf32> to vector<4x2xf32>
    %265 = arith.mulf %264, %127 : vector<4x2xf32>
    %266 = arith.subf %263, %265 : vector<4x2xf32>
    %267 = arith.addf %250, %266 : vector<4x2xf32>
    %268 = vector.broadcast %258 : vector<1x2xf32> to vector<4x2xf32>
    %269 = arith.mulf %268, %127 : vector<4x2xf32>
    %270 = vector.broadcast %261 : vector<1x2xf32> to vector<4x2xf32>
    %271 = arith.mulf %270, %121 : vector<4x2xf32>
    %272 = arith.addf %269, %271 : vector<4x2xf32>
    %273 = arith.addf %255, %272 : vector<4x2xf32>
    %274 = vector.extract_strided_slice %237 {offsets = [0, 2, 0], sizes = [1, 1, 2], strides = [1, 1, 1]} : vector<4x4x2xf32> to vector<1x1x2xf32>
    %275 = vector.shape_cast %274 : vector<1x1x2xf32> to vector<2xf32>
    %276 = vector.shape_cast %275 : vector<2xf32> to vector<1x2xf32>
    %277 = vector.extract_strided_slice %239 {offsets = [0, 2, 0], sizes = [1, 1, 2], strides = [1, 1, 1]} : vector<4x4x2xf32> to vector<1x1x2xf32>
    %278 = vector.shape_cast %277 : vector<1x1x2xf32> to vector<2xf32>
    %279 = vector.shape_cast %278 : vector<2xf32> to vector<1x2xf32>
    %280 = vector.broadcast %276 : vector<1x2xf32> to vector<4x2xf32>
    %281 = arith.mulf %280, %175 : vector<4x2xf32>
    %282 = vector.broadcast %279 : vector<1x2xf32> to vector<4x2xf32>
    %283 = arith.mulf %282, %181 : vector<4x2xf32>
    %284 = arith.subf %281, %283 : vector<4x2xf32>
    %285 = arith.addf %267, %284 : vector<4x2xf32>
    %286 = vector.broadcast %276 : vector<1x2xf32> to vector<4x2xf32>
    %287 = arith.mulf %286, %181 : vector<4x2xf32>
    %288 = vector.broadcast %279 : vector<1x2xf32> to vector<4x2xf32>
    %289 = arith.mulf %288, %175 : vector<4x2xf32>
    %290 = arith.addf %287, %289 : vector<4x2xf32>
    %291 = arith.addf %273, %290 : vector<4x2xf32>
    %292 = vector.extract_strided_slice %237 {offsets = [0, 3, 0], sizes = [1, 1, 2], strides = [1, 1, 1]} : vector<4x4x2xf32> to vector<1x1x2xf32>
    %293 = vector.shape_cast %292 : vector<1x1x2xf32> to vector<2xf32>
    %294 = vector.shape_cast %293 : vector<2xf32> to vector<1x2xf32>
    %295 = vector.extract_strided_slice %239 {offsets = [0, 3, 0], sizes = [1, 1, 2], strides = [1, 1, 1]} : vector<4x4x2xf32> to vector<1x1x2xf32>
    %296 = vector.shape_cast %295 : vector<1x1x2xf32> to vector<2xf32>
    %297 = vector.shape_cast %296 : vector<2xf32> to vector<1x2xf32>
    %298 = vector.broadcast %294 : vector<1x2xf32> to vector<4x2xf32>
    %299 = arith.mulf %298, %229 : vector<4x2xf32>
    %300 = vector.broadcast %297 : vector<1x2xf32> to vector<4x2xf32>
    %301 = arith.mulf %300, %235 : vector<4x2xf32>
    %302 = arith.subf %299, %301 : vector<4x2xf32>
    %303 = arith.addf %285, %302 : vector<4x2xf32>
    %304 = vector.broadcast %294 : vector<1x2xf32> to vector<4x2xf32>
    %305 = arith.mulf %304, %235 : vector<4x2xf32>
    %306 = vector.broadcast %297 : vector<1x2xf32> to vector<4x2xf32>
    %307 = arith.mulf %306, %229 : vector<4x2xf32>
    %308 = arith.addf %305, %307 : vector<4x2xf32>
    %309 = arith.addf %291, %308 : vector<4x2xf32>
    %310 = vector.extract_strided_slice %237 {offsets = [1, 0, 0], sizes = [1, 1, 2], strides = [1, 1, 1]} : vector<4x4x2xf32> to vector<1x1x2xf32>
    %311 = vector.shape_cast %310 : vector<1x1x2xf32> to vector<2xf32>
    %312 = vector.shape_cast %311 : vector<2xf32> to vector<1x2xf32>
    %313 = vector.extract_strided_slice %239 {offsets = [1, 0, 0], sizes = [1, 1, 2], strides = [1, 1, 1]} : vector<4x4x2xf32> to vector<1x1x2xf32>
    %314 = vector.shape_cast %313 : vector<1x1x2xf32> to vector<2xf32>
    %315 = vector.shape_cast %314 : vector<2xf32> to vector<1x2xf32>
    %316 = vector.broadcast %312 : vector<1x2xf32> to vector<4x2xf32>
    %317 = arith.mulf %316, %67 : vector<4x2xf32>
    %318 = vector.broadcast %315 : vector<1x2xf32> to vector<4x2xf32>
    %319 = arith.mulf %318, %73 : vector<4x2xf32>
    %320 = arith.subf %317, %319 : vector<4x2xf32>
    %321 = vector.broadcast %312 : vector<1x2xf32> to vector<4x2xf32>
    %322 = arith.mulf %321, %73 : vector<4x2xf32>
    %323 = vector.broadcast %315 : vector<1x2xf32> to vector<4x2xf32>
    %324 = arith.mulf %323, %67 : vector<4x2xf32>
    %325 = arith.addf %322, %324 : vector<4x2xf32>
    %326 = vector.extract_strided_slice %237 {offsets = [1, 1, 0], sizes = [1, 1, 2], strides = [1, 1, 1]} : vector<4x4x2xf32> to vector<1x1x2xf32>
    %327 = vector.shape_cast %326 : vector<1x1x2xf32> to vector<2xf32>
    %328 = vector.shape_cast %327 : vector<2xf32> to vector<1x2xf32>
    %329 = vector.extract_strided_slice %239 {offsets = [1, 1, 0], sizes = [1, 1, 2], strides = [1, 1, 1]} : vector<4x4x2xf32> to vector<1x1x2xf32>
    %330 = vector.shape_cast %329 : vector<1x1x2xf32> to vector<2xf32>
    %331 = vector.shape_cast %330 : vector<2xf32> to vector<1x2xf32>
    %332 = vector.broadcast %328 : vector<1x2xf32> to vector<4x2xf32>
    %333 = arith.mulf %332, %121 : vector<4x2xf32>
    %334 = vector.broadcast %331 : vector<1x2xf32> to vector<4x2xf32>
    %335 = arith.mulf %334, %127 : vector<4x2xf32>
    %336 = arith.subf %333, %335 : vector<4x2xf32>
    %337 = arith.addf %320, %336 : vector<4x2xf32>
    %338 = vector.broadcast %328 : vector<1x2xf32> to vector<4x2xf32>
    %339 = arith.mulf %338, %127 : vector<4x2xf32>
    %340 = vector.broadcast %331 : vector<1x2xf32> to vector<4x2xf32>
    %341 = arith.mulf %340, %121 : vector<4x2xf32>
    %342 = arith.addf %339, %341 : vector<4x2xf32>
    %343 = arith.addf %325, %342 : vector<4x2xf32>
    %344 = vector.extract_strided_slice %237 {offsets = [1, 2, 0], sizes = [1, 1, 2], strides = [1, 1, 1]} : vector<4x4x2xf32> to vector<1x1x2xf32>
    %345 = vector.shape_cast %344 : vector<1x1x2xf32> to vector<2xf32>
    %346 = vector.shape_cast %345 : vector<2xf32> to vector<1x2xf32>
    %347 = vector.extract_strided_slice %239 {offsets = [1, 2, 0], sizes = [1, 1, 2], strides = [1, 1, 1]} : vector<4x4x2xf32> to vector<1x1x2xf32>
    %348 = vector.shape_cast %347 : vector<1x1x2xf32> to vector<2xf32>
    %349 = vector.shape_cast %348 : vector<2xf32> to vector<1x2xf32>
    %350 = vector.broadcast %346 : vector<1x2xf32> to vector<4x2xf32>
    %351 = arith.mulf %350, %175 : vector<4x2xf32>
    %352 = vector.broadcast %349 : vector<1x2xf32> to vector<4x2xf32>
    %353 = arith.mulf %352, %181 : vector<4x2xf32>
    %354 = arith.subf %351, %353 : vector<4x2xf32>
    %355 = arith.addf %337, %354 : vector<4x2xf32>
    %356 = vector.broadcast %346 : vector<1x2xf32> to vector<4x2xf32>
    %357 = arith.mulf %356, %181 : vector<4x2xf32>
    %358 = vector.broadcast %349 : vector<1x2xf32> to vector<4x2xf32>
    %359 = arith.mulf %358, %175 : vector<4x2xf32>
    %360 = arith.addf %357, %359 : vector<4x2xf32>
    %361 = arith.addf %343, %360 : vector<4x2xf32>
    %362 = vector.extract_strided_slice %237 {offsets = [1, 3, 0], sizes = [1, 1, 2], strides = [1, 1, 1]} : vector<4x4x2xf32> to vector<1x1x2xf32>
    %363 = vector.shape_cast %362 : vector<1x1x2xf32> to vector<2xf32>
    %364 = vector.shape_cast %363 : vector<2xf32> to vector<1x2xf32>
    %365 = vector.extract_strided_slice %239 {offsets = [1, 3, 0], sizes = [1, 1, 2], strides = [1, 1, 1]} : vector<4x4x2xf32> to vector<1x1x2xf32>
    %366 = vector.shape_cast %365 : vector<1x1x2xf32> to vector<2xf32>
    %367 = vector.shape_cast %366 : vector<2xf32> to vector<1x2xf32>
    %368 = vector.broadcast %364 : vector<1x2xf32> to vector<4x2xf32>
    %369 = arith.mulf %368, %229 : vector<4x2xf32>
    %370 = vector.broadcast %367 : vector<1x2xf32> to vector<4x2xf32>
    %371 = arith.mulf %370, %235 : vector<4x2xf32>
    %372 = arith.subf %369, %371 : vector<4x2xf32>
    %373 = arith.addf %355, %372 : vector<4x2xf32>
    %374 = vector.broadcast %364 : vector<1x2xf32> to vector<4x2xf32>
    %375 = arith.mulf %374, %235 : vector<4x2xf32>
    %376 = vector.broadcast %367 : vector<1x2xf32> to vector<4x2xf32>
    %377 = arith.mulf %376, %229 : vector<4x2xf32>
    %378 = arith.addf %375, %377 : vector<4x2xf32>
    %379 = arith.addf %361, %378 : vector<4x2xf32>
    %380 = vector.extract_strided_slice %237 {offsets = [2, 0, 0], sizes = [1, 1, 2], strides = [1, 1, 1]} : vector<4x4x2xf32> to vector<1x1x2xf32>
    %381 = vector.shape_cast %380 : vector<1x1x2xf32> to vector<2xf32>
    %382 = vector.shape_cast %381 : vector<2xf32> to vector<1x2xf32>
    %383 = vector.extract_strided_slice %239 {offsets = [2, 0, 0], sizes = [1, 1, 2], strides = [1, 1, 1]} : vector<4x4x2xf32> to vector<1x1x2xf32>
    %384 = vector.shape_cast %383 : vector<1x1x2xf32> to vector<2xf32>
    %385 = vector.shape_cast %384 : vector<2xf32> to vector<1x2xf32>
    %386 = vector.broadcast %382 : vector<1x2xf32> to vector<4x2xf32>
    %387 = arith.mulf %386, %67 : vector<4x2xf32>
    %388 = vector.broadcast %385 : vector<1x2xf32> to vector<4x2xf32>
    %389 = arith.mulf %388, %73 : vector<4x2xf32>
    %390 = arith.subf %387, %389 : vector<4x2xf32>
    %391 = vector.broadcast %382 : vector<1x2xf32> to vector<4x2xf32>
    %392 = arith.mulf %391, %73 : vector<4x2xf32>
    %393 = vector.broadcast %385 : vector<1x2xf32> to vector<4x2xf32>
    %394 = arith.mulf %393, %67 : vector<4x2xf32>
    %395 = arith.addf %392, %394 : vector<4x2xf32>
    %396 = vector.extract_strided_slice %237 {offsets = [2, 1, 0], sizes = [1, 1, 2], strides = [1, 1, 1]} : vector<4x4x2xf32> to vector<1x1x2xf32>
    %397 = vector.shape_cast %396 : vector<1x1x2xf32> to vector<2xf32>
    %398 = vector.shape_cast %397 : vector<2xf32> to vector<1x2xf32>
    %399 = vector.extract_strided_slice %239 {offsets = [2, 1, 0], sizes = [1, 1, 2], strides = [1, 1, 1]} : vector<4x4x2xf32> to vector<1x1x2xf32>
    %400 = vector.shape_cast %399 : vector<1x1x2xf32> to vector<2xf32>
    %401 = vector.shape_cast %400 : vector<2xf32> to vector<1x2xf32>
    %402 = vector.broadcast %398 : vector<1x2xf32> to vector<4x2xf32>
    %403 = arith.mulf %402, %121 : vector<4x2xf32>
    %404 = vector.broadcast %401 : vector<1x2xf32> to vector<4x2xf32>
    %405 = arith.mulf %404, %127 : vector<4x2xf32>
    %406 = arith.subf %403, %405 : vector<4x2xf32>
    %407 = arith.addf %390, %406 : vector<4x2xf32>
    %408 = vector.broadcast %398 : vector<1x2xf32> to vector<4x2xf32>
    %409 = arith.mulf %408, %127 : vector<4x2xf32>
    %410 = vector.broadcast %401 : vector<1x2xf32> to vector<4x2xf32>
    %411 = arith.mulf %410, %121 : vector<4x2xf32>
    %412 = arith.addf %409, %411 : vector<4x2xf32>
    %413 = arith.addf %395, %412 : vector<4x2xf32>
    %414 = vector.extract_strided_slice %237 {offsets = [2, 2, 0], sizes = [1, 1, 2], strides = [1, 1, 1]} : vector<4x4x2xf32> to vector<1x1x2xf32>
    %415 = vector.shape_cast %414 : vector<1x1x2xf32> to vector<2xf32>
    %416 = vector.shape_cast %415 : vector<2xf32> to vector<1x2xf32>
    %417 = vector.extract_strided_slice %239 {offsets = [2, 2, 0], sizes = [1, 1, 2], strides = [1, 1, 1]} : vector<4x4x2xf32> to vector<1x1x2xf32>
    %418 = vector.shape_cast %417 : vector<1x1x2xf32> to vector<2xf32>
    %419 = vector.shape_cast %418 : vector<2xf32> to vector<1x2xf32>
    %420 = vector.broadcast %416 : vector<1x2xf32> to vector<4x2xf32>
    %421 = arith.mulf %420, %175 : vector<4x2xf32>
    %422 = vector.broadcast %419 : vector<1x2xf32> to vector<4x2xf32>
    %423 = arith.mulf %422, %181 : vector<4x2xf32>
    %424 = arith.subf %421, %423 : vector<4x2xf32>
    %425 = arith.addf %407, %424 : vector<4x2xf32>
    %426 = vector.broadcast %416 : vector<1x2xf32> to vector<4x2xf32>
    %427 = arith.mulf %426, %181 : vector<4x2xf32>
    %428 = vector.broadcast %419 : vector<1x2xf32> to vector<4x2xf32>
    %429 = arith.mulf %428, %175 : vector<4x2xf32>
    %430 = arith.addf %427, %429 : vector<4x2xf32>
    %431 = arith.addf %413, %430 : vector<4x2xf32>
    %432 = vector.extract_strided_slice %237 {offsets = [2, 3, 0], sizes = [1, 1, 2], strides = [1, 1, 1]} : vector<4x4x2xf32> to vector<1x1x2xf32>
    %433 = vector.shape_cast %432 : vector<1x1x2xf32> to vector<2xf32>
    %434 = vector.shape_cast %433 : vector<2xf32> to vector<1x2xf32>
    %435 = vector.extract_strided_slice %239 {offsets = [2, 3, 0], sizes = [1, 1, 2], strides = [1, 1, 1]} : vector<4x4x2xf32> to vector<1x1x2xf32>
    %436 = vector.shape_cast %435 : vector<1x1x2xf32> to vector<2xf32>
    %437 = vector.shape_cast %436 : vector<2xf32> to vector<1x2xf32>
    %438 = vector.broadcast %434 : vector<1x2xf32> to vector<4x2xf32>
    %439 = arith.mulf %438, %229 : vector<4x2xf32>
    %440 = vector.broadcast %437 : vector<1x2xf32> to vector<4x2xf32>
    %441 = arith.mulf %440, %235 : vector<4x2xf32>
    %442 = arith.subf %439, %441 : vector<4x2xf32>
    %443 = arith.addf %425, %442 : vector<4x2xf32>
    %444 = vector.broadcast %434 : vector<1x2xf32> to vector<4x2xf32>
    %445 = arith.mulf %444, %235 : vector<4x2xf32>
    %446 = vector.broadcast %437 : vector<1x2xf32> to vector<4x2xf32>
    %447 = arith.mulf %446, %229 : vector<4x2xf32>
    %448 = arith.addf %445, %447 : vector<4x2xf32>
    %449 = arith.addf %431, %448 : vector<4x2xf32>
    %450 = vector.extract_strided_slice %237 {offsets = [3, 0, 0], sizes = [1, 1, 2], strides = [1, 1, 1]} : vector<4x4x2xf32> to vector<1x1x2xf32>
    %451 = vector.shape_cast %450 : vector<1x1x2xf32> to vector<2xf32>
    %452 = vector.shape_cast %451 : vector<2xf32> to vector<1x2xf32>
    %453 = vector.extract_strided_slice %239 {offsets = [3, 0, 0], sizes = [1, 1, 2], strides = [1, 1, 1]} : vector<4x4x2xf32> to vector<1x1x2xf32>
    %454 = vector.shape_cast %453 : vector<1x1x2xf32> to vector<2xf32>
    %455 = vector.shape_cast %454 : vector<2xf32> to vector<1x2xf32>
    %456 = vector.broadcast %452 : vector<1x2xf32> to vector<4x2xf32>
    %457 = arith.mulf %456, %67 : vector<4x2xf32>
    %458 = vector.broadcast %455 : vector<1x2xf32> to vector<4x2xf32>
    %459 = arith.mulf %458, %73 : vector<4x2xf32>
    %460 = arith.subf %457, %459 : vector<4x2xf32>
    %461 = vector.broadcast %452 : vector<1x2xf32> to vector<4x2xf32>
    %462 = arith.mulf %461, %73 : vector<4x2xf32>
    %463 = vector.broadcast %455 : vector<1x2xf32> to vector<4x2xf32>
    %464 = arith.mulf %463, %67 : vector<4x2xf32>
    %465 = arith.addf %462, %464 : vector<4x2xf32>
    %466 = vector.extract_strided_slice %237 {offsets = [3, 1, 0], sizes = [1, 1, 2], strides = [1, 1, 1]} : vector<4x4x2xf32> to vector<1x1x2xf32>
    %467 = vector.shape_cast %466 : vector<1x1x2xf32> to vector<2xf32>
    %468 = vector.shape_cast %467 : vector<2xf32> to vector<1x2xf32>
    %469 = vector.extract_strided_slice %239 {offsets = [3, 1, 0], sizes = [1, 1, 2], strides = [1, 1, 1]} : vector<4x4x2xf32> to vector<1x1x2xf32>
    %470 = vector.shape_cast %469 : vector<1x1x2xf32> to vector<2xf32>
    %471 = vector.shape_cast %470 : vector<2xf32> to vector<1x2xf32>
    %472 = vector.broadcast %468 : vector<1x2xf32> to vector<4x2xf32>
    %473 = arith.mulf %472, %121 : vector<4x2xf32>
    %474 = vector.broadcast %471 : vector<1x2xf32> to vector<4x2xf32>
    %475 = arith.mulf %474, %127 : vector<4x2xf32>
    %476 = arith.subf %473, %475 : vector<4x2xf32>
    %477 = arith.addf %460, %476 : vector<4x2xf32>
    %478 = vector.broadcast %468 : vector<1x2xf32> to vector<4x2xf32>
    %479 = arith.mulf %478, %127 : vector<4x2xf32>
    %480 = vector.broadcast %471 : vector<1x2xf32> to vector<4x2xf32>
    %481 = arith.mulf %480, %121 : vector<4x2xf32>
    %482 = arith.addf %479, %481 : vector<4x2xf32>
    %483 = arith.addf %465, %482 : vector<4x2xf32>
    %484 = vector.extract_strided_slice %237 {offsets = [3, 2, 0], sizes = [1, 1, 2], strides = [1, 1, 1]} : vector<4x4x2xf32> to vector<1x1x2xf32>
    %485 = vector.shape_cast %484 : vector<1x1x2xf32> to vector<2xf32>
    %486 = vector.shape_cast %485 : vector<2xf32> to vector<1x2xf32>
    %487 = vector.extract_strided_slice %239 {offsets = [3, 2, 0], sizes = [1, 1, 2], strides = [1, 1, 1]} : vector<4x4x2xf32> to vector<1x1x2xf32>
    %488 = vector.shape_cast %487 : vector<1x1x2xf32> to vector<2xf32>
    %489 = vector.shape_cast %488 : vector<2xf32> to vector<1x2xf32>
    %490 = vector.broadcast %486 : vector<1x2xf32> to vector<4x2xf32>
    %491 = arith.mulf %490, %175 : vector<4x2xf32>
    %492 = vector.broadcast %489 : vector<1x2xf32> to vector<4x2xf32>
    %493 = arith.mulf %492, %181 : vector<4x2xf32>
    %494 = arith.subf %491, %493 : vector<4x2xf32>
    %495 = arith.addf %477, %494 : vector<4x2xf32>
    %496 = vector.broadcast %486 : vector<1x2xf32> to vector<4x2xf32>
    %497 = arith.mulf %496, %181 : vector<4x2xf32>
    %498 = vector.broadcast %489 : vector<1x2xf32> to vector<4x2xf32>
    %499 = arith.mulf %498, %175 : vector<4x2xf32>
    %500 = arith.addf %497, %499 : vector<4x2xf32>
    %501 = arith.addf %483, %500 : vector<4x2xf32>
    %502 = vector.extract_strided_slice %237 {offsets = [3, 3, 0], sizes = [1, 1, 2], strides = [1, 1, 1]} : vector<4x4x2xf32> to vector<1x1x2xf32>
    %503 = vector.shape_cast %502 : vector<1x1x2xf32> to vector<2xf32>
    %504 = vector.shape_cast %503 : vector<2xf32> to vector<1x2xf32>
    %505 = vector.extract_strided_slice %239 {offsets = [3, 3, 0], sizes = [1, 1, 2], strides = [1, 1, 1]} : vector<4x4x2xf32> to vector<1x1x2xf32>
    %506 = vector.shape_cast %505 : vector<1x1x2xf32> to vector<2xf32>
    %507 = vector.shape_cast %506 : vector<2xf32> to vector<1x2xf32>
    %508 = vector.broadcast %504 : vector<1x2xf32> to vector<4x2xf32>
    %509 = arith.mulf %508, %229 : vector<4x2xf32>
    %510 = vector.broadcast %507 : vector<1x2xf32> to vector<4x2xf32>
    %511 = arith.mulf %510, %235 : vector<4x2xf32>
    %512 = arith.subf %509, %511 : vector<4x2xf32>
    %513 = arith.addf %495, %512 : vector<4x2xf32>
    %514 = vector.broadcast %504 : vector<1x2xf32> to vector<4x2xf32>
    %515 = arith.mulf %514, %235 : vector<4x2xf32>
    %516 = vector.broadcast %507 : vector<1x2xf32> to vector<4x2xf32>
    %517 = arith.mulf %516, %229 : vector<4x2xf32>
    %518 = arith.addf %515, %517 : vector<4x2xf32>
    %519 = arith.addf %501, %518 : vector<4x2xf32>
    %c16 = arith.constant 16 : index
    %520 = memref.load %arg6[%c16] : memref<48xf32, #tpu.memory_space<smem>>
    %c16_32 = arith.constant 16 : index
    %521 = memref.load %arg7[%c16_32] : memref<48xf32, #tpu.memory_space<smem>>
    %522 = vector.broadcast %520 : f32 to vector<4x2xf32>
    %523 = arith.mulf %522, %303 : vector<4x2xf32>
    %524 = vector.broadcast %521 : f32 to vector<4x2xf32>
    %525 = arith.mulf %524, %309 : vector<4x2xf32>
    %526 = arith.subf %523, %525 : vector<4x2xf32>
    %527 = vector.broadcast %520 : f32 to vector<4x2xf32>
    %528 = arith.mulf %527, %309 : vector<4x2xf32>
    %529 = vector.broadcast %521 : f32 to vector<4x2xf32>
    %530 = arith.mulf %529, %303 : vector<4x2xf32>
    %531 = arith.addf %528, %530 : vector<4x2xf32>
    %c17 = arith.constant 17 : index
    %532 = memref.load %arg6[%c17] : memref<48xf32, #tpu.memory_space<smem>>
    %c17_33 = arith.constant 17 : index
    %533 = memref.load %arg7[%c17_33] : memref<48xf32, #tpu.memory_space<smem>>
    %534 = vector.broadcast %532 : f32 to vector<4x2xf32>
    %535 = arith.mulf %534, %373 : vector<4x2xf32>
    %536 = vector.broadcast %533 : f32 to vector<4x2xf32>
    %537 = arith.mulf %536, %379 : vector<4x2xf32>
    %538 = arith.subf %535, %537 : vector<4x2xf32>
    %539 = arith.addf %526, %538 : vector<4x2xf32>
    %540 = vector.broadcast %532 : f32 to vector<4x2xf32>
    %541 = arith.mulf %540, %379 : vector<4x2xf32>
    %542 = vector.broadcast %533 : f32 to vector<4x2xf32>
    %543 = arith.mulf %542, %373 : vector<4x2xf32>
    %544 = arith.addf %541, %543 : vector<4x2xf32>
    %545 = arith.addf %531, %544 : vector<4x2xf32>
    %c18 = arith.constant 18 : index
    %546 = memref.load %arg6[%c18] : memref<48xf32, #tpu.memory_space<smem>>
    %c18_34 = arith.constant 18 : index
    %547 = memref.load %arg7[%c18_34] : memref<48xf32, #tpu.memory_space<smem>>
    %548 = vector.broadcast %546 : f32 to vector<4x2xf32>
    %549 = arith.mulf %548, %443 : vector<4x2xf32>
    %550 = vector.broadcast %547 : f32 to vector<4x2xf32>
    %551 = arith.mulf %550, %449 : vector<4x2xf32>
    %552 = arith.subf %549, %551 : vector<4x2xf32>
    %553 = arith.addf %539, %552 : vector<4x2xf32>
    %554 = vector.broadcast %546 : f32 to vector<4x2xf32>
    %555 = arith.mulf %554, %449 : vector<4x2xf32>
    %556 = vector.broadcast %547 : f32 to vector<4x2xf32>
    %557 = arith.mulf %556, %443 : vector<4x2xf32>
    %558 = arith.addf %555, %557 : vector<4x2xf32>
    %559 = arith.addf %545, %558 : vector<4x2xf32>
    %c19 = arith.constant 19 : index
    %560 = memref.load %arg6[%c19] : memref<48xf32, #tpu.memory_space<smem>>
    %c19_35 = arith.constant 19 : index
    %561 = memref.load %arg7[%c19_35] : memref<48xf32, #tpu.memory_space<smem>>
    %562 = vector.broadcast %560 : f32 to vector<4x2xf32>
    %563 = arith.mulf %562, %513 : vector<4x2xf32>
    %564 = vector.broadcast %561 : f32 to vector<4x2xf32>
    %565 = arith.mulf %564, %519 : vector<4x2xf32>
    %566 = arith.subf %563, %565 : vector<4x2xf32>
    %567 = arith.addf %553, %566 : vector<4x2xf32>
    %568 = vector.broadcast %560 : f32 to vector<4x2xf32>
    %569 = arith.mulf %568, %519 : vector<4x2xf32>
    %570 = vector.broadcast %561 : f32 to vector<4x2xf32>
    %571 = arith.mulf %570, %513 : vector<4x2xf32>
    %572 = arith.addf %569, %571 : vector<4x2xf32>
    %573 = arith.addf %559, %572 : vector<4x2xf32>
    %c20 = arith.constant 20 : index
    %574 = memref.load %arg6[%c20] : memref<48xf32, #tpu.memory_space<smem>>
    %c20_36 = arith.constant 20 : index
    %575 = memref.load %arg7[%c20_36] : memref<48xf32, #tpu.memory_space<smem>>
    %576 = vector.broadcast %574 : f32 to vector<4x2xf32>
    %577 = arith.mulf %576, %303 : vector<4x2xf32>
    %578 = vector.broadcast %575 : f32 to vector<4x2xf32>
    %579 = arith.mulf %578, %309 : vector<4x2xf32>
    %580 = arith.subf %577, %579 : vector<4x2xf32>
    %581 = vector.broadcast %574 : f32 to vector<4x2xf32>
    %582 = arith.mulf %581, %309 : vector<4x2xf32>
    %583 = vector.broadcast %575 : f32 to vector<4x2xf32>
    %584 = arith.mulf %583, %303 : vector<4x2xf32>
    %585 = arith.addf %582, %584 : vector<4x2xf32>
    %c21 = arith.constant 21 : index
    %586 = memref.load %arg6[%c21] : memref<48xf32, #tpu.memory_space<smem>>
    %c21_37 = arith.constant 21 : index
    %587 = memref.load %arg7[%c21_37] : memref<48xf32, #tpu.memory_space<smem>>
    %588 = vector.broadcast %586 : f32 to vector<4x2xf32>
    %589 = arith.mulf %588, %373 : vector<4x2xf32>
    %590 = vector.broadcast %587 : f32 to vector<4x2xf32>
    %591 = arith.mulf %590, %379 : vector<4x2xf32>
    %592 = arith.subf %589, %591 : vector<4x2xf32>
    %593 = arith.addf %580, %592 : vector<4x2xf32>
    %594 = vector.broadcast %586 : f32 to vector<4x2xf32>
    %595 = arith.mulf %594, %379 : vector<4x2xf32>
    %596 = vector.broadcast %587 : f32 to vector<4x2xf32>
    %597 = arith.mulf %596, %373 : vector<4x2xf32>
    %598 = arith.addf %595, %597 : vector<4x2xf32>
    %599 = arith.addf %585, %598 : vector<4x2xf32>
    %c22 = arith.constant 22 : index
    %600 = memref.load %arg6[%c22] : memref<48xf32, #tpu.memory_space<smem>>
    %c22_38 = arith.constant 22 : index
    %601 = memref.load %arg7[%c22_38] : memref<48xf32, #tpu.memory_space<smem>>
    %602 = vector.broadcast %600 : f32 to vector<4x2xf32>
    %603 = arith.mulf %602, %443 : vector<4x2xf32>
    %604 = vector.broadcast %601 : f32 to vector<4x2xf32>
    %605 = arith.mulf %604, %449 : vector<4x2xf32>
    %606 = arith.subf %603, %605 : vector<4x2xf32>
    %607 = arith.addf %593, %606 : vector<4x2xf32>
    %608 = vector.broadcast %600 : f32 to vector<4x2xf32>
    %609 = arith.mulf %608, %449 : vector<4x2xf32>
    %610 = vector.broadcast %601 : f32 to vector<4x2xf32>
    %611 = arith.mulf %610, %443 : vector<4x2xf32>
    %612 = arith.addf %609, %611 : vector<4x2xf32>
    %613 = arith.addf %599, %612 : vector<4x2xf32>
    %c23 = arith.constant 23 : index
    %614 = memref.load %arg6[%c23] : memref<48xf32, #tpu.memory_space<smem>>
    %c23_39 = arith.constant 23 : index
    %615 = memref.load %arg7[%c23_39] : memref<48xf32, #tpu.memory_space<smem>>
    %616 = vector.broadcast %614 : f32 to vector<4x2xf32>
    %617 = arith.mulf %616, %513 : vector<4x2xf32>
    %618 = vector.broadcast %615 : f32 to vector<4x2xf32>
    %619 = arith.mulf %618, %519 : vector<4x2xf32>
    %620 = arith.subf %617, %619 : vector<4x2xf32>
    %621 = arith.addf %607, %620 : vector<4x2xf32>
    %622 = vector.broadcast %614 : f32 to vector<4x2xf32>
    %623 = arith.mulf %622, %519 : vector<4x2xf32>
    %624 = vector.broadcast %615 : f32 to vector<4x2xf32>
    %625 = arith.mulf %624, %513 : vector<4x2xf32>
    %626 = arith.addf %623, %625 : vector<4x2xf32>
    %627 = arith.addf %613, %626 : vector<4x2xf32>
    %c24 = arith.constant 24 : index
    %628 = memref.load %arg6[%c24] : memref<48xf32, #tpu.memory_space<smem>>
    %c24_40 = arith.constant 24 : index
    %629 = memref.load %arg7[%c24_40] : memref<48xf32, #tpu.memory_space<smem>>
    %630 = vector.broadcast %628 : f32 to vector<4x2xf32>
    %631 = arith.mulf %630, %303 : vector<4x2xf32>
    %632 = vector.broadcast %629 : f32 to vector<4x2xf32>
    %633 = arith.mulf %632, %309 : vector<4x2xf32>
    %634 = arith.subf %631, %633 : vector<4x2xf32>
    %635 = vector.broadcast %628 : f32 to vector<4x2xf32>
    %636 = arith.mulf %635, %309 : vector<4x2xf32>
    %637 = vector.broadcast %629 : f32 to vector<4x2xf32>
    %638 = arith.mulf %637, %303 : vector<4x2xf32>
    %639 = arith.addf %636, %638 : vector<4x2xf32>
    %c25 = arith.constant 25 : index
    %640 = memref.load %arg6[%c25] : memref<48xf32, #tpu.memory_space<smem>>
    %c25_41 = arith.constant 25 : index
    %641 = memref.load %arg7[%c25_41] : memref<48xf32, #tpu.memory_space<smem>>
    %642 = vector.broadcast %640 : f32 to vector<4x2xf32>
    %643 = arith.mulf %642, %373 : vector<4x2xf32>
    %644 = vector.broadcast %641 : f32 to vector<4x2xf32>
    %645 = arith.mulf %644, %379 : vector<4x2xf32>
    %646 = arith.subf %643, %645 : vector<4x2xf32>
    %647 = arith.addf %634, %646 : vector<4x2xf32>
    %648 = vector.broadcast %640 : f32 to vector<4x2xf32>
    %649 = arith.mulf %648, %379 : vector<4x2xf32>
    %650 = vector.broadcast %641 : f32 to vector<4x2xf32>
    %651 = arith.mulf %650, %373 : vector<4x2xf32>
    %652 = arith.addf %649, %651 : vector<4x2xf32>
    %653 = arith.addf %639, %652 : vector<4x2xf32>
    %c26 = arith.constant 26 : index
    %654 = memref.load %arg6[%c26] : memref<48xf32, #tpu.memory_space<smem>>
    %c26_42 = arith.constant 26 : index
    %655 = memref.load %arg7[%c26_42] : memref<48xf32, #tpu.memory_space<smem>>
    %656 = vector.broadcast %654 : f32 to vector<4x2xf32>
    %657 = arith.mulf %656, %443 : vector<4x2xf32>
    %658 = vector.broadcast %655 : f32 to vector<4x2xf32>
    %659 = arith.mulf %658, %449 : vector<4x2xf32>
    %660 = arith.subf %657, %659 : vector<4x2xf32>
    %661 = arith.addf %647, %660 : vector<4x2xf32>
    %662 = vector.broadcast %654 : f32 to vector<4x2xf32>
    %663 = arith.mulf %662, %449 : vector<4x2xf32>
    %664 = vector.broadcast %655 : f32 to vector<4x2xf32>
    %665 = arith.mulf %664, %443 : vector<4x2xf32>
    %666 = arith.addf %663, %665 : vector<4x2xf32>
    %667 = arith.addf %653, %666 : vector<4x2xf32>
    %c27 = arith.constant 27 : index
    %668 = memref.load %arg6[%c27] : memref<48xf32, #tpu.memory_space<smem>>
    %c27_43 = arith.constant 27 : index
    %669 = memref.load %arg7[%c27_43] : memref<48xf32, #tpu.memory_space<smem>>
    %670 = vector.broadcast %668 : f32 to vector<4x2xf32>
    %671 = arith.mulf %670, %513 : vector<4x2xf32>
    %672 = vector.broadcast %669 : f32 to vector<4x2xf32>
    %673 = arith.mulf %672, %519 : vector<4x2xf32>
    %674 = arith.subf %671, %673 : vector<4x2xf32>
    %675 = arith.addf %661, %674 : vector<4x2xf32>
    %676 = vector.broadcast %668 : f32 to vector<4x2xf32>
    %677 = arith.mulf %676, %519 : vector<4x2xf32>
    %678 = vector.broadcast %669 : f32 to vector<4x2xf32>
    %679 = arith.mulf %678, %513 : vector<4x2xf32>
    %680 = arith.addf %677, %679 : vector<4x2xf32>
    %681 = arith.addf %667, %680 : vector<4x2xf32>
    %c28 = arith.constant 28 : index
    %682 = memref.load %arg6[%c28] : memref<48xf32, #tpu.memory_space<smem>>
    %c28_44 = arith.constant 28 : index
    %683 = memref.load %arg7[%c28_44] : memref<48xf32, #tpu.memory_space<smem>>
    %684 = vector.broadcast %682 : f32 to vector<4x2xf32>
    %685 = arith.mulf %684, %303 : vector<4x2xf32>
    %686 = vector.broadcast %683 : f32 to vector<4x2xf32>
    %687 = arith.mulf %686, %309 : vector<4x2xf32>
    %688 = arith.subf %685, %687 : vector<4x2xf32>
    %689 = vector.broadcast %682 : f32 to vector<4x2xf32>
    %690 = arith.mulf %689, %309 : vector<4x2xf32>
    %691 = vector.broadcast %683 : f32 to vector<4x2xf32>
    %692 = arith.mulf %691, %303 : vector<4x2xf32>
    %693 = arith.addf %690, %692 : vector<4x2xf32>
    %c29 = arith.constant 29 : index
    %694 = memref.load %arg6[%c29] : memref<48xf32, #tpu.memory_space<smem>>
    %c29_45 = arith.constant 29 : index
    %695 = memref.load %arg7[%c29_45] : memref<48xf32, #tpu.memory_space<smem>>
    %696 = vector.broadcast %694 : f32 to vector<4x2xf32>
    %697 = arith.mulf %696, %373 : vector<4x2xf32>
    %698 = vector.broadcast %695 : f32 to vector<4x2xf32>
    %699 = arith.mulf %698, %379 : vector<4x2xf32>
    %700 = arith.subf %697, %699 : vector<4x2xf32>
    %701 = arith.addf %688, %700 : vector<4x2xf32>
    %702 = vector.broadcast %694 : f32 to vector<4x2xf32>
    %703 = arith.mulf %702, %379 : vector<4x2xf32>
    %704 = vector.broadcast %695 : f32 to vector<4x2xf32>
    %705 = arith.mulf %704, %373 : vector<4x2xf32>
    %706 = arith.addf %703, %705 : vector<4x2xf32>
    %707 = arith.addf %693, %706 : vector<4x2xf32>
    %c30 = arith.constant 30 : index
    %708 = memref.load %arg6[%c30] : memref<48xf32, #tpu.memory_space<smem>>
    %c30_46 = arith.constant 30 : index
    %709 = memref.load %arg7[%c30_46] : memref<48xf32, #tpu.memory_space<smem>>
    %710 = vector.broadcast %708 : f32 to vector<4x2xf32>
    %711 = arith.mulf %710, %443 : vector<4x2xf32>
    %712 = vector.broadcast %709 : f32 to vector<4x2xf32>
    %713 = arith.mulf %712, %449 : vector<4x2xf32>
    %714 = arith.subf %711, %713 : vector<4x2xf32>
    %715 = arith.addf %701, %714 : vector<4x2xf32>
    %716 = vector.broadcast %708 : f32 to vector<4x2xf32>
    %717 = arith.mulf %716, %449 : vector<4x2xf32>
    %718 = vector.broadcast %709 : f32 to vector<4x2xf32>
    %719 = arith.mulf %718, %443 : vector<4x2xf32>
    %720 = arith.addf %717, %719 : vector<4x2xf32>
    %721 = arith.addf %707, %720 : vector<4x2xf32>
    %c31 = arith.constant 31 : index
    %722 = memref.load %arg6[%c31] : memref<48xf32, #tpu.memory_space<smem>>
    %c31_47 = arith.constant 31 : index
    %723 = memref.load %arg7[%c31_47] : memref<48xf32, #tpu.memory_space<smem>>
    %724 = vector.broadcast %722 : f32 to vector<4x2xf32>
    %725 = arith.mulf %724, %513 : vector<4x2xf32>
    %726 = vector.broadcast %723 : f32 to vector<4x2xf32>
    %727 = arith.mulf %726, %519 : vector<4x2xf32>
    %728 = arith.subf %725, %727 : vector<4x2xf32>
    %729 = arith.addf %715, %728 : vector<4x2xf32>
    %730 = vector.broadcast %722 : f32 to vector<4x2xf32>
    %731 = arith.mulf %730, %519 : vector<4x2xf32>
    %732 = vector.broadcast %723 : f32 to vector<4x2xf32>
    %733 = arith.mulf %732, %513 : vector<4x2xf32>
    %734 = arith.addf %731, %733 : vector<4x2xf32>
    %735 = arith.addf %721, %734 : vector<4x2xf32>
    %c2_48 = arith.constant 2 : index
    %c0_49 = arith.constant 0 : index
    %c0_50 = arith.constant 0 : index
    %c0_51 = arith.constant 0 : index
    %736 = vector.load %arg1[%c2_48, %c0_49, %c0_50, %c0_51] : memref<3x4x4x2xf32, #tpu.memory_space<vmem>>, vector<1x4x4x2xf32>
    %737 = vector.shape_cast %736 : vector<1x4x4x2xf32> to vector<4x4x2xf32>
    %c2_52 = arith.constant 2 : index
    %c0_53 = arith.constant 0 : index
    %c0_54 = arith.constant 0 : index
    %c0_55 = arith.constant 0 : index
    %738 = vector.load %arg2[%c2_52, %c0_53, %c0_54, %c0_55] : memref<3x4x4x2xf32, #tpu.memory_space<vmem>>, vector<1x4x4x2xf32>
    %739 = vector.shape_cast %738 : vector<1x4x4x2xf32> to vector<4x4x2xf32>
    %740 = vector.extract_strided_slice %737 {offsets = [0, 0, 0], sizes = [1, 1, 2], strides = [1, 1, 1]} : vector<4x4x2xf32> to vector<1x1x2xf32>
    %741 = vector.shape_cast %740 : vector<1x1x2xf32> to vector<2xf32>
    %742 = vector.shape_cast %741 : vector<2xf32> to vector<1x2xf32>
    %743 = vector.extract_strided_slice %739 {offsets = [0, 0, 0], sizes = [1, 1, 2], strides = [1, 1, 1]} : vector<4x4x2xf32> to vector<1x1x2xf32>
    %744 = vector.shape_cast %743 : vector<1x1x2xf32> to vector<2xf32>
    %745 = vector.shape_cast %744 : vector<2xf32> to vector<1x2xf32>
    %746 = vector.broadcast %742 : vector<1x2xf32> to vector<4x2xf32>
    %747 = arith.mulf %746, %567 : vector<4x2xf32>
    %748 = vector.broadcast %745 : vector<1x2xf32> to vector<4x2xf32>
    %749 = arith.mulf %748, %573 : vector<4x2xf32>
    %750 = arith.subf %747, %749 : vector<4x2xf32>
    %751 = vector.broadcast %742 : vector<1x2xf32> to vector<4x2xf32>
    %752 = arith.mulf %751, %573 : vector<4x2xf32>
    %753 = vector.broadcast %745 : vector<1x2xf32> to vector<4x2xf32>
    %754 = arith.mulf %753, %567 : vector<4x2xf32>
    %755 = arith.addf %752, %754 : vector<4x2xf32>
    %756 = vector.extract_strided_slice %737 {offsets = [0, 1, 0], sizes = [1, 1, 2], strides = [1, 1, 1]} : vector<4x4x2xf32> to vector<1x1x2xf32>
    %757 = vector.shape_cast %756 : vector<1x1x2xf32> to vector<2xf32>
    %758 = vector.shape_cast %757 : vector<2xf32> to vector<1x2xf32>
    %759 = vector.extract_strided_slice %739 {offsets = [0, 1, 0], sizes = [1, 1, 2], strides = [1, 1, 1]} : vector<4x4x2xf32> to vector<1x1x2xf32>
    %760 = vector.shape_cast %759 : vector<1x1x2xf32> to vector<2xf32>
    %761 = vector.shape_cast %760 : vector<2xf32> to vector<1x2xf32>
    %762 = vector.broadcast %758 : vector<1x2xf32> to vector<4x2xf32>
    %763 = arith.mulf %762, %621 : vector<4x2xf32>
    %764 = vector.broadcast %761 : vector<1x2xf32> to vector<4x2xf32>
    %765 = arith.mulf %764, %627 : vector<4x2xf32>
    %766 = arith.subf %763, %765 : vector<4x2xf32>
    %767 = arith.addf %750, %766 : vector<4x2xf32>
    %768 = vector.broadcast %758 : vector<1x2xf32> to vector<4x2xf32>
    %769 = arith.mulf %768, %627 : vector<4x2xf32>
    %770 = vector.broadcast %761 : vector<1x2xf32> to vector<4x2xf32>
    %771 = arith.mulf %770, %621 : vector<4x2xf32>
    %772 = arith.addf %769, %771 : vector<4x2xf32>
    %773 = arith.addf %755, %772 : vector<4x2xf32>
    %774 = vector.extract_strided_slice %737 {offsets = [0, 2, 0], sizes = [1, 1, 2], strides = [1, 1, 1]} : vector<4x4x2xf32> to vector<1x1x2xf32>
    %775 = vector.shape_cast %774 : vector<1x1x2xf32> to vector<2xf32>
    %776 = vector.shape_cast %775 : vector<2xf32> to vector<1x2xf32>
    %777 = vector.extract_strided_slice %739 {offsets = [0, 2, 0], sizes = [1, 1, 2], strides = [1, 1, 1]} : vector<4x4x2xf32> to vector<1x1x2xf32>
    %778 = vector.shape_cast %777 : vector<1x1x2xf32> to vector<2xf32>
    %779 = vector.shape_cast %778 : vector<2xf32> to vector<1x2xf32>
    %780 = vector.broadcast %776 : vector<1x2xf32> to vector<4x2xf32>
    %781 = arith.mulf %780, %675 : vector<4x2xf32>
    %782 = vector.broadcast %779 : vector<1x2xf32> to vector<4x2xf32>
    %783 = arith.mulf %782, %681 : vector<4x2xf32>
    %784 = arith.subf %781, %783 : vector<4x2xf32>
    %785 = arith.addf %767, %784 : vector<4x2xf32>
    %786 = vector.broadcast %776 : vector<1x2xf32> to vector<4x2xf32>
    %787 = arith.mulf %786, %681 : vector<4x2xf32>
    %788 = vector.broadcast %779 : vector<1x2xf32> to vector<4x2xf32>
    %789 = arith.mulf %788, %675 : vector<4x2xf32>
    %790 = arith.addf %787, %789 : vector<4x2xf32>
    %791 = arith.addf %773, %790 : vector<4x2xf32>
    %792 = vector.extract_strided_slice %737 {offsets = [0, 3, 0], sizes = [1, 1, 2], strides = [1, 1, 1]} : vector<4x4x2xf32> to vector<1x1x2xf32>
    %793 = vector.shape_cast %792 : vector<1x1x2xf32> to vector<2xf32>
    %794 = vector.shape_cast %793 : vector<2xf32> to vector<1x2xf32>
    %795 = vector.extract_strided_slice %739 {offsets = [0, 3, 0], sizes = [1, 1, 2], strides = [1, 1, 1]} : vector<4x4x2xf32> to vector<1x1x2xf32>
    %796 = vector.shape_cast %795 : vector<1x1x2xf32> to vector<2xf32>
    %797 = vector.shape_cast %796 : vector<2xf32> to vector<1x2xf32>
    %798 = vector.broadcast %794 : vector<1x2xf32> to vector<4x2xf32>
    %799 = arith.mulf %798, %729 : vector<4x2xf32>
    %800 = vector.broadcast %797 : vector<1x2xf32> to vector<4x2xf32>
    %801 = arith.mulf %800, %735 : vector<4x2xf32>
    %802 = arith.subf %799, %801 : vector<4x2xf32>
    %803 = arith.addf %785, %802 : vector<4x2xf32>
    %804 = vector.broadcast %794 : vector<1x2xf32> to vector<4x2xf32>
    %805 = arith.mulf %804, %735 : vector<4x2xf32>
    %806 = vector.broadcast %797 : vector<1x2xf32> to vector<4x2xf32>
    %807 = arith.mulf %806, %729 : vector<4x2xf32>
    %808 = arith.addf %805, %807 : vector<4x2xf32>
    %809 = arith.addf %791, %808 : vector<4x2xf32>
    %810 = vector.extract_strided_slice %737 {offsets = [1, 0, 0], sizes = [1, 1, 2], strides = [1, 1, 1]} : vector<4x4x2xf32> to vector<1x1x2xf32>
    %811 = vector.shape_cast %810 : vector<1x1x2xf32> to vector<2xf32>
    %812 = vector.shape_cast %811 : vector<2xf32> to vector<1x2xf32>
    %813 = vector.extract_strided_slice %739 {offsets = [1, 0, 0], sizes = [1, 1, 2], strides = [1, 1, 1]} : vector<4x4x2xf32> to vector<1x1x2xf32>
    %814 = vector.shape_cast %813 : vector<1x1x2xf32> to vector<2xf32>
    %815 = vector.shape_cast %814 : vector<2xf32> to vector<1x2xf32>
    %816 = vector.broadcast %812 : vector<1x2xf32> to vector<4x2xf32>
    %817 = arith.mulf %816, %567 : vector<4x2xf32>
    %818 = vector.broadcast %815 : vector<1x2xf32> to vector<4x2xf32>
    %819 = arith.mulf %818, %573 : vector<4x2xf32>
    %820 = arith.subf %817, %819 : vector<4x2xf32>
    %821 = vector.broadcast %812 : vector<1x2xf32> to vector<4x2xf32>
    %822 = arith.mulf %821, %573 : vector<4x2xf32>
    %823 = vector.broadcast %815 : vector<1x2xf32> to vector<4x2xf32>
    %824 = arith.mulf %823, %567 : vector<4x2xf32>
    %825 = arith.addf %822, %824 : vector<4x2xf32>
    %826 = vector.extract_strided_slice %737 {offsets = [1, 1, 0], sizes = [1, 1, 2], strides = [1, 1, 1]} : vector<4x4x2xf32> to vector<1x1x2xf32>
    %827 = vector.shape_cast %826 : vector<1x1x2xf32> to vector<2xf32>
    %828 = vector.shape_cast %827 : vector<2xf32> to vector<1x2xf32>
    %829 = vector.extract_strided_slice %739 {offsets = [1, 1, 0], sizes = [1, 1, 2], strides = [1, 1, 1]} : vector<4x4x2xf32> to vector<1x1x2xf32>
    %830 = vector.shape_cast %829 : vector<1x1x2xf32> to vector<2xf32>
    %831 = vector.shape_cast %830 : vector<2xf32> to vector<1x2xf32>
    %832 = vector.broadcast %828 : vector<1x2xf32> to vector<4x2xf32>
    %833 = arith.mulf %832, %621 : vector<4x2xf32>
    %834 = vector.broadcast %831 : vector<1x2xf32> to vector<4x2xf32>
    %835 = arith.mulf %834, %627 : vector<4x2xf32>
    %836 = arith.subf %833, %835 : vector<4x2xf32>
    %837 = arith.addf %820, %836 : vector<4x2xf32>
    %838 = vector.broadcast %828 : vector<1x2xf32> to vector<4x2xf32>
    %839 = arith.mulf %838, %627 : vector<4x2xf32>
    %840 = vector.broadcast %831 : vector<1x2xf32> to vector<4x2xf32>
    %841 = arith.mulf %840, %621 : vector<4x2xf32>
    %842 = arith.addf %839, %841 : vector<4x2xf32>
    %843 = arith.addf %825, %842 : vector<4x2xf32>
    %844 = vector.extract_strided_slice %737 {offsets = [1, 2, 0], sizes = [1, 1, 2], strides = [1, 1, 1]} : vector<4x4x2xf32> to vector<1x1x2xf32>
    %845 = vector.shape_cast %844 : vector<1x1x2xf32> to vector<2xf32>
    %846 = vector.shape_cast %845 : vector<2xf32> to vector<1x2xf32>
    %847 = vector.extract_strided_slice %739 {offsets = [1, 2, 0], sizes = [1, 1, 2], strides = [1, 1, 1]} : vector<4x4x2xf32> to vector<1x1x2xf32>
    %848 = vector.shape_cast %847 : vector<1x1x2xf32> to vector<2xf32>
    %849 = vector.shape_cast %848 : vector<2xf32> to vector<1x2xf32>
    %850 = vector.broadcast %846 : vector<1x2xf32> to vector<4x2xf32>
    %851 = arith.mulf %850, %675 : vector<4x2xf32>
    %852 = vector.broadcast %849 : vector<1x2xf32> to vector<4x2xf32>
    %853 = arith.mulf %852, %681 : vector<4x2xf32>
    %854 = arith.subf %851, %853 : vector<4x2xf32>
    %855 = arith.addf %837, %854 : vector<4x2xf32>
    %856 = vector.broadcast %846 : vector<1x2xf32> to vector<4x2xf32>
    %857 = arith.mulf %856, %681 : vector<4x2xf32>
    %858 = vector.broadcast %849 : vector<1x2xf32> to vector<4x2xf32>
    %859 = arith.mulf %858, %675 : vector<4x2xf32>
    %860 = arith.addf %857, %859 : vector<4x2xf32>
    %861 = arith.addf %843, %860 : vector<4x2xf32>
    %862 = vector.extract_strided_slice %737 {offsets = [1, 3, 0], sizes = [1, 1, 2], strides = [1, 1, 1]} : vector<4x4x2xf32> to vector<1x1x2xf32>
    %863 = vector.shape_cast %862 : vector<1x1x2xf32> to vector<2xf32>
    %864 = vector.shape_cast %863 : vector<2xf32> to vector<1x2xf32>
    %865 = vector.extract_strided_slice %739 {offsets = [1, 3, 0], sizes = [1, 1, 2], strides = [1, 1, 1]} : vector<4x4x2xf32> to vector<1x1x2xf32>
    %866 = vector.shape_cast %865 : vector<1x1x2xf32> to vector<2xf32>
    %867 = vector.shape_cast %866 : vector<2xf32> to vector<1x2xf32>
    %868 = vector.broadcast %864 : vector<1x2xf32> to vector<4x2xf32>
    %869 = arith.mulf %868, %729 : vector<4x2xf32>
    %870 = vector.broadcast %867 : vector<1x2xf32> to vector<4x2xf32>
    %871 = arith.mulf %870, %735 : vector<4x2xf32>
    %872 = arith.subf %869, %871 : vector<4x2xf32>
    %873 = arith.addf %855, %872 : vector<4x2xf32>
    %874 = vector.broadcast %864 : vector<1x2xf32> to vector<4x2xf32>
    %875 = arith.mulf %874, %735 : vector<4x2xf32>
    %876 = vector.broadcast %867 : vector<1x2xf32> to vector<4x2xf32>
    %877 = arith.mulf %876, %729 : vector<4x2xf32>
    %878 = arith.addf %875, %877 : vector<4x2xf32>
    %879 = arith.addf %861, %878 : vector<4x2xf32>
    %880 = vector.extract_strided_slice %737 {offsets = [2, 0, 0], sizes = [1, 1, 2], strides = [1, 1, 1]} : vector<4x4x2xf32> to vector<1x1x2xf32>
    %881 = vector.shape_cast %880 : vector<1x1x2xf32> to vector<2xf32>
    %882 = vector.shape_cast %881 : vector<2xf32> to vector<1x2xf32>
    %883 = vector.extract_strided_slice %739 {offsets = [2, 0, 0], sizes = [1, 1, 2], strides = [1, 1, 1]} : vector<4x4x2xf32> to vector<1x1x2xf32>
    %884 = vector.shape_cast %883 : vector<1x1x2xf32> to vector<2xf32>
    %885 = vector.shape_cast %884 : vector<2xf32> to vector<1x2xf32>
    %886 = vector.broadcast %882 : vector<1x2xf32> to vector<4x2xf32>
    %887 = arith.mulf %886, %567 : vector<4x2xf32>
    %888 = vector.broadcast %885 : vector<1x2xf32> to vector<4x2xf32>
    %889 = arith.mulf %888, %573 : vector<4x2xf32>
    %890 = arith.subf %887, %889 : vector<4x2xf32>
    %891 = vector.broadcast %882 : vector<1x2xf32> to vector<4x2xf32>
    %892 = arith.mulf %891, %573 : vector<4x2xf32>
    %893 = vector.broadcast %885 : vector<1x2xf32> to vector<4x2xf32>
    %894 = arith.mulf %893, %567 : vector<4x2xf32>
    %895 = arith.addf %892, %894 : vector<4x2xf32>
    %896 = vector.extract_strided_slice %737 {offsets = [2, 1, 0], sizes = [1, 1, 2], strides = [1, 1, 1]} : vector<4x4x2xf32> to vector<1x1x2xf32>
    %897 = vector.shape_cast %896 : vector<1x1x2xf32> to vector<2xf32>
    %898 = vector.shape_cast %897 : vector<2xf32> to vector<1x2xf32>
    %899 = vector.extract_strided_slice %739 {offsets = [2, 1, 0], sizes = [1, 1, 2], strides = [1, 1, 1]} : vector<4x4x2xf32> to vector<1x1x2xf32>
    %900 = vector.shape_cast %899 : vector<1x1x2xf32> to vector<2xf32>
    %901 = vector.shape_cast %900 : vector<2xf32> to vector<1x2xf32>
    %902 = vector.broadcast %898 : vector<1x2xf32> to vector<4x2xf32>
    %903 = arith.mulf %902, %621 : vector<4x2xf32>
    %904 = vector.broadcast %901 : vector<1x2xf32> to vector<4x2xf32>
    %905 = arith.mulf %904, %627 : vector<4x2xf32>
    %906 = arith.subf %903, %905 : vector<4x2xf32>
    %907 = arith.addf %890, %906 : vector<4x2xf32>
    %908 = vector.broadcast %898 : vector<1x2xf32> to vector<4x2xf32>
    %909 = arith.mulf %908, %627 : vector<4x2xf32>
    %910 = vector.broadcast %901 : vector<1x2xf32> to vector<4x2xf32>
    %911 = arith.mulf %910, %621 : vector<4x2xf32>
    %912 = arith.addf %909, %911 : vector<4x2xf32>
    %913 = arith.addf %895, %912 : vector<4x2xf32>
    %914 = vector.extract_strided_slice %737 {offsets = [2, 2, 0], sizes = [1, 1, 2], strides = [1, 1, 1]} : vector<4x4x2xf32> to vector<1x1x2xf32>
    %915 = vector.shape_cast %914 : vector<1x1x2xf32> to vector<2xf32>
    %916 = vector.shape_cast %915 : vector<2xf32> to vector<1x2xf32>
    %917 = vector.extract_strided_slice %739 {offsets = [2, 2, 0], sizes = [1, 1, 2], strides = [1, 1, 1]} : vector<4x4x2xf32> to vector<1x1x2xf32>
    %918 = vector.shape_cast %917 : vector<1x1x2xf32> to vector<2xf32>
    %919 = vector.shape_cast %918 : vector<2xf32> to vector<1x2xf32>
    %920 = vector.broadcast %916 : vector<1x2xf32> to vector<4x2xf32>
    %921 = arith.mulf %920, %675 : vector<4x2xf32>
    %922 = vector.broadcast %919 : vector<1x2xf32> to vector<4x2xf32>
    %923 = arith.mulf %922, %681 : vector<4x2xf32>
    %924 = arith.subf %921, %923 : vector<4x2xf32>
    %925 = arith.addf %907, %924 : vector<4x2xf32>
    %926 = vector.broadcast %916 : vector<1x2xf32> to vector<4x2xf32>
    %927 = arith.mulf %926, %681 : vector<4x2xf32>
    %928 = vector.broadcast %919 : vector<1x2xf32> to vector<4x2xf32>
    %929 = arith.mulf %928, %675 : vector<4x2xf32>
    %930 = arith.addf %927, %929 : vector<4x2xf32>
    %931 = arith.addf %913, %930 : vector<4x2xf32>
    %932 = vector.extract_strided_slice %737 {offsets = [2, 3, 0], sizes = [1, 1, 2], strides = [1, 1, 1]} : vector<4x4x2xf32> to vector<1x1x2xf32>
    %933 = vector.shape_cast %932 : vector<1x1x2xf32> to vector<2xf32>
    %934 = vector.shape_cast %933 : vector<2xf32> to vector<1x2xf32>
    %935 = vector.extract_strided_slice %739 {offsets = [2, 3, 0], sizes = [1, 1, 2], strides = [1, 1, 1]} : vector<4x4x2xf32> to vector<1x1x2xf32>
    %936 = vector.shape_cast %935 : vector<1x1x2xf32> to vector<2xf32>
    %937 = vector.shape_cast %936 : vector<2xf32> to vector<1x2xf32>
    %938 = vector.broadcast %934 : vector<1x2xf32> to vector<4x2xf32>
    %939 = arith.mulf %938, %729 : vector<4x2xf32>
    %940 = vector.broadcast %937 : vector<1x2xf32> to vector<4x2xf32>
    %941 = arith.mulf %940, %735 : vector<4x2xf32>
    %942 = arith.subf %939, %941 : vector<4x2xf32>
    %943 = arith.addf %925, %942 : vector<4x2xf32>
    %944 = vector.broadcast %934 : vector<1x2xf32> to vector<4x2xf32>
    %945 = arith.mulf %944, %735 : vector<4x2xf32>
    %946 = vector.broadcast %937 : vector<1x2xf32> to vector<4x2xf32>
    %947 = arith.mulf %946, %729 : vector<4x2xf32>
    %948 = arith.addf %945, %947 : vector<4x2xf32>
    %949 = arith.addf %931, %948 : vector<4x2xf32>
    %950 = vector.extract_strided_slice %737 {offsets = [3, 0, 0], sizes = [1, 1, 2], strides = [1, 1, 1]} : vector<4x4x2xf32> to vector<1x1x2xf32>
    %951 = vector.shape_cast %950 : vector<1x1x2xf32> to vector<2xf32>
    %952 = vector.shape_cast %951 : vector<2xf32> to vector<1x2xf32>
    %953 = vector.extract_strided_slice %739 {offsets = [3, 0, 0], sizes = [1, 1, 2], strides = [1, 1, 1]} : vector<4x4x2xf32> to vector<1x1x2xf32>
    %954 = vector.shape_cast %953 : vector<1x1x2xf32> to vector<2xf32>
    %955 = vector.shape_cast %954 : vector<2xf32> to vector<1x2xf32>
    %956 = vector.broadcast %952 : vector<1x2xf32> to vector<4x2xf32>
    %957 = arith.mulf %956, %567 : vector<4x2xf32>
    %958 = vector.broadcast %955 : vector<1x2xf32> to vector<4x2xf32>
    %959 = arith.mulf %958, %573 : vector<4x2xf32>
    %960 = arith.subf %957, %959 : vector<4x2xf32>
    %961 = vector.broadcast %952 : vector<1x2xf32> to vector<4x2xf32>
    %962 = arith.mulf %961, %573 : vector<4x2xf32>
    %963 = vector.broadcast %955 : vector<1x2xf32> to vector<4x2xf32>
    %964 = arith.mulf %963, %567 : vector<4x2xf32>
    %965 = arith.addf %962, %964 : vector<4x2xf32>
    %966 = vector.extract_strided_slice %737 {offsets = [3, 1, 0], sizes = [1, 1, 2], strides = [1, 1, 1]} : vector<4x4x2xf32> to vector<1x1x2xf32>
    %967 = vector.shape_cast %966 : vector<1x1x2xf32> to vector<2xf32>
    %968 = vector.shape_cast %967 : vector<2xf32> to vector<1x2xf32>
    %969 = vector.extract_strided_slice %739 {offsets = [3, 1, 0], sizes = [1, 1, 2], strides = [1, 1, 1]} : vector<4x4x2xf32> to vector<1x1x2xf32>
    %970 = vector.shape_cast %969 : vector<1x1x2xf32> to vector<2xf32>
    %971 = vector.shape_cast %970 : vector<2xf32> to vector<1x2xf32>
    %972 = vector.broadcast %968 : vector<1x2xf32> to vector<4x2xf32>
    %973 = arith.mulf %972, %621 : vector<4x2xf32>
    %974 = vector.broadcast %971 : vector<1x2xf32> to vector<4x2xf32>
    %975 = arith.mulf %974, %627 : vector<4x2xf32>
    %976 = arith.subf %973, %975 : vector<4x2xf32>
    %977 = arith.addf %960, %976 : vector<4x2xf32>
    %978 = vector.broadcast %968 : vector<1x2xf32> to vector<4x2xf32>
    %979 = arith.mulf %978, %627 : vector<4x2xf32>
    %980 = vector.broadcast %971 : vector<1x2xf32> to vector<4x2xf32>
    %981 = arith.mulf %980, %621 : vector<4x2xf32>
    %982 = arith.addf %979, %981 : vector<4x2xf32>
    %983 = arith.addf %965, %982 : vector<4x2xf32>
    %984 = vector.extract_strided_slice %737 {offsets = [3, 2, 0], sizes = [1, 1, 2], strides = [1, 1, 1]} : vector<4x4x2xf32> to vector<1x1x2xf32>
    %985 = vector.shape_cast %984 : vector<1x1x2xf32> to vector<2xf32>
    %986 = vector.shape_cast %985 : vector<2xf32> to vector<1x2xf32>
    %987 = vector.extract_strided_slice %739 {offsets = [3, 2, 0], sizes = [1, 1, 2], strides = [1, 1, 1]} : vector<4x4x2xf32> to vector<1x1x2xf32>
    %988 = vector.shape_cast %987 : vector<1x1x2xf32> to vector<2xf32>
    %989 = vector.shape_cast %988 : vector<2xf32> to vector<1x2xf32>
    %990 = vector.broadcast %986 : vector<1x2xf32> to vector<4x2xf32>
    %991 = arith.mulf %990, %675 : vector<4x2xf32>
    %992 = vector.broadcast %989 : vector<1x2xf32> to vector<4x2xf32>
    %993 = arith.mulf %992, %681 : vector<4x2xf32>
    %994 = arith.subf %991, %993 : vector<4x2xf32>
    %995 = arith.addf %977, %994 : vector<4x2xf32>
    %996 = vector.broadcast %986 : vector<1x2xf32> to vector<4x2xf32>
    %997 = arith.mulf %996, %681 : vector<4x2xf32>
    %998 = vector.broadcast %989 : vector<1x2xf32> to vector<4x2xf32>
    %999 = arith.mulf %998, %675 : vector<4x2xf32>
    %1000 = arith.addf %997, %999 : vector<4x2xf32>
    %1001 = arith.addf %983, %1000 : vector<4x2xf32>
    %1002 = vector.extract_strided_slice %737 {offsets = [3, 3, 0], sizes = [1, 1, 2], strides = [1, 1, 1]} : vector<4x4x2xf32> to vector<1x1x2xf32>
    %1003 = vector.shape_cast %1002 : vector<1x1x2xf32> to vector<2xf32>
    %1004 = vector.shape_cast %1003 : vector<2xf32> to vector<1x2xf32>
    %1005 = vector.extract_strided_slice %739 {offsets = [3, 3, 0], sizes = [1, 1, 2], strides = [1, 1, 1]} : vector<4x4x2xf32> to vector<1x1x2xf32>
    %1006 = vector.shape_cast %1005 : vector<1x1x2xf32> to vector<2xf32>
    %1007 = vector.shape_cast %1006 : vector<2xf32> to vector<1x2xf32>
    %1008 = vector.broadcast %1004 : vector<1x2xf32> to vector<4x2xf32>
    %1009 = arith.mulf %1008, %729 : vector<4x2xf32>
    %1010 = vector.broadcast %1007 : vector<1x2xf32> to vector<4x2xf32>
    %1011 = arith.mulf %1010, %735 : vector<4x2xf32>
    %1012 = arith.subf %1009, %1011 : vector<4x2xf32>
    %1013 = arith.addf %995, %1012 : vector<4x2xf32>
    %1014 = vector.broadcast %1004 : vector<1x2xf32> to vector<4x2xf32>
    %1015 = arith.mulf %1014, %735 : vector<4x2xf32>
    %1016 = vector.broadcast %1007 : vector<1x2xf32> to vector<4x2xf32>
    %1017 = arith.mulf %1016, %729 : vector<4x2xf32>
    %1018 = arith.addf %1015, %1017 : vector<4x2xf32>
    %1019 = arith.addf %1001, %1018 : vector<4x2xf32>
    %c32 = arith.constant 32 : index
    %1020 = memref.load %arg6[%c32] : memref<48xf32, #tpu.memory_space<smem>>
    %c32_56 = arith.constant 32 : index
    %1021 = memref.load %arg7[%c32_56] : memref<48xf32, #tpu.memory_space<smem>>
    %1022 = vector.broadcast %1020 : f32 to vector<4x2xf32>
    %1023 = arith.mulf %1022, %803 : vector<4x2xf32>
    %1024 = vector.broadcast %1021 : f32 to vector<4x2xf32>
    %1025 = arith.mulf %1024, %809 : vector<4x2xf32>
    %1026 = arith.subf %1023, %1025 : vector<4x2xf32>
    %1027 = vector.broadcast %1020 : f32 to vector<4x2xf32>
    %1028 = arith.mulf %1027, %809 : vector<4x2xf32>
    %1029 = vector.broadcast %1021 : f32 to vector<4x2xf32>
    %1030 = arith.mulf %1029, %803 : vector<4x2xf32>
    %1031 = arith.addf %1028, %1030 : vector<4x2xf32>
    %c33 = arith.constant 33 : index
    %1032 = memref.load %arg6[%c33] : memref<48xf32, #tpu.memory_space<smem>>
    %c33_57 = arith.constant 33 : index
    %1033 = memref.load %arg7[%c33_57] : memref<48xf32, #tpu.memory_space<smem>>
    %1034 = vector.broadcast %1032 : f32 to vector<4x2xf32>
    %1035 = arith.mulf %1034, %873 : vector<4x2xf32>
    %1036 = vector.broadcast %1033 : f32 to vector<4x2xf32>
    %1037 = arith.mulf %1036, %879 : vector<4x2xf32>
    %1038 = arith.subf %1035, %1037 : vector<4x2xf32>
    %1039 = arith.addf %1026, %1038 : vector<4x2xf32>
    %1040 = vector.broadcast %1032 : f32 to vector<4x2xf32>
    %1041 = arith.mulf %1040, %879 : vector<4x2xf32>
    %1042 = vector.broadcast %1033 : f32 to vector<4x2xf32>
    %1043 = arith.mulf %1042, %873 : vector<4x2xf32>
    %1044 = arith.addf %1041, %1043 : vector<4x2xf32>
    %1045 = arith.addf %1031, %1044 : vector<4x2xf32>
    %c34 = arith.constant 34 : index
    %1046 = memref.load %arg6[%c34] : memref<48xf32, #tpu.memory_space<smem>>
    %c34_58 = arith.constant 34 : index
    %1047 = memref.load %arg7[%c34_58] : memref<48xf32, #tpu.memory_space<smem>>
    %1048 = vector.broadcast %1046 : f32 to vector<4x2xf32>
    %1049 = arith.mulf %1048, %943 : vector<4x2xf32>
    %1050 = vector.broadcast %1047 : f32 to vector<4x2xf32>
    %1051 = arith.mulf %1050, %949 : vector<4x2xf32>
    %1052 = arith.subf %1049, %1051 : vector<4x2xf32>
    %1053 = arith.addf %1039, %1052 : vector<4x2xf32>
    %1054 = vector.broadcast %1046 : f32 to vector<4x2xf32>
    %1055 = arith.mulf %1054, %949 : vector<4x2xf32>
    %1056 = vector.broadcast %1047 : f32 to vector<4x2xf32>
    %1057 = arith.mulf %1056, %943 : vector<4x2xf32>
    %1058 = arith.addf %1055, %1057 : vector<4x2xf32>
    %1059 = arith.addf %1045, %1058 : vector<4x2xf32>
    %c35 = arith.constant 35 : index
    %1060 = memref.load %arg6[%c35] : memref<48xf32, #tpu.memory_space<smem>>
    %c35_59 = arith.constant 35 : index
    %1061 = memref.load %arg7[%c35_59] : memref<48xf32, #tpu.memory_space<smem>>
    %1062 = vector.broadcast %1060 : f32 to vector<4x2xf32>
    %1063 = arith.mulf %1062, %1013 : vector<4x2xf32>
    %1064 = vector.broadcast %1061 : f32 to vector<4x2xf32>
    %1065 = arith.mulf %1064, %1019 : vector<4x2xf32>
    %1066 = arith.subf %1063, %1065 : vector<4x2xf32>
    %1067 = arith.addf %1053, %1066 : vector<4x2xf32>
    %1068 = vector.broadcast %1060 : f32 to vector<4x2xf32>
    %1069 = arith.mulf %1068, %1019 : vector<4x2xf32>
    %1070 = vector.broadcast %1061 : f32 to vector<4x2xf32>
    %1071 = arith.mulf %1070, %1013 : vector<4x2xf32>
    %1072 = arith.addf %1069, %1071 : vector<4x2xf32>
    %1073 = arith.addf %1059, %1072 : vector<4x2xf32>
    %c36 = arith.constant 36 : index
    %1074 = memref.load %arg6[%c36] : memref<48xf32, #tpu.memory_space<smem>>
    %c36_60 = arith.constant 36 : index
    %1075 = memref.load %arg7[%c36_60] : memref<48xf32, #tpu.memory_space<smem>>
    %1076 = vector.broadcast %1074 : f32 to vector<4x2xf32>
    %1077 = arith.mulf %1076, %803 : vector<4x2xf32>
    %1078 = vector.broadcast %1075 : f32 to vector<4x2xf32>
    %1079 = arith.mulf %1078, %809 : vector<4x2xf32>
    %1080 = arith.subf %1077, %1079 : vector<4x2xf32>
    %1081 = vector.broadcast %1074 : f32 to vector<4x2xf32>
    %1082 = arith.mulf %1081, %809 : vector<4x2xf32>
    %1083 = vector.broadcast %1075 : f32 to vector<4x2xf32>
    %1084 = arith.mulf %1083, %803 : vector<4x2xf32>
    %1085 = arith.addf %1082, %1084 : vector<4x2xf32>
    %c37 = arith.constant 37 : index
    %1086 = memref.load %arg6[%c37] : memref<48xf32, #tpu.memory_space<smem>>
    %c37_61 = arith.constant 37 : index
    %1087 = memref.load %arg7[%c37_61] : memref<48xf32, #tpu.memory_space<smem>>
    %1088 = vector.broadcast %1086 : f32 to vector<4x2xf32>
    %1089 = arith.mulf %1088, %873 : vector<4x2xf32>
    %1090 = vector.broadcast %1087 : f32 to vector<4x2xf32>
    %1091 = arith.mulf %1090, %879 : vector<4x2xf32>
    %1092 = arith.subf %1089, %1091 : vector<4x2xf32>
    %1093 = arith.addf %1080, %1092 : vector<4x2xf32>
    %1094 = vector.broadcast %1086 : f32 to vector<4x2xf32>
    %1095 = arith.mulf %1094, %879 : vector<4x2xf32>
    %1096 = vector.broadcast %1087 : f32 to vector<4x2xf32>
    %1097 = arith.mulf %1096, %873 : vector<4x2xf32>
    %1098 = arith.addf %1095, %1097 : vector<4x2xf32>
    %1099 = arith.addf %1085, %1098 : vector<4x2xf32>
    %c38 = arith.constant 38 : index
    %1100 = memref.load %arg6[%c38] : memref<48xf32, #tpu.memory_space<smem>>
    %c38_62 = arith.constant 38 : index
    %1101 = memref.load %arg7[%c38_62] : memref<48xf32, #tpu.memory_space<smem>>
    %1102 = vector.broadcast %1100 : f32 to vector<4x2xf32>
    %1103 = arith.mulf %1102, %943 : vector<4x2xf32>
    %1104 = vector.broadcast %1101 : f32 to vector<4x2xf32>
    %1105 = arith.mulf %1104, %949 : vector<4x2xf32>
    %1106 = arith.subf %1103, %1105 : vector<4x2xf32>
    %1107 = arith.addf %1093, %1106 : vector<4x2xf32>
    %1108 = vector.broadcast %1100 : f32 to vector<4x2xf32>
    %1109 = arith.mulf %1108, %949 : vector<4x2xf32>
    %1110 = vector.broadcast %1101 : f32 to vector<4x2xf32>
    %1111 = arith.mulf %1110, %943 : vector<4x2xf32>
    %1112 = arith.addf %1109, %1111 : vector<4x2xf32>
    %1113 = arith.addf %1099, %1112 : vector<4x2xf32>
    %c39 = arith.constant 39 : index
    %1114 = memref.load %arg6[%c39] : memref<48xf32, #tpu.memory_space<smem>>
    %c39_63 = arith.constant 39 : index
    %1115 = memref.load %arg7[%c39_63] : memref<48xf32, #tpu.memory_space<smem>>
    %1116 = vector.broadcast %1114 : f32 to vector<4x2xf32>
    %1117 = arith.mulf %1116, %1013 : vector<4x2xf32>
    %1118 = vector.broadcast %1115 : f32 to vector<4x2xf32>
    %1119 = arith.mulf %1118, %1019 : vector<4x2xf32>
    %1120 = arith.subf %1117, %1119 : vector<4x2xf32>
    %1121 = arith.addf %1107, %1120 : vector<4x2xf32>
    %1122 = vector.broadcast %1114 : f32 to vector<4x2xf32>
    %1123 = arith.mulf %1122, %1019 : vector<4x2xf32>
    %1124 = vector.broadcast %1115 : f32 to vector<4x2xf32>
    %1125 = arith.mulf %1124, %1013 : vector<4x2xf32>
    %1126 = arith.addf %1123, %1125 : vector<4x2xf32>
    %1127 = arith.addf %1113, %1126 : vector<4x2xf32>
    %c40 = arith.constant 40 : index
    %1128 = memref.load %arg6[%c40] : memref<48xf32, #tpu.memory_space<smem>>
    %c40_64 = arith.constant 40 : index
    %1129 = memref.load %arg7[%c40_64] : memref<48xf32, #tpu.memory_space<smem>>
    %1130 = vector.broadcast %1128 : f32 to vector<4x2xf32>
    %1131 = arith.mulf %1130, %803 : vector<4x2xf32>
    %1132 = vector.broadcast %1129 : f32 to vector<4x2xf32>
    %1133 = arith.mulf %1132, %809 : vector<4x2xf32>
    %1134 = arith.subf %1131, %1133 : vector<4x2xf32>
    %1135 = vector.broadcast %1128 : f32 to vector<4x2xf32>
    %1136 = arith.mulf %1135, %809 : vector<4x2xf32>
    %1137 = vector.broadcast %1129 : f32 to vector<4x2xf32>
    %1138 = arith.mulf %1137, %803 : vector<4x2xf32>
    %1139 = arith.addf %1136, %1138 : vector<4x2xf32>
    %c41 = arith.constant 41 : index
    %1140 = memref.load %arg6[%c41] : memref<48xf32, #tpu.memory_space<smem>>
    %c41_65 = arith.constant 41 : index
    %1141 = memref.load %arg7[%c41_65] : memref<48xf32, #tpu.memory_space<smem>>
    %1142 = vector.broadcast %1140 : f32 to vector<4x2xf32>
    %1143 = arith.mulf %1142, %873 : vector<4x2xf32>
    %1144 = vector.broadcast %1141 : f32 to vector<4x2xf32>
    %1145 = arith.mulf %1144, %879 : vector<4x2xf32>
    %1146 = arith.subf %1143, %1145 : vector<4x2xf32>
    %1147 = arith.addf %1134, %1146 : vector<4x2xf32>
    %1148 = vector.broadcast %1140 : f32 to vector<4x2xf32>
    %1149 = arith.mulf %1148, %879 : vector<4x2xf32>
    %1150 = vector.broadcast %1141 : f32 to vector<4x2xf32>
    %1151 = arith.mulf %1150, %873 : vector<4x2xf32>
    %1152 = arith.addf %1149, %1151 : vector<4x2xf32>
    %1153 = arith.addf %1139, %1152 : vector<4x2xf32>
    %c42 = arith.constant 42 : index
    %1154 = memref.load %arg6[%c42] : memref<48xf32, #tpu.memory_space<smem>>
    %c42_66 = arith.constant 42 : index
    %1155 = memref.load %arg7[%c42_66] : memref<48xf32, #tpu.memory_space<smem>>
    %1156 = vector.broadcast %1154 : f32 to vector<4x2xf32>
    %1157 = arith.mulf %1156, %943 : vector<4x2xf32>
    %1158 = vector.broadcast %1155 : f32 to vector<4x2xf32>
    %1159 = arith.mulf %1158, %949 : vector<4x2xf32>
    %1160 = arith.subf %1157, %1159 : vector<4x2xf32>
    %1161 = arith.addf %1147, %1160 : vector<4x2xf32>
    %1162 = vector.broadcast %1154 : f32 to vector<4x2xf32>
    %1163 = arith.mulf %1162, %949 : vector<4x2xf32>
    %1164 = vector.broadcast %1155 : f32 to vector<4x2xf32>
    %1165 = arith.mulf %1164, %943 : vector<4x2xf32>
    %1166 = arith.addf %1163, %1165 : vector<4x2xf32>
    %1167 = arith.addf %1153, %1166 : vector<4x2xf32>
    %c43 = arith.constant 43 : index
    %1168 = memref.load %arg6[%c43] : memref<48xf32, #tpu.memory_space<smem>>
    %c43_67 = arith.constant 43 : index
    %1169 = memref.load %arg7[%c43_67] : memref<48xf32, #tpu.memory_space<smem>>
    %1170 = vector.broadcast %1168 : f32 to vector<4x2xf32>
    %1171 = arith.mulf %1170, %1013 : vector<4x2xf32>
    %1172 = vector.broadcast %1169 : f32 to vector<4x2xf32>
    %1173 = arith.mulf %1172, %1019 : vector<4x2xf32>
    %1174 = arith.subf %1171, %1173 : vector<4x2xf32>
    %1175 = arith.addf %1161, %1174 : vector<4x2xf32>
    %1176 = vector.broadcast %1168 : f32 to vector<4x2xf32>
    %1177 = arith.mulf %1176, %1019 : vector<4x2xf32>
    %1178 = vector.broadcast %1169 : f32 to vector<4x2xf32>
    %1179 = arith.mulf %1178, %1013 : vector<4x2xf32>
    %1180 = arith.addf %1177, %1179 : vector<4x2xf32>
    %1181 = arith.addf %1167, %1180 : vector<4x2xf32>
    %c44 = arith.constant 44 : index
    %1182 = memref.load %arg6[%c44] : memref<48xf32, #tpu.memory_space<smem>>
    %c44_68 = arith.constant 44 : index
    %1183 = memref.load %arg7[%c44_68] : memref<48xf32, #tpu.memory_space<smem>>
    %1184 = vector.broadcast %1182 : f32 to vector<4x2xf32>
    %1185 = arith.mulf %1184, %803 : vector<4x2xf32>
    %1186 = vector.broadcast %1183 : f32 to vector<4x2xf32>
    %1187 = arith.mulf %1186, %809 : vector<4x2xf32>
    %1188 = arith.subf %1185, %1187 : vector<4x2xf32>
    %1189 = vector.broadcast %1182 : f32 to vector<4x2xf32>
    %1190 = arith.mulf %1189, %809 : vector<4x2xf32>
    %1191 = vector.broadcast %1183 : f32 to vector<4x2xf32>
    %1192 = arith.mulf %1191, %803 : vector<4x2xf32>
    %1193 = arith.addf %1190, %1192 : vector<4x2xf32>
    %c45 = arith.constant 45 : index
    %1194 = memref.load %arg6[%c45] : memref<48xf32, #tpu.memory_space<smem>>
    %c45_69 = arith.constant 45 : index
    %1195 = memref.load %arg7[%c45_69] : memref<48xf32, #tpu.memory_space<smem>>
    %1196 = vector.broadcast %1194 : f32 to vector<4x2xf32>
    %1197 = arith.mulf %1196, %873 : vector<4x2xf32>
    %1198 = vector.broadcast %1195 : f32 to vector<4x2xf32>
    %1199 = arith.mulf %1198, %879 : vector<4x2xf32>
    %1200 = arith.subf %1197, %1199 : vector<4x2xf32>
    %1201 = arith.addf %1188, %1200 : vector<4x2xf32>
    %1202 = vector.broadcast %1194 : f32 to vector<4x2xf32>
    %1203 = arith.mulf %1202, %879 : vector<4x2xf32>
    %1204 = vector.broadcast %1195 : f32 to vector<4x2xf32>
    %1205 = arith.mulf %1204, %873 : vector<4x2xf32>
    %1206 = arith.addf %1203, %1205 : vector<4x2xf32>
    %1207 = arith.addf %1193, %1206 : vector<4x2xf32>
    %c46 = arith.constant 46 : index
    %1208 = memref.load %arg6[%c46] : memref<48xf32, #tpu.memory_space<smem>>
    %c46_70 = arith.constant 46 : index
    %1209 = memref.load %arg7[%c46_70] : memref<48xf32, #tpu.memory_space<smem>>
    %1210 = vector.broadcast %1208 : f32 to vector<4x2xf32>
    %1211 = arith.mulf %1210, %943 : vector<4x2xf32>
    %1212 = vector.broadcast %1209 : f32 to vector<4x2xf32>
    %1213 = arith.mulf %1212, %949 : vector<4x2xf32>
    %1214 = arith.subf %1211, %1213 : vector<4x2xf32>
    %1215 = arith.addf %1201, %1214 : vector<4x2xf32>
    %1216 = vector.broadcast %1208 : f32 to vector<4x2xf32>
    %1217 = arith.mulf %1216, %949 : vector<4x2xf32>
    %1218 = vector.broadcast %1209 : f32 to vector<4x2xf32>
    %1219 = arith.mulf %1218, %943 : vector<4x2xf32>
    %1220 = arith.addf %1217, %1219 : vector<4x2xf32>
    %1221 = arith.addf %1207, %1220 : vector<4x2xf32>
    %c47 = arith.constant 47 : index
    %1222 = memref.load %arg6[%c47] : memref<48xf32, #tpu.memory_space<smem>>
    %c47_71 = arith.constant 47 : index
    %1223 = memref.load %arg7[%c47_71] : memref<48xf32, #tpu.memory_space<smem>>
    %1224 = vector.broadcast %1222 : f32 to vector<4x2xf32>
    %1225 = arith.mulf %1224, %1013 : vector<4x2xf32>
    %1226 = vector.broadcast %1223 : f32 to vector<4x2xf32>
    %1227 = arith.mulf %1226, %1019 : vector<4x2xf32>
    %1228 = arith.subf %1225, %1227 : vector<4x2xf32>
    %1229 = arith.addf %1215, %1228 : vector<4x2xf32>
    %1230 = vector.broadcast %1222 : f32 to vector<4x2xf32>
    %1231 = arith.mulf %1230, %1019 : vector<4x2xf32>
    %1232 = vector.broadcast %1223 : f32 to vector<4x2xf32>
    %1233 = arith.mulf %1232, %1013 : vector<4x2xf32>
    %1234 = arith.addf %1231, %1233 : vector<4x2xf32>
    %1235 = arith.addf %1221, %1234 : vector<4x2xf32>
    %c0_72 = arith.constant 0 : index
    %c0_73 = arith.constant 0 : index
    %c0_74 = arith.constant 0 : index
    %1236 = vector.load %arg3[%c0_72, %c0_73, %c0_74] : memref<4x4x2xf32, #tpu.memory_space<vmem>>, vector<1x4x2xf32>
    %1237 = vector.shape_cast %1236 : vector<1x4x2xf32> to vector<4x2xf32>
    %1238 = arith.subf %1237, %1067 : vector<4x2xf32>
    %c1_75 = arith.constant 1 : index
    %c0_76 = arith.constant 0 : index
    %c0_77 = arith.constant 0 : index
    %1239 = vector.load %arg3[%c1_75, %c0_76, %c0_77] : memref<4x4x2xf32, #tpu.memory_space<vmem>>, vector<1x4x2xf32>
    %1240 = vector.shape_cast %1239 : vector<1x4x2xf32> to vector<4x2xf32>
    %1241 = arith.subf %1240, %1121 : vector<4x2xf32>
    %c2_78 = arith.constant 2 : index
    %c0_79 = arith.constant 0 : index
    %c0_80 = arith.constant 0 : index
    %1242 = vector.load %arg3[%c2_78, %c0_79, %c0_80] : memref<4x4x2xf32, #tpu.memory_space<vmem>>, vector<1x4x2xf32>
    %1243 = vector.shape_cast %1242 : vector<1x4x2xf32> to vector<4x2xf32>
    %1244 = arith.subf %1243, %1175 : vector<4x2xf32>
    %c3_81 = arith.constant 3 : index
    %c0_82 = arith.constant 0 : index
    %c0_83 = arith.constant 0 : index
    %1245 = vector.load %arg3[%c3_81, %c0_82, %c0_83] : memref<4x4x2xf32, #tpu.memory_space<vmem>>, vector<1x4x2xf32>
    %1246 = vector.shape_cast %1245 : vector<1x4x2xf32> to vector<4x2xf32>
    %1247 = arith.subf %1246, %1229 : vector<4x2xf32>
    %c0_84 = arith.constant 0 : index
    %c0_85 = arith.constant 0 : index
    %c0_86 = arith.constant 0 : index
    %1248 = vector.load %arg4[%c0_84, %c0_85, %c0_86] : memref<4x4x2xf32, #tpu.memory_space<vmem>>, vector<1x4x2xf32>
    %1249 = vector.shape_cast %1248 : vector<1x4x2xf32> to vector<4x2xf32>
    %1250 = arith.subf %1249, %1073 : vector<4x2xf32>
    %c1_87 = arith.constant 1 : index
    %c0_88 = arith.constant 0 : index
    %c0_89 = arith.constant 0 : index
    %1251 = vector.load %arg4[%c1_87, %c0_88, %c0_89] : memref<4x4x2xf32, #tpu.memory_space<vmem>>, vector<1x4x2xf32>
    %1252 = vector.shape_cast %1251 : vector<1x4x2xf32> to vector<4x2xf32>
    %1253 = arith.subf %1252, %1127 : vector<4x2xf32>
    %c2_90 = arith.constant 2 : index
    %c0_91 = arith.constant 0 : index
    %c0_92 = arith.constant 0 : index
    %1254 = vector.load %arg4[%c2_90, %c0_91, %c0_92] : memref<4x4x2xf32, #tpu.memory_space<vmem>>, vector<1x4x2xf32>
    %1255 = vector.shape_cast %1254 : vector<1x4x2xf32> to vector<4x2xf32>
    %1256 = arith.subf %1255, %1181 : vector<4x2xf32>
    %c3_93 = arith.constant 3 : index
    %c0_94 = arith.constant 0 : index
    %c0_95 = arith.constant 0 : index
    %1257 = vector.load %arg4[%c3_93, %c0_94, %c0_95] : memref<4x4x2xf32, #tpu.memory_space<vmem>>, vector<1x4x2xf32>
    %1258 = vector.shape_cast %1257 : vector<1x4x2xf32> to vector<4x2xf32>
    %1259 = arith.subf %1258, %1235 : vector<4x2xf32>
    %c0_96 = arith.constant 0 : index
    %c0_97 = arith.constant 0 : index
    %1260 = vector.load %arg5[%c0_96, %c0_97] : memref<8x2xf32, #tpu.memory_space<vmem>>, vector<8x2xf32>
    %c0_98 = arith.constant 0 : index
    %c0_99 = arith.constant 0 : index
    %1261 = vector.load %arg8[%c0_98, %c0_99] : memref<32x8xf32, #tpu.memory_space<vmem>>, vector<32x8xf32>
    %cst = arith.constant dense<0.000000e+00> : vector<32x2xf32>
    %1262 = tpu.matmul %1261, %1260, %cst {dimension_numbers = #tpu.dot_dimension_numbers<[1], [0], [0], [1], [0, 0, 1, 1], [], []>} : vector<32x8xf32>, vector<8x2xf32>, vector<32x2xf32> -> vector<32x2xf32>
    %c0_100 = arith.constant 0 : index
    %c0_101 = arith.constant 0 : index
    %1263 = vector.load %arg9[%c0_100, %c0_101] : memref<32x1xf32, #tpu.memory_space<vmem>>, vector<32x1xf32>
    %1264 = vector.broadcast %1263 : vector<32x1xf32> to vector<32x2xf32>
    %1265 = arith.addf %1262, %1264 : vector<32x2xf32>
    %c0_102 = arith.constant 0 : index
    %c0_103 = arith.constant 0 : index
    %1266 = vector.load %arg14[%c0_102, %c0_103] : memref<32x32xf32, #tpu.memory_space<vmem>>, vector<32x32xf32>
    %cst_104 = arith.constant dense<0.000000e+00> : vector<32x2xf32>
    %1267 = tpu.matmul %1266, %1265, %cst_104 {dimension_numbers = #tpu.dot_dimension_numbers<[1], [0], [0], [1], [0, 0, 1, 1], [], []>} : vector<32x32xf32>, vector<32x2xf32>, vector<32x2xf32> -> vector<32x2xf32>
    %c0_105 = arith.constant 0 : index
    %c0_106 = arith.constant 0 : index
    %1268 = vector.load %arg16[%c0_105, %c0_106] : memref<32x1xf32, #tpu.memory_space<vmem>>, vector<32x1xf32>
    %1269 = vector.broadcast %1268 : vector<32x1xf32> to vector<32x2xf32>
    %1270 = arith.addf %1267, %1269 : vector<32x2xf32>
    %c0_107 = arith.constant 0 : index
    %c0_108 = arith.constant 0 : index
    %1271 = vector.load %arg15[%c0_107, %c0_108] : memref<32x32xf32, #tpu.memory_space<vmem>>, vector<32x32xf32>
    %cst_109 = arith.constant dense<0.000000e+00> : vector<32x2xf32>
    %1272 = tpu.matmul %1271, %1265, %cst_109 {dimension_numbers = #tpu.dot_dimension_numbers<[1], [0], [0], [1], [0, 0, 1, 1], [], []>} : vector<32x32xf32>, vector<32x2xf32>, vector<32x2xf32> -> vector<32x2xf32>
    %c0_110 = arith.constant 0 : index
    %c0_111 = arith.constant 0 : index
    %1273 = vector.load %arg17[%c0_110, %c0_111] : memref<32x1xf32, #tpu.memory_space<vmem>>, vector<32x1xf32>
    %1274 = vector.broadcast %1273 : vector<32x1xf32> to vector<32x2xf32>
    %1275 = arith.addf %1272, %1274 : vector<32x2xf32>
    %c0_112 = arith.constant 0 : index
    %c0_113 = arith.constant 0 : index
    %c0_114 = arith.constant 0 : index
    %1276 = vector.load %arg10[%c0_112, %c0_113, %c0_114] : memref<4x32x4xf32, #tpu.memory_space<vmem>>, vector<1x32x4xf32>
    %1277 = vector.shape_cast %1276 : vector<1x32x4xf32> to vector<32x4xf32>
    %cst_115 = arith.constant dense<0.000000e+00> : vector<32x2xf32>
    %1278 = tpu.matmul %1277, %1238, %cst_115 {dimension_numbers = #tpu.dot_dimension_numbers<[1], [0], [0], [1], [0, 0, 1, 1], [], []>} : vector<32x4xf32>, vector<4x2xf32>, vector<32x2xf32> -> vector<32x2xf32>
    %1279 = arith.addf %1270, %1278 : vector<32x2xf32>
    %c0_116 = arith.constant 0 : index
    %c0_117 = arith.constant 0 : index
    %c0_118 = arith.constant 0 : index
    %1280 = vector.load %arg11[%c0_116, %c0_117, %c0_118] : memref<4x32x4xf32, #tpu.memory_space<vmem>>, vector<1x32x4xf32>
    %1281 = vector.shape_cast %1280 : vector<1x32x4xf32> to vector<32x4xf32>
    %cst_119 = arith.constant dense<0.000000e+00> : vector<32x2xf32>
    %1282 = tpu.matmul %1281, %1250, %cst_119 {dimension_numbers = #tpu.dot_dimension_numbers<[1], [0], [0], [1], [0, 0, 1, 1], [], []>} : vector<32x4xf32>, vector<4x2xf32>, vector<32x2xf32> -> vector<32x2xf32>
    %1283 = arith.addf %1279, %1282 : vector<32x2xf32>
    %c0_120 = arith.constant 0 : index
    %c0_121 = arith.constant 0 : index
    %c0_122 = arith.constant 0 : index
    %1284 = vector.load %arg12[%c0_120, %c0_121, %c0_122] : memref<4x32x4xf32, #tpu.memory_space<vmem>>, vector<1x32x4xf32>
    %1285 = vector.shape_cast %1284 : vector<1x32x4xf32> to vector<32x4xf32>
    %cst_123 = arith.constant dense<0.000000e+00> : vector<32x2xf32>
    %1286 = tpu.matmul %1285, %1238, %cst_123 {dimension_numbers = #tpu.dot_dimension_numbers<[1], [0], [0], [1], [0, 0, 1, 1], [], []>} : vector<32x4xf32>, vector<4x2xf32>, vector<32x2xf32> -> vector<32x2xf32>
    %1287 = arith.addf %1275, %1286 : vector<32x2xf32>
    %c0_124 = arith.constant 0 : index
    %c0_125 = arith.constant 0 : index
    %c0_126 = arith.constant 0 : index
    %1288 = vector.load %arg13[%c0_124, %c0_125, %c0_126] : memref<4x32x4xf32, #tpu.memory_space<vmem>>, vector<1x32x4xf32>
    %1289 = vector.shape_cast %1288 : vector<1x32x4xf32> to vector<32x4xf32>
    %cst_127 = arith.constant dense<0.000000e+00> : vector<32x2xf32>
    %1290 = tpu.matmul %1289, %1250, %cst_127 {dimension_numbers = #tpu.dot_dimension_numbers<[1], [0], [0], [1], [0, 0, 1, 1], [], []>} : vector<32x4xf32>, vector<4x2xf32>, vector<32x2xf32> -> vector<32x2xf32>
    %1291 = arith.addf %1287, %1290 : vector<32x2xf32>
    %c1_128 = arith.constant 1 : index
    %c0_129 = arith.constant 0 : index
    %c0_130 = arith.constant 0 : index
    %1292 = vector.load %arg10[%c1_128, %c0_129, %c0_130] : memref<4x32x4xf32, #tpu.memory_space<vmem>>, vector<1x32x4xf32>
    %1293 = vector.shape_cast %1292 : vector<1x32x4xf32> to vector<32x4xf32>
    %cst_131 = arith.constant dense<0.000000e+00> : vector<32x2xf32>
    %1294 = tpu.matmul %1293, %1241, %cst_131 {dimension_numbers = #tpu.dot_dimension_numbers<[1], [0], [0], [1], [0, 0, 1, 1], [], []>} : vector<32x4xf32>, vector<4x2xf32>, vector<32x2xf32> -> vector<32x2xf32>
    %1295 = arith.addf %1283, %1294 : vector<32x2xf32>
    %c1_132 = arith.constant 1 : index
    %c0_133 = arith.constant 0 : index
    %c0_134 = arith.constant 0 : index
    %1296 = vector.load %arg11[%c1_132, %c0_133, %c0_134] : memref<4x32x4xf32, #tpu.memory_space<vmem>>, vector<1x32x4xf32>
    %1297 = vector.shape_cast %1296 : vector<1x32x4xf32> to vector<32x4xf32>
    %cst_135 = arith.constant dense<0.000000e+00> : vector<32x2xf32>
    %1298 = tpu.matmul %1297, %1253, %cst_135 {dimension_numbers = #tpu.dot_dimension_numbers<[1], [0], [0], [1], [0, 0, 1, 1], [], []>} : vector<32x4xf32>, vector<4x2xf32>, vector<32x2xf32> -> vector<32x2xf32>
    %1299 = arith.addf %1295, %1298 : vector<32x2xf32>
    %c1_136 = arith.constant 1 : index
    %c0_137 = arith.constant 0 : index
    %c0_138 = arith.constant 0 : index
    %1300 = vector.load %arg12[%c1_136, %c0_137, %c0_138] : memref<4x32x4xf32, #tpu.memory_space<vmem>>, vector<1x32x4xf32>
    %1301 = vector.shape_cast %1300 : vector<1x32x4xf32> to vector<32x4xf32>
    %cst_139 = arith.constant dense<0.000000e+00> : vector<32x2xf32>
    %1302 = tpu.matmul %1301, %1241, %cst_139 {dimension_numbers = #tpu.dot_dimension_numbers<[1], [0], [0], [1], [0, 0, 1, 1], [], []>} : vector<32x4xf32>, vector<4x2xf32>, vector<32x2xf32> -> vector<32x2xf32>
    %1303 = arith.addf %1291, %1302 : vector<32x2xf32>
    %c1_140 = arith.constant 1 : index
    %c0_141 = arith.constant 0 : index
    %c0_142 = arith.constant 0 : index
    %1304 = vector.load %arg13[%c1_140, %c0_141, %c0_142] : memref<4x32x4xf32, #tpu.memory_space<vmem>>, vector<1x32x4xf32>
    %1305 = vector.shape_cast %1304 : vector<1x32x4xf32> to vector<32x4xf32>
    %cst_143 = arith.constant dense<0.000000e+00> : vector<32x2xf32>
    %1306 = tpu.matmul %1305, %1253, %cst_143 {dimension_numbers = #tpu.dot_dimension_numbers<[1], [0], [0], [1], [0, 0, 1, 1], [], []>} : vector<32x4xf32>, vector<4x2xf32>, vector<32x2xf32> -> vector<32x2xf32>
    %1307 = arith.addf %1303, %1306 : vector<32x2xf32>
    %c2_144 = arith.constant 2 : index
    %c0_145 = arith.constant 0 : index
    %c0_146 = arith.constant 0 : index
    %1308 = vector.load %arg10[%c2_144, %c0_145, %c0_146] : memref<4x32x4xf32, #tpu.memory_space<vmem>>, vector<1x32x4xf32>
    %1309 = vector.shape_cast %1308 : vector<1x32x4xf32> to vector<32x4xf32>
    %cst_147 = arith.constant dense<0.000000e+00> : vector<32x2xf32>
    %1310 = tpu.matmul %1309, %1244, %cst_147 {dimension_numbers = #tpu.dot_dimension_numbers<[1], [0], [0], [1], [0, 0, 1, 1], [], []>} : vector<32x4xf32>, vector<4x2xf32>, vector<32x2xf32> -> vector<32x2xf32>
    %1311 = arith.addf %1299, %1310 : vector<32x2xf32>
    %c2_148 = arith.constant 2 : index
    %c0_149 = arith.constant 0 : index
    %c0_150 = arith.constant 0 : index
    %1312 = vector.load %arg11[%c2_148, %c0_149, %c0_150] : memref<4x32x4xf32, #tpu.memory_space<vmem>>, vector<1x32x4xf32>
    %1313 = vector.shape_cast %1312 : vector<1x32x4xf32> to vector<32x4xf32>
    %cst_151 = arith.constant dense<0.000000e+00> : vector<32x2xf32>
    %1314 = tpu.matmul %1313, %1256, %cst_151 {dimension_numbers = #tpu.dot_dimension_numbers<[1], [0], [0], [1], [0, 0, 1, 1], [], []>} : vector<32x4xf32>, vector<4x2xf32>, vector<32x2xf32> -> vector<32x2xf32>
    %1315 = arith.addf %1311, %1314 : vector<32x2xf32>
    %c2_152 = arith.constant 2 : index
    %c0_153 = arith.constant 0 : index
    %c0_154 = arith.constant 0 : index
    %1316 = vector.load %arg12[%c2_152, %c0_153, %c0_154] : memref<4x32x4xf32, #tpu.memory_space<vmem>>, vector<1x32x4xf32>
    %1317 = vector.shape_cast %1316 : vector<1x32x4xf32> to vector<32x4xf32>
    %cst_155 = arith.constant dense<0.000000e+00> : vector<32x2xf32>
    %1318 = tpu.matmul %1317, %1244, %cst_155 {dimension_numbers = #tpu.dot_dimension_numbers<[1], [0], [0], [1], [0, 0, 1, 1], [], []>} : vector<32x4xf32>, vector<4x2xf32>, vector<32x2xf32> -> vector<32x2xf32>
    %1319 = arith.addf %1307, %1318 : vector<32x2xf32>
    %c2_156 = arith.constant 2 : index
    %c0_157 = arith.constant 0 : index
    %c0_158 = arith.constant 0 : index
    %1320 = vector.load %arg13[%c2_156, %c0_157, %c0_158] : memref<4x32x4xf32, #tpu.memory_space<vmem>>, vector<1x32x4xf32>
    %1321 = vector.shape_cast %1320 : vector<1x32x4xf32> to vector<32x4xf32>
    %cst_159 = arith.constant dense<0.000000e+00> : vector<32x2xf32>
    %1322 = tpu.matmul %1321, %1256, %cst_159 {dimension_numbers = #tpu.dot_dimension_numbers<[1], [0], [0], [1], [0, 0, 1, 1], [], []>} : vector<32x4xf32>, vector<4x2xf32>, vector<32x2xf32> -> vector<32x2xf32>
    %1323 = arith.addf %1319, %1322 : vector<32x2xf32>
    %c3_160 = arith.constant 3 : index
    %c0_161 = arith.constant 0 : index
    %c0_162 = arith.constant 0 : index
    %1324 = vector.load %arg10[%c3_160, %c0_161, %c0_162] : memref<4x32x4xf32, #tpu.memory_space<vmem>>, vector<1x32x4xf32>
    %1325 = vector.shape_cast %1324 : vector<1x32x4xf32> to vector<32x4xf32>
    %cst_163 = arith.constant dense<0.000000e+00> : vector<32x2xf32>
    %1326 = tpu.matmul %1325, %1247, %cst_163 {dimension_numbers = #tpu.dot_dimension_numbers<[1], [0], [0], [1], [0, 0, 1, 1], [], []>} : vector<32x4xf32>, vector<4x2xf32>, vector<32x2xf32> -> vector<32x2xf32>
    %1327 = arith.addf %1315, %1326 : vector<32x2xf32>
    %c3_164 = arith.constant 3 : index
    %c0_165 = arith.constant 0 : index
    %c0_166 = arith.constant 0 : index
    %1328 = vector.load %arg11[%c3_164, %c0_165, %c0_166] : memref<4x32x4xf32, #tpu.memory_space<vmem>>, vector<1x32x4xf32>
    %1329 = vector.shape_cast %1328 : vector<1x32x4xf32> to vector<32x4xf32>
    %cst_167 = arith.constant dense<0.000000e+00> : vector<32x2xf32>
    %1330 = tpu.matmul %1329, %1259, %cst_167 {dimension_numbers = #tpu.dot_dimension_numbers<[1], [0], [0], [1], [0, 0, 1, 1], [], []>} : vector<32x4xf32>, vector<4x2xf32>, vector<32x2xf32> -> vector<32x2xf32>
    %1331 = arith.addf %1327, %1330 : vector<32x2xf32>
    %c3_168 = arith.constant 3 : index
    %c0_169 = arith.constant 0 : index
    %c0_170 = arith.constant 0 : index
    %1332 = vector.load %arg12[%c3_168, %c0_169, %c0_170] : memref<4x32x4xf32, #tpu.memory_space<vmem>>, vector<1x32x4xf32>
    %1333 = vector.shape_cast %1332 : vector<1x32x4xf32> to vector<32x4xf32>
    %cst_171 = arith.constant dense<0.000000e+00> : vector<32x2xf32>
    %1334 = tpu.matmul %1333, %1247, %cst_171 {dimension_numbers = #tpu.dot_dimension_numbers<[1], [0], [0], [1], [0, 0, 1, 1], [], []>} : vector<32x4xf32>, vector<4x2xf32>, vector<32x2xf32> -> vector<32x2xf32>
    %1335 = arith.addf %1323, %1334 : vector<32x2xf32>
    %c3_172 = arith.constant 3 : index
    %c0_173 = arith.constant 0 : index
    %c0_174 = arith.constant 0 : index
    %1336 = vector.load %arg13[%c3_172, %c0_173, %c0_174] : memref<4x32x4xf32, #tpu.memory_space<vmem>>, vector<1x32x4xf32>
    %1337 = vector.shape_cast %1336 : vector<1x32x4xf32> to vector<32x4xf32>
    %cst_175 = arith.constant dense<0.000000e+00> : vector<32x2xf32>
    %1338 = tpu.matmul %1337, %1259, %cst_175 {dimension_numbers = #tpu.dot_dimension_numbers<[1], [0], [0], [1], [0, 0, 1, 1], [], []>} : vector<32x4xf32>, vector<4x2xf32>, vector<32x2xf32> -> vector<32x2xf32>
    %1339 = arith.addf %1335, %1338 : vector<32x2xf32>
    %cst_176 = arith.constant 2.000000e+01 : f32
    %1340 = vector.broadcast %cst_176 : f32 to vector<32x2xf32>
    %1341 = arith.minimumf %1331, %1340 : vector<32x2xf32>
    %1342 = math.exp %1341 : vector<32x2xf32>
    %cst_177 = arith.constant 2.000000e+00 : f32
    %1343 = vector.broadcast %cst_177 : f32 to vector<32x2xf32>
    %1344 = arith.addf %1342, %1343 : vector<32x2xf32>
    %1345 = arith.mulf %1342, %1344 : vector<32x2xf32>
    %cst_178 = arith.constant 2.000000e+00 : f32
    %1346 = vector.broadcast %cst_178 : f32 to vector<32x2xf32>
    %1347 = arith.addf %1345, %1346 : vector<32x2xf32>
    %1348 = arith.divf %1345, %1347 : vector<32x2xf32>
    %1349 = arith.mulf %1331, %1348 : vector<32x2xf32>
    %cst_179 = arith.constant 2.000000e+01 : f32
    %1350 = vector.broadcast %cst_179 : f32 to vector<32x2xf32>
    %1351 = arith.minimumf %1339, %1350 : vector<32x2xf32>
    %1352 = math.exp %1351 : vector<32x2xf32>
    %cst_180 = arith.constant 2.000000e+00 : f32
    %1353 = vector.broadcast %cst_180 : f32 to vector<32x2xf32>
    %1354 = arith.addf %1352, %1353 : vector<32x2xf32>
    %1355 = arith.mulf %1352, %1354 : vector<32x2xf32>
    %cst_181 = arith.constant 2.000000e+00 : f32
    %1356 = vector.broadcast %cst_181 : f32 to vector<32x2xf32>
    %1357 = arith.addf %1355, %1356 : vector<32x2xf32>
    %1358 = arith.divf %1355, %1357 : vector<32x2xf32>
    %1359 = arith.mulf %1339, %1358 : vector<32x2xf32>
    %c0_182 = arith.constant 0 : index
    %c0_183 = arith.constant 0 : index
    %1360 = vector.load %arg18[%c0_182, %c0_183] : memref<32x32xf32, #tpu.memory_space<vmem>>, vector<32x32xf32>
    %cst_184 = arith.constant dense<0.000000e+00> : vector<32x2xf32>
    %1361 = tpu.matmul %1360, %1349, %cst_184 {dimension_numbers = #tpu.dot_dimension_numbers<[1], [0], [0], [1], [0, 0, 1, 1], [], []>} : vector<32x32xf32>, vector<32x2xf32>, vector<32x2xf32> -> vector<32x2xf32>
    %c0_185 = arith.constant 0 : index
    %c0_186 = arith.constant 0 : index
    %1362 = vector.load %arg19[%c0_185, %c0_186] : memref<32x32xf32, #tpu.memory_space<vmem>>, vector<32x32xf32>
    %cst_187 = arith.constant dense<0.000000e+00> : vector<32x2xf32>
    %1363 = tpu.matmul %1362, %1359, %cst_187 {dimension_numbers = #tpu.dot_dimension_numbers<[1], [0], [0], [1], [0, 0, 1, 1], [], []>} : vector<32x32xf32>, vector<32x2xf32>, vector<32x2xf32> -> vector<32x2xf32>
    %c0_188 = arith.constant 0 : index
    %c0_189 = arith.constant 0 : index
    %1364 = vector.load %arg20[%c0_188, %c0_189] : memref<32x32xf32, #tpu.memory_space<vmem>>, vector<32x32xf32>
    %1365 = arith.addf %1349, %1359 : vector<32x2xf32>
    %cst_190 = arith.constant dense<0.000000e+00> : vector<32x2xf32>
    %1366 = tpu.matmul %1364, %1365, %cst_190 {dimension_numbers = #tpu.dot_dimension_numbers<[1], [0], [0], [1], [0, 0, 1, 1], [], []>} : vector<32x32xf32>, vector<32x2xf32>, vector<32x2xf32> -> vector<32x2xf32>
    %1367 = arith.subf %1361, %1363 : vector<32x2xf32>
    %c0_191 = arith.constant 0 : index
    %c0_192 = arith.constant 0 : index
    %1368 = vector.load %arg21[%c0_191, %c0_192] : memref<32x1xf32, #tpu.memory_space<vmem>>, vector<32x1xf32>
    %1369 = vector.broadcast %1368 : vector<32x1xf32> to vector<32x2xf32>
    %1370 = arith.addf %1367, %1369 : vector<32x2xf32>
    %cst_193 = arith.constant 2.000000e+01 : f32
    %1371 = vector.broadcast %cst_193 : f32 to vector<32x2xf32>
    %1372 = arith.minimumf %1370, %1371 : vector<32x2xf32>
    %1373 = math.exp %1372 : vector<32x2xf32>
    %cst_194 = arith.constant 2.000000e+00 : f32
    %1374 = vector.broadcast %cst_194 : f32 to vector<32x2xf32>
    %1375 = arith.addf %1373, %1374 : vector<32x2xf32>
    %1376 = arith.mulf %1373, %1375 : vector<32x2xf32>
    %cst_195 = arith.constant 2.000000e+00 : f32
    %1377 = vector.broadcast %cst_195 : f32 to vector<32x2xf32>
    %1378 = arith.addf %1376, %1377 : vector<32x2xf32>
    %1379 = arith.divf %1376, %1378 : vector<32x2xf32>
    %1380 = arith.mulf %1370, %1379 : vector<32x2xf32>
    %1381 = arith.subf %1366, %1361 : vector<32x2xf32>
    %1382 = arith.subf %1381, %1363 : vector<32x2xf32>
    %c0_196 = arith.constant 0 : index
    %c0_197 = arith.constant 0 : index
    %1383 = vector.load %arg22[%c0_196, %c0_197] : memref<32x1xf32, #tpu.memory_space<vmem>>, vector<32x1xf32>
    %1384 = vector.broadcast %1383 : vector<32x1xf32> to vector<32x2xf32>
    %1385 = arith.addf %1382, %1384 : vector<32x2xf32>
    %cst_198 = arith.constant 2.000000e+01 : f32
    %1386 = vector.broadcast %cst_198 : f32 to vector<32x2xf32>
    %1387 = arith.minimumf %1385, %1386 : vector<32x2xf32>
    %1388 = math.exp %1387 : vector<32x2xf32>
    %cst_199 = arith.constant 2.000000e+00 : f32
    %1389 = vector.broadcast %cst_199 : f32 to vector<32x2xf32>
    %1390 = arith.addf %1388, %1389 : vector<32x2xf32>
    %1391 = arith.mulf %1388, %1390 : vector<32x2xf32>
    %cst_200 = arith.constant 2.000000e+00 : f32
    %1392 = vector.broadcast %cst_200 : f32 to vector<32x2xf32>
    %1393 = arith.addf %1391, %1392 : vector<32x2xf32>
    %1394 = arith.divf %1391, %1393 : vector<32x2xf32>
    %1395 = arith.mulf %1385, %1394 : vector<32x2xf32>
    %c0_201 = arith.constant 0 : index
    %c0_202 = arith.constant 0 : index
    %1396 = vector.load %arg23[%c0_201, %c0_202] : memref<4x32xf32, #tpu.memory_space<vmem>>, vector<4x32xf32>
    %cst_203 = arith.constant dense<0.000000e+00> : vector<4x2xf32>
    %1397 = tpu.matmul %1396, %1380, %cst_203 {dimension_numbers = #tpu.dot_dimension_numbers<[1], [0], [0], [1], [0, 0, 1, 1], [], []>} : vector<4x32xf32>, vector<32x2xf32>, vector<4x2xf32> -> vector<4x2xf32>
    %c0_204 = arith.constant 0 : index
    %c0_205 = arith.constant 0 : index
    %1398 = vector.load %arg24[%c0_204, %c0_205] : memref<4x32xf32, #tpu.memory_space<vmem>>, vector<4x32xf32>
    %cst_206 = arith.constant dense<0.000000e+00> : vector<4x2xf32>
    %1399 = tpu.matmul %1398, %1395, %cst_206 {dimension_numbers = #tpu.dot_dimension_numbers<[1], [0], [0], [1], [0, 0, 1, 1], [], []>} : vector<4x32xf32>, vector<32x2xf32>, vector<4x2xf32> -> vector<4x2xf32>
    %c0_207 = arith.constant 0 : index
    %c0_208 = arith.constant 0 : index
    %1400 = vector.load %arg25[%c0_207, %c0_208] : memref<4x32xf32, #tpu.memory_space<vmem>>, vector<4x32xf32>
    %1401 = arith.addf %1380, %1395 : vector<32x2xf32>
    %cst_209 = arith.constant dense<0.000000e+00> : vector<4x2xf32>
    %1402 = tpu.matmul %1400, %1401, %cst_209 {dimension_numbers = #tpu.dot_dimension_numbers<[1], [0], [0], [1], [0, 0, 1, 1], [], []>} : vector<4x32xf32>, vector<32x2xf32>, vector<4x2xf32> -> vector<4x2xf32>
    %1403 = arith.subf %1397, %1399 : vector<4x2xf32>
    %c0_210 = arith.constant 0 : index
    %c0_211 = arith.constant 0 : index
    %1404 = vector.load %arg26[%c0_210, %c0_211] : memref<4x1xf32, #tpu.memory_space<vmem>>, vector<4x1xf32>
    %1405 = vector.broadcast %1404 : vector<4x1xf32> to vector<4x2xf32>
    %1406 = arith.addf %1403, %1405 : vector<4x2xf32>
    %1407 = arith.subf %1402, %1397 : vector<4x2xf32>
    %1408 = arith.subf %1407, %1399 : vector<4x2xf32>
    %c0_212 = arith.constant 0 : index
    %c0_213 = arith.constant 0 : index
    %1409 = vector.load %arg27[%c0_212, %c0_213] : memref<4x1xf32, #tpu.memory_space<vmem>>, vector<4x1xf32>
    %1410 = vector.broadcast %1409 : vector<4x1xf32> to vector<4x2xf32>
    %1411 = arith.addf %1408, %1410 : vector<4x2xf32>
    %1412 = arith.mulf %1406, %1406 : vector<4x2xf32>
    %1413 = arith.mulf %1411, %1411 : vector<4x2xf32>
    %1414 = arith.addf %1412, %1413 : vector<4x2xf32>
    %cst_214 = arith.constant dense<0.000000e+00> : vector<2xf32>
    %1415 = vector.multi_reduction <add>, %1414, %cst_214 [0] : vector<4x2xf32> to vector<2xf32>
    %1416 = vector.shape_cast %1415 : vector<2xf32> to vector<1x2xf32>
    %cst_215 = arith.constant 9.99999996E-13 : f32
    %1417 = vector.broadcast %cst_215 : f32 to vector<1x2xf32>
    %1418 = arith.addf %1416, %1417 : vector<1x2xf32>
    %1419 = math.rsqrt %1418 : vector<1x2xf32>
    %1420 = vector.broadcast %1419 : vector<1x2xf32> to vector<4x2xf32>
    %1421 = arith.mulf %1406, %1420 : vector<4x2xf32>
    %c0_216 = arith.constant 0 : index
    %c0_217 = arith.constant 0 : index
    %1422 = vector.load %arg28[%c0_216, %c0_217] : memref<4x2xf32, #tpu.memory_space<vmem>>, vector<4x2xf32>
    tpu.vector_store %arg28[%c0_216, %c0_217], %1421 {strides = array<i32>} : memref<4x2xf32, #tpu.memory_space<vmem>>, vector<4x2xf32>,
    %1423 = vector.broadcast %1419 : vector<1x2xf32> to vector<4x2xf32>
    %1424 = arith.mulf %1411, %1423 : vector<4x2xf32>
    %c0_218 = arith.constant 0 : index
    %c0_219 = arith.constant 0 : index
    %1425 = vector.load %arg29[%c0_218, %c0_219] : memref<4x2xf32, #tpu.memory_space<vmem>>, vector<4x2xf32>
    tpu.vector_store %arg29[%c0_218, %c0_219], %1424 {strides = array<i32>} : memref<4x2xf32, #tpu.memory_space<vmem>>, vector<4x2xf32>,
    return
  }
  func.func @transform_0(%arg0: i32) -> (i32, i32, i32, i32) {
    %c0_i32 = arith.constant 0 : i32
    %c0_i32_0 = arith.constant 0 : i32
    %c0_i32_1 = arith.constant 0 : i32
    %c0_i32_2 = arith.constant 0 : i32
    return %c0_i32, %c0_i32_0, %c0_i32_1, %arg0 : i32, i32, i32, i32
  }
  func.func @transform_1(%arg0: i32) -> (i32, i32, i32, i32) {
    %c0_i32 = arith.constant 0 : i32
    %c0_i32_0 = arith.constant 0 : i32
    %c0_i32_1 = arith.constant 0 : i32
    %c0_i32_2 = arith.constant 0 : i32
    return %c0_i32, %c0_i32_0, %c0_i32_1, %arg0 : i32, i32, i32, i32
  }
  func.func @transform_2(%arg0: i32) -> (i32, i32, i32) {
    %c0_i32 = arith.constant 0 : i32
    %c0_i32_0 = arith.constant 0 : i32
    %c0_i32_1 = arith.constant 0 : i32
    return %c0_i32, %c0_i32_0, %arg0 : i32, i32, i32
  }
  func.func @transform_3(%arg0: i32) -> (i32, i32, i32) {
    %c0_i32 = arith.constant 0 : i32
    %c0_i32_0 = arith.constant 0 : i32
    %c0_i32_1 = arith.constant 0 : i32
    return %c0_i32, %c0_i32_0, %arg0 : i32, i32, i32
  }
  func.func @transform_4(%arg0: i32) -> (i32, i32) {
    %c0_i32 = arith.constant 0 : i32
    %c0_i32_0 = arith.constant 0 : i32
    return %c0_i32, %arg0 : i32, i32
  }
  func.func @transform_5(%arg0: i32) -> i32 {
    %c0_i32 = arith.constant 0 : i32
    %c0_i32_0 = arith.constant 0 : i32
    return %c0_i32 : i32
  }
  func.func @transform_6(%arg0: i32) -> i32 {
    %c0_i32 = arith.constant 0 : i32
    %c0_i32_0 = arith.constant 0 : i32
    return %c0_i32 : i32
  }
  func.func @transform_7(%arg0: i32) -> (i32, i32) {
    %c0_i32 = arith.constant 0 : i32
    %c0_i32_0 = arith.constant 0 : i32
    %c0_i32_1 = arith.constant 0 : i32
    return %c0_i32, %c0_i32_0 : i32, i32
  }
  func.func @transform_8(%arg0: i32) -> (i32, i32) {
    %c0_i32 = arith.constant 0 : i32
    %c0_i32_0 = arith.constant 0 : i32
    %c0_i32_1 = arith.constant 0 : i32
    return %c0_i32, %c0_i32_0 : i32, i32
  }
  func.func @transform_9(%arg0: i32) -> (i32, i32, i32) {
    %c0_i32 = arith.constant 0 : i32
    %c0_i32_0 = arith.constant 0 : i32
    %c0_i32_1 = arith.constant 0 : i32
    %c0_i32_2 = arith.constant 0 : i32
    return %c0_i32, %c0_i32_0, %c0_i32_1 : i32, i32, i32
  }
  func.func @transform_10(%arg0: i32) -> (i32, i32, i32) {
    %c0_i32 = arith.constant 0 : i32
    %c0_i32_0 = arith.constant 0 : i32
    %c0_i32_1 = arith.constant 0 : i32
    %c0_i32_2 = arith.constant 0 : i32
    return %c0_i32, %c0_i32_0, %c0_i32_1 : i32, i32, i32
  }
  func.func @transform_11(%arg0: i32) -> (i32, i32, i32) {
    %c0_i32 = arith.constant 0 : i32
    %c0_i32_0 = arith.constant 0 : i32
    %c0_i32_1 = arith.constant 0 : i32
    %c0_i32_2 = arith.constant 0 : i32
    return %c0_i32, %c0_i32_0, %c0_i32_1 : i32, i32, i32
  }
  func.func @transform_12(%arg0: i32) -> (i32, i32, i32) {
    %c0_i32 = arith.constant 0 : i32
    %c0_i32_0 = arith.constant 0 : i32
    %c0_i32_1 = arith.constant 0 : i32
    %c0_i32_2 = arith.constant 0 : i32
    return %c0_i32, %c0_i32_0, %c0_i32_1 : i32, i32, i32
  }
  func.func @transform_13(%arg0: i32) -> (i32, i32) {
    %c0_i32 = arith.constant 0 : i32
    %c0_i32_0 = arith.constant 0 : i32
    %c0_i32_1 = arith.constant 0 : i32
    return %c0_i32, %c0_i32_0 : i32, i32
  }
  func.func @transform_14(%arg0: i32) -> (i32, i32) {
    %c0_i32 = arith.constant 0 : i32
    %c0_i32_0 = arith.constant 0 : i32
    %c0_i32_1 = arith.constant 0 : i32
    return %c0_i32, %c0_i32_0 : i32, i32
  }
  func.func @transform_15(%arg0: i32) -> (i32, i32) {
    %c0_i32 = arith.constant 0 : i32
    %c0_i32_0 = arith.constant 0 : i32
    %c0_i32_1 = arith.constant 0 : i32
    return %c0_i32, %c0_i32_0 : i32, i32
  }
  func.func @transform_16(%arg0: i32) -> (i32, i32) {
    %c0_i32 = arith.constant 0 : i32
    %c0_i32_0 = arith.constant 0 : i32
    %c0_i32_1 = arith.constant 0 : i32
    return %c0_i32, %c0_i32_0 : i32, i32
  }
  func.func @transform_17(%arg0: i32) -> (i32, i32) {
    %c0_i32 = arith.constant 0 : i32
    %c0_i32_0 = arith.constant 0 : i32
    %c0_i32_1 = arith.constant 0 : i32
    return %c0_i32, %c0_i32_0 : i32, i32
  }
  func.func @transform_18(%arg0: i32) -> (i32, i32) {
    %c0_i32 = arith.constant 0 : i32
    %c0_i32_0 = arith.constant 0 : i32
    %c0_i32_1 = arith.constant 0 : i32
    return %c0_i32, %c0_i32_0 : i32, i32
  }
  func.func @transform_19(%arg0: i32) -> (i32, i32) {
    %c0_i32 = arith.constant 0 : i32
    %c0_i32_0 = arith.constant 0 : i32
    %c0_i32_1 = arith.constant 0 : i32
    return %c0_i32, %c0_i32_0 : i32, i32
  }
  func.func @transform_20(%arg0: i32) -> (i32, i32) {
    %c0_i32 = arith.constant 0 : i32
    %c0_i32_0 = arith.constant 0 : i32
    %c0_i32_1 = arith.constant 0 : i32
    return %c0_i32, %c0_i32_0 : i32, i32
  }
  func.func @transform_21(%arg0: i32) -> (i32, i32) {
    %c0_i32 = arith.constant 0 : i32
    %c0_i32_0 = arith.constant 0 : i32
    %c0_i32_1 = arith.constant 0 : i32
    return %c0_i32, %c0_i32_0 : i32, i32
  }
  func.func @transform_22(%arg0: i32) -> (i32, i32) {
    %c0_i32 = arith.constant 0 : i32
    %c0_i32_0 = arith.constant 0 : i32
    %c0_i32_1 = arith.constant 0 : i32
    return %c0_i32, %c0_i32_0 : i32, i32
  }
  func.func @transform_23(%arg0: i32) -> (i32, i32) {
    %c0_i32 = arith.constant 0 : i32
    %c0_i32_0 = arith.constant 0 : i32
    %c0_i32_1 = arith.constant 0 : i32
    return %c0_i32, %c0_i32_0 : i32, i32
  }
  func.func @transform_24(%arg0: i32) -> (i32, i32) {
    %c0_i32 = arith.constant 0 : i32
    %c0_i32_0 = arith.constant 0 : i32
    %c0_i32_1 = arith.constant 0 : i32
    return %c0_i32, %c0_i32_0 : i32, i32
  }
  func.func @transform_25(%arg0: i32) -> (i32, i32) {
    %c0_i32 = arith.constant 0 : i32
    %c0_i32_0 = arith.constant 0 : i32
    %c0_i32_1 = arith.constant 0 : i32
    return %c0_i32, %c0_i32_0 : i32, i32
  }
  func.func @transform_26(%arg0: i32) -> (i32, i32) {
    %c0_i32 = arith.constant 0 : i32
    %c0_i32_0 = arith.constant 0 : i32
    %c0_i32_1 = arith.constant 0 : i32
    return %c0_i32, %c0_i32_0 : i32, i32
  }
  func.func @transform_27(%arg0: i32) -> (i32, i32) {
    %c0_i32 = arith.constant 0 : i32
    %c0_i32_0 = arith.constant 0 : i32
    return %c0_i32, %arg0 : i32, i32
  }
  func.func @transform_28(%arg0: i32) -> (i32, i32) {
    %c0_i32 = arith.constant 0 : i32
    %c0_i32_0 = arith.constant 0 : i32
    return %c0_i32, %arg0 : i32, i32
  }
}

</mosaic_0001>

<llo_original>
// kernel: custom-call
$region0: #{custom-call}
  %s0 = inlined_call_operand.vmem [shape: c64[2,3,4,4], index: 0, kind: input, shape index: {}]
  %s1 = inlined_call_operand.vmem [shape: f32[2,3,4,4], index: 1, kind: output, shape index: {}]
  %v2 = vld [vmem:[%s0] sm:$0xff]
  %3 = vst [vmem:[%s1] sm:$0xff] %v2
  %s4 = scalar_lea.vmem %s1, 8
  %s5 = scalar_lea.vmem %s0, 8
  %v6 = vld [vmem:[%s5] sm:$0xff]
  %7 = vst [vmem:[%s4] sm:$0xff] %v6
  %s8 = scalar_lea.vmem %s1, 16
  %s9 = scalar_lea.vmem %s0, 16
  %v10 = vld [vmem:[%s9] sm:$0xff]
  %11 = vst [vmem:[%s8] sm:$0xff] %v10
  %s12 = scalar_lea.vmem %s1, 24
  %s13 = scalar_lea.vmem %s0, 24
  %v14 = vld [vmem:[%s13] sm:$0xff]
  %15 = vst [vmem:[%s12] sm:$0xff] %v14
  %s16 = scalar_lea.vmem %s1, 32
  %s17 = scalar_lea.vmem %s0, 32
  %v18 = vld [vmem:[%s17] sm:$0xff]
  %19 = vst [vmem:[%s16] sm:$0xff] %v18
  %s20 = scalar_lea.vmem %s1, 40
  %s21 = scalar_lea.vmem %s0, 40
  %v22 = vld [vmem:[%s21] sm:$0xff]
  %23 = vst [vmem:[%s20] sm:$0xff] %v22

// kernel: custom-call.1
$region0: #{custom-call.1}
  %s0 = inlined_call_operand.vmem [shape: c64[2,3,4,4], index: 0, kind: input, shape index: {}]
  %s1 = inlined_call_operand.vmem [shape: f32[2,3,4,4], index: 1, kind: output, shape index: {}]
  %s2 = scalar_lea.vmem %s0, 48
  %v3 = vld [vmem:[%s2] sm:$0xff]
  %4 = vst [vmem:[%s1] sm:$0xff] %v3
  %s5 = scalar_lea.vmem %s1, 8
  %s6 = scalar_lea.vmem %s2, 8
  %v7 = vld [vmem:[%s6] sm:$0xff]
  %8 = vst [vmem:[%s5] sm:$0xff] %v7
  %s9 = scalar_lea.vmem %s1, 16
  %s10 = scalar_lea.vmem %s2, 16
  %v11 = vld [vmem:[%s10] sm:$0xff]
  %12 = vst [vmem:[%s9] sm:$0xff] %v11
  %s13 = scalar_lea.vmem %s1, 24
  %s14 = scalar_lea.vmem %s2, 24
  %v15 = vld [vmem:[%s14] sm:$0xff]
  %16 = vst [vmem:[%s13] sm:$0xff] %v15
  %s17 = scalar_lea.vmem %s1, 32
  %s18 = scalar_lea.vmem %s2, 32
  %v19 = vld [vmem:[%s18] sm:$0xff]
  %20 = vst [vmem:[%s17] sm:$0xff] %v19
  %s21 = scalar_lea.vmem %s1, 40
  %s22 = scalar_lea.vmem %s2, 40
  %v23 = vld [vmem:[%s22] sm:$0xff]
  %24 = vst [vmem:[%s21] sm:$0xff] %v23

// kernel: custom-call.2
$region0: #{custom-call.2}
  %s0 = inlined_call_operand.vmem [shape: c64[2,4,4], index: 0, kind: input, shape index: {}]
  %s1 = inlined_call_operand.vmem [shape: f32[2,4,4], index: 1, kind: output, shape index: {}]
  %v2 = vld [vmem:[%s0] sm:$0xff]
  %3 = vst [vmem:[%s1] sm:$0xff] %v2
  %s4 = scalar_lea.vmem %s1, 8
  %s5 = scalar_lea.vmem %s0, 8
  %v6 = vld [vmem:[%s5] sm:$0xff]
  %7 = vst [vmem:[%s4] sm:$0xff] %v6

// kernel: custom-call.3
$region0: #{custom-call.3}
  %s0 = inlined_call_operand.vmem [shape: c64[2,4,4], index: 0, kind: input, shape index: {}]
  %s1 = inlined_call_operand.vmem [shape: f32[2,4,4], index: 1, kind: output, shape index: {}]
  %s2 = scalar_lea.vmem %s0, 16
  %v3 = vld [vmem:[%s2] sm:$0xff]
  %4 = vst [vmem:[%s1] sm:$0xff] %v3
  %s5 = scalar_lea.vmem %s1, 8
  %s6 = scalar_lea.vmem %s2, 8
  %v7 = vld [vmem:[%s6] sm:$0xff]
  %8 = vst [vmem:[%s5] sm:$0xff] %v7

// kernel: custom-call.4
$region0: #{custom-call.4}
  %s0 = inlined_call_operand.hbm [shape: c64[2,4], index: 0, kind: input, shape index: {}]
  %s1 = inlined_call_operand.vmem [shape: f32[2,4], index: 1, kind: output, shape index: {}]
  $region1: #{custom-call.4} parent=0
    #allocation0 [shape = 's32[1]{0}', space=sflag, size = 0x4, scoped, tag = 'scoped memory for custom-call.4']
    %2 = vsyncpa [#allocation0], 0
    %s3 = sshll.u32 %s1, 4
    %s4 = int_to_ptr.vmem [resolvable:$true] %s3
    %6 = dma.hbm_to_vmem [thread:$0]  %s0, 32, %s4, [#allocation0]
    %7 = dma.done [#allocation0], 32
    %8 = vsyncpa [#allocation0], 1

// kernel: custom-call.5
$region0: #{custom-call.5}
  %s0 = inlined_call_operand.hbm [shape: c64[2,4], index: 0, kind: input, shape index: {}]
  %s1 = inlined_call_operand.vmem [shape: f32[2,4], index: 1, kind: output, shape index: {}]
  %s2 = scalar_lea.hbm %s0, 32
  $region1: #{custom-call.5} parent=0
    #allocation0 [shape = 's32[1]{0}', space=sflag, size = 0x4, scoped, tag = 'scoped memory for custom-call.5']
    %3 = vsyncpa [#allocation0], 0
    %s4 = sshll.u32 %s1, 4
    %s5 = int_to_ptr.vmem [resolvable:$true] %s4
    %7 = dma.hbm_to_vmem [thread:$0]  %s2, 32, %s5, [#allocation0]
    %8 = dma.done [#allocation0], 32
    %9 = vsyncpa [#allocation0], 1

// kernel: custom-call.6
$region0: #{custom-call.6}
  %s0 = inlined_call_operand.vmem [shape: f32[2,4], index: 0, kind: input, shape index: {}]
  %s1 = inlined_call_operand.vmem [shape: f32[2,4], index: 1, kind: input, shape index: {}]
  %s2 = inlined_call_operand.vmem [shape: c64[2,4], index: 2, kind: output, shape index: {}]
  %s4 = scalar_lea.vmem %s2, 4
  %v5 = vld [vmem:[%s0] sm:$0xf]
  %vm6 = vcmask 1043456
  %7 = vst.msk [vmem:[%s2] sm:$0xff] %vm6, %v5
  %v8 = vld [vmem:[%s1] sm:$0xf]
  %vm9 = vcmask 1043456
  %10 = vst.msk [vmem:[%s4] sm:$0xff] %vm9, %v8

// kernel: quantum_model_v4.1
$region0: #{quantum_model_v4.1}
  #allocation0 [shape = 'u32[]', space=smem, size = 0x4, offset = 0x4, fixed_abs, tag = 'smem constant byte address 0x4 - core index']
  #allocation1 [shape = 'u32[144,128]{1,0:T(1,128)}', space=vmem, size = 0x12000, scoped, tag = 'internal scratch']
  %s0 = inlined_call_operand.vmem [shape: f32[3,4,4,2], index: 0, kind: input, shape index: {}]
  %s1 = inlined_call_operand.vmem [shape: f32[3,4,4,2], index: 1, kind: input, shape index: {}]
  %s2 = inlined_call_operand.vmem [shape: f32[4,4,2], index: 2, kind: input, shape index: {}]
  %s3 = inlined_call_operand.vmem [shape: f32[4,4,2], index: 3, kind: input, shape index: {}]
  %s4 = inlined_call_operand.vmem [shape: f32[8,2], index: 4, kind: input, shape index: {}]
  %s5 = inlined_call_operand.vmem [shape: f32[48], index: 5, kind: input, shape index: {}]
  %s6 = inlined_call_operand.vmem [shape: f32[48], index: 6, kind: input, shape index: {}]
  %s7 = inlined_call_operand.vmem [shape: f32[32,8], index: 7, kind: input, shape index: {}]
  %s8 = inlined_call_operand.vmem [shape: f32[32,1], index: 8, kind: input, shape index: {}]
  %s9 = inlined_call_operand.vmem [shape: f32[4,32,4], index: 9, kind: input, shape index: {}]
  %s10 = inlined_call_operand.vmem [shape: f32[4,32,4], index: 10, kind: input, shape index: {}]
  %s11 = inlined_call_operand.vmem [shape: f32[4,32,4], index: 11, kind: input, shape index: {}]
  %s12 = inlined_call_operand.vmem [shape: f32[4,32,4], index: 12, kind: input, shape index: {}]
  %s13 = inlined_call_operand.vmem [shape: f32[32,32], index: 13, kind: input, shape index: {}]
  %s14 = inlined_call_operand.vmem [shape: f32[32,32], index: 14, kind: input, shape index: {}]
  %s15 = inlined_call_operand.vmem [shape: f32[32,1], index: 15, kind: input, shape index: {}]
  %s16 = inlined_call_operand.vmem [shape: f32[32,1], index: 16, kind: input, shape index: {}]
  %s17 = inlined_call_operand.vmem [shape: f32[32,32], index: 17, kind: input, shape index: {}]
  %s18 = inlined_call_operand.vmem [shape: f32[32,32], index: 18, kind: input, shape index: {}]
  %s19 = inlined_call_operand.vmem [shape: f32[32,32], index: 19, kind: input, shape index: {}]
  %s20 = inlined_call_operand.vmem [shape: f32[32,1], index: 20, kind: input, shape index: {}]
  %s21 = inlined_call_operand.vmem [shape: f32[32,1], index: 21, kind: input, shape index: {}]
  %s22 = inlined_call_operand.vmem [shape: f32[4,32], index: 22, kind: input, shape index: {}]
  %s23 = inlined_call_operand.vmem [shape: f32[4,32], index: 23, kind: input, shape index: {}]
  %s24 = inlined_call_operand.vmem [shape: f32[4,32], index: 24, kind: input, shape index: {}]
  %s25 = inlined_call_operand.vmem [shape: f32[4,1], index: 25, kind: input, shape index: {}]
  %s26 = inlined_call_operand.vmem [shape: f32[4,1], index: 26, kind: input, shape index: {}]
  %s27 = inlined_call_operand.vmem [shape: f32[4,2], index: 27, kind: output, shape index: {0}]
  %s28 = inlined_call_operand.vmem [shape: f32[4,2], index: 28, kind: output, shape index: {1}]
  %29 = xla_tuple %s27, %s28
  %s30 = sld [smem:[#allocation0]]
  $region134: #{quantum_model_v4.1} parent=0
    _
  %s32 = ssub.s32 1, %s30
  %s33 = scalar_select 0, %s32, %s30
  $region1: #{quantum_model_v4.1} parent=0
    #allocation2 [shape = 'u8[512]{0}', space=smem, size = 0x200, scoped, tag = 'input window, operand 5, single buffered']
    #allocation3 [shape = 's32[1]{0}', space=sflag, size = 0x4, scoped, tag = 'scoped memory for quantum_model_v4.1']
    #allocation4 [shape = 'u8[512]{0}', space=smem, size = 0x200, scoped, tag = 'input window, operand 6, single buffered']
    #allocation5 [shape = 's32[1]{0}', space=sflag, size = 0x4, scoped, tag = 'scoped memory for quantum_model_v4.1']
    %34 = vsyncpa [#allocation3], 0
    %35 = vsyncpa [#allocation5], 0
    // Predicated region
    $region2: #{quantum_model_v4.1} parent=1 // pred_check
      _
    $region3: #{quantum_model_v4.1} parent=1 // pred_check_branch
      %37 = sbr.rel (0) target = $region5
    $region4: #{quantum_model_v4.1} parent=1 // pred_region
      _
    $region5: #{quantum_model_v4.1} parent=1 // pred_fallthru
      _
    // Predicated region
    $region6: #{quantum_model_v4.1} parent=1 // pred_check
      _
    $region7: #{quantum_model_v4.1} parent=1 // pred_check_branch
      %39 = sbr.rel (0) target = $region9
    $region8: #{quantum_model_v4.1} parent=1 // pred_region
      _
    $region9: #{quantum_model_v4.1} parent=1 // pred_fallthru
      _
    // Predicated region
    $region10: #{quantum_model_v4.1} parent=1 // pred_check
      _
    $region11: #{quantum_model_v4.1} parent=1 // pred_check_branch
      %41 = sbr.rel (0) target = $region13
    $region12: #{quantum_model_v4.1} parent=1 // pred_region
      _
    $region13: #{quantum_model_v4.1} parent=1 // pred_fallthru
      _
    // Predicated region
    $region14: #{quantum_model_v4.1} parent=1 // pred_check
      _
    $region15: #{quantum_model_v4.1} parent=1 // pred_check_branch
      %43 = sbr.rel (0) target = $region17
    $region16: #{quantum_model_v4.1} parent=1 // pred_region
      _
    $region17: #{quantum_model_v4.1} parent=1 // pred_fallthru
      _
    // Predicated region
    $region18: #{quantum_model_v4.1} parent=1 // pred_check
      _
    $region19: #{quantum_model_v4.1} parent=1 // pred_check_branch
      %45 = sbr.rel (0) target = $region21
    $region20: #{quantum_model_v4.1} parent=1 // pred_region
      _
    $region21: #{quantum_model_v4.1} parent=1 // pred_fallthru
      _
    // Predicated region
    $region22: #{quantum_model_v4.1} parent=1 // pred_check
      _
    $region23: #{quantum_model_v4.1} parent=1 // pred_check_branch
      %47 = sbr.rel (0) target = $region25
    $region24: #{quantum_model_v4.1} parent=1 // pred_region
      %s49 = ssub.s32 16, 16
      %50 = vsyncadd [#allocation3], %s49
      %s52 = sshll.u32 %s5, 4
      %s53 = int_to_ptr.vmem [resolvable:$true] %s52
      %55 = dma.vmem_to_smem %s53, 16, [#allocation2], [#allocation3]
    $region25: #{quantum_model_v4.1} parent=1 // pred_fallthru
      _
    // Predicated region
    $region26: #{quantum_model_v4.1} parent=1 // pred_check
      _
    $region27: #{quantum_model_v4.1} parent=1 // pred_check_branch
      %57 = sbr.rel (0) target = $region29
    $region28: #{quantum_model_v4.1} parent=1 // pred_region
      %s59 = ssub.s32 16, 16
      %60 = vsyncadd [#allocation5], %s59
      %s62 = sshll.u32 %s6, 4
      %s63 = int_to_ptr.vmem [resolvable:$true] %s62
      %65 = dma.vmem_to_smem %s63, 16, [#allocation4], [#allocation5]
    $region29: #{quantum_model_v4.1} parent=1 // pred_fallthru
      _
    // Predicated region
    $region30: #{quantum_model_v4.1} parent=1 // pred_check
      _
    $region31: #{quantum_model_v4.1} parent=1 // pred_check_branch
      %67 = sbr.rel (0) target = $region33
    $region32: #{quantum_model_v4.1} parent=1 // pred_region
      _
    $region33: #{quantum_model_v4.1} parent=1 // pred_fallthru
      _
    // Predicated region
    $region34: #{quantum_model_v4.1} parent=1 // pred_check
      _
    $region35: #{quantum_model_v4.1} parent=1 // pred_check_branch
      %69 = sbr.rel (0) target = $region37
    $region36: #{quantum_model_v4.1} parent=1 // pred_region
      _
    $region37: #{quantum_model_v4.1} parent=1 // pred_fallthru
      _
    // Predicated region
    $region38: #{quantum_model_v4.1} parent=1 // pred_check
      _
    $region39: #{quantum_model_v4.1} parent=1 // pred_check_branch
      %71 = sbr.rel (0) target = $region41
    $region40: #{quantum_model_v4.1} parent=1 // pred_region
      _
    $region41: #{quantum_model_v4.1} parent=1 // pred_fallthru
      _
    // Predicated region
    $region42: #{quantum_model_v4.1} parent=1 // pred_check
      _
    $region43: #{quantum_model_v4.1} parent=1 // pred_check_branch
      %73 = sbr.rel (0) target = $region45
    $region44: #{quantum_model_v4.1} parent=1 // pred_region
      _
    $region45: #{quantum_model_v4.1} parent=1 // pred_fallthru
      _
    // Predicated region
    $region46: #{quantum_model_v4.1} parent=1 // pred_check
      _
    $region47: #{quantum_model_v4.1} parent=1 // pred_check_branch
      %75 = sbr.rel (0) target = $region49
    $region48: #{quantum_model_v4.1} parent=1 // pred_region
      _
    $region49: #{quantum_model_v4.1} parent=1 // pred_fallthru
      _
    // Predicated region
    $region50: #{quantum_model_v4.1} parent=1 // pred_check
      _
    $region51: #{quantum_model_v4.1} parent=1 // pred_check_branch
      %77 = sbr.rel (0) target = $region53
    $region52: #{quantum_model_v4.1} parent=1 // pred_region
      _
    $region53: #{quantum_model_v4.1} parent=1 // pred_fallthru
      _
    // Predicated region
    $region54: #{quantum_model_v4.1} parent=1 // pred_check
      _
    $region55: #{quantum_model_v4.1} parent=1 // pred_check_branch
      %79 = sbr.rel (0) target = $region57
    $region56: #{quantum_model_v4.1} parent=1 // pred_region
      _
    $region57: #{quantum_model_v4.1} parent=1 // pred_fallthru
      _
    // Predicated region
    $region58: #{quantum_model_v4.1} parent=1 // pred_check
      _
    $region59: #{quantum_model_v4.1} parent=1 // pred_check_branch
      %81 = sbr.rel (0) target = $region61
    $region60: #{quantum_model_v4.1} parent=1 // pred_region
      _
    $region61: #{quantum_model_v4.1} parent=1 // pred_fallthru
      _
    // Predicated region
    $region62: #{quantum_model_v4.1} parent=1 // pred_check
      _
    $region63: #{quantum_model_v4.1} parent=1 // pred_check_branch
      %83 = sbr.rel (0) target = $region65
    $region64: #{quantum_model_v4.1} parent=1 // pred_region
      _
    $region65: #{quantum_model_v4.1} parent=1 // pred_fallthru
      _
    // Predicated region
    $region66: #{quantum_model_v4.1} parent=1 // pred_check
      _
    $region67: #{quantum_model_v4.1} parent=1 // pred_check_branch
      %85 = sbr.rel (0) target = $region69
    $region68: #{quantum_model_v4.1} parent=1 // pred_region
      _
    $region69: #{quantum_model_v4.1} parent=1 // pred_fallthru
      _
    // Predicated region
    $region70: #{quantum_model_v4.1} parent=1 // pred_check
      _
    $region71: #{quantum_model_v4.1} parent=1 // pred_check_branch
      %87 = sbr.rel (0) target = $region73
    $region72: #{quantum_model_v4.1} parent=1 // pred_region
      _
    $region73: #{quantum_model_v4.1} parent=1 // pred_fallthru
      _
    // Predicated region
    $region74: #{quantum_model_v4.1} parent=1 // pred_check
      _
    $region75: #{quantum_model_v4.1} parent=1 // pred_check_branch
      %89 = sbr.rel (0) target = $region77
    $region76: #{quantum_model_v4.1} parent=1 // pred_region
      _
    $region77: #{quantum_model_v4.1} parent=1 // pred_fallthru
      _
    // Predicated region
    $region78: #{quantum_model_v4.1} parent=1 // pred_check
      _
    $region79: #{quantum_model_v4.1} parent=1 // pred_check_branch
      %91 = sbr.rel (0) target = $region81
    $region80: #{quantum_model_v4.1} parent=1 // pred_region
      _
    $region81: #{quantum_model_v4.1} parent=1 // pred_fallthru
      _
    // Predicated region
    $region82: #{quantum_model_v4.1} parent=1 // pred_check
      _
    $region83: #{quantum_model_v4.1} parent=1 // pred_check_branch
      %93 = sbr.rel (0) target = $region85
    $region84: #{quantum_model_v4.1} parent=1 // pred_region
      _
    $region85: #{quantum_model_v4.1} parent=1 // pred_fallthru
      _
    // Predicated region
    $region86: #{quantum_model_v4.1} parent=1 // pred_check
      _
    $region87: #{quantum_model_v4.1} parent=1 // pred_check_branch
      %95 = sbr.rel (0) target = $region89
    $region88: #{quantum_model_v4.1} parent=1 // pred_region
      _
    $region89: #{quantum_model_v4.1} parent=1 // pred_fallthru
      _
    // Predicated region
    $region90: #{quantum_model_v4.1} parent=1 // pred_check
      _
    $region91: #{quantum_model_v4.1} parent=1 // pred_check_branch
      %97 = sbr.rel (0) target = $region93
    $region92: #{quantum_model_v4.1} parent=1 // pred_region
      _
    $region93: #{quantum_model_v4.1} parent=1 // pred_fallthru
      _
    // Predicated region
    $region94: #{quantum_model_v4.1} parent=1 // pred_check
      _
    $region95: #{quantum_model_v4.1} parent=1 // pred_check_branch
      %99 = sbr.rel (0) target = $region97
    $region96: #{quantum_model_v4.1} parent=1 // pred_region
      _
    $region97: #{quantum_model_v4.1} parent=1 // pred_fallthru
      _
    // Predicated region
    $region98: #{quantum_model_v4.1} parent=1 // pred_check
      _
    $region99: #{quantum_model_v4.1} parent=1 // pred_check_branch
      %101 = sbr.rel (0) target = $region101
    $region100: #{quantum_model_v4.1} parent=1 // pred_region
      _
    $region101: #{quantum_model_v4.1} parent=1 // pred_fallthru
      _
    // Predicated region
    $region102: #{quantum_model_v4.1} parent=1 // pred_check
      _
    $region103: #{quantum_model_v4.1} parent=1 // pred_check_branch
      %103 = sbr.rel (0) target = $region105
    $region104: #{quantum_model_v4.1} parent=1 // pred_region
      _
    $region105: #{quantum_model_v4.1} parent=1 // pred_fallthru
      _
    // Predicated region
    $region106: #{quantum_model_v4.1} parent=1 // pred_check
      _
    $region107: #{quantum_model_v4.1} parent=1 // pred_check_branch
      %105 = sbr.rel (0) target = $region109
    $region108: #{quantum_model_v4.1} parent=1 // pred_region
      _
    $region109: #{quantum_model_v4.1} parent=1 // pred_fallthru
      _
    // Predicated region
    $region110: #{quantum_model_v4.1} parent=1 // pred_check
      _
    $region111: #{quantum_model_v4.1} parent=1 // pred_check_branch
      %107 = sbr.rel (0) target = $region113
    $region112: #{quantum_model_v4.1} parent=1 // pred_region
      %108 = dma.done [#allocation3], 16
    $region113: #{quantum_model_v4.1} parent=1 // pred_fallthru
      _
    // Predicated region
    $region114: #{quantum_model_v4.1} parent=1 // pred_check
      _
    $region115: #{quantum_model_v4.1} parent=1 // pred_check_branch
      %110 = sbr.rel (0) target = $region117
    $region116: #{quantum_model_v4.1} parent=1 // pred_region
      %111 = dma.done [#allocation5], 16
    $region117: #{quantum_model_v4.1} parent=1 // pred_fallthru
      _
    %112 = sfence
    %v113 = vld [vmem:[%s0] sm:$0xf]
    %v114 = vld [vmem:[%s0 + $0x4] sm:$0xf]
    %v115 = vld [vmem:[%s0 + $0x8] sm:$0xf]
    %v116 = vld [vmem:[%s0 + $0xc] sm:$0xf]
    %v117 = vld [vmem:[%s1] sm:$0xf]
    %v118 = vld [vmem:[%s1 + $0x4] sm:$0xf]
    %v119 = vld [vmem:[%s1 + $0x8] sm:$0xf]
    %v120 = vld [vmem:[%s1 + $0xc] sm:$0xf]
    %s121 = sld [smem:[#allocation2]]
    %s122 = sld [smem:[#allocation4]]
    %v123 = vstv %s121
    %v124 = vmul.f32 %v123, %v113
    %v125 = vstv %s122
    %v126 = vmul.f32 %v125, %v117
    %v127 = vsub.f32 %v124, %v126
    %v128 = vmul.f32 %v123, %v117
    %v129 = vmul.f32 %v125, %v113
    %v130 = vadd.f32 %v128, %v129
    %s131 = sld [smem:[#allocation2 + $0x1]]
    %s132 = sld [smem:[#allocation4 + $0x1]]
    %v133 = vstv %s131
    %v134 = vmul.f32 %v133, %v114
    %v135 = vstv %s132
    %v136 = vmul.f32 %v135, %v118
    %v137 = vsub.f32 %v134, %v136
    %v138 = vadd.f32 %v127, %v137
    %v139 = vmul.f32 %v133, %v118
    %v140 = vmul.f32 %v135, %v114
    %v141 = vadd.f32 %v139, %v140
    %v142 = vadd.f32 %v130, %v141
    %s143 = sld [smem:[#allocation2 + $0x2]]
    %s144 = sld [smem:[#allocation4 + $0x2]]
    %v145 = vstv %s143
    %v146 = vmul.f32 %v145, %v115
    %v147 = vstv %s144
    %v148 = vmul.f32 %v147, %v119
    %v149 = vsub.f32 %v146, %v148
    %v150 = vadd.f32 %v138, %v149
    %v151 = vmul.f32 %v145, %v119
    %v152 = vmul.f32 %v147, %v115
    %v153 = vadd.f32 %v151, %v152
    %v154 = vadd.f32 %v142, %v153
    %s155 = sld [smem:[#allocation2 + $0x3]]
    %s156 = sld [smem:[#allocation4 + $0x3]]
    %v157 = vstv %s155
    %v158 = vmul.f32 %v157, %v116
    %v159 = vstv %s156
    %v160 = vmul.f32 %v159, %v120
    %v161 = vsub.f32 %v158, %v160
    %v162 = vadd.f32 %v150, %v161
    %v163 = vmul.f32 %v157, %v120
    %v164 = vmul.f32 %v159, %v116
    %v165 = vadd.f32 %v163, %v164
    %v166 = vadd.f32 %v154, %v165
    %s167 = sld [smem:[#allocation2 + $0x4]]
    %s168 = sld [smem:[#allocation4 + $0x4]]
    %v169 = vstv %s167
    %v170 = vmul.f32 %v169, %v113
    %v171 = vstv %s168
    %v172 = vmul.f32 %v171, %v117
    %v173 = vsub.f32 %v170, %v172
    %v174 = vmul.f32 %v169, %v117
    %v175 = vmul.f32 %v171, %v113
    %v176 = vadd.f32 %v174, %v175
    %s177 = sld [smem:[#allocation2 + $0x5]]
    %s178 = sld [smem:[#allocation4 + $0x5]]
    %v179 = vstv %s177
    %v180 = vmul.f32 %v179, %v114
    %v181 = vstv %s178
    %v182 = vmul.f32 %v181, %v118
    %v183 = vsub.f32 %v180, %v182
    %v184 = vadd.f32 %v173, %v183
    %v185 = vmul.f32 %v179, %v118
    %v186 = vmul.f32 %v181, %v114
    %v187 = vadd.f32 %v185, %v186
    %v188 = vadd.f32 %v176, %v187
    %s189 = sld [smem:[#allocation2 + $0x6]]
    %s190 = sld [smem:[#allocation4 + $0x6]]
    %v191 = vstv %s189
    %v192 = vmul.f32 %v191, %v115
    %v193 = vstv %s190
    %v194 = vmul.f32 %v193, %v119
    %v195 = vsub.f32 %v192, %v194
    %v196 = vadd.f32 %v184, %v195
    %v197 = vmul.f32 %v191, %v119
    %v198 = vmul.f32 %v193, %v115
    %v199 = vadd.f32 %v197, %v198
    %v200 = vadd.f32 %v188, %v199
    %s201 = sld [smem:[#allocation2 + $0x7]]
    %s202 = sld [smem:[#allocation4 + $0x7]]
    %v203 = vstv %s201
    %v204 = vmul.f32 %v203, %v116
    %v205 = vstv %s202
    %v206 = vmul.f32 %v205, %v120
    %v207 = vsub.f32 %v204, %v206
    %v208 = vadd.f32 %v196, %v207
    %v209 = vmul.f32 %v203, %v120
    %v210 = vmul.f32 %v205, %v116
    %v211 = vadd.f32 %v209, %v210
    %v212 = vadd.f32 %v200, %v211
    %s213 = sld [smem:[#allocation2 + $0x8]]
    %s214 = sld [smem:[#allocation4 + $0x8]]
    %v215 = vstv %s213
    %v216 = vmul.f32 %v215, %v113
    %v217 = vstv %s214
    %v218 = vmul.f32 %v217, %v117
    %v219 = vsub.f32 %v216, %v218
    %v220 = vmul.f32 %v215, %v117
    %v221 = vmul.f32 %v217, %v113
    %v222 = vadd.f32 %v220, %v221
    %s223 = sld [smem:[#allocation2 + $0x9]]
    %s224 = sld [smem:[#allocation4 + $0x9]]
    %v225 = vstv %s223
    %v226 = vmul.f32 %v225, %v114
    %v227 = vstv %s224
    %v228 = vmul.f32 %v227, %v118
    %v229 = vsub.f32 %v226, %v228
    %v230 = vadd.f32 %v219, %v229
    %v231 = vmul.f32 %v225, %v118
    %v232 = vmul.f32 %v227, %v114
    %v233 = vadd.f32 %v231, %v232
    %v234 = vadd.f32 %v222, %v233
    %s235 = sld [smem:[#allocation2 + $0xa]]
    %s236 = sld [smem:[#allocation4 + $0xa]]
    %v237 = vstv %s235
    %v238 = vmul.f32 %v237, %v115
    %v239 = vstv %s236
    %v240 = vmul.f32 %v239, %v119
    %v241 = vsub.f32 %v238, %v240
    %v242 = vadd.f32 %v230, %v241
    %v243 = vmul.f32 %v237, %v119
    %v244 = vmul.f32 %v239, %v115
    %v245 = vadd.f32 %v243, %v244
    %v246 = vadd.f32 %v234, %v245
    %s247 = sld [smem:[#allocation2 + $0xb]]
    %s248 = sld [smem:[#allocation4 + $0xb]]
    %v249 = vstv %s247
    %v250 = vmul.f32 %v249, %v116
    %v251 = vstv %s248
    %v252 = vmul.f32 %v251, %v120
    %v253 = vsub.f32 %v250, %v252
    %v254 = vadd.f32 %v242, %v253
    %v255 = vmul.f32 %v249, %v120
    %v256 = vmul.f32 %v251, %v116
    %v257 = vadd.f32 %v255, %v256
    %v258 = vadd.f32 %v246, %v257
    %s259 = sld [smem:[#allocation2 + $0xc]]
    %s260 = sld [smem:[#allocation4 + $0xc]]
    %v261 = vstv %s259
    %v262 = vmul.f32 %v261, %v113
    %v263 = vstv %s260
    %v264 = vmul.f32 %v263, %v117
    %v265 = vsub.f32 %v262, %v264
    %v266 = vmul.f32 %v261, %v117
    %v267 = vmul.f32 %v263, %v113
    %v268 = vadd.f32 %v266, %v267
    %s269 = sld [smem:[#allocation2 + $0xd]]
    %s270 = sld [smem:[#allocation4 + $0xd]]
    %v271 = vstv %s269
    %v272 = vmul.f32 %v271, %v114
    %v273 = vstv %s270
    %v274 = vmul.f32 %v273, %v118
    %v275 = vsub.f32 %v272, %v274
    %v276 = vadd.f32 %v265, %v275
    %v277 = vmul.f32 %v271, %v118
    %v278 = vmul.f32 %v273, %v114
    %v279 = vadd.f32 %v277, %v278
    %v280 = vadd.f32 %v268, %v279
    %s281 = sld [smem:[#allocation2 + $0xe]]
    %s282 = sld [smem:[#allocation4 + $0xe]]
    %v283 = vstv %s281
    %v284 = vmul.f32 %v283, %v115
    %v285 = vstv %s282
    %v286 = vmul.f32 %v285, %v119
    %v287 = vsub.f32 %v284, %v286
    %v288 = vadd.f32 %v276, %v287
    %v289 = vmul.f32 %v283, %v119
    %v290 = vmul.f32 %v285, %v115
    %v291 = vadd.f32 %v289, %v290
    %v292 = vadd.f32 %v280, %v291
    %s293 = sld [smem:[#allocation2 + $0xf]]
    %s294 = sld [smem:[#allocation4 + $0xf]]
    %v295 = vstv %s293
    %v296 = vmul.f32 %v295, %v116
    %v297 = vstv %s294
    %v298 = vmul.f32 %v297, %v120
    %v299 = vsub.f32 %v296, %v298
    %v300 = vadd.f32 %v288, %v299
    %v301 = vmul.f32 %v295, %v120
    %v302 = vmul.f32 %v297, %v116
    %v303 = vadd.f32 %v301, %v302
    %v304 = vadd.f32 %v292, %v303
    %s305 = scalar_lea.vmem %s0, 16
    %v306 = vld [vmem:[%s305] sm:$0xf]
    %v307 = vld [vmem:[%s305 + $0x4] sm:$0xf]
    %v308 = vld [vmem:[%s305 + $0x8] sm:$0xf]
    %v309 = vld [vmem:[%s305 + $0xc] sm:$0xf]
    %s310 = scalar_lea.vmem %s1, 16
    %v311 = vld [vmem:[%s310] sm:$0xf]
    %v312 = vld [vmem:[%s310 + $0x4] sm:$0xf]
    %v313 = vld [vmem:[%s310 + $0x8] sm:$0xf]
    %v314 = vld [vmem:[%s310 + $0xc] sm:$0xf]
    %v315 = vlaneseq
    %v316 = vshrl.u32 %v315, 7
    %v317 = vsub.s32 0, %v316
    %v318 = vrot.slane %v306, %v317
    %v319 = vmul.f32 %v318, %v162
    %v320 = vlaneseq
    %v321 = vshrl.u32 %v320, 7
    %v322 = vsub.s32 0, %v321
    %v323 = vrot.slane %v311, %v322
    %v324 = vmul.f32 %v323, %v166
    %v325 = vsub.f32 %v319, %v324
    %v326 = vmul.f32 %v318, %v166
    %v327 = vmul.f32 %v323, %v162
    %v328 = vadd.f32 %v326, %v327
    %v329 = vlaneseq
    %v330 = vshrl.u32 %v329, 7
    %v331 = vsub.s32 1, %v330
    %v332 = vrot.slane %v306, %v331
    %v333 = vmul.f32 %v332, %v208
    %v334 = vlaneseq
    %v335 = vshrl.u32 %v334, 7
    %v336 = vsub.s32 1, %v335
    %v337 = vrot.slane %v311, %v336
    %v338 = vmul.f32 %v337, %v212
    %v339 = vsub.f32 %v333, %v338
    %v340 = vadd.f32 %v325, %v339
    %v341 = vmul.f32 %v332, %v212
    %v342 = vmul.f32 %v337, %v208
    %v343 = vadd.f32 %v341, %v342
    %v344 = vadd.f32 %v328, %v343
    %v345 = vlaneseq
    %v346 = vshrl.u32 %v345, 7
    %v347 = vsub.s32 2, %v346
    %v348 = vrot.slane %v306, %v347
    %v349 = vmul.f32 %v348, %v254
    %v350 = vlaneseq
    %v351 = vshrl.u32 %v350, 7
    %v352 = vsub.s32 2, %v351
    %v353 = vrot.slane %v311, %v352
    %v354 = vmul.f32 %v353, %v258
    %v355 = vsub.f32 %v349, %v354
    %v356 = vadd.f32 %v340, %v355
    %v357 = vmul.f32 %v348, %v258
    %v358 = vmul.f32 %v353, %v254
    %v359 = vadd.f32 %v357, %v358
    %v360 = vadd.f32 %v344, %v359
    %v361 = vlaneseq
    %v362 = vshrl.u32 %v361, 7
    %v363 = vsub.s32 3, %v362
    %v364 = vrot.slane %v306, %v363
    %v365 = vmul.f32 %v364, %v300
    %v366 = vlaneseq
    %v367 = vshrl.u32 %v366, 7
    %v368 = vsub.s32 3, %v367
    %v369 = vrot.slane %v311, %v368
    %v370 = vmul.f32 %v369, %v304
    %v371 = vsub.f32 %v365, %v370
    %v372 = vadd.f32 %v356, %v371
    %v373 = vmul.f32 %v364, %v304
    %v374 = vmul.f32 %v369, %v300
    %v375 = vadd.f32 %v373, %v374
    %v376 = vadd.f32 %v360, %v375
    %v377 = vlaneseq
    %v378 = vshrl.u32 %v377, 7
    %v379 = vsub.s32 0, %v378
    %v380 = vrot.slane %v307, %v379
    %v381 = vmul.f32 %v380, %v162
    %v382 = vlaneseq
    %v383 = vshrl.u32 %v382, 7
    %v384 = vsub.s32 0, %v383
    %v385 = vrot.slane %v312, %v384
    %v386 = vmul.f32 %v385, %v166
    %v387 = vsub.f32 %v381, %v386
    %v388 = vmul.f32 %v380, %v166
    %v389 = vmul.f32 %v385, %v162
    %v390 = vadd.f32 %v388, %v389
    %v391 = vlaneseq
    %v392 = vshrl.u32 %v391, 7
    %v393 = vsub.s32 1, %v392
    %v394 = vrot.slane %v307, %v393
    %v395 = vmul.f32 %v394, %v208
    %v396 = vlaneseq
    %v397 = vshrl.u32 %v396, 7
    %v398 = vsub.s32 1, %v397
    %v399 = vrot.slane %v312, %v398
    %v400 = vmul.f32 %v399, %v212
    %v401 = vsub.f32 %v395, %v400
    %v402 = vadd.f32 %v387, %v401
    %v403 = vmul.f32 %v394, %v212
    %v404 = vmul.f32 %v399, %v208
    %v405 = vadd.f32 %v403, %v404
    %v406 = vadd.f32 %v390, %v405
    %v407 = vlaneseq
    %v408 = vshrl.u32 %v407, 7
    %v409 = vsub.s32 2, %v408
    %v410 = vrot.slane %v307, %v409
    %v411 = vmul.f32 %v410, %v254
    %v412 = vlaneseq
    %v413 = vshrl.u32 %v412, 7
    %v414 = vsub.s32 2, %v413
    %v415 = vrot.slane %v312, %v414
    %v416 = vmul.f32 %v415, %v258
    %v417 = vsub.f32 %v411, %v416
    %v418 = vadd.f32 %v402, %v417
    %v419 = vmul.f32 %v410, %v258
    %v420 = vmul.f32 %v415, %v254
    %v421 = vadd.f32 %v419, %v420
    %v422 = vadd.f32 %v406, %v421
    %v423 = vlaneseq
    %v424 = vshrl.u32 %v423, 7
    %v425 = vsub.s32 3, %v424
    %v426 = vrot.slane %v307, %v425
    %v427 = vmul.f32 %v426, %v300
    %v428 = vlaneseq
    %v429 = vshrl.u32 %v428, 7
    %v430 = vsub.s32 3, %v429
    %v431 = vrot.slane %v312, %v430
    %v432 = vmul.f32 %v431, %v304
    %v433 = vsub.f32 %v427, %v432
    %v434 = vadd.f32 %v418, %v433
    %v435 = vmul.f32 %v426, %v304
    %v436 = vmul.f32 %v431, %v300
    %v437 = vadd.f32 %v435, %v436
    %v438 = vadd.f32 %v422, %v437
    %v439 = vlaneseq
    %v440 = vshrl.u32 %v439, 7
    %v441 = vsub.s32 0, %v440
    %v442 = vrot.slane %v308, %v441
    %v443 = vmul.f32 %v442, %v162
    %v444 = vlaneseq
    %v445 = vshrl.u32 %v444, 7
    %v446 = vsub.s32 0, %v445
    %v447 = vrot.slane %v313, %v446
    %v448 = vmul.f32 %v447, %v166
    %v449 = vsub.f32 %v443, %v448
    %v450 = vmul.f32 %v442, %v166
    %v451 = vmul.f32 %v447, %v162
    %v452 = vadd.f32 %v450, %v451
    %v453 = vlaneseq
    %v454 = vshrl.u32 %v453, 7
    %v455 = vsub.s32 1, %v454
    %v456 = vrot.slane %v308, %v455
    %v457 = vmul.f32 %v456, %v208
    %v458 = vlaneseq
    %v459 = vshrl.u32 %v458, 7
    %v460 = vsub.s32 1, %v459
    %v461 = vrot.slane %v313, %v460
    %v462 = vmul.f32 %v461, %v212
    %v463 = vsub.f32 %v457, %v462
    %v464 = vadd.f32 %v449, %v463
    %v465 = vmul.f32 %v456, %v212
    %v466 = vmul.f32 %v461, %v208
    %v467 = vadd.f32 %v465, %v466
    %v468 = vadd.f32 %v452, %v467
    %v469 = vlaneseq
    %v470 = vshrl.u32 %v469, 7
    %v471 = vsub.s32 2, %v470
    %v472 = vrot.slane %v308, %v471
    %v473 = vmul.f32 %v472, %v254
    %v474 = vlaneseq
    %v475 = vshrl.u32 %v474, 7
    %v476 = vsub.s32 2, %v475
    %v477 = vrot.slane %v313, %v476
    %v478 = vmul.f32 %v477, %v258
    %v479 = vsub.f32 %v473, %v478
    %v480 = vadd.f32 %v464, %v479
    %v481 = vmul.f32 %v472, %v258
    %v482 = vmul.f32 %v477, %v254
    %v483 = vadd.f32 %v481, %v482
    %v484 = vadd.f32 %v468, %v483
    %v485 = vlaneseq
    %v486 = vshrl.u32 %v485, 7
    %v487 = vsub.s32 3, %v486
    %v488 = vrot.slane %v308, %v487
    %v489 = vmul.f32 %v488, %v300
    %v490 = vlaneseq
    %v491 = vshrl.u32 %v490, 7
    %v492 = vsub.s32 3, %v491
    %v493 = vrot.slane %v313, %v492
    %v494 = vmul.f32 %v493, %v304
    %v495 = vsub.f32 %v489, %v494
    %v496 = vadd.f32 %v480, %v495
    %v497 = vmul.f32 %v488, %v304
    %v498 = vmul.f32 %v493, %v300
    %v499 = vadd.f32 %v497, %v498
    %v500 = vadd.f32 %v484, %v499
    %v501 = vlaneseq
    %v502 = vshrl.u32 %v501, 7
    %v503 = vsub.s32 0, %v502
    %v504 = vrot.slane %v309, %v503
    %v505 = vmul.f32 %v504, %v162
    %v506 = vlaneseq
    %v507 = vshrl.u32 %v506, 7
    %v508 = vsub.s32 0, %v507
    %v509 = vrot.slane %v314, %v508
    %v510 = vmul.f32 %v509, %v166
    %v511 = vsub.f32 %v505, %v510
    %v512 = vmul.f32 %v504, %v166
    %v513 = vmul.f32 %v509, %v162
    %v514 = vadd.f32 %v512, %v513
    %v515 = vlaneseq
    %v516 = vshrl.u32 %v515, 7
    %v517 = vsub.s32 1, %v516
    %v518 = vrot.slane %v309, %v517
    %v519 = vmul.f32 %v518, %v208
    %v520 = vlaneseq
    %v521 = vshrl.u32 %v520, 7
    %v522 = vsub.s32 1, %v521
    %v523 = vrot.slane %v314, %v522
    %v524 = vmul.f32 %v523, %v212
    %v525 = vsub.f32 %v519, %v524
    %v526 = vadd.f32 %v511, %v525
    %v527 = vmul.f32 %v518, %v212
    %v528 = vmul.f32 %v523, %v208
    %v529 = vadd.f32 %v527, %v528
    %v530 = vadd.f32 %v514, %v529
    %v531 = vlaneseq
    %v532 = vshrl.u32 %v531, 7
    %v533 = vsub.s32 2, %v532
    %v534 = vrot.slane %v309, %v533
    %v535 = vmul.f32 %v534, %v254
    %v536 = vlaneseq
    %v537 = vshrl.u32 %v536, 7
    %v538 = vsub.s32 2, %v537
    %v539 = vrot.slane %v314, %v538
    %v540 = vmul.f32 %v539, %v258
    %v541 = vsub.f32 %v535, %v540
    %v542 = vadd.f32 %v526, %v541
    %v543 = vmul.f32 %v534, %v258
    %v544 = vmul.f32 %v539, %v254
    %v545 = vadd.f32 %v543, %v544
    %v546 = vadd.f32 %v530, %v545
    %v547 = vlaneseq
    %v548 = vshrl.u32 %v547, 7
    %v549 = vsub.s32 3, %v548
    %v550 = vrot.slane %v309, %v549
    %v551 = vmul.f32 %v550, %v300
    %v552 = vlaneseq
    %v553 = vshrl.u32 %v552, 7
    %v554 = vsub.s32 3, %v553
    %v555 = vrot.slane %v314, %v554
    %v556 = vmul.f32 %v555, %v304
    %v557 = vsub.f32 %v551, %v556
    %v558 = vadd.f32 %v542, %v557
    %v559 = vmul.f32 %v550, %v304
    %v560 = vmul.f32 %v555, %v300
    %v561 = vadd.f32 %v559, %v560
    %v562 = vadd.f32 %v546, %v561
    %s563 = sld [smem:[#allocation2 + $0x10]]
    %s564 = sld [smem:[#allocation4 + $0x10]]
    %v565 = vstv %s563
    %v566 = vmul.f32 %v565, %v372
    %v567 = vstv %s564
    %v568 = vmul.f32 %v567, %v376
    %v569 = vsub.f32 %v566, %v568
    %v570 = vmul.f32 %v565, %v376
    %v571 = vmul.f32 %v567, %v372
    %v572 = vadd.f32 %v570, %v571
    %s573 = sld [smem:[#allocation2 + $0x11]]
    %s574 = sld [smem:[#allocation4 + $0x11]]
    %v575 = vstv %s573
    %v576 = vmul.f32 %v575, %v434
    %v577 = vstv %s574
    %v578 = vmul.f32 %v577, %v438
    %v579 = vsub.f32 %v576, %v578
    %v580 = vadd.f32 %v569, %v579
    %v581 = vmul.f32 %v575, %v438
    %v582 = vmul.f32 %v577, %v434
    %v583 = vadd.f32 %v581, %v582
    %v584 = vadd.f32 %v572, %v583
    %s585 = sld [smem:[#allocation2 + $0x12]]
    %s586 = sld [smem:[#allocation4 + $0x12]]
    %v587 = vstv %s585
    %v588 = vmul.f32 %v587, %v496
    %v589 = vstv %s586
    %v590 = vmul.f32 %v589, %v500
    %v591 = vsub.f32 %v588, %v590
    %v592 = vadd.f32 %v580, %v591
    %v593 = vmul.f32 %v587, %v500
    %v594 = vmul.f32 %v589, %v496
    %v595 = vadd.f32 %v593, %v594
    %v596 = vadd.f32 %v584, %v595
    %s597 = sld [smem:[#allocation2 + $0x13]]
    %s598 = sld [smem:[#allocation4 + $0x13]]
    %v599 = vstv %s597
    %v600 = vmul.f32 %v599, %v558
    %v601 = vstv %s598
    %v602 = vmul.f32 %v601, %v562
    %v603 = vsub.f32 %v600, %v602
    %v604 = vadd.f32 %v592, %v603
    %v605 = vmul.f32 %v599, %v562
    %v606 = vmul.f32 %v601, %v558
    %v607 = vadd.f32 %v605, %v606
    %v608 = vadd.f32 %v596, %v607
    %s609 = sld [smem:[#allocation2 + $0x14]]
    %s610 = sld [smem:[#allocation4 + $0x14]]
    %v611 = vstv %s609
    %v612 = vmul.f32 %v611, %v372
    %v613 = vstv %s610
    %v614 = vmul.f32 %v613, %v376
    %v615 = vsub.f32 %v612, %v614
    %v616 = vmul.f32 %v611, %v376
    %v617 = vmul.f32 %v613, %v372
    %v618 = vadd.f32 %v616, %v617
    %s619 = sld [smem:[#allocation2 + $0x15]]
    %s620 = sld [smem:[#allocation4 + $0x15]]
    %v621 = vstv %s619
    %v622 = vmul.f32 %v621, %v434
    %v623 = vstv %s620
    %v624 = vmul.f32 %v623, %v438
    %v625 = vsub.f32 %v622, %v624
    %v626 = vadd.f32 %v615, %v625
    %v627 = vmul.f32 %v621, %v438
    %v628 = vmul.f32 %v623, %v434
    %v629 = vadd.f32 %v627, %v628
    %v630 = vadd.f32 %v618, %v629
    %s631 = sld [smem:[#allocation2 + $0x16]]
    %s632 = sld [smem:[#allocation4 + $0x16]]
    %v633 = vstv %s631
    %v634 = vmul.f32 %v633, %v496
    %v635 = vstv %s632
    %v636 = vmul.f32 %v635, %v500
    %v637 = vsub.f32 %v634, %v636
    %v638 = vadd.f32 %v626, %v637
    %v639 = vmul.f32 %v633, %v500
    %v640 = vmul.f32 %v635, %v496
    %v641 = vadd.f32 %v639, %v640
    %v642 = vadd.f32 %v630, %v641
    %s643 = sld [smem:[#allocation2 + $0x17]]
    %s644 = sld [smem:[#allocation4 + $0x17]]
    %v645 = vstv %s643
    %v646 = vmul.f32 %v645, %v558
    %v647 = vstv %s644
    %v648 = vmul.f32 %v647, %v562
    %v649 = vsub.f32 %v646, %v648
    %v650 = vadd.f32 %v638, %v649
    %v651 = vmul.f32 %v645, %v562
    %v652 = vmul.f32 %v647, %v558
    %v653 = vadd.f32 %v651, %v652
    %v654 = vadd.f32 %v642, %v653
    %s655 = sld [smem:[#allocation2 + $0x18]]
    %s656 = sld [smem:[#allocation4 + $0x18]]
    %v657 = vstv %s655
    %v658 = vmul.f32 %v657, %v372
    %v659 = vstv %s656
    %v660 = vmul.f32 %v659, %v376
    %v661 = vsub.f32 %v658, %v660
    %v662 = vmul.f32 %v657, %v376
    %v663 = vmul.f32 %v659, %v372
    %v664 = vadd.f32 %v662, %v663
    %s665 = sld [smem:[#allocation2 + $0x19]]
    %s666 = sld [smem:[#allocation4 + $0x19]]
    %v667 = vstv %s665
    %v668 = vmul.f32 %v667, %v434
    %v669 = vstv %s666
    %v670 = vmul.f32 %v669, %v438
    %v671 = vsub.f32 %v668, %v670
    %v672 = vadd.f32 %v661, %v671
    %v673 = vmul.f32 %v667, %v438
    %v674 = vmul.f32 %v669, %v434
    %v675 = vadd.f32 %v673, %v674
    %v676 = vadd.f32 %v664, %v675
    %s677 = sld [smem:[#allocation2 + $0x1a]]
    %s678 = sld [smem:[#allocation4 + $0x1a]]
    %v679 = vstv %s677
    %v680 = vmul.f32 %v679, %v496
    %v681 = vstv %s678
    %v682 = vmul.f32 %v681, %v500
    %v683 = vsub.f32 %v680, %v682
    %v684 = vadd.f32 %v672, %v683
    %v685 = vmul.f32 %v679, %v500
    %v686 = vmul.f32 %v681, %v496
    %v687 = vadd.f32 %v685, %v686
    %v688 = vadd.f32 %v676, %v687
    %s689 = sld [smem:[#allocation2 + $0x1b]]
    %s690 = sld [smem:[#allocation4 + $0x1b]]
    %v691 = vstv %s689
    %v692 = vmul.f32 %v691, %v558
    %v693 = vstv %s690
    %v694 = vmul.f32 %v693, %v562
    %v695 = vsub.f32 %v692, %v694
    %v696 = vadd.f32 %v684, %v695
    %v697 = vmul.f32 %v691, %v562
    %v698 = vmul.f32 %v693, %v558
    %v699 = vadd.f32 %v697, %v698
    %v700 = vadd.f32 %v688, %v699
    %s701 = sld [smem:[#allocation2 + $0x1c]]
    %s702 = sld [smem:[#allocation4 + $0x1c]]
    %v703 = vstv %s701
    %v704 = vmul.f32 %v703, %v372
    %v705 = vstv %s702
    %v706 = vmul.f32 %v705, %v376
    %v707 = vsub.f32 %v704, %v706
    %v708 = vmul.f32 %v703, %v376
    %v709 = vmul.f32 %v705, %v372
    %v710 = vadd.f32 %v708, %v709
    %s711 = sld [smem:[#allocation2 + $0x1d]]
    %s712 = sld [smem:[#allocation4 + $0x1d]]
    %v713 = vstv %s711
    %v714 = vmul.f32 %v713, %v434
    %v715 = vstv %s712
    %v716 = vmul.f32 %v715, %v438
    %v717 = vsub.f32 %v714, %v716
    %v718 = vadd.f32 %v707, %v717
    %v719 = vmul.f32 %v713, %v438
    %v720 = vmul.f32 %v715, %v434
    %v721 = vadd.f32 %v719, %v720
    %v722 = vadd.f32 %v710, %v721
    %s723 = sld [smem:[#allocation2 + $0x1e]]
    %s724 = sld [smem:[#allocation4 + $0x1e]]
    %v725 = vstv %s723
    %v726 = vmul.f32 %v725, %v496
    %v727 = vstv %s724
    %v728 = vmul.f32 %v727, %v500
    %v729 = vsub.f32 %v726, %v728
    %v730 = vadd.f32 %v718, %v729
    %v731 = vmul.f32 %v725, %v500
    %v732 = vmul.f32 %v727, %v496
    %v733 = vadd.f32 %v731, %v732
    %v734 = vadd.f32 %v722, %v733
    %s735 = sld [smem:[#allocation2 + $0x1f]]
    %s736 = sld [smem:[#allocation4 + $0x1f]]
    %v737 = vstv %s735
    %v738 = vmul.f32 %v737, %v558
    %v739 = vstv %s736
    %v740 = vmul.f32 %v739, %v562
    %v741 = vsub.f32 %v738, %v740
    %v742 = vadd.f32 %v730, %v741
    %v743 = vmul.f32 %v737, %v562
    %v744 = vmul.f32 %v739, %v558
    %v745 = vadd.f32 %v743, %v744
    %v746 = vadd.f32 %v734, %v745
    %s747 = scalar_lea.vmem %s0, 32
    %v748 = vld [vmem:[%s747] sm:$0xf]
    %v749 = vld [vmem:[%s747 + $0x4] sm:$0xf]
    %v750 = vld [vmem:[%s747 + $0x8] sm:$0xf]
    %v751 = vld [vmem:[%s747 + $0xc] sm:$0xf]
    %s752 = scalar_lea.vmem %s1, 32
    %v753 = vld [vmem:[%s752] sm:$0xf]
    %v754 = vld [vmem:[%s752 + $0x4] sm:$0xf]
    %v755 = vld [vmem:[%s752 + $0x8] sm:$0xf]
    %v756 = vld [vmem:[%s752 + $0xc] sm:$0xf]
    %v757 = vlaneseq
    %v758 = vshrl.u32 %v757, 7
    %v759 = vsub.s32 0, %v758
    %v760 = vrot.slane %v748, %v759
    %v761 = vmul.f32 %v760, %v604
    %v762 = vlaneseq
    %v763 = vshrl.u32 %v762, 7
    %v764 = vsub.s32 0, %v763
    %v765 = vrot.slane %v753, %v764
    %v766 = vmul.f32 %v765, %v608
    %v767 = vsub.f32 %v761, %v766
    %v768 = vmul.f32 %v760, %v608
    %v769 = vmul.f32 %v765, %v604
    %v770 = vadd.f32 %v768, %v769
    %v771 = vlaneseq
    %v772 = vshrl.u32 %v771, 7
    %v773 = vsub.s32 1, %v772
    %v774 = vrot.slane %v748, %v773
    %v775 = vmul.f32 %v774, %v650
    %v776 = vlaneseq
    %v777 = vshrl.u32 %v776, 7
    %v778 = vsub.s32 1, %v777
    %v779 = vrot.slane %v753, %v778
    %v780 = vmul.f32 %v779, %v654
    %v781 = vsub.f32 %v775, %v780
    %v782 = vadd.f32 %v767, %v781
    %v783 = vmul.f32 %v774, %v654
    %v784 = vmul.f32 %v779, %v650
    %v785 = vadd.f32 %v783, %v784
    %v786 = vadd.f32 %v770, %v785
    %v787 = vlaneseq
    %v788 = vshrl.u32 %v787, 7
    %v789 = vsub.s32 2, %v788
    %v790 = vrot.slane %v748, %v789
    %v791 = vmul.f32 %v790, %v696
    %v792 = vlaneseq
    %v793 = vshrl.u32 %v792, 7
    %v794 = vsub.s32 2, %v793
    %v795 = vrot.slane %v753, %v794
    %v796 = vmul.f32 %v795, %v700
    %v797 = vsub.f32 %v791, %v796
    %v798 = vadd.f32 %v782, %v797
    %v799 = vmul.f32 %v790, %v700
    %v800 = vmul.f32 %v795, %v696
    %v801 = vadd.f32 %v799, %v800
    %v802 = vadd.f32 %v786, %v801
    %v803 = vlaneseq
    %v804 = vshrl.u32 %v803, 7
    %v805 = vsub.s32 3, %v804
    %v806 = vrot.slane %v748, %v805
    %v807 = vmul.f32 %v806, %v742
    %v808 = vlaneseq
    %v809 = vshrl.u32 %v808, 7
    %v810 = vsub.s32 3, %v809
    %v811 = vrot.slane %v753, %v810
    %v812 = vmul.f32 %v811, %v746
    %v813 = vsub.f32 %v807, %v812
    %v814 = vadd.f32 %v798, %v813
    %v815 = vmul.f32 %v806, %v746
    %v816 = vmul.f32 %v811, %v742
    %v817 = vadd.f32 %v815, %v816
    %v818 = vadd.f32 %v802, %v817
    %v819 = vlaneseq
    %v820 = vshrl.u32 %v819, 7
    %v821 = vsub.s32 0, %v820
    %v822 = vrot.slane %v749, %v821
    %v823 = vmul.f32 %v822, %v604
    %v824 = vlaneseq
    %v825 = vshrl.u32 %v824, 7
    %v826 = vsub.s32 0, %v825
    %v827 = vrot.slane %v754, %v826
    %v828 = vmul.f32 %v827, %v608
    %v829 = vsub.f32 %v823, %v828
    %v830 = vmul.f32 %v822, %v608
    %v831 = vmul.f32 %v827, %v604
    %v832 = vadd.f32 %v830, %v831
    %v833 = vlaneseq
    %v834 = vshrl.u32 %v833, 7
    %v835 = vsub.s32 1, %v834
    %v836 = vrot.slane %v749, %v835
    %v837 = vmul.f32 %v836, %v650
    %v838 = vlaneseq
    %v839 = vshrl.u32 %v838, 7
    %v840 = vsub.s32 1, %v839
    %v841 = vrot.slane %v754, %v840
    %v842 = vmul.f32 %v841, %v654
    %v843 = vsub.f32 %v837, %v842
    %v844 = vadd.f32 %v829, %v843
    %v845 = vmul.f32 %v836, %v654
    %v846 = vmul.f32 %v841, %v650
    %v847 = vadd.f32 %v845, %v846
    %v848 = vadd.f32 %v832, %v847
    %v849 = vlaneseq
    %v850 = vshrl.u32 %v849, 7
    %v851 = vsub.s32 2, %v850
    %v852 = vrot.slane %v749, %v851
    %v853 = vmul.f32 %v852, %v696
    %v854 = vlaneseq
    %v855 = vshrl.u32 %v854, 7
    %v856 = vsub.s32 2, %v855
    %v857 = vrot.slane %v754, %v856
    %v858 = vmul.f32 %v857, %v700
    %v859 = vsub.f32 %v853, %v858
    %v860 = vadd.f32 %v844, %v859
    %v861 = vmul.f32 %v852, %v700
    %v862 = vmul.f32 %v857, %v696
    %v863 = vadd.f32 %v861, %v862
    %v864 = vadd.f32 %v848, %v863
    %v865 = vlaneseq
    %v866 = vshrl.u32 %v865, 7
    %v867 = vsub.s32 3, %v866
    %v868 = vrot.slane %v749, %v867
    %v869 = vmul.f32 %v868, %v742
    %v870 = vlaneseq
    %v871 = vshrl.u32 %v870, 7
    %v872 = vsub.s32 3, %v871
    %v873 = vrot.slane %v754, %v872
    %v874 = vmul.f32 %v873, %v746
    %v875 = vsub.f32 %v869, %v874
    %v876 = vadd.f32 %v860, %v875
    %v877 = vmul.f32 %v868, %v746
    %v878 = vmul.f32 %v873, %v742
    %v879 = vadd.f32 %v877, %v878
    %v880 = vadd.f32 %v864, %v879
    %v881 = vlaneseq
    %v882 = vshrl.u32 %v881, 7
    %v883 = vsub.s32 0, %v882
    %v884 = vrot.slane %v750, %v883
    %v885 = vmul.f32 %v884, %v604
    %v886 = vlaneseq
    %v887 = vshrl.u32 %v886, 7
    %v888 = vsub.s32 0, %v887
    %v889 = vrot.slane %v755, %v888
    %v890 = vmul.f32 %v889, %v608
    %v891 = vsub.f32 %v885, %v890
    %v892 = vmul.f32 %v884, %v608
    %v893 = vmul.f32 %v889, %v604
    %v894 = vadd.f32 %v892, %v893
    %v895 = vlaneseq
    %v896 = vshrl.u32 %v895, 7
    %v897 = vsub.s32 1, %v896
    %v898 = vrot.slane %v750, %v897
    %v899 = vmul.f32 %v898, %v650
    %v900 = vlaneseq
    %v901 = vshrl.u32 %v900, 7
    %v902 = vsub.s32 1, %v901
    %v903 = vrot.slane %v755, %v902
    %v904 = vmul.f32 %v903, %v654
    %v905 = vsub.f32 %v899, %v904
    %v906 = vadd.f32 %v891, %v905
    %v907 = vmul.f32 %v898, %v654
    %v908 = vmul.f32 %v903, %v650
    %v909 = vadd.f32 %v907, %v908
    %v910 = vadd.f32 %v894, %v909
    %v911 = vlaneseq
    %v912 = vshrl.u32 %v911, 7
    %v913 = vsub.s32 2, %v912
    %v914 = vrot.slane %v750, %v913
    %v915 = vmul.f32 %v914, %v696
    %v916 = vlaneseq
    %v917 = vshrl.u32 %v916, 7
    %v918 = vsub.s32 2, %v917
    %v919 = vrot.slane %v755, %v918
    %v920 = vmul.f32 %v919, %v700
    %v921 = vsub.f32 %v915, %v920
    %v922 = vadd.f32 %v906, %v921
    %v923 = vmul.f32 %v914, %v700
    %v924 = vmul.f32 %v919, %v696
    %v925 = vadd.f32 %v923, %v924
    %v926 = vadd.f32 %v910, %v925
    %v927 = vlaneseq
    %v928 = vshrl.u32 %v927, 7
    %v929 = vsub.s32 3, %v928
    %v930 = vrot.slane %v750, %v929
    %v931 = vmul.f32 %v930, %v742
    %v932 = vlaneseq
    %v933 = vshrl.u32 %v932, 7
    %v934 = vsub.s32 3, %v933
    %v935 = vrot.slane %v755, %v934
    %v936 = vmul.f32 %v935, %v746
    %v937 = vsub.f32 %v931, %v936
    %v938 = vadd.f32 %v922, %v937
    %v939 = vmul.f32 %v930, %v746
    %v940 = vmul.f32 %v935, %v742
    %v941 = vadd.f32 %v939, %v940
    %v942 = vadd.f32 %v926, %v941
    %v943 = vlaneseq
    %v944 = vshrl.u32 %v943, 7
    %v945 = vsub.s32 0, %v944
    %v946 = vrot.slane %v751, %v945
    %v947 = vmul.f32 %v946, %v604
    %v948 = vlaneseq
    %v949 = vshrl.u32 %v948, 7
    %v950 = vsub.s32 0, %v949
    %v951 = vrot.slane %v756, %v950
    %v952 = vmul.f32 %v951, %v608
    %v953 = vsub.f32 %v947, %v952
    %v954 = vmul.f32 %v946, %v608
    %v955 = vmul.f32 %v951, %v604
    %v956 = vadd.f32 %v954, %v955
    %v957 = vlaneseq
    %v958 = vshrl.u32 %v957, 7
    %v959 = vsub.s32 1, %v958
    %v960 = vrot.slane %v751, %v959
    %v961 = vmul.f32 %v960, %v650
    %v962 = vlaneseq
    %v963 = vshrl.u32 %v962, 7
    %v964 = vsub.s32 1, %v963
    %v965 = vrot.slane %v756, %v964
    %v966 = vmul.f32 %v965, %v654
    %v967 = vsub.f32 %v961, %v966
    %v968 = vadd.f32 %v953, %v967
    %v969 = vmul.f32 %v960, %v654
    %v970 = vmul.f32 %v965, %v650
    %v971 = vadd.f32 %v969, %v970
    %v972 = vadd.f32 %v956, %v971
    %v973 = vlaneseq
    %v974 = vshrl.u32 %v973, 7
    %v975 = vsub.s32 2, %v974
    %v976 = vrot.slane %v751, %v975
    %v977 = vmul.f32 %v976, %v696
    %v978 = vlaneseq
    %v979 = vshrl.u32 %v978, 7
    %v980 = vsub.s32 2, %v979
    %v981 = vrot.slane %v756, %v980
    %v982 = vmul.f32 %v981, %v700
    %v983 = vsub.f32 %v977, %v982
    %v984 = vadd.f32 %v968, %v983
    %v985 = vmul.f32 %v976, %v700
    %v986 = vmul.f32 %v981, %v696
    %v987 = vadd.f32 %v985, %v986
    %v988 = vadd.f32 %v972, %v987
    %v989 = vlaneseq
    %v990 = vshrl.u32 %v989, 7
    %v991 = vsub.s32 3, %v990
    %v992 = vrot.slane %v751, %v991
    %v993 = vmul.f32 %v992, %v742
    %v994 = vlaneseq
    %v995 = vshrl.u32 %v994, 7
    %v996 = vsub.s32 3, %v995
    %v997 = vrot.slane %v756, %v996
    %v998 = vmul.f32 %v997, %v746
    %v999 = vsub.f32 %v993, %v998
    %v1000 = vadd.f32 %v984, %v999
    %v1001 = vmul.f32 %v992, %v746
    %v1002 = vmul.f32 %v997, %v742
    %v1003 = vadd.f32 %v1001, %v1002
    %v1004 = vadd.f32 %v988, %v1003
    %s1005 = sld [smem:[#allocation2 + $0x20]]
    %s1006 = sld [smem:[#allocation4 + $0x20]]
    %v1007 = vstv %s1005
    %v1008 = vmul.f32 %v1007, %v814
    %v1009 = vstv %s1006
    %v1010 = vmul.f32 %v1009, %v818
    %v1011 = vsub.f32 %v1008, %v1010
    %v1012 = vmul.f32 %v1007, %v818
    %v1013 = vmul.f32 %v1009, %v814
    %v1014 = vadd.f32 %v1012, %v1013
    %s1015 = sld [smem:[#allocation2 + $0x21]]
    %s1016 = sld [smem:[#allocation4 + $0x21]]
    %v1017 = vstv %s1015
    %v1018 = vmul.f32 %v1017, %v876
    %v1019 = vstv %s1016
    %v1020 = vmul.f32 %v1019, %v880
    %v1021 = vsub.f32 %v1018, %v1020
    %v1022 = vadd.f32 %v1011, %v1021
    %v1023 = vmul.f32 %v1017, %v880
    %v1024 = vmul.f32 %v1019, %v876
    %v1025 = vadd.f32 %v1023, %v1024
    %v1026 = vadd.f32 %v1014, %v1025
    %s1027 = sld [smem:[#allocation2 + $0x22]]
    %s1028 = sld [smem:[#allocation4 + $0x22]]
    %v1029 = vstv %s1027
    %v1030 = vmul.f32 %v1029, %v938
    %v1031 = vstv %s1028
    %v1032 = vmul.f32 %v1031, %v942
    %v1033 = vsub.f32 %v1030, %v1032
    %v1034 = vadd.f32 %v1022, %v1033
    %v1035 = vmul.f32 %v1029, %v942
    %v1036 = vmul.f32 %v1031, %v938
    %v1037 = vadd.f32 %v1035, %v1036
    %v1038 = vadd.f32 %v1026, %v1037
    %s1039 = sld [smem:[#allocation2 + $0x23]]
    %s1040 = sld [smem:[#allocation4 + $0x23]]
    %v1041 = vstv %s1039
    %v1042 = vmul.f32 %v1041, %v1000
    %v1043 = vstv %s1040
    %v1044 = vmul.f32 %v1043, %v1004
    %v1045 = vsub.f32 %v1042, %v1044
    %v1046 = vadd.f32 %v1034, %v1045
    %v1047 = vmul.f32 %v1041, %v1004
    %v1048 = vmul.f32 %v1043, %v1000
    %v1049 = vadd.f32 %v1047, %v1048
    %v1050 = vadd.f32 %v1038, %v1049
    %s1051 = sld [smem:[#allocation2 + $0x24]]
    %s1052 = sld [smem:[#allocation4 + $0x24]]
    %v1053 = vstv %s1051
    %v1054 = vmul.f32 %v1053, %v814
    %v1055 = vstv %s1052
    %v1056 = vmul.f32 %v1055, %v818
    %v1057 = vsub.f32 %v1054, %v1056
    %v1058 = vmul.f32 %v1053, %v818
    %v1059 = vmul.f32 %v1055, %v814
    %v1060 = vadd.f32 %v1058, %v1059
    %s1061 = sld [smem:[#allocation2 + $0x25]]
    %s1062 = sld [smem:[#allocation4 + $0x25]]
    %v1063 = vstv %s1061
    %v1064 = vmul.f32 %v1063, %v876
    %v1065 = vstv %s1062
    %v1066 = vmul.f32 %v1065, %v880
    %v1067 = vsub.f32 %v1064, %v1066
    %v1068 = vadd.f32 %v1057, %v1067
    %v1069 = vmul.f32 %v1063, %v880
    %v1070 = vmul.f32 %v1065, %v876
    %v1071 = vadd.f32 %v1069, %v1070
    %v1072 = vadd.f32 %v1060, %v1071
    %s1073 = sld [smem:[#allocation2 + $0x26]]
    %s1074 = sld [smem:[#allocation4 + $0x26]]
    %v1075 = vstv %s1073
    %v1076 = vmul.f32 %v1075, %v938
    %v1077 = vstv %s1074
    %v1078 = vmul.f32 %v1077, %v942
    %v1079 = vsub.f32 %v1076, %v1078
    %v1080 = vadd.f32 %v1068, %v1079
    %v1081 = vmul.f32 %v1075, %v942
    %v1082 = vmul.f32 %v1077, %v938
    %v1083 = vadd.f32 %v1081, %v1082
    %v1084 = vadd.f32 %v1072, %v1083
    %s1085 = sld [smem:[#allocation2 + $0x27]]
    %s1086 = sld [smem:[#allocation4 + $0x27]]
    %v1087 = vstv %s1085
    %v1088 = vmul.f32 %v1087, %v1000
    %v1089 = vstv %s1086
    %v1090 = vmul.f32 %v1089, %v1004
    %v1091 = vsub.f32 %v1088, %v1090
    %v1092 = vadd.f32 %v1080, %v1091
    %v1093 = vmul.f32 %v1087, %v1004
    %v1094 = vmul.f32 %v1089, %v1000
    %v1095 = vadd.f32 %v1093, %v1094
    %v1096 = vadd.f32 %v1084, %v1095
    %s1097 = sld [smem:[#allocation2 + $0x28]]
    %s1098 = sld [smem:[#allocation4 + $0x28]]
    %v1099 = vstv %s1097
    %v1100 = vmul.f32 %v1099, %v814
    %v1101 = vstv %s1098
    %v1102 = vmul.f32 %v1101, %v818
    %v1103 = vsub.f32 %v1100, %v1102
    %v1104 = vmul.f32 %v1099, %v818
    %v1105 = vmul.f32 %v1101, %v814
    %v1106 = vadd.f32 %v1104, %v1105
    %s1107 = sld [smem:[#allocation2 + $0x29]]
    %s1108 = sld [smem:[#allocation4 + $0x29]]
    %v1109 = vstv %s1107
    %v1110 = vmul.f32 %v1109, %v876
    %v1111 = vstv %s1108
    %v1112 = vmul.f32 %v1111, %v880
    %v1113 = vsub.f32 %v1110, %v1112
    %v1114 = vadd.f32 %v1103, %v1113
    %v1115 = vmul.f32 %v1109, %v880
    %v1116 = vmul.f32 %v1111, %v876
    %v1117 = vadd.f32 %v1115, %v1116
    %v1118 = vadd.f32 %v1106, %v1117
    %s1119 = sld [smem:[#allocation2 + $0x2a]]
    %s1120 = sld [smem:[#allocation4 + $0x2a]]
    %v1121 = vstv %s1119
    %v1122 = vmul.f32 %v1121, %v938
    %v1123 = vstv %s1120
    %v1124 = vmul.f32 %v1123, %v942
    %v1125 = vsub.f32 %v1122, %v1124
    %v1126 = vadd.f32 %v1114, %v1125
    %v1127 = vmul.f32 %v1121, %v942
    %v1128 = vmul.f32 %v1123, %v938
    %v1129 = vadd.f32 %v1127, %v1128
    %v1130 = vadd.f32 %v1118, %v1129
    %s1131 = sld [smem:[#allocation2 + $0x2b]]
    %s1132 = sld [smem:[#allocation4 + $0x2b]]
    %v1133 = vstv %s1131
    %v1134 = vmul.f32 %v1133, %v1000
    %v1135 = vstv %s1132
    %v1136 = vmul.f32 %v1135, %v1004
    %v1137 = vsub.f32 %v1134, %v1136
    %v1138 = vadd.f32 %v1126, %v1137
    %v1139 = vmul.f32 %v1133, %v1004
    %v1140 = vmul.f32 %v1135, %v1000
    %v1141 = vadd.f32 %v1139, %v1140
    %v1142 = vadd.f32 %v1130, %v1141
    %s1143 = sld [smem:[#allocation2 + $0x2c]]
    %s1144 = sld [smem:[#allocation4 + $0x2c]]
    %v1145 = vstv %s1143
    %v1146 = vmul.f32 %v1145, %v814
    %v1147 = vstv %s1144
    %v1148 = vmul.f32 %v1147, %v818
    %v1149 = vsub.f32 %v1146, %v1148
    %v1150 = vmul.f32 %v1145, %v818
    %v1151 = vmul.f32 %v1147, %v814
    %v1152 = vadd.f32 %v1150, %v1151
    %s1153 = sld [smem:[#allocation2 + $0x2d]]
    %s1154 = sld [smem:[#allocation4 + $0x2d]]
    %v1155 = vstv %s1153
    %v1156 = vmul.f32 %v1155, %v876
    %v1157 = vstv %s1154
    %v1158 = vmul.f32 %v1157, %v880
    %v1159 = vsub.f32 %v1156, %v1158
    %v1160 = vadd.f32 %v1149, %v1159
    %v1161 = vmul.f32 %v1155, %v880
    %v1162 = vmul.f32 %v1157, %v876
    %v1163 = vadd.f32 %v1161, %v1162
    %v1164 = vadd.f32 %v1152, %v1163
    %s1165 = sld [smem:[#allocation2 + $0x2e]]
    %s1166 = sld [smem:[#allocation4 + $0x2e]]
    %v1167 = vstv %s1165
    %v1168 = vmul.f32 %v1167, %v938
    %v1169 = vstv %s1166
    %v1170 = vmul.f32 %v1169, %v942
    %v1171 = vsub.f32 %v1168, %v1170
    %v1172 = vadd.f32 %v1160, %v1171
    %v1173 = vmul.f32 %v1167, %v942
    %v1174 = vmul.f32 %v1169, %v938
    %v1175 = vadd.f32 %v1173, %v1174
    %v1176 = vadd.f32 %v1164, %v1175
    %s1177 = sld [smem:[#allocation2 + $0x2f]]
    %s1178 = sld [smem:[#allocation4 + $0x2f]]
    %v1179 = vstv %s1177
    %v1180 = vmul.f32 %v1179, %v1000
    %v1181 = vstv %s1178
    %v1182 = vmul.f32 %v1181, %v1004
    %v1183 = vsub.f32 %v1180, %v1182
    %v1184 = vadd.f32 %v1172, %v1183
    %v1185 = vmul.f32 %v1179, %v1004
    %v1186 = vmul.f32 %v1181, %v1000
    %v1187 = vadd.f32 %v1185, %v1186
    %v1188 = vadd.f32 %v1176, %v1187
    %v1189 = vld [vmem:[%s2] sm:$0xf]
    %v1190 = vsub.f32 %v1189, %v1046
    %s1191 = scalar_lea.vmem %s2, 4
    %v1192 = vld [vmem:[%s1191] sm:$0xf]
    %v1193 = vsub.f32 %v1192, %v1092
    %s1194 = scalar_lea.vmem %s2, 8
    %v1195 = vld [vmem:[%s1194] sm:$0xf]
    %v1196 = vsub.f32 %v1195, %v1138
    %s1197 = scalar_lea.vmem %s2, 12
    %v1198 = vld [vmem:[%s1197] sm:$0xf]
    %v1199 = vsub.f32 %v1198, %v1184
    %v1200 = vld [vmem:[%s3] sm:$0xf]
    %v1201 = vsub.f32 %v1200, %v1050
    %s1202 = scalar_lea.vmem %s3, 4
    %v1203 = vld [vmem:[%s1202] sm:$0xf]
    %v1204 = vsub.f32 %v1203, %v1096
    %s1205 = scalar_lea.vmem %s3, 8
    %v1206 = vld [vmem:[%s1205] sm:$0xf]
    %v1207 = vsub.f32 %v1206, %v1142
    %s1208 = scalar_lea.vmem %s3, 12
    %v1209 = vld [vmem:[%s1208] sm:$0xf]
    %v1210 = vsub.f32 %v1209, %v1188
    %v1211 = vld [vmem:[%s4] sm:$0xff]
    %v1212 = vld [vmem:[%s7] sm:$0xff]
    %v1213 = vld [vmem:[%s7 + $0x8] sm:$0xff]
    %v1214 = vld [vmem:[%s7 + $0x10] sm:$0xff]
    %v1215 = vld [vmem:[%s7 + $0x18] sm:$0xff]
    %v1216 = vld [vmem:[%s8] sm:$0xff]
    %v1217 = vld [vmem:[%s8 + $0x8] sm:$0xff]
    %v1218 = vld [vmem:[%s8 + $0x10] sm:$0xff]
    %v1219 = vld [vmem:[%s8 + $0x18] sm:$0xff]
    %1221 = vset.pattern.permute.xlu0 0
    %1222 = vperm.xlu0 %1221, %v1216
    %v1223 = vpop.permute.xlu0 %1222
    %1226 = vset.pattern.permute.xlu0 0
    %1227 = vperm.xlu0 %1226, %v1217
    %v1228 = vpop.permute.xlu0 %1227
    %1231 = vset.pattern.permute.xlu0 0
    %1232 = vperm.xlu0 %1231, %v1218
    %v1233 = vpop.permute.xlu0 %1232
    %1236 = vset.pattern.permute.xlu0 0
    %1237 = vperm.xlu0 %1236, %v1219
    %v1238 = vpop.permute.xlu0 %1237
    %vm1240 = vcmask 64512
    %v1242 = vsel %vm1240, %v1212, 0
    %v1245 = vsel %vm1240, %v1213, 0
    %v1248 = vsel %vm1240, %v1214, 0
    %v1251 = vsel %vm1240, %v1215, 0
    %1253 = vmatprep.subr.mxu0 0.0
    %1254 = vmatpush1.msra.mxu0 %v1211
    %1255 = vmatprep.subr.mxu0 0.0
    %1256 = vmatpush1.msra.mxu0 0.0
    %1257 = vmatprep.subr.mxu0 0.0
    %1258 = vmatpush1.msra.mxu0 0.0
    %1259 = vmatprep.subr.mxu0 0.0
    %1260 = vmatpush1.msra.mxu0 0.0
    %1261 = vmatprep.subr.mxu0 0.0
    %1262 = vmatpush1.msra.mxu0 0.0
    %1263 = vmatprep.subr.mxu0 0.0
    %1264 = vmatpush1.msra.mxu0 0.0
    %1265 = vmatprep.subr.mxu0 0.0
    %1266 = vmatpush1.msra.mxu0 0.0
    %1267 = vmatprep.subr.mxu0 0.0
    %1268 = vmatpush1.msra.mxu0 0.0
    %1269 = vmatprep.subr.mxu0 0.0
    %1270 = vmatpush1.msra.mxu0 0.0
    %1271 = vmatprep.subr.mxu0 0.0
    %1272 = vmatpush1.msra.mxu0 0.0
    %1273 = vmatprep.subr.mxu0 0.0
    %1274 = vmatpush1.msra.mxu0 0.0
    %1275 = vmatprep.subr.mxu0 0.0
    %1276 = vmatpush1.msra.mxu0 0.0
    %1277 = vmatprep.subr.mxu0 0.0
    %1278 = vmatpush1.msra.mxu0 0.0
    %1279 = vmatprep.subr.mxu0 0.0
    %1280 = vmatpush1.msra.mxu0 0.0
    %1281 = vmatprep.subr.mxu0 0.0
    %1282 = vmatpush1.msra.mxu0 0.0
    %1283 = vmatprep.subr.mxu0 0.0
    %1284 = vmatpush1.msra.mxu0 0.0
    %1285 = vmatprep.subr.mxu0 0.0
    %1286 = vmatpush1.msra.mxu0 0.0
    %1287 = vmatprep.subr.mxu0 0.0
    %1288 = vmatpush1.msra.mxu0 0.0
    %1289 = vmatprep.subr.mxu0 0.0
    %1290 = vmatpush1.msra.mxu0 0.0
    %1291 = vmatprep.subr.mxu0 0.0
    %1292 = vmatpush1.msra.mxu0 0.0
    %1293 = vmatprep.subr.mxu0 0.0
    %1294 = vmatpush1.msra.mxu0 0.0
    %1295 = vmatprep.subr.mxu0 0.0
    %1296 = vmatpush1.msra.mxu0 0.0
    %1297 = vmatprep.subr.mxu0 0.0
    %1298 = vmatpush1.msra.mxu0 0.0
    %1299 = vmatprep.subr.mxu0 0.0
    %1300 = vmatpush1.msra.mxu0 0.0
    %1301 = vmatprep.subr.mxu0 0.0
    %1302 = vmatpush1.msra.mxu0 0.0
    %1303 = vmatprep.subr.mxu0 0.0
    %1304 = vmatpush1.msra.mxu0 0.0
    %1305 = vmatprep.subr.mxu0 0.0
    %1306 = vmatpush1.msra.mxu0 0.0
    %1307 = vmatprep.subr.mxu0 0.0
    %1308 = vmatpush1.msra.mxu0 0.0
    %1309 = vmatprep.subr.mxu0 0.0
    %1310 = vmatpush1.msra.mxu0 0.0
    %1311 = vmatprep.subr.mxu0 0.0
    %1312 = vmatpush1.msra.mxu0 0.0
    %1313 = vmatprep.subr.mxu0 0.0
    %1314 = vmatpush1.msra.mxu0 0.0
    %1315 = vmatprep.subr.mxu0 0.0
    %1316 = vmatpush1.msra.mxu0 0.0
    %1317 = vmatprep.mubr.f32.mxu0 0.0
    %1318 = vmatmul.mubr.f32.gmra.mrb[0].mxu0 %v1242
    %v1319 = vpop.f32.mrb[0].mxu0
    %v1320 = vadd.f32 %v1223, %v1319
    %v1321 = vpop.f32.mrb[0].mxu0
    %1322 = vmatprep.mubr.f32.mxu0 0.0
    %1323 = vmatmul.mubr.f32.gmra.mrb[0].mxu0 %v1245
    %v1324 = vpop.f32.mrb[0].mxu0
    %v1325 = vadd.f32 %v1228, %v1324
    %v1326 = vpop.f32.mrb[0].mxu0
    %1327 = vmatprep.mubr.f32.mxu0 0.0
    %1328 = vmatmul.mubr.f32.gmra.mrb[0].mxu0 %v1248
    %v1329 = vpop.f32.mrb[0].mxu0
    %v1330 = vadd.f32 %v1233, %v1329
    %v1331 = vpop.f32.mrb[0].mxu0
    %1332 = vmatprep.mubr.f32.mxu0 0.0
    %1333 = vmatmul.mubr.f32.gmra.mrb[0].mxu0 %v1251
    %v1334 = vpop.f32.mrb[0].mxu0
    %v1335 = vadd.f32 %v1238, %v1334
    %v1336 = vpop.f32.mrb[0].mxu0
    %1337 = vdwg.mxu0
    %v1338 = vld [vmem:[%s13] sm:$0xff]
    %v1339 = vld [vmem:[%s13 + $0x8] sm:$0xff]
    %v1340 = vld [vmem:[%s13 + $0x10] sm:$0xff]
    %v1341 = vld [vmem:[%s13 + $0x18] sm:$0xff]
    %v1342 = vld [vmem:[%s15] sm:$0xff]
    %v1343 = vld [vmem:[%s15 + $0x8] sm:$0xff]
    %v1344 = vld [vmem:[%s15 + $0x10] sm:$0xff]
    %v1345 = vld [vmem:[%s15 + $0x18] sm:$0xff]
    %1347 = vset.pattern.permute.xlu0 0
    %1348 = vperm.xlu0 %1347, %v1342
    %v1349 = vpop.permute.xlu0 %1348
    %1352 = vset.pattern.permute.xlu0 0
    %1353 = vperm.xlu0 %1352, %v1343
    %v1354 = vpop.permute.xlu0 %1353
    %1357 = vset.pattern.permute.xlu0 0
    %1358 = vperm.xlu0 %1357, %v1344
    %v1359 = vpop.permute.xlu0 %1358
    %1362 = vset.pattern.permute.xlu0 0
    %1363 = vperm.xlu0 %1362, %v1345
    %v1364 = vpop.permute.xlu0 %1363
    %vm1366 = vcmask 261120
    %v1368 = vsel %vm1366, %v1338, 0
    %v1371 = vsel %vm1366, %v1339, 0
    %v1374 = vsel %vm1366, %v1340, 0
    %v1377 = vsel %vm1366, %v1341, 0
    %1379 = vmatprep.subr.mxu0 0.0
    %1380 = vmatpush1.msra.mxu0 %v1320
    %1381 = vmatprep.subr.mxu0 0.0
    %1382 = vmatpush1.msra.mxu0 %v1325
    %1383 = vmatprep.subr.mxu0 0.0
    %1384 = vmatpush1.msra.mxu0 %v1330
    %1385 = vmatprep.subr.mxu0 0.0
    %1386 = vmatpush1.msra.mxu0 %v1335
    %1387 = vmatprep.subr.mxu0 0.0
    %1388 = vmatpush1.msra.mxu0 0.0
    %1389 = vmatprep.subr.mxu0 0.0
    %1390 = vmatpush1.msra.mxu0 0.0
    %1391 = vmatprep.subr.mxu0 0.0
    %1392 = vmatpush1.msra.mxu0 0.0
    %1393 = vmatprep.subr.mxu0 0.0
    %1394 = vmatpush1.msra.mxu0 0.0
    %1395 = vmatprep.subr.mxu0 0.0
    %1396 = vmatpush1.msra.mxu0 0.0
    %1397 = vmatprep.subr.mxu0 0.0
    %1398 = vmatpush1.msra.mxu0 0.0
    %1399 = vmatprep.subr.mxu0 0.0
    %1400 = vmatpush1.msra.mxu0 0.0
    %1401 = vmatprep.subr.mxu0 0.0
    %1402 = vmatpush1.msra.mxu0 0.0
    %1403 = vmatprep.subr.mxu0 0.0
    %1404 = vmatpush1.msra.mxu0 0.0
    %1405 = vmatprep.subr.mxu0 0.0
    %1406 = vmatpush1.msra.mxu0 0.0
    %1407 = vmatprep.subr.mxu0 0.0
    %1408 = vmatpush1.msra.mxu0 0.0
    %1409 = vmatprep.subr.mxu0 0.0
    %1410 = vmatpush1.msra.mxu0 0.0
    %1411 = vmatprep.subr.mxu0 0.0
    %1412 = vmatpush1.msra.mxu0 0.0
    %1413 = vmatprep.subr.mxu0 0.0
    %1414 = vmatpush1.msra.mxu0 0.0
    %1415 = vmatprep.subr.mxu0 0.0
    %1416 = vmatpush1.msra.mxu0 0.0
    %1417 = vmatprep.subr.mxu0 0.0
    %1418 = vmatpush1.msra.mxu0 0.0
    %1419 = vmatprep.subr.mxu0 0.0
    %1420 = vmatpush1.msra.mxu0 0.0
    %1421 = vmatprep.subr.mxu0 0.0
    %1422 = vmatpush1.msra.mxu0 0.0
    %1423 = vmatprep.subr.mxu0 0.0
    %1424 = vmatpush1.msra.mxu0 0.0
    %1425 = vmatprep.subr.mxu0 0.0
    %1426 = vmatpush1.msra.mxu0 0.0
    %1427 = vmatprep.subr.mxu0 0.0
    %1428 = vmatpush1.msra.mxu0 0.0
    %1429 = vmatprep.subr.mxu0 0.0
    %1430 = vmatpush1.msra.mxu0 0.0
    %1431 = vmatprep.subr.mxu0 0.0
    %1432 = vmatpush1.msra.mxu0 0.0
    %1433 = vmatprep.subr.mxu0 0.0
    %1434 = vmatpush1.msra.mxu0 0.0
    %1435 = vmatprep.subr.mxu0 0.0
    %1436 = vmatpush1.msra.mxu0 0.0
    %1437 = vmatprep.subr.mxu0 0.0
    %1438 = vmatpush1.msra.mxu0 0.0
    %1439 = vmatprep.subr.mxu0 0.0
    %1440 = vmatpush1.msra.mxu0 0.0
    %1441 = vmatprep.subr.mxu0 0.0
    %1442 = vmatpush1.msra.mxu0 0.0
    %1443 = vmatprep.mubr.f32.mxu0 0.0
    %1444 = vmatmul.mubr.f32.gmra.mrb[0].mxu0 %v1368
    %v1445 = vpop.f32.mrb[0].mxu0
    %v1446 = vadd.f32 %v1349, %v1445
    %v1447 = vpop.f32.mrb[0].mxu0
    %1448 = vmatprep.mubr.f32.mxu0 0.0
    %1449 = vmatmul.mubr.f32.gmra.mrb[0].mxu0 %v1371
    %v1450 = vpop.f32.mrb[0].mxu0
    %v1451 = vadd.f32 %v1354, %v1450
    %v1452 = vpop.f32.mrb[0].mxu0
    %1453 = vmatprep.mubr.f32.mxu0 0.0
    %1454 = vmatmul.mubr.f32.gmra.mrb[0].mxu0 %v1374
    %v1455 = vpop.f32.mrb[0].mxu0
    %v1456 = vadd.f32 %v1359, %v1455
    %v1457 = vpop.f32.mrb[0].mxu0
    %1458 = vmatprep.mubr.f32.mxu0 0.0
    %1459 = vmatmul.mubr.f32.gmra.mrb[0].mxu0 %v1377
    %v1460 = vpop.f32.mrb[0].mxu0
    %v1461 = vadd.f32 %v1364, %v1460
    %v1462 = vpop.f32.mrb[0].mxu0
    %1463 = vdwg.mxu0
    %v1464 = vld [vmem:[%s14] sm:$0xff]
    %v1465 = vld [vmem:[%s14 + $0x8] sm:$0xff]
    %v1466 = vld [vmem:[%s14 + $0x10] sm:$0xff]
    %v1467 = vld [vmem:[%s14 + $0x18] sm:$0xff]
    %v1468 = vld [vmem:[%s16] sm:$0xff]
    %v1469 = vld [vmem:[%s16 + $0x8] sm:$0xff]
    %v1470 = vld [vmem:[%s16 + $0x10] sm:$0xff]
    %v1471 = vld [vmem:[%s16 + $0x18] sm:$0xff]
    %1473 = vset.pattern.permute.xlu0 0
    %1474 = vperm.xlu0 %1473, %v1468
    %v1475 = vpop.permute.xlu0 %1474
    %1478 = vset.pattern.permute.xlu0 0
    %1479 = vperm.xlu0 %1478, %v1469
    %v1480 = vpop.permute.xlu0 %1479
    %1483 = vset.pattern.permute.xlu0 0
    %1484 = vperm.xlu0 %1483, %v1470
    %v1485 = vpop.permute.xlu0 %1484
    %1488 = vset.pattern.permute.xlu0 0
    %1489 = vperm.xlu0 %1488, %v1471
    %v1490 = vpop.permute.xlu0 %1489
    %v1493 = vsel %vm1366, %v1464, 0
    %v1496 = vsel %vm1366, %v1465, 0
    %v1499 = vsel %vm1366, %v1466, 0
    %v1502 = vsel %vm1366, %v1467, 0
    %1504 = vmatprep.subr.mxu0 0.0
    %1505 = vmatpush1.msra.mxu0 %v1320
    %1506 = vmatprep.subr.mxu0 0.0
    %1507 = vmatpush1.msra.mxu0 %v1325
    %1508 = vmatprep.subr.mxu0 0.0
    %1509 = vmatpush1.msra.mxu0 %v1330
    %1510 = vmatprep.subr.mxu0 0.0
    %1511 = vmatpush1.msra.mxu0 %v1335
    %1512 = vmatprep.subr.mxu0 0.0
    %1513 = vmatpush1.msra.mxu0 0.0
    %1514 = vmatprep.subr.mxu0 0.0
    %1515 = vmatpush1.msra.mxu0 0.0
    %1516 = vmatprep.subr.mxu0 0.0
    %1517 = vmatpush1.msra.mxu0 0.0
    %1518 = vmatprep.subr.mxu0 0.0
    %1519 = vmatpush1.msra.mxu0 0.0
    %1520 = vmatprep.subr.mxu0 0.0
    %1521 = vmatpush1.msra.mxu0 0.0
    %1522 = vmatprep.subr.mxu0 0.0
    %1523 = vmatpush1.msra.mxu0 0.0
    %1524 = vmatprep.subr.mxu0 0.0
    %1525 = vmatpush1.msra.mxu0 0.0
    %1526 = vmatprep.subr.mxu0 0.0
    %1527 = vmatpush1.msra.mxu0 0.0
    %1528 = vmatprep.subr.mxu0 0.0
    %1529 = vmatpush1.msra.mxu0 0.0
    %1530 = vmatprep.subr.mxu0 0.0
    %1531 = vmatpush1.msra.mxu0 0.0
    %1532 = vmatprep.subr.mxu0 0.0
    %1533 = vmatpush1.msra.mxu0 0.0
    %1534 = vmatprep.subr.mxu0 0.0
    %1535 = vmatpush1.msra.mxu0 0.0
    %1536 = vmatprep.subr.mxu0 0.0
    %1537 = vmatpush1.msra.mxu0 0.0
    %1538 = vmatprep.subr.mxu0 0.0
    %1539 = vmatpush1.msra.mxu0 0.0
    %1540 = vmatprep.subr.mxu0 0.0
    %1541 = vmatpush1.msra.mxu0 0.0
    %1542 = vmatprep.subr.mxu0 0.0
    %1543 = vmatpush1.msra.mxu0 0.0
    %1544 = vmatprep.subr.mxu0 0.0
    %1545 = vmatpush1.msra.mxu0 0.0
    %1546 = vmatprep.subr.mxu0 0.0
    %1547 = vmatpush1.msra.mxu0 0.0
    %1548 = vmatprep.subr.mxu0 0.0
    %1549 = vmatpush1.msra.mxu0 0.0
    %1550 = vmatprep.subr.mxu0 0.0
    %1551 = vmatpush1.msra.mxu0 0.0
    %1552 = vmatprep.subr.mxu0 0.0
    %1553 = vmatpush1.msra.mxu0 0.0
    %1554 = vmatprep.subr.mxu0 0.0
    %1555 = vmatpush1.msra.mxu0 0.0
    %1556 = vmatprep.subr.mxu0 0.0
    %1557 = vmatpush1.msra.mxu0 0.0
    %1558 = vmatprep.subr.mxu0 0.0
    %1559 = vmatpush1.msra.mxu0 0.0
    %1560 = vmatprep.subr.mxu0 0.0
    %1561 = vmatpush1.msra.mxu0 0.0
    %1562 = vmatprep.subr.mxu0 0.0
    %1563 = vmatpush1.msra.mxu0 0.0
    %1564 = vmatprep.subr.mxu0 0.0
    %1565 = vmatpush1.msra.mxu0 0.0
    %1566 = vmatprep.subr.mxu0 0.0
    %1567 = vmatpush1.msra.mxu0 0.0
    %1568 = vmatprep.mubr.f32.mxu0 0.0
    %1569 = vmatmul.mubr.f32.gmra.mrb[0].mxu0 %v1493
    %v1570 = vpop.f32.mrb[0].mxu0
    %v1571 = vadd.f32 %v1475, %v1570
    %v1572 = vpop.f32.mrb[0].mxu0
    %1573 = vmatprep.mubr.f32.mxu0 0.0
    %1574 = vmatmul.mubr.f32.gmra.mrb[0].mxu0 %v1496
    %v1575 = vpop.f32.mrb[0].mxu0
    %v1576 = vadd.f32 %v1480, %v1575
    %v1577 = vpop.f32.mrb[0].mxu0
    %1578 = vmatprep.mubr.f32.mxu0 0.0
    %1579 = vmatmul.mubr.f32.gmra.mrb[0].mxu0 %v1499
    %v1580 = vpop.f32.mrb[0].mxu0
    %v1581 = vadd.f32 %v1485, %v1580
    %v1582 = vpop.f32.mrb[0].mxu0
    %1583 = vmatprep.mubr.f32.mxu0 0.0
    %1584 = vmatmul.mubr.f32.gmra.mrb[0].mxu0 %v1502
    %v1585 = vpop.f32.mrb[0].mxu0
    %v1586 = vadd.f32 %v1490, %v1585
    %v1587 = vpop.f32.mrb[0].mxu0
    %1588 = vdwg.mxu0
    %v1589 = vld [vmem:[%s9] sm:$0xff]
    %v1590 = vld [vmem:[%s9 + $0x8] sm:$0xff]
    %v1591 = vld [vmem:[%s9 + $0x10] sm:$0xff]
    %v1592 = vld [vmem:[%s9 + $0x18] sm:$0xff]
    %vm1593 = vcmask 31744
    %v1595 = vsel %vm1593, %v1589, 0
    %v1598 = vsel %vm1593, %v1590, 0
    %v1601 = vsel %vm1593, %v1591, 0
    %v1604 = vsel %vm1593, %v1592, 0
    %vm1606 = vcmask 1043456
    %v1608 = vsel %vm1606, %v1190, 0
    %1610 = vmatprep.subr.mxu0 0.0
    %1611 = vmatpush1.msra.mxu0 %v1608
    %1612 = vmatprep.subr.mxu0 0.0
    %1613 = vmatpush1.msra.mxu0 0.0
    %1614 = vmatprep.subr.mxu0 0.0
    %1615 = vmatpush1.msra.mxu0 0.0
    %1616 = vmatprep.subr.mxu0 0.0
    %1617 = vmatpush1.msra.mxu0 0.0
    %1618 = vmatprep.subr.mxu0 0.0
    %1619 = vmatpush1.msra.mxu0 0.0
    %1620 = vmatprep.subr.mxu0 0.0
    %1621 = vmatpush1.msra.mxu0 0.0
    %1622 = vmatprep.subr.mxu0 0.0
    %1623 = vmatpush1.msra.mxu0 0.0
    %1624 = vmatprep.subr.mxu0 0.0
    %1625 = vmatpush1.msra.mxu0 0.0
    %1626 = vmatprep.subr.mxu0 0.0
    %1627 = vmatpush1.msra.mxu0 0.0
    %1628 = vmatprep.subr.mxu0 0.0
    %1629 = vmatpush1.msra.mxu0 0.0
    %1630 = vmatprep.subr.mxu0 0.0
    %1631 = vmatpush1.msra.mxu0 0.0
    %1632 = vmatprep.subr.mxu0 0.0
    %1633 = vmatpush1.msra.mxu0 0.0
    %1634 = vmatprep.subr.mxu0 0.0
    %1635 = vmatpush1.msra.mxu0 0.0
    %1636 = vmatprep.subr.mxu0 0.0
    %1637 = vmatpush1.msra.mxu0 0.0
    %1638 = vmatprep.subr.mxu0 0.0
    %1639 = vmatpush1.msra.mxu0 0.0
    %1640 = vmatprep.subr.mxu0 0.0
    %1641 = vmatpush1.msra.mxu0 0.0
    %1642 = vmatprep.subr.mxu0 0.0
    %1643 = vmatpush1.msra.mxu0 0.0
    %1644 = vmatprep.subr.mxu0 0.0
    %1645 = vmatpush1.msra.mxu0 0.0
    %1646 = vmatprep.subr.mxu0 0.0
    %1647 = vmatpush1.msra.mxu0 0.0
    %1648 = vmatprep.subr.mxu0 0.0
    %1649 = vmatpush1.msra.mxu0 0.0
    %1650 = vmatprep.subr.mxu0 0.0
    %1651 = vmatpush1.msra.mxu0 0.0
    %1652 = vmatprep.subr.mxu0 0.0
    %1653 = vmatpush1.msra.mxu0 0.0
    %1654 = vmatprep.subr.mxu0 0.0
    %1655 = vmatpush1.msra.mxu0 0.0
    %1656 = vmatprep.subr.mxu0 0.0
    %1657 = vmatpush1.msra.mxu0 0.0
    %1658 = vmatprep.subr.mxu0 0.0
    %1659 = vmatpush1.msra.mxu0 0.0
    %1660 = vmatprep.subr.mxu0 0.0
    %1661 = vmatpush1.msra.mxu0 0.0
    %1662 = vmatprep.subr.mxu0 0.0
    %1663 = vmatpush1.msra.mxu0 0.0
    %1664 = vmatprep.subr.mxu0 0.0
    %1665 = vmatpush1.msra.mxu0 0.0
    %1666 = vmatprep.subr.mxu0 0.0
    %1667 = vmatpush1.msra.mxu0 0.0
    %1668 = vmatprep.subr.mxu0 0.0
    %1669 = vmatpush1.msra.mxu0 0.0
    %1670 = vmatprep.subr.mxu0 0.0
    %1671 = vmatpush1.msra.mxu0 0.0
    %1672 = vmatprep.subr.mxu0 0.0
    %1673 = vmatpush1.msra.mxu0 0.0
    %1674 = vmatprep.mubr.f32.mxu0 0.0
    %1675 = vmatmul.mubr.f32.gmra.mrb[0].mxu0 %v1595
    %v1676 = vpop.f32.mrb[0].mxu0
    %v1677 = vadd.f32 0.0, %v1676
    %v1678 = vpop.f32.mrb[0].mxu0
    %1679 = vmatprep.mubr.f32.mxu0 0.0
    %1680 = vmatmul.mubr.f32.gmra.mrb[0].mxu0 %v1598
    %v1681 = vpop.f32.mrb[0].mxu0
    %v1682 = vadd.f32 0.0, %v1681
    %v1683 = vpop.f32.mrb[0].mxu0
    %1684 = vmatprep.mubr.f32.mxu0 0.0
    %1685 = vmatmul.mubr.f32.gmra.mrb[0].mxu0 %v1601
    %v1686 = vpop.f32.mrb[0].mxu0
    %v1687 = vadd.f32 0.0, %v1686
    %v1688 = vpop.f32.mrb[0].mxu0
    %1689 = vmatprep.mubr.f32.mxu0 0.0
    %1690 = vmatmul.mubr.f32.gmra.mrb[0].mxu0 %v1604
    %v1691 = vpop.f32.mrb[0].mxu0
    %v1692 = vadd.f32 0.0, %v1691
    %v1693 = vpop.f32.mrb[0].mxu0
    %1694 = vdwg.mxu0
    %v1695 = vadd.f32 %v1446, %v1677
    %v1696 = vadd.f32 %v1451, %v1682
    %v1697 = vadd.f32 %v1456, %v1687
    %v1698 = vadd.f32 %v1461, %v1692
    %v1699 = vld [vmem:[%s10] sm:$0xff]
    %v1700 = vld [vmem:[%s10 + $0x8] sm:$0xff]
    %v1701 = vld [vmem:[%s10 + $0x10] sm:$0xff]
    %v1702 = vld [vmem:[%s10 + $0x18] sm:$0xff]
    %v1704 = vsel %vm1593, %v1699, 0
    %v1707 = vsel %vm1593, %v1700, 0
    %v1710 = vsel %vm1593, %v1701, 0
    %v1713 = vsel %vm1593, %v1702, 0
    %v1716 = vsel %vm1606, %v1201, 0
    %1718 = vmatprep.subr.mxu0 0.0
    %1719 = vmatpush1.msra.mxu0 %v1716
    %1720 = vmatprep.subr.mxu0 0.0
    %1721 = vmatpush1.msra.mxu0 0.0
    %1722 = vmatprep.subr.mxu0 0.0
    %1723 = vmatpush1.msra.mxu0 0.0
    %1724 = vmatprep.subr.mxu0 0.0
    %1725 = vmatpush1.msra.mxu0 0.0
    %1726 = vmatprep.subr.mxu0 0.0
    %1727 = vmatpush1.msra.mxu0 0.0
    %1728 = vmatprep.subr.mxu0 0.0
    %1729 = vmatpush1.msra.mxu0 0.0
    %1730 = vmatprep.subr.mxu0 0.0
    %1731 = vmatpush1.msra.mxu0 0.0
    %1732 = vmatprep.subr.mxu0 0.0
    %1733 = vmatpush1.msra.mxu0 0.0
    %1734 = vmatprep.subr.mxu0 0.0
    %1735 = vmatpush1.msra.mxu0 0.0
    %1736 = vmatprep.subr.mxu0 0.0
    %1737 = vmatpush1.msra.mxu0 0.0
    %1738 = vmatprep.subr.mxu0 0.0
    %1739 = vmatpush1.msra.mxu0 0.0
    %1740 = vmatprep.subr.mxu0 0.0
    %1741 = vmatpush1.msra.mxu0 0.0
    %1742 = vmatprep.subr.mxu0 0.0
    %1743 = vmatpush1.msra.mxu0 0.0
    %1744 = vmatprep.subr.mxu0 0.0
    %1745 = vmatpush1.msra.mxu0 0.0
    %1746 = vmatprep.subr.mxu0 0.0
    %1747 = vmatpush1.msra.mxu0 0.0
    %1748 = vmatprep.subr.mxu0 0.0
    %1749 = vmatpush1.msra.mxu0 0.0
    %1750 = vmatprep.subr.mxu0 0.0
    %1751 = vmatpush1.msra.mxu0 0.0
    %1752 = vmatprep.subr.mxu0 0.0
    %1753 = vmatpush1.msra.mxu0 0.0
    %1754 = vmatprep.subr.mxu0 0.0
    %1755 = vmatpush1.msra.mxu0 0.0
    %1756 = vmatprep.subr.mxu0 0.0
    %1757 = vmatpush1.msra.mxu0 0.0
    %1758 = vmatprep.subr.mxu0 0.0
    %1759 = vmatpush1.msra.mxu0 0.0
    %1760 = vmatprep.subr.mxu0 0.0
    %1761 = vmatpush1.msra.mxu0 0.0
    %1762 = vmatprep.subr.mxu0 0.0
    %1763 = vmatpush1.msra.mxu0 0.0
    %1764 = vmatprep.subr.mxu0 0.0
    %1765 = vmatpush1.msra.mxu0 0.0
    %1766 = vmatprep.subr.mxu0 0.0
    %1767 = vmatpush1.msra.mxu0 0.0
    %1768 = vmatprep.subr.mxu0 0.0
    %1769 = vmatpush1.msra.mxu0 0.0
    %1770 = vmatprep.subr.mxu0 0.0
    %1771 = vmatpush1.msra.mxu0 0.0
    %1772 = vmatprep.subr.mxu0 0.0
    %1773 = vmatpush1.msra.mxu0 0.0
    %1774 = vmatprep.subr.mxu0 0.0
    %1775 = vmatpush1.msra.mxu0 0.0
    %1776 = vmatprep.subr.mxu0 0.0
    %1777 = vmatpush1.msra.mxu0 0.0
    %1778 = vmatprep.subr.mxu0 0.0
    %1779 = vmatpush1.msra.mxu0 0.0
    %1780 = vmatprep.subr.mxu0 0.0
    %1781 = vmatpush1.msra.mxu0 0.0
    %1782 = vmatprep.mubr.f32.mxu0 0.0
    %1783 = vmatmul.mubr.f32.gmra.mrb[0].mxu0 %v1704
    %v1784 = vpop.f32.mrb[0].mxu0
    %v1785 = vadd.f32 0.0, %v1784
    %v1786 = vpop.f32.mrb[0].mxu0
    %1787 = vmatprep.mubr.f32.mxu0 0.0
    %1788 = vmatmul.mubr.f32.gmra.mrb[0].mxu0 %v1707
    %v1789 = vpop.f32.mrb[0].mxu0
    %v1790 = vadd.f32 0.0, %v1789
    %v1791 = vpop.f32.mrb[0].mxu0
    %1792 = vmatprep.mubr.f32.mxu0 0.0
    %1793 = vmatmul.mubr.f32.gmra.mrb[0].mxu0 %v1710
    %v1794 = vpop.f32.mrb[0].mxu0
    %v1795 = vadd.f32 0.0, %v1794
    %v1796 = vpop.f32.mrb[0].mxu0
    %1797 = vmatprep.mubr.f32.mxu0 0.0
    %1798 = vmatmul.mubr.f32.gmra.mrb[0].mxu0 %v1713
    %v1799 = vpop.f32.mrb[0].mxu0
    %v1800 = vadd.f32 0.0, %v1799
    %v1801 = vpop.f32.mrb[0].mxu0
    %1802 = vdwg.mxu0
    %v1803 = vadd.f32 %v1695, %v1785
    %v1804 = vadd.f32 %v1696, %v1790
    %v1805 = vadd.f32 %v1697, %v1795
    %v1806 = vadd.f32 %v1698, %v1800
    %v1807 = vld [vmem:[%s11] sm:$0xff]
    %v1808 = vld [vmem:[%s11 + $0x8] sm:$0xff]
    %v1809 = vld [vmem:[%s11 + $0x10] sm:$0xff]
    %v1810 = vld [vmem:[%s11 + $0x18] sm:$0xff]
    %v1812 = vsel %vm1593, %v1807, 0
    %v1815 = vsel %vm1593, %v1808, 0
    %v1818 = vsel %vm1593, %v1809, 0
    %v1821 = vsel %vm1593, %v1810, 0
    %1823 = vmatprep.subr.mxu0 0.0
    %1824 = vmatpush1.msra.mxu0 %v1608
    %1825 = vmatprep.subr.mxu0 0.0
    %1826 = vmatpush1.msra.mxu0 0.0
    %1827 = vmatprep.subr.mxu0 0.0
    %1828 = vmatpush1.msra.mxu0 0.0
    %1829 = vmatprep.subr.mxu0 0.0
    %1830 = vmatpush1.msra.mxu0 0.0
    %1831 = vmatprep.subr.mxu0 0.0
    %1832 = vmatpush1.msra.mxu0 0.0
    %1833 = vmatprep.subr.mxu0 0.0
    %1834 = vmatpush1.msra.mxu0 0.0
    %1835 = vmatprep.subr.mxu0 0.0
    %1836 = vmatpush1.msra.mxu0 0.0
    %1837 = vmatprep.subr.mxu0 0.0
    %1838 = vmatpush1.msra.mxu0 0.0
    %1839 = vmatprep.subr.mxu0 0.0
    %1840 = vmatpush1.msra.mxu0 0.0
    %1841 = vmatprep.subr.mxu0 0.0
    %1842 = vmatpush1.msra.mxu0 0.0
    %1843 = vmatprep.subr.mxu0 0.0
    %1844 = vmatpush1.msra.mxu0 0.0
    %1845 = vmatprep.subr.mxu0 0.0
    %1846 = vmatpush1.msra.mxu0 0.0
    %1847 = vmatprep.subr.mxu0 0.0
    %1848 = vmatpush1.msra.mxu0 0.0
    %1849 = vmatprep.subr.mxu0 0.0
    %1850 = vmatpush1.msra.mxu0 0.0
    %1851 = vmatprep.subr.mxu0 0.0
    %1852 = vmatpush1.msra.mxu0 0.0
    %1853 = vmatprep.subr.mxu0 0.0
    %1854 = vmatpush1.msra.mxu0 0.0
    %1855 = vmatprep.subr.mxu0 0.0
    %1856 = vmatpush1.msra.mxu0 0.0
    %1857 = vmatprep.subr.mxu0 0.0
    %1858 = vmatpush1.msra.mxu0 0.0
    %1859 = vmatprep.subr.mxu0 0.0
    %1860 = vmatpush1.msra.mxu0 0.0
    %1861 = vmatprep.subr.mxu0 0.0
    %1862 = vmatpush1.msra.mxu0 0.0
    %1863 = vmatprep.subr.mxu0 0.0
    %1864 = vmatpush1.msra.mxu0 0.0
    %1865 = vmatprep.subr.mxu0 0.0
    %1866 = vmatpush1.msra.mxu0 0.0
    %1867 = vmatprep.subr.mxu0 0.0
    %1868 = vmatpush1.msra.mxu0 0.0
    %1869 = vmatprep.subr.mxu0 0.0
    %1870 = vmatpush1.msra.mxu0 0.0
    %1871 = vmatprep.subr.mxu0 0.0
    %1872 = vmatpush1.msra.mxu0 0.0
    %1873 = vmatprep.subr.mxu0 0.0
    %1874 = vmatpush1.msra.mxu0 0.0
    %1875 = vmatprep.subr.mxu0 0.0
    %1876 = vmatpush1.msra.mxu0 0.0
    %1877 = vmatprep.subr.mxu0 0.0
    %1878 = vmatpush1.msra.mxu0 0.0
    %1879 = vmatprep.subr.mxu0 0.0
    %1880 = vmatpush1.msra.mxu0 0.0
    %1881 = vmatprep.subr.mxu0 0.0
    %1882 = vmatpush1.msra.mxu0 0.0
    %1883 = vmatprep.subr.mxu0 0.0
    %1884 = vmatpush1.msra.mxu0 0.0
    %1885 = vmatprep.subr.mxu0 0.0
    %1886 = vmatpush1.msra.mxu0 0.0
    %1887 = vmatprep.mubr.f32.mxu0 0.0
    %1888 = vmatmul.mubr.f32.gmra.mrb[0].mxu0 %v1812
    %v1889 = vpop.f32.mrb[0].mxu0
    %v1890 = vadd.f32 0.0, %v1889
    %v1891 = vpop.f32.mrb[0].mxu0
    %1892 = vmatprep.mubr.f32.mxu0 0.0
    %1893 = vmatmul.mubr.f32.gmra.mrb[0].mxu0 %v1815
    %v1894 = vpop.f32.mrb[0].mxu0
    %v1895 = vadd.f32 0.0, %v1894
    %v1896 = vpop.f32.mrb[0].mxu0
    %1897 = vmatprep.mubr.f32.mxu0 0.0
    %1898 = vmatmul.mubr.f32.gmra.mrb[0].mxu0 %v1818
    %v1899 = vpop.f32.mrb[0].mxu0
    %v1900 = vadd.f32 0.0, %v1899
    %v1901 = vpop.f32.mrb[0].mxu0
    %1902 = vmatprep.mubr.f32.mxu0 0.0
    %1903 = vmatmul.mubr.f32.gmra.mrb[0].mxu0 %v1821
    %v1904 = vpop.f32.mrb[0].mxu0
    %v1905 = vadd.f32 0.0, %v1904
    %v1906 = vpop.f32.mrb[0].mxu0
    %1907 = vdwg.mxu0
    %v1908 = vadd.f32 %v1571, %v1890
    %v1909 = vadd.f32 %v1576, %v1895
    %v1910 = vadd.f32 %v1581, %v1900
    %v1911 = vadd.f32 %v1586, %v1905
    %v1912 = vld [vmem:[%s12] sm:$0xff]
    %v1913 = vld [vmem:[%s12 + $0x8] sm:$0xff]
    %v1914 = vld [vmem:[%s12 + $0x10] sm:$0xff]
    %v1915 = vld [vmem:[%s12 + $0x18] sm:$0xff]
    %v1917 = vsel %vm1593, %v1912, 0
    %v1920 = vsel %vm1593, %v1913, 0
    %v1923 = vsel %vm1593, %v1914, 0
    %v1926 = vsel %vm1593, %v1915, 0
    %1928 = vmatprep.subr.mxu0 0.0
    %1929 = vmatpush1.msra.mxu0 %v1716
    %1930 = vmatprep.subr.mxu0 0.0
    %1931 = vmatpush1.msra.mxu0 0.0
    %1932 = vmatprep.subr.mxu0 0.0
    %1933 = vmatpush1.msra.mxu0 0.0
    %1934 = vmatprep.subr.mxu0 0.0
    %1935 = vmatpush1.msra.mxu0 0.0
    %1936 = vmatprep.subr.mxu0 0.0
    %1937 = vmatpush1.msra.mxu0 0.0
    %1938 = vmatprep.subr.mxu0 0.0
    %1939 = vmatpush1.msra.mxu0 0.0
    %1940 = vmatprep.subr.mxu0 0.0
    %1941 = vmatpush1.msra.mxu0 0.0
    %1942 = vmatprep.subr.mxu0 0.0
    %1943 = vmatpush1.msra.mxu0 0.0
    %1944 = vmatprep.subr.mxu0 0.0
    %1945 = vmatpush1.msra.mxu0 0.0
    %1946 = vmatprep.subr.mxu0 0.0
    %1947 = vmatpush1.msra.mxu0 0.0
    %1948 = vmatprep.subr.mxu0 0.0
    %1949 = vmatpush1.msra.mxu0 0.0
    %1950 = vmatprep.subr.mxu0 0.0
    %1951 = vmatpush1.msra.mxu0 0.0
    %1952 = vmatprep.subr.mxu0 0.0
    %1953 = vmatpush1.msra.mxu0 0.0
    %1954 = vmatprep.subr.mxu0 0.0
    %1955 = vmatpush1.msra.mxu0 0.0
    %1956 = vmatprep.subr.mxu0 0.0
    %1957 = vmatpush1.msra.mxu0 0.0
    %1958 = vmatprep.subr.mxu0 0.0
    %1959 = vmatpush1.msra.mxu0 0.0
    %1960 = vmatprep.subr.mxu0 0.0
    %1961 = vmatpush1.msra.mxu0 0.0
    %1962 = vmatprep.subr.mxu0 0.0
    %1963 = vmatpush1.msra.mxu0 0.0
    %1964 = vmatprep.subr.mxu0 0.0
    %1965 = vmatpush1.msra.mxu0 0.0
    %1966 = vmatprep.subr.mxu0 0.0
    %1967 = vmatpush1.msra.mxu0 0.0
    %1968 = vmatprep.subr.mxu0 0.0
    %1969 = vmatpush1.msra.mxu0 0.0
    %1970 = vmatprep.subr.mxu0 0.0
    %1971 = vmatpush1.msra.mxu0 0.0
    %1972 = vmatprep.subr.mxu0 0.0
    %1973 = vmatpush1.msra.mxu0 0.0
    %1974 = vmatprep.subr.mxu0 0.0
    %1975 = vmatpush1.msra.mxu0 0.0
    %1976 = vmatprep.subr.mxu0 0.0
    %1977 = vmatpush1.msra.mxu0 0.0
    %1978 = vmatprep.subr.mxu0 0.0
    %1979 = vmatpush1.msra.mxu0 0.0
    %1980 = vmatprep.subr.mxu0 0.0
    %1981 = vmatpush1.msra.mxu0 0.0
    %1982 = vmatprep.subr.mxu0 0.0
    %1983 = vmatpush1.msra.mxu0 0.0
    %1984 = vmatprep.subr.mxu0 0.0
    %1985 = vmatpush1.msra.mxu0 0.0
    %1986 = vmatprep.subr.mxu0 0.0
    %1987 = vmatpush1.msra.mxu0 0.0
    %1988 = vmatprep.subr.mxu0 0.0
    %1989 = vmatpush1.msra.mxu0 0.0
    %1990 = vmatprep.subr.mxu0 0.0
    %1991 = vmatpush1.msra.mxu0 0.0
    %1992 = vmatprep.mubr.f32.mxu0 0.0
    %1993 = vmatmul.mubr.f32.gmra.mrb[0].mxu0 %v1917
    %v1994 = vpop.f32.mrb[0].mxu0
    %v1995 = vadd.f32 0.0, %v1994
    %v1996 = vpop.f32.mrb[0].mxu0
    %1997 = vmatprep.mubr.f32.mxu0 0.0
    %1998 = vmatmul.mubr.f32.gmra.mrb[0].mxu0 %v1920
    %v1999 = vpop.f32.mrb[0].mxu0
    %v2000 = vadd.f32 0.0, %v1999
    %v2001 = vpop.f32.mrb[0].mxu0
    %2002 = vmatprep.mubr.f32.mxu0 0.0
    %2003 = vmatmul.mubr.f32.gmra.mrb[0].mxu0 %v1923
    %v2004 = vpop.f32.mrb[0].mxu0
    %v2005 = vadd.f32 0.0, %v2004
    %v2006 = vpop.f32.mrb[0].mxu0
    %2007 = vmatprep.mubr.f32.mxu0 0.0
    %2008 = vmatmul.mubr.f32.gmra.mrb[0].mxu0 %v1926
    %v2009 = vpop.f32.mrb[0].mxu0
    %v2010 = vadd.f32 0.0, %v2009
    %v2011 = vpop.f32.mrb[0].mxu0
    %2012 = vdwg.mxu0
    %v2013 = vadd.f32 %v1908, %v1995
    %v2014 = vadd.f32 %v1909, %v2000
    %v2015 = vadd.f32 %v1910, %v2005
    %v2016 = vadd.f32 %v1911, %v2010
    %s2017 = scalar_lea.vmem %s9, 32
    %v2018 = vld [vmem:[%s2017] sm:$0xff]
    %v2019 = vld [vmem:[%s2017 + $0x8] sm:$0xff]
    %v2020 = vld [vmem:[%s2017 + $0x10] sm:$0xff]
    %v2021 = vld [vmem:[%s2017 + $0x18] sm:$0xff]
    %v2023 = vsel %vm1593, %v2018, 0
    %v2026 = vsel %vm1593, %v2019, 0
    %v2029 = vsel %vm1593, %v2020, 0
    %v2032 = vsel %vm1593, %v2021, 0
    %v2035 = vsel %vm1606, %v1193, 0
    %2037 = vmatprep.subr.mxu0 0.0
    %2038 = vmatpush1.msra.mxu0 %v2035
    %2039 = vmatprep.subr.mxu0 0.0
    %2040 = vmatpush1.msra.mxu0 0.0
    %2041 = vmatprep.subr.mxu0 0.0
    %2042 = vmatpush1.msra.mxu0 0.0
    %2043 = vmatprep.subr.mxu0 0.0
    %2044 = vmatpush1.msra.mxu0 0.0
    %2045 = vmatprep.subr.mxu0 0.0
    %2046 = vmatpush1.msra.mxu0 0.0
    %2047 = vmatprep.subr.mxu0 0.0
    %2048 = vmatpush1.msra.mxu0 0.0
    %2049 = vmatprep.subr.mxu0 0.0
    %2050 = vmatpush1.msra.mxu0 0.0
    %2051 = vmatprep.subr.mxu0 0.0
    %2052 = vmatpush1.msra.mxu0 0.0
    %2053 = vmatprep.subr.mxu0 0.0
    %2054 = vmatpush1.msra.mxu0 0.0
    %2055 = vmatprep.subr.mxu0 0.0
    %2056 = vmatpush1.msra.mxu0 0.0
    %2057 = vmatprep.subr.mxu0 0.0
    %2058 = vmatpush1.msra.mxu0 0.0
    %2059 = vmatprep.subr.mxu0 0.0
    %2060 = vmatpush1.msra.mxu0 0.0
    %2061 = vmatprep.subr.mxu0 0.0
    %2062 = vmatpush1.msra.mxu0 0.0
    %2063 = vmatprep.subr.mxu0 0.0
    %2064 = vmatpush1.msra.mxu0 0.0
    %2065 = vmatprep.subr.mxu0 0.0
    %2066 = vmatpush1.msra.mxu0 0.0
    %2067 = vmatprep.subr.mxu0 0.0
    %2068 = vmatpush1.msra.mxu0 0.0
    %2069 = vmatprep.subr.mxu0 0.0
    %2070 = vmatpush1.msra.mxu0 0.0
    %2071 = vmatprep.subr.mxu0 0.0
    %2072 = vmatpush1.msra.mxu0 0.0
    %2073 = vmatprep.subr.mxu0 0.0
    %2074 = vmatpush1.msra.mxu0 0.0
    %2075 = vmatprep.subr.mxu0 0.0
    %2076 = vmatpush1.msra.mxu0 0.0
    %2077 = vmatprep.subr.mxu0 0.0
    %2078 = vmatpush1.msra.mxu0 0.0
    %2079 = vmatprep.subr.mxu0 0.0
    %2080 = vmatpush1.msra.mxu0 0.0
    %2081 = vmatprep.subr.mxu0 0.0
    %2082 = vmatpush1.msra.mxu0 0.0
    %2083 = vmatprep.subr.mxu0 0.0
    %2084 = vmatpush1.msra.mxu0 0.0
    %2085 = vmatprep.subr.mxu0 0.0
    %2086 = vmatpush1.msra.mxu0 0.0
    %2087 = vmatprep.subr.mxu0 0.0
    %2088 = vmatpush1.msra.mxu0 0.0
    %2089 = vmatprep.subr.mxu0 0.0
    %2090 = vmatpush1.msra.mxu0 0.0
    %2091 = vmatprep.subr.mxu0 0.0
    %2092 = vmatpush1.msra.mxu0 0.0
    %2093 = vmatprep.subr.mxu0 0.0
    %2094 = vmatpush1.msra.mxu0 0.0
    %2095 = vmatprep.subr.mxu0 0.0
    %2096 = vmatpush1.msra.mxu0 0.0
    %2097 = vmatprep.subr.mxu0 0.0
    %2098 = vmatpush1.msra.mxu0 0.0
    %2099 = vmatprep.subr.mxu0 0.0
    %2100 = vmatpush1.msra.mxu0 0.0
    %2101 = vmatprep.mubr.f32.mxu0 0.0
    %2102 = vmatmul.mubr.f32.gmra.mrb[0].mxu0 %v2023
    %v2103 = vpop.f32.mrb[0].mxu0
    %v2104 = vadd.f32 0.0, %v2103
    %v2105 = vpop.f32.mrb[0].mxu0
    %2106 = vmatprep.mubr.f32.mxu0 0.0
    %2107 = vmatmul.mubr.f32.gmra.mrb[0].mxu0 %v2026
    %v2108 = vpop.f32.mrb[0].mxu0
    %v2109 = vadd.f32 0.0, %v2108
    %v2110 = vpop.f32.mrb[0].mxu0
    %2111 = vmatprep.mubr.f32.mxu0 0.0
    %2112 = vmatmul.mubr.f32.gmra.mrb[0].mxu0 %v2029
    %v2113 = vpop.f32.mrb[0].mxu0
    %v2114 = vadd.f32 0.0, %v2113
    %v2115 = vpop.f32.mrb[0].mxu0
    %2116 = vmatprep.mubr.f32.mxu0 0.0
    %2117 = vmatmul.mubr.f32.gmra.mrb[0].mxu0 %v2032
    %v2118 = vpop.f32.mrb[0].mxu0
    %v2119 = vadd.f32 0.0, %v2118
    %v2120 = vpop.f32.mrb[0].mxu0
    %2121 = vdwg.mxu0
    %v2122 = vadd.f32 %v1803, %v2104
    %v2123 = vadd.f32 %v1804, %v2109
    %v2124 = vadd.f32 %v1805, %v2114
    %v2125 = vadd.f32 %v1806, %v2119
    %s2126 = scalar_lea.vmem %s10, 32
    %v2127 = vld [vmem:[%s2126] sm:$0xff]
    %v2128 = vld [vmem:[%s2126 + $0x8] sm:$0xff]
    %v2129 = vld [vmem:[%s2126 + $0x10] sm:$0xff]
    %v2130 = vld [vmem:[%s2126 + $0x18] sm:$0xff]
    %v2132 = vsel %vm1593, %v2127, 0
    %v2135 = vsel %vm1593, %v2128, 0
    %v2138 = vsel %vm1593, %v2129, 0
    %v2141 = vsel %vm1593, %v2130, 0
    %v2144 = vsel %vm1606, %v1204, 0
    %2146 = vmatprep.subr.mxu0 0.0
    %2147 = vmatpush1.msra.mxu0 %v2144
    %2148 = vmatprep.subr.mxu0 0.0
    %2149 = vmatpush1.msra.mxu0 0.0
    %2150 = vmatprep.subr.mxu0 0.0
    %2151 = vmatpush1.msra.mxu0 0.0
    %2152 = vmatprep.subr.mxu0 0.0
    %2153 = vmatpush1.msra.mxu0 0.0
    %2154 = vmatprep.subr.mxu0 0.0
    %2155 = vmatpush1.msra.mxu0 0.0
    %2156 = vmatprep.subr.mxu0 0.0
    %2157 = vmatpush1.msra.mxu0 0.0
    %2158 = vmatprep.subr.mxu0 0.0
    %2159 = vmatpush1.msra.mxu0 0.0
    %2160 = vmatprep.subr.mxu0 0.0
    %2161 = vmatpush1.msra.mxu0 0.0
    %2162 = vmatprep.subr.mxu0 0.0
    %2163 = vmatpush1.msra.mxu0 0.0
    %2164 = vmatprep.subr.mxu0 0.0
    %2165 = vmatpush1.msra.mxu0 0.0
    %2166 = vmatprep.subr.mxu0 0.0
    %2167 = vmatpush1.msra.mxu0 0.0
    %2168 = vmatprep.subr.mxu0 0.0
    %2169 = vmatpush1.msra.mxu0 0.0
    %2170 = vmatprep.subr.mxu0 0.0
    %2171 = vmatpush1.msra.mxu0 0.0
    %2172 = vmatprep.subr.mxu0 0.0
    %2173 = vmatpush1.msra.mxu0 0.0
    %2174 = vmatprep.subr.mxu0 0.0
    %2175 = vmatpush1.msra.mxu0 0.0
    %2176 = vmatprep.subr.mxu0 0.0
    %2177 = vmatpush1.msra.mxu0 0.0
    %2178 = vmatprep.subr.mxu0 0.0
    %2179 = vmatpush1.msra.mxu0 0.0
    %2180 = vmatprep.subr.mxu0 0.0
    %2181 = vmatpush1.msra.mxu0 0.0
    %2182 = vmatprep.subr.mxu0 0.0
    %2183 = vmatpush1.msra.mxu0 0.0
    %2184 = vmatprep.subr.mxu0 0.0
    %2185 = vmatpush1.msra.mxu0 0.0
    %2186 = vmatprep.subr.mxu0 0.0
    %2187 = vmatpush1.msra.mxu0 0.0
    %2188 = vmatprep.subr.mxu0 0.0
    %2189 = vmatpush1.msra.mxu0 0.0
    %2190 = vmatprep.subr.mxu0 0.0
    %2191 = vmatpush1.msra.mxu0 0.0
    %2192 = vmatprep.subr.mxu0 0.0
    %2193 = vmatpush1.msra.mxu0 0.0
    %2194 = vmatprep.subr.mxu0 0.0
    %2195 = vmatpush1.msra.mxu0 0.0
    %2196 = vmatprep.subr.mxu0 0.0
    %2197 = vmatpush1.msra.mxu0 0.0
    %2198 = vmatprep.subr.mxu0 0.0
    %2199 = vmatpush1.msra.mxu0 0.0
    %2200 = vmatprep.subr.mxu0 0.0
    %2201 = vmatpush1.msra.mxu0 0.0
    %2202 = vmatprep.subr.mxu0 0.0
    %2203 = vmatpush1.msra.mxu0 0.0
    %2204 = vmatprep.subr.mxu0 0.0
    %2205 = vmatpush1.msra.mxu0 0.0
    %2206 = vmatprep.subr.mxu0 0.0
    %2207 = vmatpush1.msra.mxu0 0.0
    %2208 = vmatprep.subr.mxu0 0.0
    %2209 = vmatpush1.msra.mxu0 0.0
    %2210 = vmatprep.mubr.f32.mxu0 0.0
    %2211 = vmatmul.mubr.f32.gmra.mrb[0].mxu0 %v2132
    %v2212 = vpop.f32.mrb[0].mxu0
    %v2213 = vadd.f32 0.0, %v2212
    %v2214 = vpop.f32.mrb[0].mxu0
    %2215 = vmatprep.mubr.f32.mxu0 0.0
    %2216 = vmatmul.mubr.f32.gmra.mrb[0].mxu0 %v2135
    %v2217 = vpop.f32.mrb[0].mxu0
    %v2218 = vadd.f32 0.0, %v2217
    %v2219 = vpop.f32.mrb[0].mxu0
    %2220 = vmatprep.mubr.f32.mxu0 0.0
    %2221 = vmatmul.mubr.f32.gmra.mrb[0].mxu0 %v2138
    %v2222 = vpop.f32.mrb[0].mxu0
    %v2223 = vadd.f32 0.0, %v2222
    %v2224 = vpop.f32.mrb[0].mxu0
    %2225 = vmatprep.mubr.f32.mxu0 0.0
    %2226 = vmatmul.mubr.f32.gmra.mrb[0].mxu0 %v2141
    %v2227 = vpop.f32.mrb[0].mxu0
    %v2228 = vadd.f32 0.0, %v2227
    %v2229 = vpop.f32.mrb[0].mxu0
    %2230 = vdwg.mxu0
    %v2231 = vadd.f32 %v2122, %v2213
    %v2232 = vadd.f32 %v2123, %v2218
    %v2233 = vadd.f32 %v2124, %v2223
    %v2234 = vadd.f32 %v2125, %v2228
    %s2235 = scalar_lea.vmem %s11, 32
    %v2236 = vld [vmem:[%s2235] sm:$0xff]
    %v2237 = vld [vmem:[%s2235 + $0x8] sm:$0xff]
    %v2238 = vld [vmem:[%s2235 + $0x10] sm:$0xff]
    %v2239 = vld [vmem:[%s2235 + $0x18] sm:$0xff]
    %v2241 = vsel %vm1593, %v2236, 0
    %v2244 = vsel %vm1593, %v2237, 0
    %v2247 = vsel %vm1593, %v2238, 0
    %v2250 = vsel %vm1593, %v2239, 0
    %2252 = vmatprep.subr.mxu0 0.0
    %2253 = vmatpush1.msra.mxu0 %v2035
    %2254 = vmatprep.subr.mxu0 0.0
    %2255 = vmatpush1.msra.mxu0 0.0
    %2256 = vmatprep.subr.mxu0 0.0
    %2257 = vmatpush1.msra.mxu0 0.0
    %2258 = vmatprep.subr.mxu0 0.0
    %2259 = vmatpush1.msra.mxu0 0.0
    %2260 = vmatprep.subr.mxu0 0.0
    %2261 = vmatpush1.msra.mxu0 0.0
    %2262 = vmatprep.subr.mxu0 0.0
    %2263 = vmatpush1.msra.mxu0 0.0
    %2264 = vmatprep.subr.mxu0 0.0
    %2265 = vmatpush1.msra.mxu0 0.0
    %2266 = vmatprep.subr.mxu0 0.0
    %2267 = vmatpush1.msra.mxu0 0.0
    %2268 = vmatprep.subr.mxu0 0.0
    %2269 = vmatpush1.msra.mxu0 0.0
    %2270 = vmatprep.subr.mxu0 0.0
    %2271 = vmatpush1.msra.mxu0 0.0
    %2272 = vmatprep.subr.mxu0 0.0
    %2273 = vmatpush1.msra.mxu0 0.0
    %2274 = vmatprep.subr.mxu0 0.0
    %2275 = vmatpush1.msra.mxu0 0.0
    %2276 = vmatprep.subr.mxu0 0.0
    %2277 = vmatpush1.msra.mxu0 0.0
    %2278 = vmatprep.subr.mxu0 0.0
    %2279 = vmatpush1.msra.mxu0 0.0
    %2280 = vmatprep.subr.mxu0 0.0
    %2281 = vmatpush1.msra.mxu0 0.0
    %2282 = vmatprep.subr.mxu0 0.0
    %2283 = vmatpush1.msra.mxu0 0.0
    %2284 = vmatprep.subr.mxu0 0.0
    %2285 = vmatpush1.msra.mxu0 0.0
    %2286 = vmatprep.subr.mxu0 0.0
    %2287 = vmatpush1.msra.mxu0 0.0
    %2288 = vmatprep.subr.mxu0 0.0
    %2289 = vmatpush1.msra.mxu0 0.0
    %2290 = vmatprep.subr.mxu0 0.0
    %2291 = vmatpush1.msra.mxu0 0.0
    %2292 = vmatprep.subr.mxu0 0.0
    %2293 = vmatpush1.msra.mxu0 0.0
    %2294 = vmatprep.subr.mxu0 0.0
    %2295 = vmatpush1.msra.mxu0 0.0
    %2296 = vmatprep.subr.mxu0 0.0
    %2297 = vmatpush1.msra.mxu0 0.0
    %2298 = vmatprep.subr.mxu0 0.0
    %2299 = vmatpush1.msra.mxu0 0.0
    %2300 = vmatprep.subr.mxu0 0.0
    %2301 = vmatpush1.msra.mxu0 0.0
    %2302 = vmatprep.subr.mxu0 0.0
    %2303 = vmatpush1.msra.mxu0 0.0
    %2304 = vmatprep.subr.mxu0 0.0
    %2305 = vmatpush1.msra.mxu0 0.0
    %2306 = vmatprep.subr.mxu0 0.0
    %2307 = vmatpush1.msra.mxu0 0.0
    %2308 = vmatprep.subr.mxu0 0.0
    %2309 = vmatpush1.msra.mxu0 0.0
    %2310 = vmatprep.subr.mxu0 0.0
    %2311 = vmatpush1.msra.mxu0 0.0
    %2312 = vmatprep.subr.mxu0 0.0
    %2313 = vmatpush1.msra.mxu0 0.0
    %2314 = vmatprep.subr.mxu0 0.0
    %2315 = vmatpush1.msra.mxu0 0.0
    %2316 = vmatprep.mubr.f32.mxu0 0.0
    %2317 = vmatmul.mubr.f32.gmra.mrb[0].mxu0 %v2241
    %v2318 = vpop.f32.mrb[0].mxu0
    %v2319 = vadd.f32 0.0, %v2318
    %v2320 = vpop.f32.mrb[0].mxu0
    %2321 = vmatprep.mubr.f32.mxu0 0.0
    %2322 = vmatmul.mubr.f32.gmra.mrb[0].mxu0 %v2244
    %v2323 = vpop.f32.mrb[0].mxu0
    %v2324 = vadd.f32 0.0, %v2323
    %v2325 = vpop.f32.mrb[0].mxu0
    %2326 = vmatprep.mubr.f32.mxu0 0.0
    %2327 = vmatmul.mubr.f32.gmra.mrb[0].mxu0 %v2247
    %v2328 = vpop.f32.mrb[0].mxu0
    %v2329 = vadd.f32 0.0, %v2328
    %v2330 = vpop.f32.mrb[0].mxu0
    %2331 = vmatprep.mubr.f32.mxu0 0.0
    %2332 = vmatmul.mubr.f32.gmra.mrb[0].mxu0 %v2250
    %v2333 = vpop.f32.mrb[0].mxu0
    %v2334 = vadd.f32 0.0, %v2333
    %v2335 = vpop.f32.mrb[0].mxu0
    %2336 = vdwg.mxu0
    %v2337 = vadd.f32 %v2013, %v2319
    %v2338 = vadd.f32 %v2014, %v2324
    %v2339 = vadd.f32 %v2015, %v2329
    %v2340 = vadd.f32 %v2016, %v2334
    %s2341 = scalar_lea.vmem %s12, 32
    %v2342 = vld [vmem:[%s2341] sm:$0xff]
    %v2343 = vld [vmem:[%s2341 + $0x8] sm:$0xff]
    %v2344 = vld [vmem:[%s2341 + $0x10] sm:$0xff]
    %v2345 = vld [vmem:[%s2341 + $0x18] sm:$0xff]
    %v2347 = vsel %vm1593, %v2342, 0
    %v2350 = vsel %vm1593, %v2343, 0
    %v2353 = vsel %vm1593, %v2344, 0
    %v2356 = vsel %vm1593, %v2345, 0
    %2358 = vmatprep.subr.mxu0 0.0
    %2359 = vmatpush1.msra.mxu0 %v2144
    %2360 = vmatprep.subr.mxu0 0.0
    %2361 = vmatpush1.msra.mxu0 0.0
    %2362 = vmatprep.subr.mxu0 0.0
    %2363 = vmatpush1.msra.mxu0 0.0
    %2364 = vmatprep.subr.mxu0 0.0
    %2365 = vmatpush1.msra.mxu0 0.0
    %2366 = vmatprep.subr.mxu0 0.0
    %2367 = vmatpush1.msra.mxu0 0.0
    %2368 = vmatprep.subr.mxu0 0.0
    %2369 = vmatpush1.msra.mxu0 0.0
    %2370 = vmatprep.subr.mxu0 0.0
    %2371 = vmatpush1.msra.mxu0 0.0
    %2372 = vmatprep.subr.mxu0 0.0
    %2373 = vmatpush1.msra.mxu0 0.0
    %2374 = vmatprep.subr.mxu0 0.0
    %2375 = vmatpush1.msra.mxu0 0.0
    %2376 = vmatprep.subr.mxu0 0.0
    %2377 = vmatpush1.msra.mxu0 0.0
    %2378 = vmatprep.subr.mxu0 0.0
    %2379 = vmatpush1.msra.mxu0 0.0
    %2380 = vmatprep.subr.mxu0 0.0
    %2381 = vmatpush1.msra.mxu0 0.0
    %2382 = vmatprep.subr.mxu0 0.0
    %2383 = vmatpush1.msra.mxu0 0.0
    %2384 = vmatprep.subr.mxu0 0.0
    %2385 = vmatpush1.msra.mxu0 0.0
    %2386 = vmatprep.subr.mxu0 0.0
    %2387 = vmatpush1.msra.mxu0 0.0
    %2388 = vmatprep.subr.mxu0 0.0
    %2389 = vmatpush1.msra.mxu0 0.0
    %2390 = vmatprep.subr.mxu0 0.0
    %2391 = vmatpush1.msra.mxu0 0.0
    %2392 = vmatprep.subr.mxu0 0.0
    %2393 = vmatpush1.msra.mxu0 0.0
    %2394 = vmatprep.subr.mxu0 0.0
    %2395 = vmatpush1.msra.mxu0 0.0
    %2396 = vmatprep.subr.mxu0 0.0
    %2397 = vmatpush1.msra.mxu0 0.0
    %2398 = vmatprep.subr.mxu0 0.0
    %2399 = vmatpush1.msra.mxu0 0.0
    %2400 = vmatprep.subr.mxu0 0.0
    %2401 = vmatpush1.msra.mxu0 0.0
    %2402 = vmatprep.subr.mxu0 0.0
    %2403 = vmatpush1.msra.mxu0 0.0
    %2404 = vmatprep.subr.mxu0 0.0
    %2405 = vmatpush1.msra.mxu0 0.0
    %2406 = vmatprep.subr.mxu0 0.0
    %2407 = vmatpush1.msra.mxu0 0.0
    %2408 = vmatprep.subr.mxu0 0.0
    %2409 = vmatpush1.msra.mxu0 0.0
    %2410 = vmatprep.subr.mxu0 0.0
    %2411 = vmatpush1.msra.mxu0 0.0
    %2412 = vmatprep.subr.mxu0 0.0
    %2413 = vmatpush1.msra.mxu0 0.0
    %2414 = vmatprep.subr.mxu0 0.0
    %2415 = vmatpush1.msra.mxu0 0.0
    %2416 = vmatprep.subr.mxu0 0.0
    %2417 = vmatpush1.msra.mxu0 0.0
    %2418 = vmatprep.subr.mxu0 0.0
    %2419 = vmatpush1.msra.mxu0 0.0
    %2420 = vmatprep.subr.mxu0 0.0
    %2421 = vmatpush1.msra.mxu0 0.0
    %2422 = vmatprep.mubr.f32.mxu0 0.0
    %2423 = vmatmul.mubr.f32.gmra.mrb[0].mxu0 %v2347
    %v2424 = vpop.f32.mrb[0].mxu0
    %v2425 = vadd.f32 0.0, %v2424
    %v2426 = vpop.f32.mrb[0].mxu0
    %2427 = vmatprep.mubr.f32.mxu0 0.0
    %2428 = vmatmul.mubr.f32.gmra.mrb[0].mxu0 %v2350
    %v2429 = vpop.f32.mrb[0].mxu0
    %v2430 = vadd.f32 0.0, %v2429
    %v2431 = vpop.f32.mrb[0].mxu0
    %2432 = vmatprep.mubr.f32.mxu0 0.0
    %2433 = vmatmul.mubr.f32.gmra.mrb[0].mxu0 %v2353
    %v2434 = vpop.f32.mrb[0].mxu0
    %v2435 = vadd.f32 0.0, %v2434
    %v2436 = vpop.f32.mrb[0].mxu0
    %2437 = vmatprep.mubr.f32.mxu0 0.0
    %2438 = vmatmul.mubr.f32.gmra.mrb[0].mxu0 %v2356
    %v2439 = vpop.f32.mrb[0].mxu0
    %v2440 = vadd.f32 0.0, %v2439
    %v2441 = vpop.f32.mrb[0].mxu0
    %2442 = vdwg.mxu0
    %v2443 = vadd.f32 %v2337, %v2425
    %v2444 = vadd.f32 %v2338, %v2430
    %v2445 = vadd.f32 %v2339, %v2435
    %v2446 = vadd.f32 %v2340, %v2440
    %s2447 = scalar_lea.vmem %s9, 64
    %v2448 = vld [vmem:[%s2447] sm:$0xff]
    %v2449 = vld [vmem:[%s2447 + $0x8] sm:$0xff]
    %v2450 = vld [vmem:[%s2447 + $0x10] sm:$0xff]
    %v2451 = vld [vmem:[%s2447 + $0x18] sm:$0xff]
    %v2453 = vsel %vm1593, %v2448, 0
    %v2456 = vsel %vm1593, %v2449, 0
    %v2459 = vsel %vm1593, %v2450, 0
    %v2462 = vsel %vm1593, %v2451, 0
    %v2465 = vsel %vm1606, %v1196, 0
    %2467 = vmatprep.subr.mxu0 0.0
    %2468 = vmatpush1.msra.mxu0 %v2465
    %2469 = vmatprep.subr.mxu0 0.0
    %2470 = vmatpush1.msra.mxu0 0.0
    %2471 = vmatprep.subr.mxu0 0.0
    %2472 = vmatpush1.msra.mxu0 0.0
    %2473 = vmatprep.subr.mxu0 0.0
    %2474 = vmatpush1.msra.mxu0 0.0
    %2475 = vmatprep.subr.mxu0 0.0
    %2476 = vmatpush1.msra.mxu0 0.0
    %2477 = vmatprep.subr.mxu0 0.0
    %2478 = vmatpush1.msra.mxu0 0.0
    %2479 = vmatprep.subr.mxu0 0.0
    %2480 = vmatpush1.msra.mxu0 0.0
    %2481 = vmatprep.subr.mxu0 0.0
    %2482 = vmatpush1.msra.mxu0 0.0
    %2483 = vmatprep.subr.mxu0 0.0
    %2484 = vmatpush1.msra.mxu0 0.0
    %2485 = vmatprep.subr.mxu0 0.0
    %2486 = vmatpush1.msra.mxu0 0.0
    %2487 = vmatprep.subr.mxu0 0.0
    %2488 = vmatpush1.msra.mxu0 0.0
    %2489 = vmatprep.subr.mxu0 0.0
    %2490 = vmatpush1.msra.mxu0 0.0
    %2491 = vmatprep.subr.mxu0 0.0
    %2492 = vmatpush1.msra.mxu0 0.0
    %2493 = vmatprep.subr.mxu0 0.0
    %2494 = vmatpush1.msra.mxu0 0.0
    %2495 = vmatprep.subr.mxu0 0.0
    %2496 = vmatpush1.msra.mxu0 0.0
    %2497 = vmatprep.subr.mxu0 0.0
    %2498 = vmatpush1.msra.mxu0 0.0
    %2499 = vmatprep.subr.mxu0 0.0
    %2500 = vmatpush1.msra.mxu0 0.0
    %2501 = vmatprep.subr.mxu0 0.0
    %2502 = vmatpush1.msra.mxu0 0.0
    %2503 = vmatprep.subr.mxu0 0.0
    %2504 = vmatpush1.msra.mxu0 0.0
    %2505 = vmatprep.subr.mxu0 0.0
    %2506 = vmatpush1.msra.mxu0 0.0
    %2507 = vmatprep.subr.mxu0 0.0
    %2508 = vmatpush1.msra.mxu0 0.0
    %2509 = vmatprep.subr.mxu0 0.0
    %2510 = vmatpush1.msra.mxu0 0.0
    %2511 = vmatprep.subr.mxu0 0.0
    %2512 = vmatpush1.msra.mxu0 0.0
    %2513 = vmatprep.subr.mxu0 0.0
    %2514 = vmatpush1.msra.mxu0 0.0
    %2515 = vmatprep.subr.mxu0 0.0
    %2516 = vmatpush1.msra.mxu0 0.0
    %2517 = vmatprep.subr.mxu0 0.0
    %2518 = vmatpush1.msra.mxu0 0.0
    %2519 = vmatprep.subr.mxu0 0.0
    %2520 = vmatpush1.msra.mxu0 0.0
    %2521 = vmatprep.subr.mxu0 0.0
    %2522 = vmatpush1.msra.mxu0 0.0
    %2523 = vmatprep.subr.mxu0 0.0
    %2524 = vmatpush1.msra.mxu0 0.0
    %2525 = vmatprep.subr.mxu0 0.0
    %2526 = vmatpush1.msra.mxu0 0.0
    %2527 = vmatprep.subr.mxu0 0.0
    %2528 = vmatpush1.msra.mxu0 0.0
    %2529 = vmatprep.subr.mxu0 0.0
    %2530 = vmatpush1.msra.mxu0 0.0
    %2531 = vmatprep.mubr.f32.mxu0 0.0
    %2532 = vmatmul.mubr.f32.gmra.mrb[0].mxu0 %v2453
    %v2533 = vpop.f32.mrb[0].mxu0
    %v2534 = vadd.f32 0.0, %v2533
    %v2535 = vpop.f32.mrb[0].mxu0
    %2536 = vmatprep.mubr.f32.mxu0 0.0
    %2537 = vmatmul.mubr.f32.gmra.mrb[0].mxu0 %v2456
    %v2538 = vpop.f32.mrb[0].mxu0
    %v2539 = vadd.f32 0.0, %v2538
    %v2540 = vpop.f32.mrb[0].mxu0
    %2541 = vmatprep.mubr.f32.mxu0 0.0
    %2542 = vmatmul.mubr.f32.gmra.mrb[0].mxu0 %v2459
    %v2543 = vpop.f32.mrb[0].mxu0
    %v2544 = vadd.f32 0.0, %v2543
    %v2545 = vpop.f32.mrb[0].mxu0
    %2546 = vmatprep.mubr.f32.mxu0 0.0
    %2547 = vmatmul.mubr.f32.gmra.mrb[0].mxu0 %v2462
    %v2548 = vpop.f32.mrb[0].mxu0
    %v2549 = vadd.f32 0.0, %v2548
    %v2550 = vpop.f32.mrb[0].mxu0
    %2551 = vdwg.mxu0
    %v2552 = vadd.f32 %v2231, %v2534
    %v2553 = vadd.f32 %v2232, %v2539
    %v2554 = vadd.f32 %v2233, %v2544
    %v2555 = vadd.f32 %v2234, %v2549
    %s2556 = scalar_lea.vmem %s10, 64
    %v2557 = vld [vmem:[%s2556] sm:$0xff]
    %v2558 = vld [vmem:[%s2556 + $0x8] sm:$0xff]
    %v2559 = vld [vmem:[%s2556 + $0x10] sm:$0xff]
    %v2560 = vld [vmem:[%s2556 + $0x18] sm:$0xff]
    %v2562 = vsel %vm1593, %v2557, 0
    %v2565 = vsel %vm1593, %v2558, 0
    %v2568 = vsel %vm1593, %v2559, 0
    %v2571 = vsel %vm1593, %v2560, 0
    %v2574 = vsel %vm1606, %v1207, 0
    %2576 = vmatprep.subr.mxu0 0.0
    %2577 = vmatpush1.msra.mxu0 %v2574
    %2578 = vmatprep.subr.mxu0 0.0
    %2579 = vmatpush1.msra.mxu0 0.0
    %2580 = vmatprep.subr.mxu0 0.0
    %2581 = vmatpush1.msra.mxu0 0.0
    %2582 = vmatprep.subr.mxu0 0.0
    %2583 = vmatpush1.msra.mxu0 0.0
    %2584 = vmatprep.subr.mxu0 0.0
    %2585 = vmatpush1.msra.mxu0 0.0
    %2586 = vmatprep.subr.mxu0 0.0
    %2587 = vmatpush1.msra.mxu0 0.0
    %2588 = vmatprep.subr.mxu0 0.0
    %2589 = vmatpush1.msra.mxu0 0.0
    %2590 = vmatprep.subr.mxu0 0.0
    %2591 = vmatpush1.msra.mxu0 0.0
    %2592 = vmatprep.subr.mxu0 0.0
    %2593 = vmatpush1.msra.mxu0 0.0
    %2594 = vmatprep.subr.mxu0 0.0
    %2595 = vmatpush1.msra.mxu0 0.0
    %2596 = vmatprep.subr.mxu0 0.0
    %2597 = vmatpush1.msra.mxu0 0.0
    %2598 = vmatprep.subr.mxu0 0.0
    %2599 = vmatpush1.msra.mxu0 0.0
    %2600 = vmatprep.subr.mxu0 0.0
    %2601 = vmatpush1.msra.mxu0 0.0
    %2602 = vmatprep.subr.mxu0 0.0
    %2603 = vmatpush1.msra.mxu0 0.0
    %2604 = vmatprep.subr.mxu0 0.0
    %2605 = vmatpush1.msra.mxu0 0.0
    %2606 = vmatprep.subr.mxu0 0.0
    %2607 = vmatpush1.msra.mxu0 0.0
    %2608 = vmatprep.subr.mxu0 0.0
    %2609 = vmatpush1.msra.mxu0 0.0
    %2610 = vmatprep.subr.mxu0 0.0
    %2611 = vmatpush1.msra.mxu0 0.0
    %2612 = vmatprep.subr.mxu0 0.0
    %2613 = vmatpush1.msra.mxu0 0.0
    %2614 = vmatprep.subr.mxu0 0.0
    %2615 = vmatpush1.msra.mxu0 0.0
    %2616 = vmatprep.subr.mxu0 0.0
    %2617 = vmatpush1.msra.mxu0 0.0
    %2618 = vmatprep.subr.mxu0 0.0
    %2619 = vmatpush1.msra.mxu0 0.0
    %2620 = vmatprep.subr.mxu0 0.0
    %2621 = vmatpush1.msra.mxu0 0.0
    %2622 = vmatprep.subr.mxu0 0.0
    %2623 = vmatpush1.msra.mxu0 0.0
    %2624 = vmatprep.subr.mxu0 0.0
    %2625 = vmatpush1.msra.mxu0 0.0
    %2626 = vmatprep.subr.mxu0 0.0
    %2627 = vmatpush1.msra.mxu0 0.0
    %2628 = vmatprep.subr.mxu0 0.0
    %2629 = vmatpush1.msra.mxu0 0.0
    %2630 = vmatprep.subr.mxu0 0.0
    %2631 = vmatpush1.msra.mxu0 0.0
    %2632 = vmatprep.subr.mxu0 0.0
    %2633 = vmatpush1.msra.mxu0 0.0
    %2634 = vmatprep.subr.mxu0 0.0
    %2635 = vmatpush1.msra.mxu0 0.0
    %2636 = vmatprep.subr.mxu0 0.0
    %2637 = vmatpush1.msra.mxu0 0.0
    %2638 = vmatprep.subr.mxu0 0.0
    %2639 = vmatpush1.msra.mxu0 0.0
    %2640 = vmatprep.mubr.f32.mxu0 0.0
    %2641 = vmatmul.mubr.f32.gmra.mrb[0].mxu0 %v2562
    %v2642 = vpop.f32.mrb[0].mxu0
    %v2643 = vadd.f32 0.0, %v2642
    %v2644 = vpop.f32.mrb[0].mxu0
    %2645 = vmatprep.mubr.f32.mxu0 0.0
    %2646 = vmatmul.mubr.f32.gmra.mrb[0].mxu0 %v2565
    %v2647 = vpop.f32.mrb[0].mxu0
    %v2648 = vadd.f32 0.0, %v2647
    %v2649 = vpop.f32.mrb[0].mxu0
    %2650 = vmatprep.mubr.f32.mxu0 0.0
    %2651 = vmatmul.mubr.f32.gmra.mrb[0].mxu0 %v2568
    %v2652 = vpop.f32.mrb[0].mxu0
    %v2653 = vadd.f32 0.0, %v2652
    %v2654 = vpop.f32.mrb[0].mxu0
    %2655 = vmatprep.mubr.f32.mxu0 0.0
    %2656 = vmatmul.mubr.f32.gmra.mrb[0].mxu0 %v2571
    %v2657 = vpop.f32.mrb[0].mxu0
    %v2658 = vadd.f32 0.0, %v2657
    %v2659 = vpop.f32.mrb[0].mxu0
    %2660 = vdwg.mxu0
    %v2661 = vadd.f32 %v2552, %v2643
    %v2662 = vadd.f32 %v2553, %v2648
    %v2663 = vadd.f32 %v2554, %v2653
    %v2664 = vadd.f32 %v2555, %v2658
    %s2665 = scalar_lea.vmem %s11, 64
    %v2666 = vld [vmem:[%s2665] sm:$0xff]
    %v2667 = vld [vmem:[%s2665 + $0x8] sm:$0xff]
    %v2668 = vld [vmem:[%s2665 + $0x10] sm:$0xff]
    %v2669 = vld [vmem:[%s2665 + $0x18] sm:$0xff]
    %v2671 = vsel %vm1593, %v2666, 0
    %v2674 = vsel %vm1593, %v2667, 0
    %v2677 = vsel %vm1593, %v2668, 0
    %v2680 = vsel %vm1593, %v2669, 0
    %2682 = vmatprep.subr.mxu0 0.0
    %2683 = vmatpush1.msra.mxu0 %v2465
    %2684 = vmatprep.subr.mxu0 0.0
    %2685 = vmatpush1.msra.mxu0 0.0
    %2686 = vmatprep.subr.mxu0 0.0
    %2687 = vmatpush1.msra.mxu0 0.0
    %2688 = vmatprep.subr.mxu0 0.0
    %2689 = vmatpush1.msra.mxu0 0.0
    %2690 = vmatprep.subr.mxu0 0.0
    %2691 = vmatpush1.msra.mxu0 0.0
    %2692 = vmatprep.subr.mxu0 0.0
    %2693 = vmatpush1.msra.mxu0 0.0
    %2694 = vmatprep.subr.mxu0 0.0
    %2695 = vmatpush1.msra.mxu0 0.0
    %2696 = vmatprep.subr.mxu0 0.0
    %2697 = vmatpush1.msra.mxu0 0.0
    %2698 = vmatprep.subr.mxu0 0.0
    %2699 = vmatpush1.msra.mxu0 0.0
    %2700 = vmatprep.subr.mxu0 0.0
    %2701 = vmatpush1.msra.mxu0 0.0
    %2702 = vmatprep.subr.mxu0 0.0
    %2703 = vmatpush1.msra.mxu0 0.0
    %2704 = vmatprep.subr.mxu0 0.0
    %2705 = vmatpush1.msra.mxu0 0.0
    %2706 = vmatprep.subr.mxu0 0.0
    %2707 = vmatpush1.msra.mxu0 0.0
    %2708 = vmatprep.subr.mxu0 0.0
    %2709 = vmatpush1.msra.mxu0 0.0
    %2710 = vmatprep.subr.mxu0 0.0
    %2711 = vmatpush1.msra.mxu0 0.0
    %2712 = vmatprep.subr.mxu0 0.0
    %2713 = vmatpush1.msra.mxu0 0.0
    %2714 = vmatprep.subr.mxu0 0.0
    %2715 = vmatpush1.msra.mxu0 0.0
    %2716 = vmatprep.subr.mxu0 0.0
    %2717 = vmatpush1.msra.mxu0 0.0
    %2718 = vmatprep.subr.mxu0 0.0
    %2719 = vmatpush1.msra.mxu0 0.0
    %2720 = vmatprep.subr.mxu0 0.0
    %2721 = vmatpush1.msra.mxu0 0.0
    %2722 = vmatprep.subr.mxu0 0.0
    %2723 = vmatpush1.msra.mxu0 0.0
    %2724 = vmatprep.subr.mxu0 0.0
    %2725 = vmatpush1.msra.mxu0 0.0
    %2726 = vmatprep.subr.mxu0 0.0
    %2727 = vmatpush1.msra.mxu0 0.0
    %2728 = vmatprep.subr.mxu0 0.0
    %2729 = vmatpush1.msra.mxu0 0.0
    %2730 = vmatprep.subr.mxu0 0.0
    %2731 = vmatpush1.msra.mxu0 0.0
    %2732 = vmatprep.subr.mxu0 0.0
    %2733 = vmatpush1.msra.mxu0 0.0
    %2734 = vmatprep.subr.mxu0 0.0
    %2735 = vmatpush1.msra.mxu0 0.0
    %2736 = vmatprep.subr.mxu0 0.0
    %2737 = vmatpush1.msra.mxu0 0.0
    %2738 = vmatprep.subr.mxu0 0.0
    %2739 = vmatpush1.msra.mxu0 0.0
    %2740 = vmatprep.subr.mxu0 0.0
    %2741 = vmatpush1.msra.mxu0 0.0
    %2742 = vmatprep.subr.mxu0 0.0
    %2743 = vmatpush1.msra.mxu0 0.0
    %2744 = vmatprep.subr.mxu0 0.0
    %2745 = vmatpush1.msra.mxu0 0.0
    %2746 = vmatprep.mubr.f32.mxu0 0.0
    %2747 = vmatmul.mubr.f32.gmra.mrb[0].mxu0 %v2671
    %v2748 = vpop.f32.mrb[0].mxu0
    %v2749 = vadd.f32 0.0, %v2748
    %v2750 = vpop.f32.mrb[0].mxu0
    %2751 = vmatprep.mubr.f32.mxu0 0.0
    %2752 = vmatmul.mubr.f32.gmra.mrb[0].mxu0 %v2674
    %v2753 = vpop.f32.mrb[0].mxu0
    %v2754 = vadd.f32 0.0, %v2753
    %v2755 = vpop.f32.mrb[0].mxu0
    %2756 = vmatprep.mubr.f32.mxu0 0.0
    %2757 = vmatmul.mubr.f32.gmra.mrb[0].mxu0 %v2677
    %v2758 = vpop.f32.mrb[0].mxu0
    %v2759 = vadd.f32 0.0, %v2758
    %v2760 = vpop.f32.mrb[0].mxu0
    %2761 = vmatprep.mubr.f32.mxu0 0.0
    %2762 = vmatmul.mubr.f32.gmra.mrb[0].mxu0 %v2680
    %v2763 = vpop.f32.mrb[0].mxu0
    %v2764 = vadd.f32 0.0, %v2763
    %v2765 = vpop.f32.mrb[0].mxu0
    %2766 = vdwg.mxu0
    %v2767 = vadd.f32 %v2443, %v2749
    %v2768 = vadd.f32 %v2444, %v2754
    %v2769 = vadd.f32 %v2445, %v2759
    %v2770 = vadd.f32 %v2446, %v2764
    %s2771 = scalar_lea.vmem %s12, 64
    %v2772 = vld [vmem:[%s2771] sm:$0xff]
    %v2773 = vld [vmem:[%s2771 + $0x8] sm:$0xff]
    %v2774 = vld [vmem:[%s2771 + $0x10] sm:$0xff]
    %v2775 = vld [vmem:[%s2771 + $0x18] sm:$0xff]
    %v2777 = vsel %vm1593, %v2772, 0
    %v2780 = vsel %vm1593, %v2773, 0
    %v2783 = vsel %vm1593, %v2774, 0
    %v2786 = vsel %vm1593, %v2775, 0
    %2788 = vmatprep.subr.mxu0 0.0
    %2789 = vmatpush1.msra.mxu0 %v2574
    %2790 = vmatprep.subr.mxu0 0.0
    %2791 = vmatpush1.msra.mxu0 0.0
    %2792 = vmatprep.subr.mxu0 0.0
    %2793 = vmatpush1.msra.mxu0 0.0
    %2794 = vmatprep.subr.mxu0 0.0
    %2795 = vmatpush1.msra.mxu0 0.0
    %2796 = vmatprep.subr.mxu0 0.0
    %2797 = vmatpush1.msra.mxu0 0.0
    %2798 = vmatprep.subr.mxu0 0.0
    %2799 = vmatpush1.msra.mxu0 0.0
    %2800 = vmatprep.subr.mxu0 0.0
    %2801 = vmatpush1.msra.mxu0 0.0
    %2802 = vmatprep.subr.mxu0 0.0
    %2803 = vmatpush1.msra.mxu0 0.0
    %2804 = vmatprep.subr.mxu0 0.0
    %2805 = vmatpush1.msra.mxu0 0.0
    %2806 = vmatprep.subr.mxu0 0.0
    %2807 = vmatpush1.msra.mxu0 0.0
    %2808 = vmatprep.subr.mxu0 0.0
    %2809 = vmatpush1.msra.mxu0 0.0
    %2810 = vmatprep.subr.mxu0 0.0
    %2811 = vmatpush1.msra.mxu0 0.0
    %2812 = vmatprep.subr.mxu0 0.0
    %2813 = vmatpush1.msra.mxu0 0.0
    %2814 = vmatprep.subr.mxu0 0.0
    %2815 = vmatpush1.msra.mxu0 0.0
    %2816 = vmatprep.subr.mxu0 0.0
    %2817 = vmatpush1.msra.mxu0 0.0
    %2818 = vmatprep.subr.mxu0 0.0
    %2819 = vmatpush1.msra.mxu0 0.0
    %2820 = vmatprep.subr.mxu0 0.0
    %2821 = vmatpush1.msra.mxu0 0.0
    %2822 = vmatprep.subr.mxu0 0.0
    %2823 = vmatpush1.msra.mxu0 0.0
    %2824 = vmatprep.subr.mxu0 0.0
    %2825 = vmatpush1.msra.mxu0 0.0
    %2826 = vmatprep.subr.mxu0 0.0
    %2827 = vmatpush1.msra.mxu0 0.0
    %2828 = vmatprep.subr.mxu0 0.0
    %2829 = vmatpush1.msra.mxu0 0.0
    %2830 = vmatprep.subr.mxu0 0.0
    %2831 = vmatpush1.msra.mxu0 0.0
    %2832 = vmatprep.subr.mxu0 0.0
    %2833 = vmatpush1.msra.mxu0 0.0
    %2834 = vmatprep.subr.mxu0 0.0
    %2835 = vmatpush1.msra.mxu0 0.0
    %2836 = vmatprep.subr.mxu0 0.0
    %2837 = vmatpush1.msra.mxu0 0.0
    %2838 = vmatprep.subr.mxu0 0.0
    %2839 = vmatpush1.msra.mxu0 0.0
    %2840 = vmatprep.subr.mxu0 0.0
    %2841 = vmatpush1.msra.mxu0 0.0
    %2842 = vmatprep.subr.mxu0 0.0
    %2843 = vmatpush1.msra.mxu0 0.0
    %2844 = vmatprep.subr.mxu0 0.0
    %2845 = vmatpush1.msra.mxu0 0.0
    %2846 = vmatprep.subr.mxu0 0.0
    %2847 = vmatpush1.msra.mxu0 0.0
    %2848 = vmatprep.subr.mxu0 0.0
    %2849 = vmatpush1.msra.mxu0 0.0
    %2850 = vmatprep.subr.mxu0 0.0
    %2851 = vmatpush1.msra.mxu0 0.0
    %2852 = vmatprep.mubr.f32.mxu0 0.0
    %2853 = vmatmul.mubr.f32.gmra.mrb[0].mxu0 %v2777
    %v2854 = vpop.f32.mrb[0].mxu0
    %v2855 = vadd.f32 0.0, %v2854
    %v2856 = vpop.f32.mrb[0].mxu0
    %2857 = vmatprep.mubr.f32.mxu0 0.0
    %2858 = vmatmul.mubr.f32.gmra.mrb[0].mxu0 %v2780
    %v2859 = vpop.f32.mrb[0].mxu0
    %v2860 = vadd.f32 0.0, %v2859
    %v2861 = vpop.f32.mrb[0].mxu0
    %2862 = vmatprep.mubr.f32.mxu0 0.0
    %2863 = vmatmul.mubr.f32.gmra.mrb[0].mxu0 %v2783
    %v2864 = vpop.f32.mrb[0].mxu0
    %v2865 = vadd.f32 0.0, %v2864
    %v2866 = vpop.f32.mrb[0].mxu0
    %2867 = vmatprep.mubr.f32.mxu0 0.0
    %2868 = vmatmul.mubr.f32.gmra.mrb[0].mxu0 %v2786
    %v2869 = vpop.f32.mrb[0].mxu0
    %v2870 = vadd.f32 0.0, %v2869
    %v2871 = vpop.f32.mrb[0].mxu0
    %2872 = vdwg.mxu0
    %v2873 = vadd.f32 %v2767, %v2855
    %v2874 = vadd.f32 %v2768, %v2860
    %v2875 = vadd.f32 %v2769, %v2865
    %v2876 = vadd.f32 %v2770, %v2870
    %s2877 = scalar_lea.vmem %s9, 96
    %v2878 = vld [vmem:[%s2877] sm:$0xff]
    %v2879 = vld [vmem:[%s2877 + $0x8] sm:$0xff]
    %v2880 = vld [vmem:[%s2877 + $0x10] sm:$0xff]
    %v2881 = vld [vmem:[%s2877 + $0x18] sm:$0xff]
    %v2883 = vsel %vm1593, %v2878, 0
    %v2886 = vsel %vm1593, %v2879, 0
    %v2889 = vsel %vm1593, %v2880, 0
    %v2892 = vsel %vm1593, %v2881, 0
    %v2895 = vsel %vm1606, %v1199, 0
    %2897 = vmatprep.subr.mxu0 0.0
    %2898 = vmatpush1.msra.mxu0 %v2895
    %2899 = vmatprep.subr.mxu0 0.0
    %2900 = vmatpush1.msra.mxu0 0.0
    %2901 = vmatprep.subr.mxu0 0.0
    %2902 = vmatpush1.msra.mxu0 0.0
    %2903 = vmatprep.subr.mxu0 0.0
    %2904 = vmatpush1.msra.mxu0 0.0
    %2905 = vmatprep.subr.mxu0 0.0
    %2906 = vmatpush1.msra.mxu0 0.0
    %2907 = vmatprep.subr.mxu0 0.0
    %2908 = vmatpush1.msra.mxu0 0.0
    %2909 = vmatprep.subr.mxu0 0.0
    %2910 = vmatpush1.msra.mxu0 0.0
    %2911 = vmatprep.subr.mxu0 0.0
    %2912 = vmatpush1.msra.mxu0 0.0
    %2913 = vmatprep.subr.mxu0 0.0
    %2914 = vmatpush1.msra.mxu0 0.0
    %2915 = vmatprep.subr.mxu0 0.0
    %2916 = vmatpush1.msra.mxu0 0.0
    %2917 = vmatprep.subr.mxu0 0.0
    %2918 = vmatpush1.msra.mxu0 0.0
    %2919 = vmatprep.subr.mxu0 0.0
    %2920 = vmatpush1.msra.mxu0 0.0
    %2921 = vmatprep.subr.mxu0 0.0
    %2922 = vmatpush1.msra.mxu0 0.0
    %2923 = vmatprep.subr.mxu0 0.0
    %2924 = vmatpush1.msra.mxu0 0.0
    %2925 = vmatprep.subr.mxu0 0.0
    %2926 = vmatpush1.msra.mxu0 0.0
    %2927 = vmatprep.subr.mxu0 0.0
    %2928 = vmatpush1.msra.mxu0 0.0
    %2929 = vmatprep.subr.mxu0 0.0
    %2930 = vmatpush1.msra.mxu0 0.0
    %2931 = vmatprep.subr.mxu0 0.0
    %2932 = vmatpush1.msra.mxu0 0.0
    %2933 = vmatprep.subr.mxu0 0.0
    %2934 = vmatpush1.msra.mxu0 0.0
    %2935 = vmatprep.subr.mxu0 0.0
    %2936 = vmatpush1.msra.mxu0 0.0
    %2937 = vmatprep.subr.mxu0 0.0
    %2938 = vmatpush1.msra.mxu0 0.0
    %2939 = vmatprep.subr.mxu0 0.0
    %2940 = vmatpush1.msra.mxu0 0.0
    %2941 = vmatprep.subr.mxu0 0.0
    %2942 = vmatpush1.msra.mxu0 0.0
    %2943 = vmatprep.subr.mxu0 0.0
    %2944 = vmatpush1.msra.mxu0 0.0
    %2945 = vmatprep.subr.mxu0 0.0
    %2946 = vmatpush1.msra.mxu0 0.0
    %2947 = vmatprep.subr.mxu0 0.0
    %2948 = vmatpush1.msra.mxu0 0.0
    %2949 = vmatprep.subr.mxu0 0.0
    %2950 = vmatpush1.msra.mxu0 0.0
    %2951 = vmatprep.subr.mxu0 0.0
    %2952 = vmatpush1.msra.mxu0 0.0
    %2953 = vmatprep.subr.mxu0 0.0
    %2954 = vmatpush1.msra.mxu0 0.0
    %2955 = vmatprep.subr.mxu0 0.0
    %2956 = vmatpush1.msra.mxu0 0.0
    %2957 = vmatprep.subr.mxu0 0.0
    %2958 = vmatpush1.msra.mxu0 0.0
    %2959 = vmatprep.subr.mxu0 0.0
    %2960 = vmatpush1.msra.mxu0 0.0
    %2961 = vmatprep.mubr.f32.mxu0 0.0
    %2962 = vmatmul.mubr.f32.gmra.mrb[0].mxu0 %v2883
    %v2963 = vpop.f32.mrb[0].mxu0
    %v2964 = vadd.f32 0.0, %v2963
    %v2965 = vpop.f32.mrb[0].mxu0
    %2966 = vmatprep.mubr.f32.mxu0 0.0
    %2967 = vmatmul.mubr.f32.gmra.mrb[0].mxu0 %v2886
    %v2968 = vpop.f32.mrb[0].mxu0
    %v2969 = vadd.f32 0.0, %v2968
    %v2970 = vpop.f32.mrb[0].mxu0
    %2971 = vmatprep.mubr.f32.mxu0 0.0
    %2972 = vmatmul.mubr.f32.gmra.mrb[0].mxu0 %v2889
    %v2973 = vpop.f32.mrb[0].mxu0
    %v2974 = vadd.f32 0.0, %v2973
    %v2975 = vpop.f32.mrb[0].mxu0
    %2976 = vmatprep.mubr.f32.mxu0 0.0
    %2977 = vmatmul.mubr.f32.gmra.mrb[0].mxu0 %v2892
    %v2978 = vpop.f32.mrb[0].mxu0
    %v2979 = vadd.f32 0.0, %v2978
    %v2980 = vpop.f32.mrb[0].mxu0
    %2981 = vdwg.mxu0
    %v2982 = vadd.f32 %v2661, %v2964
    %v2983 = vadd.f32 %v2662, %v2969
    %v2984 = vadd.f32 %v2663, %v2974
    %v2985 = vadd.f32 %v2664, %v2979
    %s2986 = scalar_lea.vmem %s10, 96
    %v2987 = vld [vmem:[%s2986] sm:$0xff]
    %v2988 = vld [vmem:[%s2986 + $0x8] sm:$0xff]
    %v2989 = vld [vmem:[%s2986 + $0x10] sm:$0xff]
    %v2990 = vld [vmem:[%s2986 + $0x18] sm:$0xff]
    %v2992 = vsel %vm1593, %v2987, 0
    %v2995 = vsel %vm1593, %v2988, 0
    %v2998 = vsel %vm1593, %v2989, 0
    %v3001 = vsel %vm1593, %v2990, 0
    %v3004 = vsel %vm1606, %v1210, 0
    %3006 = vmatprep.subr.mxu0 0.0
    %3007 = vmatpush1.msra.mxu0 %v3004
    %3008 = vmatprep.subr.mxu0 0.0
    %3009 = vmatpush1.msra.mxu0 0.0
    %3010 = vmatprep.subr.mxu0 0.0
    %3011 = vmatpush1.msra.mxu0 0.0
    %3012 = vmatprep.subr.mxu0 0.0
    %3013 = vmatpush1.msra.mxu0 0.0
    %3014 = vmatprep.subr.mxu0 0.0
    %3015 = vmatpush1.msra.mxu0 0.0
    %3016 = vmatprep.subr.mxu0 0.0
    %3017 = vmatpush1.msra.mxu0 0.0
    %3018 = vmatprep.subr.mxu0 0.0
    %3019 = vmatpush1.msra.mxu0 0.0
    %3020 = vmatprep.subr.mxu0 0.0
    %3021 = vmatpush1.msra.mxu0 0.0
    %3022 = vmatprep.subr.mxu0 0.0
    %3023 = vmatpush1.msra.mxu0 0.0
    %3024 = vmatprep.subr.mxu0 0.0
    %3025 = vmatpush1.msra.mxu0 0.0
    %3026 = vmatprep.subr.mxu0 0.0
    %3027 = vmatpush1.msra.mxu0 0.0
    %3028 = vmatprep.subr.mxu0 0.0
    %3029 = vmatpush1.msra.mxu0 0.0
    %3030 = vmatprep.subr.mxu0 0.0
    %3031 = vmatpush1.msra.mxu0 0.0
    %3032 = vmatprep.subr.mxu0 0.0
    %3033 = vmatpush1.msra.mxu0 0.0
    %3034 = vmatprep.subr.mxu0 0.0
    %3035 = vmatpush1.msra.mxu0 0.0
    %3036 = vmatprep.subr.mxu0 0.0
    %3037 = vmatpush1.msra.mxu0 0.0
    %3038 = vmatprep.subr.mxu0 0.0
    %3039 = vmatpush1.msra.mxu0 0.0
    %3040 = vmatprep.subr.mxu0 0.0
    %3041 = vmatpush1.msra.mxu0 0.0
    %3042 = vmatprep.subr.mxu0 0.0
    %3043 = vmatpush1.msra.mxu0 0.0
    %3044 = vmatprep.subr.mxu0 0.0
    %3045 = vmatpush1.msra.mxu0 0.0
    %3046 = vmatprep.subr.mxu0 0.0
    %3047 = vmatpush1.msra.mxu0 0.0
    %3048 = vmatprep.subr.mxu0 0.0
    %3049 = vmatpush1.msra.mxu0 0.0
    %3050 = vmatprep.subr.mxu0 0.0
    %3051 = vmatpush1.msra.mxu0 0.0
    %3052 = vmatprep.subr.mxu0 0.0
    %3053 = vmatpush1.msra.mxu0 0.0
    %3054 = vmatprep.subr.mxu0 0.0
    %3055 = vmatpush1.msra.mxu0 0.0
    %3056 = vmatprep.subr.mxu0 0.0
    %3057 = vmatpush1.msra.mxu0 0.0
    %3058 = vmatprep.subr.mxu0 0.0
    %3059 = vmatpush1.msra.mxu0 0.0
    %3060 = vmatprep.subr.mxu0 0.0
    %3061 = vmatpush1.msra.mxu0 0.0
    %3062 = vmatprep.subr.mxu0 0.0
    %3063 = vmatpush1.msra.mxu0 0.0
    %3064 = vmatprep.subr.mxu0 0.0
    %3065 = vmatpush1.msra.mxu0 0.0
    %3066 = vmatprep.subr.mxu0 0.0
    %3067 = vmatpush1.msra.mxu0 0.0
    %3068 = vmatprep.subr.mxu0 0.0
    %3069 = vmatpush1.msra.mxu0 0.0
    %3070 = vmatprep.mubr.f32.mxu0 0.0
    %3071 = vmatmul.mubr.f32.gmra.mrb[0].mxu0 %v2992
    %v3072 = vpop.f32.mrb[0].mxu0
    %v3073 = vadd.f32 0.0, %v3072
    %v3074 = vpop.f32.mrb[0].mxu0
    %3075 = vmatprep.mubr.f32.mxu0 0.0
    %3076 = vmatmul.mubr.f32.gmra.mrb[0].mxu0 %v2995
    %v3077 = vpop.f32.mrb[0].mxu0
    %v3078 = vadd.f32 0.0, %v3077
    %v3079 = vpop.f32.mrb[0].mxu0
    %3080 = vmatprep.mubr.f32.mxu0 0.0
    %3081 = vmatmul.mubr.f32.gmra.mrb[0].mxu0 %v2998
    %v3082 = vpop.f32.mrb[0].mxu0
    %v3083 = vadd.f32 0.0, %v3082
    %v3084 = vpop.f32.mrb[0].mxu0
    %3085 = vmatprep.mubr.f32.mxu0 0.0
    %3086 = vmatmul.mubr.f32.gmra.mrb[0].mxu0 %v3001
    %v3087 = vpop.f32.mrb[0].mxu0
    %v3088 = vadd.f32 0.0, %v3087
    %v3089 = vpop.f32.mrb[0].mxu0
    %3090 = vdwg.mxu0
    %v3091 = vadd.f32 %v2982, %v3073
    %v3092 = vadd.f32 %v2983, %v3078
    %v3093 = vadd.f32 %v2984, %v3083
    %v3094 = vadd.f32 %v2985, %v3088
    %s3095 = scalar_lea.vmem %s11, 96
    %v3096 = vld [vmem:[%s3095] sm:$0xff]
    %v3097 = vld [vmem:[%s3095 + $0x8] sm:$0xff]
    %v3098 = vld [vmem:[%s3095 + $0x10] sm:$0xff]
    %v3099 = vld [vmem:[%s3095 + $0x18] sm:$0xff]
    %v3101 = vsel %vm1593, %v3096, 0
    %v3104 = vsel %vm1593, %v3097, 0
    %v3107 = vsel %vm1593, %v3098, 0
    %v3110 = vsel %vm1593, %v3099, 0
    %3112 = vmatprep.subr.mxu0 0.0
    %3113 = vmatpush1.msra.mxu0 %v2895
    %3114 = vmatprep.subr.mxu0 0.0
    %3115 = vmatpush1.msra.mxu0 0.0
    %3116 = vmatprep.subr.mxu0 0.0
    %3117 = vmatpush1.msra.mxu0 0.0
    %3118 = vmatprep.subr.mxu0 0.0
    %3119 = vmatpush1.msra.mxu0 0.0
    %3120 = vmatprep.subr.mxu0 0.0
    %3121 = vmatpush1.msra.mxu0 0.0
    %3122 = vmatprep.subr.mxu0 0.0
    %3123 = vmatpush1.msra.mxu0 0.0
    %3124 = vmatprep.subr.mxu0 0.0
    %3125 = vmatpush1.msra.mxu0 0.0
    %3126 = vmatprep.subr.mxu0 0.0
    %3127 = vmatpush1.msra.mxu0 0.0
    %3128 = vmatprep.subr.mxu0 0.0
    %3129 = vmatpush1.msra.mxu0 0.0
    %3130 = vmatprep.subr.mxu0 0.0
    %3131 = vmatpush1.msra.mxu0 0.0
    %3132 = vmatprep.subr.mxu0 0.0
    %3133 = vmatpush1.msra.mxu0 0.0
    %3134 = vmatprep.subr.mxu0 0.0
    %3135 = vmatpush1.msra.mxu0 0.0
    %3136 = vmatprep.subr.mxu0 0.0
    %3137 = vmatpush1.msra.mxu0 0.0
    %3138 = vmatprep.subr.mxu0 0.0
    %3139 = vmatpush1.msra.mxu0 0.0
    %3140 = vmatprep.subr.mxu0 0.0
    %3141 = vmatpush1.msra.mxu0 0.0
    %3142 = vmatprep.subr.mxu0 0.0
    %3143 = vmatpush1.msra.mxu0 0.0
    %3144 = vmatprep.subr.mxu0 0.0
    %3145 = vmatpush1.msra.mxu0 0.0
    %3146 = vmatprep.subr.mxu0 0.0
    %3147 = vmatpush1.msra.mxu0 0.0
    %3148 = vmatprep.subr.mxu0 0.0
    %3149 = vmatpush1.msra.mxu0 0.0
    %3150 = vmatprep.subr.mxu0 0.0
    %3151 = vmatpush1.msra.mxu0 0.0
    %3152 = vmatprep.subr.mxu0 0.0
    %3153 = vmatpush1.msra.mxu0 0.0
    %3154 = vmatprep.subr.mxu0 0.0
    %3155 = vmatpush1.msra.mxu0 0.0
    %3156 = vmatprep.subr.mxu0 0.0
    %3157 = vmatpush1.msra.mxu0 0.0
    %3158 = vmatprep.subr.mxu0 0.0
    %3159 = vmatpush1.msra.mxu0 0.0
    %3160 = vmatprep.subr.mxu0 0.0
    %3161 = vmatpush1.msra.mxu0 0.0
    %3162 = vmatprep.subr.mxu0 0.0
    %3163 = vmatpush1.msra.mxu0 0.0
    %3164 = vmatprep.subr.mxu0 0.0
    %3165 = vmatpush1.msra.mxu0 0.0
    %3166 = vmatprep.subr.mxu0 0.0
    %3167 = vmatpush1.msra.mxu0 0.0
    %3168 = vmatprep.subr.mxu0 0.0
    %3169 = vmatpush1.msra.mxu0 0.0
    %3170 = vmatprep.subr.mxu0 0.0
    %3171 = vmatpush1.msra.mxu0 0.0
    %3172 = vmatprep.subr.mxu0 0.0
    %3173 = vmatpush1.msra.mxu0 0.0
    %3174 = vmatprep.subr.mxu0 0.0
    %3175 = vmatpush1.msra.mxu0 0.0
    %3176 = vmatprep.mubr.f32.mxu0 0.0
    %3177 = vmatmul.mubr.f32.gmra.mrb[0].mxu0 %v3101
    %v3178 = vpop.f32.mrb[0].mxu0
    %v3179 = vadd.f32 0.0, %v3178
    %v3180 = vpop.f32.mrb[0].mxu0
    %3181 = vmatprep.mubr.f32.mxu0 0.0
    %3182 = vmatmul.mubr.f32.gmra.mrb[0].mxu0 %v3104
    %v3183 = vpop.f32.mrb[0].mxu0
    %v3184 = vadd.f32 0.0, %v3183
    %v3185 = vpop.f32.mrb[0].mxu0
    %3186 = vmatprep.mubr.f32.mxu0 0.0
    %3187 = vmatmul.mubr.f32.gmra.mrb[0].mxu0 %v3107
    %v3188 = vpop.f32.mrb[0].mxu0
    %v3189 = vadd.f32 0.0, %v3188
    %v3190 = vpop.f32.mrb[0].mxu0
    %3191 = vmatprep.mubr.f32.mxu0 0.0
    %3192 = vmatmul.mubr.f32.gmra.mrb[0].mxu0 %v3110
    %v3193 = vpop.f32.mrb[0].mxu0
    %v3194 = vadd.f32 0.0, %v3193
    %v3195 = vpop.f32.mrb[0].mxu0
    %3196 = vdwg.mxu0
    %v3197 = vadd.f32 %v2873, %v3179
    %v3198 = vadd.f32 %v2874, %v3184
    %v3199 = vadd.f32 %v2875, %v3189
    %v3200 = vadd.f32 %v2876, %v3194
    %s3201 = scalar_lea.vmem %s12, 96
    %v3202 = vld [vmem:[%s3201] sm:$0xff]
    %v3203 = vld [vmem:[%s3201 + $0x8] sm:$0xff]
    %v3204 = vld [vmem:[%s3201 + $0x10] sm:$0xff]
    %v3205 = vld [vmem:[%s3201 + $0x18] sm:$0xff]
    %v3207 = vsel %vm1593, %v3202, 0
    %v3210 = vsel %vm1593, %v3203, 0
    %v3213 = vsel %vm1593, %v3204, 0
    %v3216 = vsel %vm1593, %v3205, 0
    %3218 = vmatprep.subr.mxu0 0.0
    %3219 = vmatpush1.msra.mxu0 %v3004
    %3220 = vmatprep.subr.mxu0 0.0
    %3221 = vmatpush1.msra.mxu0 0.0
    %3222 = vmatprep.subr.mxu0 0.0
    %3223 = vmatpush1.msra.mxu0 0.0
    %3224 = vmatprep.subr.mxu0 0.0
    %3225 = vmatpush1.msra.mxu0 0.0
    %3226 = vmatprep.subr.mxu0 0.0
    %3227 = vmatpush1.msra.mxu0 0.0
    %3228 = vmatprep.subr.mxu0 0.0
    %3229 = vmatpush1.msra.mxu0 0.0
    %3230 = vmatprep.subr.mxu0 0.0
    %3231 = vmatpush1.msra.mxu0 0.0
    %3232 = vmatprep.subr.mxu0 0.0
    %3233 = vmatpush1.msra.mxu0 0.0
    %3234 = vmatprep.subr.mxu0 0.0
    %3235 = vmatpush1.msra.mxu0 0.0
    %3236 = vmatprep.subr.mxu0 0.0
    %3237 = vmatpush1.msra.mxu0 0.0
    %3238 = vmatprep.subr.mxu0 0.0
    %3239 = vmatpush1.msra.mxu0 0.0
    %3240 = vmatprep.subr.mxu0 0.0
    %3241 = vmatpush1.msra.mxu0 0.0
    %3242 = vmatprep.subr.mxu0 0.0
    %3243 = vmatpush1.msra.mxu0 0.0
    %3244 = vmatprep.subr.mxu0 0.0
    %3245 = vmatpush1.msra.mxu0 0.0
    %3246 = vmatprep.subr.mxu0 0.0
    %3247 = vmatpush1.msra.mxu0 0.0
    %3248 = vmatprep.subr.mxu0 0.0
    %3249 = vmatpush1.msra.mxu0 0.0
    %3250 = vmatprep.subr.mxu0 0.0
    %3251 = vmatpush1.msra.mxu0 0.0
    %3252 = vmatprep.subr.mxu0 0.0
    %3253 = vmatpush1.msra.mxu0 0.0
    %3254 = vmatprep.subr.mxu0 0.0
    %3255 = vmatpush1.msra.mxu0 0.0
    %3256 = vmatprep.subr.mxu0 0.0
    %3257 = vmatpush1.msra.mxu0 0.0
    %3258 = vmatprep.subr.mxu0 0.0
    %3259 = vmatpush1.msra.mxu0 0.0
    %3260 = vmatprep.subr.mxu0 0.0
    %3261 = vmatpush1.msra.mxu0 0.0
    %3262 = vmatprep.subr.mxu0 0.0
    %3263 = vmatpush1.msra.mxu0 0.0
    %3264 = vmatprep.subr.mxu0 0.0
    %3265 = vmatpush1.msra.mxu0 0.0
    %3266 = vmatprep.subr.mxu0 0.0
    %3267 = vmatpush1.msra.mxu0 0.0
    %3268 = vmatprep.subr.mxu0 0.0
    %3269 = vmatpush1.msra.mxu0 0.0
    %3270 = vmatprep.subr.mxu0 0.0
    %3271 = vmatpush1.msra.mxu0 0.0
    %3272 = vmatprep.subr.mxu0 0.0
    %3273 = vmatpush1.msra.mxu0 0.0
    %3274 = vmatprep.subr.mxu0 0.0
    %3275 = vmatpush1.msra.mxu0 0.0
    %3276 = vmatprep.subr.mxu0 0.0
    %3277 = vmatpush1.msra.mxu0 0.0
    %3278 = vmatprep.subr.mxu0 0.0
    %3279 = vmatpush1.msra.mxu0 0.0
    %3280 = vmatprep.subr.mxu0 0.0
    %3281 = vmatpush1.msra.mxu0 0.0
    %3282 = vmatprep.mubr.f32.mxu0 0.0
    %3283 = vmatmul.mubr.f32.gmra.mrb[0].mxu0 %v3207
    %v3284 = vpop.f32.mrb[0].mxu0
    %v3285 = vadd.f32 0.0, %v3284
    %v3286 = vpop.f32.mrb[0].mxu0
    %3287 = vmatprep.mubr.f32.mxu0 0.0
    %3288 = vmatmul.mubr.f32.gmra.mrb[0].mxu0 %v3210
    %v3289 = vpop.f32.mrb[0].mxu0
    %v3290 = vadd.f32 0.0, %v3289
    %v3291 = vpop.f32.mrb[0].mxu0
    %3292 = vmatprep.mubr.f32.mxu0 0.0
    %3293 = vmatmul.mubr.f32.gmra.mrb[0].mxu0 %v3213
    %v3294 = vpop.f32.mrb[0].mxu0
    %v3295 = vadd.f32 0.0, %v3294
    %v3296 = vpop.f32.mrb[0].mxu0
    %3297 = vmatprep.mubr.f32.mxu0 0.0
    %3298 = vmatmul.mubr.f32.gmra.mrb[0].mxu0 %v3216
    %v3299 = vpop.f32.mrb[0].mxu0
    %v3300 = vadd.f32 0.0, %v3299
    %v3301 = vpop.f32.mrb[0].mxu0
    %3302 = vdwg.mxu0
    %v3303 = vadd.f32 %v3197, %v3285
    %v3304 = vadd.f32 %v3198, %v3290
    %v3305 = vadd.f32 %v3199, %v3295
    %v3306 = vadd.f32 %v3200, %v3300
    %v3307 = vmin.f32 %v3091, 20.0
    %v3308 = vmin.f32 %v3092, 20.0
    %v3309 = vmin.f32 %v3093, 20.0
    %v3310 = vmin.f32 %v3094, 20.0
    %v3311 = vmul.f32 %v3307, 1.442695
    %v3312 = vpow.pop %v3311
    %v3313 = vmul.f32 %v3308, 1.442695
    %v3314 = vpow.pop %v3313
    %v3315 = vmul.f32 %v3309, 1.442695
    %v3316 = vpow.pop %v3315
    %v3317 = vmul.f32 %v3310, 1.442695
    %v3318 = vpow.pop %v3317
    %v3319 = vadd.f32 %v3312, 2.0
    %v3320 = vadd.f32 %v3314, 2.0
    %v3321 = vadd.f32 %v3316, 2.0
    %v3322 = vadd.f32 %v3318, 2.0
    %v3323 = vmul.f32 %v3312, %v3319
    %v3324 = vmul.f32 %v3314, %v3320
    %v3325 = vmul.f32 %v3316, %v3321
    %v3326 = vmul.f32 %v3318, %v3322
    %v3327 = vadd.f32 %v3323, 2.0
    %v3328 = vadd.f32 %v3324, 2.0
    %v3329 = vadd.f32 %v3325, 2.0
    %v3330 = vadd.f32 %v3326, 2.0
    %v3331 = vrcp.pop %v3327
    %v3332 = vmul.f32 %v3323, %v3331
    %v3333 = vrcp.pop %v3328
    %v3334 = vmul.f32 %v3324, %v3333
    %v3335 = vrcp.pop %v3329
    %v3336 = vmul.f32 %v3325, %v3335
    %v3337 = vrcp.pop %v3330
    %v3338 = vmul.f32 %v3326, %v3337
    %v3339 = vmul.f32 %v3091, %v3332
    %v3340 = vmul.f32 %v3092, %v3334
    %v3341 = vmul.f32 %v3093, %v3336
    %v3342 = vmul.f32 %v3094, %v3338
    %v3343 = vmin.f32 %v3303, 20.0
    %v3344 = vmin.f32 %v3304, 20.0
    %v3345 = vmin.f32 %v3305, 20.0
    %v3346 = vmin.f32 %v3306, 20.0
    %v3347 = vmul.f32 %v3343, 1.442695
    %v3348 = vpow.pop %v3347
    %v3349 = vmul.f32 %v3344, 1.442695
    %v3350 = vpow.pop %v3349
    %v3351 = vmul.f32 %v3345, 1.442695
    %v3352 = vpow.pop %v3351
    %v3353 = vmul.f32 %v3346, 1.442695
    %v3354 = vpow.pop %v3353
    %v3355 = vadd.f32 %v3348, 2.0
    %v3356 = vadd.f32 %v3350, 2.0
    %v3357 = vadd.f32 %v3352, 2.0
    %v3358 = vadd.f32 %v3354, 2.0
    %v3359 = vmul.f32 %v3348, %v3355
    %v3360 = vmul.f32 %v3350, %v3356
    %v3361 = vmul.f32 %v3352, %v3357
    %v3362 = vmul.f32 %v3354, %v3358
    %v3363 = vadd.f32 %v3359, 2.0
    %v3364 = vadd.f32 %v3360, 2.0
    %v3365 = vadd.f32 %v3361, 2.0
    %v3366 = vadd.f32 %v3362, 2.0
    %v3367 = vrcp.pop %v3363
    %v3368 = vmul.f32 %v3359, %v3367
    %v3369 = vrcp.pop %v3364
    %v3370 = vmul.f32 %v3360, %v3369
    %v3371 = vrcp.pop %v3365
    %v3372 = vmul.f32 %v3361, %v3371
    %v3373 = vrcp.pop %v3366
    %v3374 = vmul.f32 %v3362, %v3373
    %v3375 = vmul.f32 %v3303, %v3368
    %v3376 = vmul.f32 %v3304, %v3370
    %v3377 = vmul.f32 %v3305, %v3372
    %v3378 = vmul.f32 %v3306, %v3374
    %v3379 = vld [vmem:[%s17] sm:$0xff]
    %v3380 = vld [vmem:[%s17 + $0x8] sm:$0xff]
    %v3381 = vld [vmem:[%s17 + $0x10] sm:$0xff]
    %v3382 = vld [vmem:[%s17 + $0x18] sm:$0xff]
    %v3384 = vsel %vm1366, %v3379, 0
    %v3387 = vsel %vm1366, %v3380, 0
    %v3390 = vsel %vm1366, %v3381, 0
    %v3393 = vsel %vm1366, %v3382, 0
    %3395 = vmatprep.subr.mxu0 0.0
    %3396 = vmatpush1.msra.mxu0 %v3339
    %3397 = vmatprep.subr.mxu0 0.0
    %3398 = vmatpush1.msra.mxu0 %v3340
    %3399 = vmatprep.subr.mxu0 0.0
    %3400 = vmatpush1.msra.mxu0 %v3341
    %3401 = vmatprep.subr.mxu0 0.0
    %3402 = vmatpush1.msra.mxu0 %v3342
    %3403 = vmatprep.subr.mxu0 0.0
    %3404 = vmatpush1.msra.mxu0 0.0
    %3405 = vmatprep.subr.mxu0 0.0
    %3406 = vmatpush1.msra.mxu0 0.0
    %3407 = vmatprep.subr.mxu0 0.0
    %3408 = vmatpush1.msra.mxu0 0.0
    %3409 = vmatprep.subr.mxu0 0.0
    %3410 = vmatpush1.msra.mxu0 0.0
    %3411 = vmatprep.subr.mxu0 0.0
    %3412 = vmatpush1.msra.mxu0 0.0
    %3413 = vmatprep.subr.mxu0 0.0
    %3414 = vmatpush1.msra.mxu0 0.0
    %3415 = vmatprep.subr.mxu0 0.0
    %3416 = vmatpush1.msra.mxu0 0.0
    %3417 = vmatprep.subr.mxu0 0.0
    %3418 = vmatpush1.msra.mxu0 0.0
    %3419 = vmatprep.subr.mxu0 0.0
    %3420 = vmatpush1.msra.mxu0 0.0
    %3421 = vmatprep.subr.mxu0 0.0
    %3422 = vmatpush1.msra.mxu0 0.0
    %3423 = vmatprep.subr.mxu0 0.0
    %3424 = vmatpush1.msra.mxu0 0.0
    %3425 = vmatprep.subr.mxu0 0.0
    %3426 = vmatpush1.msra.mxu0 0.0
    %3427 = vmatprep.subr.mxu0 0.0
    %3428 = vmatpush1.msra.mxu0 0.0
    %3429 = vmatprep.subr.mxu0 0.0
    %3430 = vmatpush1.msra.mxu0 0.0
    %3431 = vmatprep.subr.mxu0 0.0
    %3432 = vmatpush1.msra.mxu0 0.0
    %3433 = vmatprep.subr.mxu0 0.0
    %3434 = vmatpush1.msra.mxu0 0.0
    %3435 = vmatprep.subr.mxu0 0.0
    %3436 = vmatpush1.msra.mxu0 0.0
    %3437 = vmatprep.subr.mxu0 0.0
    %3438 = vmatpush1.msra.mxu0 0.0
    %3439 = vmatprep.subr.mxu0 0.0
    %3440 = vmatpush1.msra.mxu0 0.0
    %3441 = vmatprep.subr.mxu0 0.0
    %3442 = vmatpush1.msra.mxu0 0.0
    %3443 = vmatprep.subr.mxu0 0.0
    %3444 = vmatpush1.msra.mxu0 0.0
    %3445 = vmatprep.subr.mxu0 0.0
    %3446 = vmatpush1.msra.mxu0 0.0
    %3447 = vmatprep.subr.mxu0 0.0
    %3448 = vmatpush1.msra.mxu0 0.0
    %3449 = vmatprep.subr.mxu0 0.0
    %3450 = vmatpush1.msra.mxu0 0.0
    %3451 = vmatprep.subr.mxu0 0.0
    %3452 = vmatpush1.msra.mxu0 0.0
    %3453 = vmatprep.subr.mxu0 0.0
    %3454 = vmatpush1.msra.mxu0 0.0
    %3455 = vmatprep.subr.mxu0 0.0
    %3456 = vmatpush1.msra.mxu0 0.0
    %3457 = vmatprep.subr.mxu0 0.0
    %3458 = vmatpush1.msra.mxu0 0.0
    %3459 = vmatprep.mubr.f32.mxu0 0.0
    %3460 = vmatmul.mubr.f32.gmra.mrb[0].mxu0 %v3384
    %v3461 = vpop.f32.mrb[0].mxu0
    %v3462 = vadd.f32 0.0, %v3461
    %v3463 = vpop.f32.mrb[0].mxu0
    %3464 = vmatprep.mubr.f32.mxu0 0.0
    %3465 = vmatmul.mubr.f32.gmra.mrb[0].mxu0 %v3387
    %v3466 = vpop.f32.mrb[0].mxu0
    %v3467 = vadd.f32 0.0, %v3466
    %v3468 = vpop.f32.mrb[0].mxu0
    %3469 = vmatprep.mubr.f32.mxu0 0.0
    %3470 = vmatmul.mubr.f32.gmra.mrb[0].mxu0 %v3390
    %v3471 = vpop.f32.mrb[0].mxu0
    %v3472 = vadd.f32 0.0, %v3471
    %v3473 = vpop.f32.mrb[0].mxu0
    %3474 = vmatprep.mubr.f32.mxu0 0.0
    %3475 = vmatmul.mubr.f32.gmra.mrb[0].mxu0 %v3393
    %v3476 = vpop.f32.mrb[0].mxu0
    %v3477 = vadd.f32 0.0, %v3476
    %v3478 = vpop.f32.mrb[0].mxu0
    %3479 = vdwg.mxu0
    %v3480 = vld [vmem:[%s18] sm:$0xff]
    %v3481 = vld [vmem:[%s18 + $0x8] sm:$0xff]
    %v3482 = vld [vmem:[%s18 + $0x10] sm:$0xff]
    %v3483 = vld [vmem:[%s18 + $0x18] sm:$0xff]
    %v3485 = vsel %vm1366, %v3480, 0
    %v3488 = vsel %vm1366, %v3481, 0
    %v3491 = vsel %vm1366, %v3482, 0
    %v3494 = vsel %vm1366, %v3483, 0
    %3496 = vmatprep.subr.mxu0 0.0
    %3497 = vmatpush1.msra.mxu0 %v3375
    %3498 = vmatprep.subr.mxu0 0.0
    %3499 = vmatpush1.msra.mxu0 %v3376
    %3500 = vmatprep.subr.mxu0 0.0
    %3501 = vmatpush1.msra.mxu0 %v3377
    %3502 = vmatprep.subr.mxu0 0.0
    %3503 = vmatpush1.msra.mxu0 %v3378
    %3504 = vmatprep.subr.mxu0 0.0
    %3505 = vmatpush1.msra.mxu0 0.0
    %3506 = vmatprep.subr.mxu0 0.0
    %3507 = vmatpush1.msra.mxu0 0.0
    %3508 = vmatprep.subr.mxu0 0.0
    %3509 = vmatpush1.msra.mxu0 0.0
    %3510 = vmatprep.subr.mxu0 0.0
    %3511 = vmatpush1.msra.mxu0 0.0
    %3512 = vmatprep.subr.mxu0 0.0
    %3513 = vmatpush1.msra.mxu0 0.0
    %3514 = vmatprep.subr.mxu0 0.0
    %3515 = vmatpush1.msra.mxu0 0.0
    %3516 = vmatprep.subr.mxu0 0.0
    %3517 = vmatpush1.msra.mxu0 0.0
    %3518 = vmatprep.subr.mxu0 0.0
    %3519 = vmatpush1.msra.mxu0 0.0
    %3520 = vmatprep.subr.mxu0 0.0
    %3521 = vmatpush1.msra.mxu0 0.0
    %3522 = vmatprep.subr.mxu0 0.0
    %3523 = vmatpush1.msra.mxu0 0.0
    %3524 = vmatprep.subr.mxu0 0.0
    %3525 = vmatpush1.msra.mxu0 0.0
    %3526 = vmatprep.subr.mxu0 0.0
    %3527 = vmatpush1.msra.mxu0 0.0
    %3528 = vmatprep.subr.mxu0 0.0
    %3529 = vmatpush1.msra.mxu0 0.0
    %3530 = vmatprep.subr.mxu0 0.0
    %3531 = vmatpush1.msra.mxu0 0.0
    %3532 = vmatprep.subr.mxu0 0.0
    %3533 = vmatpush1.msra.mxu0 0.0
    %3534 = vmatprep.subr.mxu0 0.0
    %3535 = vmatpush1.msra.mxu0 0.0
    %3536 = vmatprep.subr.mxu0 0.0
    %3537 = vmatpush1.msra.mxu0 0.0
    %3538 = vmatprep.subr.mxu0 0.0
    %3539 = vmatpush1.msra.mxu0 0.0
    %3540 = vmatprep.subr.mxu0 0.0
    %3541 = vmatpush1.msra.mxu0 0.0
    %3542 = vmatprep.subr.mxu0 0.0
    %3543 = vmatpush1.msra.mxu0 0.0
    %3544 = vmatprep.subr.mxu0 0.0
    %3545 = vmatpush1.msra.mxu0 0.0
    %3546 = vmatprep.subr.mxu0 0.0
    %3547 = vmatpush1.msra.mxu0 0.0
    %3548 = vmatprep.subr.mxu0 0.0
    %3549 = vmatpush1.msra.mxu0 0.0
    %3550 = vmatprep.subr.mxu0 0.0
    %3551 = vmatpush1.msra.mxu0 0.0
    %3552 = vmatprep.subr.mxu0 0.0
    %3553 = vmatpush1.msra.mxu0 0.0
    %3554 = vmatprep.subr.mxu0 0.0
    %3555 = vmatpush1.msra.mxu0 0.0
    %3556 = vmatprep.subr.mxu0 0.0
    %3557 = vmatpush1.msra.mxu0 0.0
    %3558 = vmatprep.subr.mxu0 0.0
    %3559 = vmatpush1.msra.mxu0 0.0
    %3560 = vmatprep.mubr.f32.mxu0 0.0
    %3561 = vmatmul.mubr.f32.gmra.mrb[0].mxu0 %v3485
    %v3562 = vpop.f32.mrb[0].mxu0
    %v3563 = vadd.f32 0.0, %v3562
    %v3564 = vpop.f32.mrb[0].mxu0
    %3565 = vmatprep.mubr.f32.mxu0 0.0
    %3566 = vmatmul.mubr.f32.gmra.mrb[0].mxu0 %v3488
    %v3567 = vpop.f32.mrb[0].mxu0
    %v3568 = vadd.f32 0.0, %v3567
    %v3569 = vpop.f32.mrb[0].mxu0
    %3570 = vmatprep.mubr.f32.mxu0 0.0
    %3571 = vmatmul.mubr.f32.gmra.mrb[0].mxu0 %v3491
    %v3572 = vpop.f32.mrb[0].mxu0
    %v3573 = vadd.f32 0.0, %v3572
    %v3574 = vpop.f32.mrb[0].mxu0
    %3575 = vmatprep.mubr.f32.mxu0 0.0
    %3576 = vmatmul.mubr.f32.gmra.mrb[0].mxu0 %v3494
    %v3577 = vpop.f32.mrb[0].mxu0
    %v3578 = vadd.f32 0.0, %v3577
    %v3579 = vpop.f32.mrb[0].mxu0
    %3580 = vdwg.mxu0
    %v3581 = vld [vmem:[%s19] sm:$0xff]
    %v3582 = vld [vmem:[%s19 + $0x8] sm:$0xff]
    %v3583 = vld [vmem:[%s19 + $0x10] sm:$0xff]
    %v3584 = vld [vmem:[%s19 + $0x18] sm:$0xff]
    %v3585 = vadd.f32 %v3339, %v3375
    %v3586 = vadd.f32 %v3340, %v3376
    %v3587 = vadd.f32 %v3341, %v3377
    %v3588 = vadd.f32 %v3342, %v3378
    %v3590 = vsel %vm1366, %v3581, 0
    %v3593 = vsel %vm1366, %v3582, 0
    %v3596 = vsel %vm1366, %v3583, 0
    %v3599 = vsel %vm1366, %v3584, 0
    %3601 = vmatprep.subr.mxu0 0.0
    %3602 = vmatpush1.msra.mxu0 %v3585
    %3603 = vmatprep.subr.mxu0 0.0
    %3604 = vmatpush1.msra.mxu0 %v3586
    %3605 = vmatprep.subr.mxu0 0.0
    %3606 = vmatpush1.msra.mxu0 %v3587
    %3607 = vmatprep.subr.mxu0 0.0
    %3608 = vmatpush1.msra.mxu0 %v3588
    %3609 = vmatprep.subr.mxu0 0.0
    %3610 = vmatpush1.msra.mxu0 0.0
    %3611 = vmatprep.subr.mxu0 0.0
    %3612 = vmatpush1.msra.mxu0 0.0
    %3613 = vmatprep.subr.mxu0 0.0
    %3614 = vmatpush1.msra.mxu0 0.0
    %3615 = vmatprep.subr.mxu0 0.0
    %3616 = vmatpush1.msra.mxu0 0.0
    %3617 = vmatprep.subr.mxu0 0.0
    %3618 = vmatpush1.msra.mxu0 0.0
    %3619 = vmatprep.subr.mxu0 0.0
    %3620 = vmatpush1.msra.mxu0 0.0
    %3621 = vmatprep.subr.mxu0 0.0
    %3622 = vmatpush1.msra.mxu0 0.0
    %3623 = vmatprep.subr.mxu0 0.0
    %3624 = vmatpush1.msra.mxu0 0.0
    %3625 = vmatprep.subr.mxu0 0.0
    %3626 = vmatpush1.msra.mxu0 0.0
    %3627 = vmatprep.subr.mxu0 0.0
    %3628 = vmatpush1.msra.mxu0 0.0
    %3629 = vmatprep.subr.mxu0 0.0
    %3630 = vmatpush1.msra.mxu0 0.0
    %3631 = vmatprep.subr.mxu0 0.0
    %3632 = vmatpush1.msra.mxu0 0.0
    %3633 = vmatprep.subr.mxu0 0.0
    %3634 = vmatpush1.msra.mxu0 0.0
    %3635 = vmatprep.subr.mxu0 0.0
    %3636 = vmatpush1.msra.mxu0 0.0
    %3637 = vmatprep.subr.mxu0 0.0
    %3638 = vmatpush1.msra.mxu0 0.0
    %3639 = vmatprep.subr.mxu0 0.0
    %3640 = vmatpush1.msra.mxu0 0.0
    %3641 = vmatprep.subr.mxu0 0.0
    %3642 = vmatpush1.msra.mxu0 0.0
    %3643 = vmatprep.subr.mxu0 0.0
    %3644 = vmatpush1.msra.mxu0 0.0
    %3645 = vmatprep.subr.mxu0 0.0
    %3646 = vmatpush1.msra.mxu0 0.0
    %3647 = vmatprep.subr.mxu0 0.0
    %3648 = vmatpush1.msra.mxu0 0.0
    %3649 = vmatprep.subr.mxu0 0.0
    %3650 = vmatpush1.msra.mxu0 0.0
    %3651 = vmatprep.subr.mxu0 0.0
    %3652 = vmatpush1.msra.mxu0 0.0
    %3653 = vmatprep.subr.mxu0 0.0
    %3654 = vmatpush1.msra.mxu0 0.0
    %3655 = vmatprep.subr.mxu0 0.0
    %3656 = vmatpush1.msra.mxu0 0.0
    %3657 = vmatprep.subr.mxu0 0.0
    %3658 = vmatpush1.msra.mxu0 0.0
    %3659 = vmatprep.subr.mxu0 0.0
    %3660 = vmatpush1.msra.mxu0 0.0
    %3661 = vmatprep.subr.mxu0 0.0
    %3662 = vmatpush1.msra.mxu0 0.0
    %3663 = vmatprep.subr.mxu0 0.0
    %3664 = vmatpush1.msra.mxu0 0.0
    %3665 = vmatprep.mubr.f32.mxu0 0.0
    %3666 = vmatmul.mubr.f32.gmra.mrb[0].mxu0 %v3590
    %v3667 = vpop.f32.mrb[0].mxu0
    %v3668 = vadd.f32 0.0, %v3667
    %v3669 = vpop.f32.mrb[0].mxu0
    %3670 = vmatprep.mubr.f32.mxu0 0.0
    %3671 = vmatmul.mubr.f32.gmra.mrb[0].mxu0 %v3593
    %v3672 = vpop.f32.mrb[0].mxu0
    %v3673 = vadd.f32 0.0, %v3672
    %v3674 = vpop.f32.mrb[0].mxu0
    %3675 = vmatprep.mubr.f32.mxu0 0.0
    %3676 = vmatmul.mubr.f32.gmra.mrb[0].mxu0 %v3596
    %v3677 = vpop.f32.mrb[0].mxu0
    %v3678 = vadd.f32 0.0, %v3677
    %v3679 = vpop.f32.mrb[0].mxu0
    %3680 = vmatprep.mubr.f32.mxu0 0.0
    %3681 = vmatmul.mubr.f32.gmra.mrb[0].mxu0 %v3599
    %v3682 = vpop.f32.mrb[0].mxu0
    %v3683 = vadd.f32 0.0, %v3682
    %v3684 = vpop.f32.mrb[0].mxu0
    %3685 = vdwg.mxu0
    %v3686 = vsub.f32 %v3462, %v3563
    %v3687 = vsub.f32 %v3467, %v3568
    %v3688 = vsub.f32 %v3472, %v3573
    %v3689 = vsub.f32 %v3477, %v3578
    %v3690 = vld [vmem:[%s20] sm:$0xff]
    %v3691 = vld [vmem:[%s20 + $0x8] sm:$0xff]
    %v3692 = vld [vmem:[%s20 + $0x10] sm:$0xff]
    %v3693 = vld [vmem:[%s20 + $0x18] sm:$0xff]
    %3695 = vset.pattern.permute.xlu0 0
    %3696 = vperm.xlu0 %3695, %v3690
    %v3697 = vpop.permute.xlu0 %3696
    %3700 = vset.pattern.permute.xlu0 0
    %3701 = vperm.xlu0 %3700, %v3691
    %v3702 = vpop.permute.xlu0 %3701
    %3705 = vset.pattern.permute.xlu0 0
    %3706 = vperm.xlu0 %3705, %v3692
    %v3707 = vpop.permute.xlu0 %3706
    %3710 = vset.pattern.permute.xlu0 0
    %3711 = vperm.xlu0 %3710, %v3693
    %v3712 = vpop.permute.xlu0 %3711
    %v3714 = vadd.f32 %v3686, %v3697
    %v3715 = vadd.f32 %v3687, %v3702
    %v3716 = vadd.f32 %v3688, %v3707
    %v3717 = vadd.f32 %v3689, %v3712
    %v3718 = vmin.f32 %v3714, 20.0
    %v3719 = vmin.f32 %v3715, 20.0
    %v3720 = vmin.f32 %v3716, 20.0
    %v3721 = vmin.f32 %v3717, 20.0
    %v3722 = vmul.f32 %v3718, 1.442695
    %v3723 = vpow.pop %v3722
    %v3724 = vmul.f32 %v3719, 1.442695
    %v3725 = vpow.pop %v3724
    %v3726 = vmul.f32 %v3720, 1.442695
    %v3727 = vpow.pop %v3726
    %v3728 = vmul.f32 %v3721, 1.442695
    %v3729 = vpow.pop %v3728
    %v3730 = vadd.f32 %v3723, 2.0
    %v3731 = vadd.f32 %v3725, 2.0
    %v3732 = vadd.f32 %v3727, 2.0
    %v3733 = vadd.f32 %v3729, 2.0
    %v3734 = vmul.f32 %v3723, %v3730
    %v3735 = vmul.f32 %v3725, %v3731
    %v3736 = vmul.f32 %v3727, %v3732
    %v3737 = vmul.f32 %v3729, %v3733
    %v3738 = vadd.f32 %v3734, 2.0
    %v3739 = vadd.f32 %v3735, 2.0
    %v3740 = vadd.f32 %v3736, 2.0
    %v3741 = vadd.f32 %v3737, 2.0
    %v3742 = vrcp.pop %v3738
    %v3743 = vmul.f32 %v3734, %v3742
    %v3744 = vrcp.pop %v3739
    %v3745 = vmul.f32 %v3735, %v3744
    %v3746 = vrcp.pop %v3740
    %v3747 = vmul.f32 %v3736, %v3746
    %v3748 = vrcp.pop %v3741
    %v3749 = vmul.f32 %v3737, %v3748
    %v3750 = vmul.f32 %v3714, %v3743
    %v3751 = vmul.f32 %v3715, %v3745
    %v3752 = vmul.f32 %v3716, %v3747
    %v3753 = vmul.f32 %v3717, %v3749
    %v3754 = vsub.f32 %v3668, %v3462
    %v3755 = vsub.f32 %v3673, %v3467
    %v3756 = vsub.f32 %v3678, %v3472
    %v3757 = vsub.f32 %v3683, %v3477
    %v3758 = vsub.f32 %v3754, %v3563
    %v3759 = vsub.f32 %v3755, %v3568
    %v3760 = vsub.f32 %v3756, %v3573
    %v3761 = vsub.f32 %v3757, %v3578
    %v3762 = vld [vmem:[%s21] sm:$0xff]
    %v3763 = vld [vmem:[%s21 + $0x8] sm:$0xff]
    %v3764 = vld [vmem:[%s21 + $0x10] sm:$0xff]
    %v3765 = vld [vmem:[%s21 + $0x18] sm:$0xff]
    %3767 = vset.pattern.permute.xlu0 0
    %3768 = vperm.xlu0 %3767, %v3762
    %v3769 = vpop.permute.xlu0 %3768
    %3772 = vset.pattern.permute.xlu0 0
    %3773 = vperm.xlu0 %3772, %v3763
    %v3774 = vpop.permute.xlu0 %3773
    %3777 = vset.pattern.permute.xlu0 0
    %3778 = vperm.xlu0 %3777, %v3764
    %v3779 = vpop.permute.xlu0 %3778
    %3782 = vset.pattern.permute.xlu0 0
    %3783 = vperm.xlu0 %3782, %v3765
    %v3784 = vpop.permute.xlu0 %3783
    %v3786 = vadd.f32 %v3758, %v3769
    %v3787 = vadd.f32 %v3759, %v3774
    %v3788 = vadd.f32 %v3760, %v3779
    %v3789 = vadd.f32 %v3761, %v3784
    %v3790 = vmin.f32 %v3786, 20.0
    %v3791 = vmin.f32 %v3787, 20.0
    %v3792 = vmin.f32 %v3788, 20.0
    %v3793 = vmin.f32 %v3789, 20.0
    %v3794 = vmul.f32 %v3790, 1.442695
    %v3795 = vpow.pop %v3794
    %v3796 = vmul.f32 %v3791, 1.442695
    %v3797 = vpow.pop %v3796
    %v3798 = vmul.f32 %v3792, 1.442695
    %v3799 = vpow.pop %v3798
    %v3800 = vmul.f32 %v3793, 1.442695
    %v3801 = vpow.pop %v3800
    %v3802 = vadd.f32 %v3795, 2.0
    %v3803 = vadd.f32 %v3797, 2.0
    %v3804 = vadd.f32 %v3799, 2.0
    %v3805 = vadd.f32 %v3801, 2.0
    %v3806 = vmul.f32 %v3795, %v3802
    %v3807 = vmul.f32 %v3797, %v3803
    %v3808 = vmul.f32 %v3799, %v3804
    %v3809 = vmul.f32 %v3801, %v3805
    %v3810 = vadd.f32 %v3806, 2.0
    %v3811 = vadd.f32 %v3807, 2.0
    %v3812 = vadd.f32 %v3808, 2.0
    %v3813 = vadd.f32 %v3809, 2.0
    %v3814 = vrcp.pop %v3810
    %v3815 = vmul.f32 %v3806, %v3814
    %v3816 = vrcp.pop %v3811
    %v3817 = vmul.f32 %v3807, %v3816
    %v3818 = vrcp.pop %v3812
    %v3819 = vmul.f32 %v3808, %v3818
    %v3820 = vrcp.pop %v3813
    %v3821 = vmul.f32 %v3809, %v3820
    %v3822 = vmul.f32 %v3786, %v3815
    %v3823 = vmul.f32 %v3787, %v3817
    %v3824 = vmul.f32 %v3788, %v3819
    %v3825 = vmul.f32 %v3789, %v3821
    %v3826 = vld [vmem:[%s22] sm:$0xf]
    %v3828 = vsel %vm1366, %v3826, 0
    %3830 = vmatprep.subr.mxu0 0.0
    %3831 = vmatpush1.msra.mxu0 %v3750
    %3832 = vmatprep.subr.mxu0 0.0
    %3833 = vmatpush1.msra.mxu0 %v3751
    %3834 = vmatprep.subr.mxu0 0.0
    %3835 = vmatpush1.msra.mxu0 %v3752
    %3836 = vmatprep.subr.mxu0 0.0
    %3837 = vmatpush1.msra.mxu0 %v3753
    %3838 = vmatprep.subr.mxu0 0.0
    %3839 = vmatpush1.msra.mxu0 0.0
    %3840 = vmatprep.subr.mxu0 0.0
    %3841 = vmatpush1.msra.mxu0 0.0
    %3842 = vmatprep.subr.mxu0 0.0
    %3843 = vmatpush1.msra.mxu0 0.0
    %3844 = vmatprep.subr.mxu0 0.0
    %3845 = vmatpush1.msra.mxu0 0.0
    %3846 = vmatprep.subr.mxu0 0.0
    %3847 = vmatpush1.msra.mxu0 0.0
    %3848 = vmatprep.subr.mxu0 0.0
    %3849 = vmatpush1.msra.mxu0 0.0
    %3850 = vmatprep.subr.mxu0 0.0
    %3851 = vmatpush1.msra.mxu0 0.0
    %3852 = vmatprep.subr.mxu0 0.0
    %3853 = vmatpush1.msra.mxu0 0.0
    %3854 = vmatprep.subr.mxu0 0.0
    %3855 = vmatpush1.msra.mxu0 0.0
    %3856 = vmatprep.subr.mxu0 0.0
    %3857 = vmatpush1.msra.mxu0 0.0
    %3858 = vmatprep.subr.mxu0 0.0
    %3859 = vmatpush1.msra.mxu0 0.0
    %3860 = vmatprep.subr.mxu0 0.0
    %3861 = vmatpush1.msra.mxu0 0.0
    %3862 = vmatprep.subr.mxu0 0.0
    %3863 = vmatpush1.msra.mxu0 0.0
    %3864 = vmatprep.subr.mxu0 0.0
    %3865 = vmatpush1.msra.mxu0 0.0
    %3866 = vmatprep.subr.mxu0 0.0
    %3867 = vmatpush1.msra.mxu0 0.0
    %3868 = vmatprep.subr.mxu0 0.0
    %3869 = vmatpush1.msra.mxu0 0.0
    %3870 = vmatprep.subr.mxu0 0.0
    %3871 = vmatpush1.msra.mxu0 0.0
    %3872 = vmatprep.subr.mxu0 0.0
    %3873 = vmatpush1.msra.mxu0 0.0
    %3874 = vmatprep.subr.mxu0 0.0
    %3875 = vmatpush1.msra.mxu0 0.0
    %3876 = vmatprep.subr.mxu0 0.0
    %3877 = vmatpush1.msra.mxu0 0.0
    %3878 = vmatprep.subr.mxu0 0.0
    %3879 = vmatpush1.msra.mxu0 0.0
    %3880 = vmatprep.subr.mxu0 0.0
    %3881 = vmatpush1.msra.mxu0 0.0
    %3882 = vmatprep.subr.mxu0 0.0
    %3883 = vmatpush1.msra.mxu0 0.0
    %3884 = vmatprep.subr.mxu0 0.0
    %3885 = vmatpush1.msra.mxu0 0.0
    %3886 = vmatprep.subr.mxu0 0.0
    %3887 = vmatpush1.msra.mxu0 0.0
    %3888 = vmatprep.subr.mxu0 0.0
    %3889 = vmatpush1.msra.mxu0 0.0
    %3890 = vmatprep.subr.mxu0 0.0
    %3891 = vmatpush1.msra.mxu0 0.0
    %3892 = vmatprep.subr.mxu0 0.0
    %3893 = vmatpush1.msra.mxu0 0.0
    %3894 = vmatprep.mubr.f32.mxu0 0.0
    %3895 = vmatmul.mubr.f32.gmra.mrb[0].mxu0 %v3828
    %v3896 = vpop.f32.mrb[0].mxu0
    %v3897 = vadd.f32 0.0, %v3896
    %v3898 = vpop.f32.mrb[0].mxu0
    %3899 = vdwg.mxu0
    %v3900 = vld [vmem:[%s23] sm:$0xf]
    %v3902 = vsel %vm1366, %v3900, 0
    %3904 = vmatprep.subr.mxu0 0.0
    %3905 = vmatpush1.msra.mxu0 %v3822
    %3906 = vmatprep.subr.mxu0 0.0
    %3907 = vmatpush1.msra.mxu0 %v3823
    %3908 = vmatprep.subr.mxu0 0.0
    %3909 = vmatpush1.msra.mxu0 %v3824
    %3910 = vmatprep.subr.mxu0 0.0
    %3911 = vmatpush1.msra.mxu0 %v3825
    %3912 = vmatprep.subr.mxu0 0.0
    %3913 = vmatpush1.msra.mxu0 0.0
    %3914 = vmatprep.subr.mxu0 0.0
    %3915 = vmatpush1.msra.mxu0 0.0
    %3916 = vmatprep.subr.mxu0 0.0
    %3917 = vmatpush1.msra.mxu0 0.0
    %3918 = vmatprep.subr.mxu0 0.0
    %3919 = vmatpush1.msra.mxu0 0.0
    %3920 = vmatprep.subr.mxu0 0.0
    %3921 = vmatpush1.msra.mxu0 0.0
    %3922 = vmatprep.subr.mxu0 0.0
    %3923 = vmatpush1.msra.mxu0 0.0
    %3924 = vmatprep.subr.mxu0 0.0
    %3925 = vmatpush1.msra.mxu0 0.0
    %3926 = vmatprep.subr.mxu0 0.0
    %3927 = vmatpush1.msra.mxu0 0.0
    %3928 = vmatprep.subr.mxu0 0.0
    %3929 = vmatpush1.msra.mxu0 0.0
    %3930 = vmatprep.subr.mxu0 0.0
    %3931 = vmatpush1.msra.mxu0 0.0
    %3932 = vmatprep.subr.mxu0 0.0
    %3933 = vmatpush1.msra.mxu0 0.0
    %3934 = vmatprep.subr.mxu0 0.0
    %3935 = vmatpush1.msra.mxu0 0.0
    %3936 = vmatprep.subr.mxu0 0.0
    %3937 = vmatpush1.msra.mxu0 0.0
    %3938 = vmatprep.subr.mxu0 0.0
    %3939 = vmatpush1.msra.mxu0 0.0
    %3940 = vmatprep.subr.mxu0 0.0
    %3941 = vmatpush1.msra.mxu0 0.0
    %3942 = vmatprep.subr.mxu0 0.0
    %3943 = vmatpush1.msra.mxu0 0.0
    %3944 = vmatprep.subr.mxu0 0.0
    %3945 = vmatpush1.msra.mxu0 0.0
    %3946 = vmatprep.subr.mxu0 0.0
    %3947 = vmatpush1.msra.mxu0 0.0
    %3948 = vmatprep.subr.mxu0 0.0
    %3949 = vmatpush1.msra.mxu0 0.0
    %3950 = vmatprep.subr.mxu0 0.0
    %3951 = vmatpush1.msra.mxu0 0.0
    %3952 = vmatprep.subr.mxu0 0.0
    %3953 = vmatpush1.msra.mxu0 0.0
    %3954 = vmatprep.subr.mxu0 0.0
    %3955 = vmatpush1.msra.mxu0 0.0
    %3956 = vmatprep.subr.mxu0 0.0
    %3957 = vmatpush1.msra.mxu0 0.0
    %3958 = vmatprep.subr.mxu0 0.0
    %3959 = vmatpush1.msra.mxu0 0.0
    %3960 = vmatprep.subr.mxu0 0.0
    %3961 = vmatpush1.msra.mxu0 0.0
    %3962 = vmatprep.subr.mxu0 0.0
    %3963 = vmatpush1.msra.mxu0 0.0
    %3964 = vmatprep.subr.mxu0 0.0
    %3965 = vmatpush1.msra.mxu0 0.0
    %3966 = vmatprep.subr.mxu0 0.0
    %3967 = vmatpush1.msra.mxu0 0.0
    %3968 = vmatprep.mubr.f32.mxu0 0.0
    %3969 = vmatmul.mubr.f32.gmra.mrb[0].mxu0 %v3902
    %v3970 = vpop.f32.mrb[0].mxu0
    %v3971 = vadd.f32 0.0, %v3970
    %v3972 = vpop.f32.mrb[0].mxu0
    %3973 = vdwg.mxu0
    %v3974 = vld [vmem:[%s24] sm:$0xf]
    %v3975 = vadd.f32 %v3750, %v3822
    %v3976 = vadd.f32 %v3751, %v3823
    %v3977 = vadd.f32 %v3752, %v3824
    %v3978 = vadd.f32 %v3753, %v3825
    %v3980 = vsel %vm1366, %v3974, 0
    %3982 = vmatprep.subr.mxu0 0.0
    %3983 = vmatpush1.msra.mxu0 %v3975
    %3984 = vmatprep.subr.mxu0 0.0
    %3985 = vmatpush1.msra.mxu0 %v3976
    %3986 = vmatprep.subr.mxu0 0.0
    %3987 = vmatpush1.msra.mxu0 %v3977
    %3988 = vmatprep.subr.mxu0 0.0
    %3989 = vmatpush1.msra.mxu0 %v3978
    %3990 = vmatprep.subr.mxu0 0.0
    %3991 = vmatpush1.msra.mxu0 0.0
    %3992 = vmatprep.subr.mxu0 0.0
    %3993 = vmatpush1.msra.mxu0 0.0
    %3994 = vmatprep.subr.mxu0 0.0
    %3995 = vmatpush1.msra.mxu0 0.0
    %3996 = vmatprep.subr.mxu0 0.0
    %3997 = vmatpush1.msra.mxu0 0.0
    %3998 = vmatprep.subr.mxu0 0.0
    %3999 = vmatpush1.msra.mxu0 0.0
    %4000 = vmatprep.subr.mxu0 0.0
    %4001 = vmatpush1.msra.mxu0 0.0
    %4002 = vmatprep.subr.mxu0 0.0
    %4003 = vmatpush1.msra.mxu0 0.0
    %4004 = vmatprep.subr.mxu0 0.0
    %4005 = vmatpush1.msra.mxu0 0.0
    %4006 = vmatprep.subr.mxu0 0.0
    %4007 = vmatpush1.msra.mxu0 0.0
    %4008 = vmatprep.subr.mxu0 0.0
    %4009 = vmatpush1.msra.mxu0 0.0
    %4010 = vmatprep.subr.mxu0 0.0
    %4011 = vmatpush1.msra.mxu0 0.0
    %4012 = vmatprep.subr.mxu0 0.0
    %4013 = vmatpush1.msra.mxu0 0.0
    %4014 = vmatprep.subr.mxu0 0.0
    %4015 = vmatpush1.msra.mxu0 0.0
    %4016 = vmatprep.subr.mxu0 0.0
    %4017 = vmatpush1.msra.mxu0 0.0
    %4018 = vmatprep.subr.mxu0 0.0
    %4019 = vmatpush1.msra.mxu0 0.0
    %4020 = vmatprep.subr.mxu0 0.0
    %4021 = vmatpush1.msra.mxu0 0.0
    %4022 = vmatprep.subr.mxu0 0.0
    %4023 = vmatpush1.msra.mxu0 0.0
    %4024 = vmatprep.subr.mxu0 0.0
    %4025 = vmatpush1.msra.mxu0 0.0
    %4026 = vmatprep.subr.mxu0 0.0
    %4027 = vmatpush1.msra.mxu0 0.0
    %4028 = vmatprep.subr.mxu0 0.0
    %4029 = vmatpush1.msra.mxu0 0.0
    %4030 = vmatprep.subr.mxu0 0.0
    %4031 = vmatpush1.msra.mxu0 0.0
    %4032 = vmatprep.subr.mxu0 0.0
    %4033 = vmatpush1.msra.mxu0 0.0
    %4034 = vmatprep.subr.mxu0 0.0
    %4035 = vmatpush1.msra.mxu0 0.0
    %4036 = vmatprep.subr.mxu0 0.0
    %4037 = vmatpush1.msra.mxu0 0.0
    %4038 = vmatprep.subr.mxu0 0.0
    %4039 = vmatpush1.msra.mxu0 0.0
    %4040 = vmatprep.subr.mxu0 0.0
    %4041 = vmatpush1.msra.mxu0 0.0
    %4042 = vmatprep.subr.mxu0 0.0
    %4043 = vmatpush1.msra.mxu0 0.0
    %4044 = vmatprep.subr.mxu0 0.0
    %4045 = vmatpush1.msra.mxu0 0.0
    %4046 = vmatprep.mubr.f32.mxu0 0.0
    %4047 = vmatmul.mubr.f32.gmra.mrb[0].mxu0 %v3980
    %v4048 = vpop.f32.mrb[0].mxu0
    %v4049 = vadd.f32 0.0, %v4048
    %v4050 = vpop.f32.mrb[0].mxu0
    %4051 = vdwg.mxu0
    %v4052 = vsub.f32 %v3897, %v3971
    %v4053 = vld [vmem:[%s25] sm:$0xf]
    %4055 = vset.pattern.permute.xlu0 0
    %4056 = vperm.xlu0 %4055, %v4053
    %v4057 = vpop.permute.xlu0 %4056
    %v4059 = vadd.f32 %v4052, %v4057
    %v4060 = vsub.f32 %v4049, %v3897
    %v4061 = vsub.f32 %v4060, %v3971
    %v4062 = vld [vmem:[%s26] sm:$0xf]
    %4064 = vset.pattern.permute.xlu0 0
    %4065 = vperm.xlu0 %4064, %v4062
    %v4066 = vpop.permute.xlu0 %4065
    %v4068 = vadd.f32 %v4061, %v4066
    %v4069 = vmul.f32 %v4059, %v4059
    %v4070 = vmul.f32 %v4068, %v4068
    %v4071 = vadd.f32 %v4069, %v4070
    %vm4072 = vcmask 11264
    %v4073 = vsel %vm4072, %v4071, 0.0
    %v4074 = vrot.slane %v4073, 4
    %v4075 = vadd.f32 %v4073, %v4074
    %v4076 = vrot.slane %v4075, 2
    %v4077 = vadd.f32 %v4075, %v4076
    %v4078 = vrot.slane %v4077, 1
    %v4079 = vadd.f32 %v4077, %v4078
    %v4080 = vadd.f32 %v4079, 1e-12
    %v4081 = vrsqrt.pop %v4080
    %v4082 = vmul.f32 %v4059, %v4081
    %4083 = vst.msk [vmem:[%s27] sm:$0xf] %vm4072, %v4082
    %v4084 = vmul.f32 %v4068, %v4081
    %4085 = vst.msk [vmem:[%s28] sm:$0xf] %vm4072, %v4084
    // Predicated region
    $region118: #{quantum_model_v4.1} parent=1 // pred_check
      _
    $region119: #{quantum_model_v4.1} parent=1 // pred_check_branch
      %4087 = sbr.rel (0) target = $region121
    $region120: #{quantum_model_v4.1} parent=1 // pred_region
      _
    $region121: #{quantum_model_v4.1} parent=1 // pred_fallthru
      _
    // Predicated region
    $region122: #{quantum_model_v4.1} parent=1 // pred_check
      _
    $region123: #{quantum_model_v4.1} parent=1 // pred_check_branch
      %4089 = sbr.rel (0) target = $region125
    $region124: #{quantum_model_v4.1} parent=1 // pred_region
      _
    $region125: #{quantum_model_v4.1} parent=1 // pred_fallthru
      _
    // Predicated region
    $region126: #{quantum_model_v4.1} parent=1 // pred_check
      _
    $region127: #{quantum_model_v4.1} parent=1 // pred_check_branch
      %4091 = sbr.rel (0) target = $region129
    $region128: #{quantum_model_v4.1} parent=1 // pred_region
      _
    $region129: #{quantum_model_v4.1} parent=1 // pred_fallthru
      _
    // Predicated region
    $region130: #{quantum_model_v4.1} parent=1 // pred_check
      _
    $region131: #{quantum_model_v4.1} parent=1 // pred_check_branch
      %4093 = sbr.rel (0) target = $region133
    $region132: #{quantum_model_v4.1} parent=1 // pred_region
      _
    $region133: #{quantum_model_v4.1} parent=1 // pred_fallthru
      _
    %4094 = vsyncpa [#allocation3], 1
    %4095 = vsyncpa [#allocation5], 1

</llo_original>
